<compile_context>
chip_gen: v5e
topology: v5e:2x2
jax: 0.10.0
libtpu: 0.0.40
codegen_flags: <defaults>
</compile_context>

<pallas_src>
import jax
import jax.numpy as jnp
from jax import lax
from jax.experimental import pallas as pl
from jax.experimental.pallas import tpu as pltpu

# ----------------------------- model config (small, synthetic) ----------------
SEQ = 256            # tokens per call
HIDDEN = 256         # hidden_size
NUM_HEADS = 2        # num_attention_heads == num_key_value_heads (MHA)
HEAD_DIM = HIDDEN // NUM_HEADS            # 128
INTERMEDIATE = 512   # MLP intermediate size
RMS_EPS = 1e-6
ROPE_THETA = 500000.0

TQ = 128             # query-token tile; grid axis is "parallel" (2 TCs on v7x)
MASK_VALUE = -1e30   # finite mask (avoids NaN for fully-masked score columns)


def _rmsnorm(x, w, eps):
    # vLLM RMSNorm.forward_native: x * rsqrt(mean(x^2) + eps) * weight   (f32)
    var = jnp.mean(x * x, axis=-1, keepdims=True)
    return x * lax.rsqrt(var + eps) * w


def _rope_neox(t, cos, sin):
    # neox RoPE: t*cos + rotate_half(t)*sin, rotate_half(t) = concat(-x2, x1).
    half = HEAD_DIM // 2
    rot = jnp.concatenate([-t[:, half:], t[:, :half]], axis=-1)
    return t * cos + rot * sin


# ===================== fully fused decoder-layer kernel =======================
def olmo_layer_kernel(x_ref, wqkv_ref, qnw_ref, knw_ref, cos_ref, sin_ref,
                      wo_ref, ln1_ref, wgu_ref, wdown_ref, ln2_ref, out_ref):
    H = HIDDEN
    S = x_ref.shape[0]
    qi = pl.program_id(0)
    q_off = pl.multiple_of(qi * TQ, TQ)

    x_full = x_ref[...]                              # [S, H]  f32 (residual / KV src)
    x_tile = x_ref[pl.ds(q_off, TQ), :]              # [TQ, H] f32 (this tile's rows)
    xb_full = x_full.astype(jnp.bfloat16)
    xb_tile = x_tile.astype(jnp.bfloat16)

    # --- qkv projection (bf16 MXU operands, f32 accumulate) --------------------
    # q only for this tile; k/v for the whole sequence (needed by causal attn).
    q = jnp.dot(xb_tile, wqkv_ref[:, :H], preferred_element_type=jnp.float32)
    kv = jnp.dot(xb_full, wqkv_ref[:, H:], preferred_element_type=jnp.float32)
    k = kv[:, :H]
    v = kv[:, H:]

    # --- q/k RMSNorm over the full packed hidden dim (MHA config) --------------
    q = _rmsnorm(q, qnw_ref[...], RMS_EPS)
    k = _rmsnorm(k, knw_ref[...], RMS_EPS)

    cos_q = cos_ref[pl.ds(q_off, TQ), :]
    sin_q = sin_ref[pl.ds(q_off, TQ), :]
    cos_k = cos_ref[...]
    sin_k = sin_ref[...]

    # --- causal attention: single KV tile of size SEQ (full-width MXU) ---------
    row = lax.broadcasted_iota(jnp.int32, (TQ, S), 0) + q_off
    col = lax.broadcasted_iota(jnp.int32, (TQ, S), 1)
    mask = row >= col                                 # shared across heads
    scale = HEAD_DIM ** -0.5

    heads = []
    for h in range(NUM_HEADS):                        # static, unrolled
        lo, hi = h * HEAD_DIM, (h + 1) * HEAD_DIM
        qh = _rope_neox(q[:, lo:hi], cos_q, sin_q).astype(jnp.bfloat16)   # [TQ, hd]
        kh = _rope_neox(k[:, lo:hi], cos_k, sin_k).astype(jnp.bfloat16)   # [S, hd]
        vh = v[:, lo:hi].astype(jnp.bfloat16)                             # [S, hd]

        s = lax.dot_general(qh, kh, (((1,), (1,)), ((), ())),
                            preferred_element_type=jnp.float32) * scale   # [TQ, S]
        s = jnp.where(mask, s, MASK_VALUE)
        m = jnp.max(s, axis=-1, keepdims=True)
        p = jnp.exp(s - m)                             # unnormalized, f32
        l = jnp.sum(p, axis=-1, keepdims=True)
        oh = jnp.dot(p.astype(jnp.bfloat16), vh,
                     preferred_element_type=jnp.float32)                  # [TQ, hd]
        heads.append(oh * pl.reciprocal(l, approx=True))

    attn = jnp.concatenate(heads, axis=-1).astype(jnp.bfloat16)           # [TQ, H]

    # --- o_proj + input_layernorm (post-norm) + residual -----------------------
    o = jnp.dot(attn, wo_ref[...], preferred_element_type=jnp.float32)
    h1 = _rmsnorm(o, ln1_ref[...], RMS_EPS) + x_tile

    # --- MLP (gate_up -> SiluAndMul -> down) + post_attention_layernorm + resid
    gu = jnp.dot(h1.astype(jnp.bfloat16), wgu_ref[...],
                 preferred_element_type=jnp.float32)                      # [TQ, 2I]
    gate = gu[:, :INTERMEDIATE]
    up = gu[:, INTERMEDIATE:]
    act = gate * pl.reciprocal(1.0 + jnp.exp(-gate), approx=True) * up    # silu*up
    down = jnp.dot(act.astype(jnp.bfloat16), wdown_ref[...],
                   preferred_element_type=jnp.float32)                    # [TQ, H]
    out_ref[...] = (_rmsnorm(down, ln2_ref[...], RMS_EPS) + h1).astype(out_ref.dtype)


@jax.jit
def olmo_decoder_layer(x, wqkv, q_norm_w, k_norm_w, cos, sin,
                       wo, ln1_w, wgu, wdown, ln2_w):
    S, H = x.shape
    assert S % TQ == 0
    hd = HEAD_DIM
    grid = (S // TQ,)
    return pl.pallas_call(
        olmo_layer_kernel,
        out_shape=jax.ShapeDtypeStruct((S, H), jnp.float32),
        grid=grid,
        in_specs=[
            pl.BlockSpec((S, H), lambda i: (0, 0)),                 # x (full, f32)
            pl.BlockSpec((H, 3 * H), lambda i: (0, 0)),             # Wqkv (bf16)
            pl.BlockSpec((1, H), lambda i: (0, 0)),                 # q_norm w
            pl.BlockSpec((1, H), lambda i: (0, 0)),                 # k_norm w
            pl.BlockSpec((S, hd), lambda i: (0, 0)),                # cos table
            pl.BlockSpec((S, hd), lambda i: (0, 0)),                # sin table
            pl.BlockSpec((H, H), lambda i: (0, 0)),                 # Wo (bf16)
            pl.BlockSpec((1, H), lambda i: (0, 0)),                 # input_layernorm w
            pl.BlockSpec((H, 2 * INTERMEDIATE), lambda i: (0, 0)),  # W_gate_up (bf16)
            pl.BlockSpec((INTERMEDIATE, H), lambda i: (0, 0)),      # W_down (bf16)
            pl.BlockSpec((1, H), lambda i: (0, 0)),                 # post_attn ln w
        ],
        out_specs=pl.BlockSpec((TQ, H), lambda i: (i, 0)),
        compiler_params=pltpu.CompilerParams(
            dimension_semantics=("parallel",)),
    )(x, wqkv, q_norm_w, k_norm_w, cos, sin, wo, ln1_w, wgu, wdown, ln2_w)


# -------------------------------- pure-JAX reference ---------------------------
def olmo_decoder_layer_ref(x, wqkv, q_norm_w, k_norm_w, cos, sin,
                           wo, ln1_w, wgu, wdown, ln2_w):
    S, H = x.shape
    nh, hd = NUM_HEADS, HEAD_DIM

    qkv = jnp.dot(x.astype(jnp.bfloat16), wqkv, preferred_element_type=jnp.float32)
    q, k, v = jnp.split(qkv, 3, axis=-1)
    q = _rmsnorm(q, q_norm_w, RMS_EPS)
    k = _rmsnorm(k, k_norm_w, RMS_EPS)
    q = q.reshape(S, nh, hd)
    k = k.reshape(S, nh, hd)
    v = v.reshape(S, nh, hd)

    def rope(t):
        x1, x2 = t[..., : hd // 2], t[..., hd // 2:]
        rot = jnp.concatenate([-x2, x1], axis=-1)
        return t * cos[:, None, :] + rot * sin[:, None, :]

    qb = rope(q).astype(jnp.bfloat16)
    kb = rope(k).astype(jnp.bfloat16)
    vb = v.astype(jnp.bfloat16)

    s = jnp.einsum('qhd,khd->hqk', qb, kb,
                   preferred_element_type=jnp.float32) * (hd ** -0.5)
    mask = jnp.tril(jnp.ones((S, S), bool))
    s = jnp.where(mask[None], s, MASK_VALUE)
    m = jnp.max(s, axis=-1, keepdims=True)
    p = jnp.exp(s - m)
    l = jnp.sum(p, axis=-1, keepdims=True)
    o = jnp.einsum('hqk,khd->qhd', p.astype(jnp.bfloat16), vb,
                   preferred_element_type=jnp.float32)
    o = (o / jnp.swapaxes(l, 0, 1)).reshape(S, H)
    attn_out = jnp.dot(o.astype(jnp.bfloat16), wo, preferred_element_type=jnp.float32)

    h1 = _rmsnorm(attn_out, ln1_w, RMS_EPS) + x

    gu = jnp.dot(h1.astype(jnp.bfloat16), wgu, preferred_element_type=jnp.float32)
    gate, up = gu[:, :INTERMEDIATE], gu[:, INTERMEDIATE:]
    act = gate * jax.nn.sigmoid(gate) * up
    down = jnp.dot(act.astype(jnp.bfloat16), wdown, preferred_element_type=jnp.float32)
    return _rmsnorm(down, ln2_w, RMS_EPS) + h1


# ------------------------------------- main -------------------------------------
if __name__ == "__main__":
    key = jax.random.PRNGKey(0)
    ks = jax.random.split(key, 10)
    f32 = jnp.float32

    x = jax.random.normal(ks[0], (SEQ, HIDDEN), f32)
    # Weights stored in bf16 (halves HBM traffic, bf16 MXU rate).
    wqkv = (jax.random.normal(ks[1], (HIDDEN, 3 * HIDDEN), f32)
            * HIDDEN ** -0.5).astype(jnp.bfloat16)
    wo = (jax.random.normal(ks[2], (HIDDEN, HIDDEN), f32)
          * HIDDEN ** -0.5).astype(jnp.bfloat16)
    wgu = (jax.random.normal(ks[3], (HIDDEN, 2 * INTERMEDIATE), f32)
           * HIDDEN ** -0.5).astype(jnp.bfloat16)
    wdown = (jax.random.normal(ks[4], (INTERMEDIATE, HIDDEN), f32)
             * INTERMEDIATE ** -0.5).astype(jnp.bfloat16)
    # Norm weights (init ~1 in the real model; perturb slightly, deterministic).
    q_norm_w = 1.0 + 0.1 * jax.random.normal(ks[5], (1, HIDDEN), f32)
    k_norm_w = 1.0 + 0.1 * jax.random.normal(ks[6], (1, HIDDEN), f32)
    ln1_w = 1.0 + 0.1 * jax.random.normal(ks[7], (1, HIDDEN), f32)
    ln2_w = 1.0 + 0.1 * jax.random.normal(ks[8], (1, HIDDEN), f32)

    # RoPE tables (neox style, rotary_dim == head_dim), positions = arange(SEQ).
    positions = jnp.arange(SEQ, dtype=f32)
    inv_freq = 1.0 / (ROPE_THETA ** (jnp.arange(0, HEAD_DIM, 2, dtype=f32)
                                     / HEAD_DIM))
    angles = positions[:, None] * inv_freq[None, :]            # [S, hd/2]
    cos = jnp.concatenate([jnp.cos(angles)] * 2, axis=-1)      # [S, hd]
    sin = jnp.concatenate([jnp.sin(angles)] * 2, axis=-1)      # [S, hd]

    out = olmo_decoder_layer(x, wqkv, q_norm_w, k_norm_w, cos, sin,
                             wo, ln1_w, wgu, wdown, ln2_w)
    out = jax.block_until_ready(out)

    ref = olmo_decoder_layer_ref(x, wqkv, q_norm_w, k_norm_w, cos, sin,
                                 wo, ln1_w, wgu, wdown, ln2_w)
    assert out.shape == (SEQ, HIDDEN)
    max_err = float(jnp.max(jnp.abs(out - ref)))
    assert jnp.allclose(out, ref, atol=2e-2, rtol=2e-2), max_err

    print("KERNEL_OK")
</pallas_src>

<mosaic_0001>
module attributes {stable_mosaic.version = 11 : i64} {
  func.func @olmo_layer_kernel(%arg0: i32, %arg1: memref<256x256xf32, #tpu.memory_space<vmem>>, %arg2: memref<256x768xbf16, #tpu.memory_space<vmem>>, %arg3: memref<1x256xf32, #tpu.memory_space<vmem>>, %arg4: memref<1x256xf32, #tpu.memory_space<vmem>>, %arg5: memref<256x128xf32, #tpu.memory_space<vmem>>, %arg6: memref<256x128xf32, #tpu.memory_space<vmem>>, %arg7: memref<256x256xbf16, #tpu.memory_space<vmem>>, %arg8: memref<1x256xf32, #tpu.memory_space<vmem>>, %arg9: memref<256x1024xbf16, #tpu.memory_space<vmem>>, %arg10: memref<512x256xbf16, #tpu.memory_space<vmem>>, %arg11: memref<1x256xf32, #tpu.memory_space<vmem>>, %arg12: memref<128x256xf32, #tpu.memory_space<vmem>>) attributes {dimension_semantics = [#tpu.dimension_semantics<parallel>], iteration_bounds = array<i64: 2>, scalar_prefetch = 0 : i64, scratch_operands = 0 : i64, tpu.core_type = #tpu.core_type<tc>, window_params = [{pipeline_mode = #tpu.pipeline_mode<synchronous>, transform_indices = @transform_0, window_bounds = array<i64: 256, 256>}, {pipeline_mode = #tpu.pipeline_mode<synchronous>, transform_indices = @transform_1, window_bounds = array<i64: 256, 768>}, {pipeline_mode = #tpu.pipeline_mode<synchronous>, transform_indices = @transform_2, window_bounds = array<i64: 1, 256>}, {pipeline_mode = #tpu.pipeline_mode<synchronous>, transform_indices = @transform_3, window_bounds = array<i64: 1, 256>}, {pipeline_mode = #tpu.pipeline_mode<synchronous>, transform_indices = @transform_4, window_bounds = array<i64: 256, 128>}, {pipeline_mode = #tpu.pipeline_mode<synchronous>, transform_indices = @transform_5, window_bounds = array<i64: 256, 128>}, {pipeline_mode = #tpu.pipeline_mode<synchronous>, transform_indices = @transform_6, window_bounds = array<i64: 256, 256>}, {pipeline_mode = #tpu.pipeline_mode<synchronous>, transform_indices = @transform_7, window_bounds = array<i64: 1, 256>}, {pipeline_mode = #tpu.pipeline_mode<synchronous>, transform_indices = @transform_8, window_bounds = array<i64: 256, 1024>}, {pipeline_mode = #tpu.pipeline_mode<synchronous>, transform_indices = @transform_9, window_bounds = array<i64: 512, 256>}, {pipeline_mode = #tpu.pipeline_mode<synchronous>, transform_indices = @transform_10, window_bounds = array<i64: 1, 256>}, {transform_indices = @transform_11, window_bounds = array<i64: 128, 256>}]} {
    %c128_i32 = arith.constant 128 : i32
    %0 = arith.muli %arg0, %c128_i32 : i32
    %1 = tpu.assume_multiple %0, 128 : i32
    %c0 = arith.constant 0 : index
    %c0_0 = arith.constant 0 : index
    %2 = vector.load %arg1[%c0, %c0_0] : memref<256x256xf32, #tpu.memory_space<vmem>>, vector<256x256xf32>
    %3 = arith.index_cast %1 : i32 to index
    %c0_1 = arith.constant 0 : index
    %4 = vector.load %arg1[%3, %c0_1] : memref<256x256xf32, #tpu.memory_space<vmem>>, vector<128x256xf32>
    %5 = arith.truncf %2 : vector<256x256xf32> to vector<256x256xbf16>
    %6 = arith.truncf %4 : vector<128x256xf32> to vector<128x256xbf16>
    %c0_2 = arith.constant 0 : index
    %c0_3 = arith.constant 0 : index
    %7 = vector.load %arg2[%c0_2, %c0_3] : memref<256x768xbf16, #tpu.memory_space<vmem>>, vector<256x256xbf16>
    %cst = arith.constant dense<0.000000e+00> : vector<128x256xf32>
    %8 = tpu.matmul %6, %7, %cst {dimension_numbers = #tpu.dot_dimension_numbers<[1], [0], [0], [1], [0, 0, 1, 1], [], []>} : vector<128x256xbf16>, vector<256x256xbf16>, vector<128x256xf32> -> vector<128x256xf32>
    %c0_4 = arith.constant 0 : index
    %c256 = arith.constant 256 : index
    %9 = vector.load %arg2[%c0_4, %c256] : memref<256x768xbf16, #tpu.memory_space<vmem>>, vector<256x512xbf16>
    %cst_5 = arith.constant dense<0.000000e+00> : vector<256x512xf32>
    %10 = tpu.matmul %5, %9, %cst_5 {dimension_numbers = #tpu.dot_dimension_numbers<[1], [0], [0], [1], [0, 0, 1, 1], [], []>} : vector<256x256xbf16>, vector<256x512xbf16>, vector<256x512xf32> -> vector<256x512xf32>
    %11 = vector.extract_strided_slice %10 {offsets = [0, 0], sizes = [256, 256], strides = [1, 1]} : vector<256x512xf32> to vector<256x256xf32>
    %12 = vector.extract_strided_slice %10 {offsets = [0, 256], sizes = [256, 256], strides = [1, 1]} : vector<256x512xf32> to vector<256x256xf32>
    %c0_6 = arith.constant 0 : index
    %c0_7 = arith.constant 0 : index
    %13 = vector.load %arg3[%c0_6, %c0_7] : memref<1x256xf32, #tpu.memory_space<vmem>>, vector<1x256xf32>
    %14 = arith.mulf %8, %8 : vector<128x256xf32>
    %cst_8 = arith.constant dense<0.000000e+00> : vector<128xf32>
    %15 = vector.multi_reduction <add>, %14, %cst_8 [1] : vector<128x256xf32> to vector<128xf32>
    %16 = vector.shape_cast %15 : vector<128xf32> to vector<128x1xf32>
    %cst_9 = arith.constant 2.560000e+02 : f32
    %17 = vector.broadcast %cst_9 : f32 to vector<128x1xf32>
    %18 = arith.divf %16, %17 : vector<128x1xf32>
    %cst_10 = arith.constant 9.99999997E-7 : f32
    %19 = vector.broadcast %cst_10 : f32 to vector<128x1xf32>
    %20 = arith.addf %18, %19 : vector<128x1xf32>
    %21 = math.rsqrt %20 : vector<128x1xf32>
    %22 = vector.broadcast %21 : vector<128x1xf32> to vector<128x256xf32>
    %23 = arith.mulf %8, %22 : vector<128x256xf32>
    %24 = vector.broadcast %13 : vector<1x256xf32> to vector<128x256xf32>
    %25 = arith.mulf %23, %24 : vector<128x256xf32>
    %c0_11 = arith.constant 0 : index
    %c0_12 = arith.constant 0 : index
    %26 = vector.load %arg4[%c0_11, %c0_12] : memref<1x256xf32, #tpu.memory_space<vmem>>, vector<1x256xf32>
    %27 = arith.mulf %11, %11 : vector<256x256xf32>
    %cst_13 = arith.constant dense<0.000000e+00> : vector<256xf32>
    %28 = vector.multi_reduction <add>, %27, %cst_13 [1] : vector<256x256xf32> to vector<256xf32>
    %29 = vector.shape_cast %28 : vector<256xf32> to vector<256x1xf32>
    %cst_14 = arith.constant 2.560000e+02 : f32
    %30 = vector.broadcast %cst_14 : f32 to vector<256x1xf32>
    %31 = arith.divf %29, %30 : vector<256x1xf32>
    %cst_15 = arith.constant 9.99999997E-7 : f32
    %32 = vector.broadcast %cst_15 : f32 to vector<256x1xf32>
    %33 = arith.addf %31, %32 : vector<256x1xf32>
    %34 = math.rsqrt %33 : vector<256x1xf32>
    %35 = vector.broadcast %34 : vector<256x1xf32> to vector<256x256xf32>
    %36 = arith.mulf %11, %35 : vector<256x256xf32>
    %37 = vector.broadcast %26 : vector<1x256xf32> to vector<256x256xf32>
    %38 = arith.mulf %36, %37 : vector<256x256xf32>
    %39 = arith.index_cast %1 : i32 to index
    %c0_16 = arith.constant 0 : index
    %40 = vector.load %arg5[%39, %c0_16] : memref<256x128xf32, #tpu.memory_space<vmem>>, vector<128x128xf32>
    %41 = arith.index_cast %1 : i32 to index
    %c0_17 = arith.constant 0 : index
    %42 = vector.load %arg6[%41, %c0_17] : memref<256x128xf32, #tpu.memory_space<vmem>>, vector<128x128xf32>
    %c0_18 = arith.constant 0 : index
    %c0_19 = arith.constant 0 : index
    %43 = vector.load %arg5[%c0_18, %c0_19] : memref<256x128xf32, #tpu.memory_space<vmem>>, vector<256x128xf32>
    %c0_20 = arith.constant 0 : index
    %c0_21 = arith.constant 0 : index
    %44 = vector.load %arg6[%c0_20, %c0_21] : memref<256x128xf32, #tpu.memory_space<vmem>>, vector<256x128xf32>
    %45 = tpu.iota {dimensions = array<i32: 0>} : vector<128x256xi32>
    %46 = vector.broadcast %1 : i32 to vector<128x256xi32>
    %47 = arith.addi %45, %46 : vector<128x256xi32>
    %48 = tpu.iota {dimensions = array<i32: 1>} : vector<128x256xi32>
    %49 = arith.cmpi sge, %47, %48 : vector<128x256xi32>
    %50 = vector.extract_strided_slice %25 {offsets = [0, 0], sizes = [128, 128], strides = [1, 1]} : vector<128x256xf32> to vector<128x128xf32>
    %51 = vector.extract_strided_slice %50 {offsets = [0, 64], sizes = [128, 64], strides = [1, 1]} : vector<128x128xf32> to vector<128x64xf32>
    %cst_22 = arith.constant 0.000000e+00 : f32
    %52 = vector.broadcast %cst_22 : f32 to vector<128x64xf32>
    %53 = arith.subf %52, %51 : vector<128x64xf32>
    %54 = vector.extract_strided_slice %50 {offsets = [0, 0], sizes = [128, 64], strides = [1, 1]} : vector<128x128xf32> to vector<128x64xf32>
    %55 = tpu.concatenate %53, %54 in 1 : vector<128x64xf32>, vector<128x64xf32> -> vector<128x128xf32>
    %56 = arith.mulf %50, %40 : vector<128x128xf32>
    %57 = arith.mulf %55, %42 : vector<128x128xf32>
    %58 = arith.addf %56, %57 : vector<128x128xf32>
    %59 = arith.truncf %58 : vector<128x128xf32> to vector<128x128xbf16>
    %60 = vector.extract_strided_slice %38 {offsets = [0, 0], sizes = [256, 128], strides = [1, 1]} : vector<256x256xf32> to vector<256x128xf32>
    %61 = vector.extract_strided_slice %60 {offsets = [0, 64], sizes = [256, 64], strides = [1, 1]} : vector<256x128xf32> to vector<256x64xf32>
    %cst_23 = arith.constant 0.000000e+00 : f32
    %62 = vector.broadcast %cst_23 : f32 to vector<256x64xf32>
    %63 = arith.subf %62, %61 : vector<256x64xf32>
    %64 = vector.extract_strided_slice %60 {offsets = [0, 0], sizes = [256, 64], strides = [1, 1]} : vector<256x128xf32> to vector<256x64xf32>
    %65 = tpu.concatenate %63, %64 in 1 : vector<256x64xf32>, vector<256x64xf32> -> vector<256x128xf32>
    %66 = arith.mulf %60, %43 : vector<256x128xf32>
    %67 = arith.mulf %65, %44 : vector<256x128xf32>
    %68 = arith.addf %66, %67 : vector<256x128xf32>
    %69 = arith.truncf %68 : vector<256x128xf32> to vector<256x128xbf16>
    %70 = vector.extract_strided_slice %12 {offsets = [0, 0], sizes = [256, 128], strides = [1, 1]} : vector<256x256xf32> to vector<256x128xf32>
    %71 = arith.truncf %70 : vector<256x128xf32> to vector<256x128xbf16>
    %cst_24 = arith.constant dense<0.000000e+00> : vector<128x256xf32>
    %72 = tpu.matmul %59, %69, %cst_24 {dimension_numbers = #tpu.dot_dimension_numbers<[1], [1], [0], [0], [0, 0, 1, 0], [], []>} : vector<128x128xbf16>, vector<256x128xbf16>, vector<128x256xf32> -> vector<128x256xf32>
    %cst_25 = arith.constant 0.0883883461 : f32
    %73 = vector.broadcast %cst_25 : f32 to vector<128x256xf32>
    %74 = arith.mulf %72, %73 : vector<128x256xf32>
    %cst_26 = arith.constant -1.000000e+30 : f32
    %75 = vector.broadcast %cst_26 : f32 to vector<128x256xf32>
    %76 = arith.select %49, %74, %75 : vector<128x256xi1>, vector<128x256xf32>
    %cst_27 = arith.constant dense<0xFF800000> : vector<128xf32>
    %77 = vector.multi_reduction <maximumf>, %76, %cst_27 [1] : vector<128x256xf32> to vector<128xf32>
    %78 = vector.shape_cast %77 : vector<128xf32> to vector<128x1xf32>
    %79 = vector.broadcast %78 : vector<128x1xf32> to vector<128x256xf32>
    %80 = arith.subf %76, %79 : vector<128x256xf32>
    %81 = math.exp %80 : vector<128x256xf32>
    %cst_28 = arith.constant dense<0.000000e+00> : vector<128xf32>
    %82 = vector.multi_reduction <add>, %81, %cst_28 [1] : vector<128x256xf32> to vector<128xf32>
    %83 = vector.shape_cast %82 : vector<128xf32> to vector<128x1xf32>
    %84 = arith.truncf %81 : vector<128x256xf32> to vector<128x256xbf16>
    %cst_29 = arith.constant dense<0.000000e+00> : vector<128x128xf32>
    %85 = tpu.matmul %84, %71, %cst_29 {dimension_numbers = #tpu.dot_dimension_numbers<[1], [0], [0], [1], [0, 0, 1, 1], [], []>} : vector<128x256xbf16>, vector<256x128xbf16>, vector<128x128xf32> -> vector<128x128xf32>
    %86 = tpu.reciprocal %83 {approx = true} : vector<128x1xf32> -> vector<128x1xf32>
    %87 = vector.broadcast %86 : vector<128x1xf32> to vector<128x128xf32>
    %88 = arith.mulf %85, %87 : vector<128x128xf32>
    %89 = vector.extract_strided_slice %25 {offsets = [0, 128], sizes = [128, 128], strides = [1, 1]} : vector<128x256xf32> to vector<128x128xf32>
    %90 = vector.extract_strided_slice %89 {offsets = [0, 64], sizes = [128, 64], strides = [1, 1]} : vector<128x128xf32> to vector<128x64xf32>
    %cst_30 = arith.constant 0.000000e+00 : f32
    %91 = vector.broadcast %cst_30 : f32 to vector<128x64xf32>
    %92 = arith.subf %91, %90 : vector<128x64xf32>
    %93 = vector.extract_strided_slice %89 {offsets = [0, 0], sizes = [128, 64], strides = [1, 1]} : vector<128x128xf32> to vector<128x64xf32>
    %94 = tpu.concatenate %92, %93 in 1 : vector<128x64xf32>, vector<128x64xf32> -> vector<128x128xf32>
    %95 = arith.mulf %89, %40 : vector<128x128xf32>
    %96 = arith.mulf %94, %42 : vector<128x128xf32>
    %97 = arith.addf %95, %96 : vector<128x128xf32>
    %98 = arith.truncf %97 : vector<128x128xf32> to vector<128x128xbf16>
    %99 = vector.extract_strided_slice %38 {offsets = [0, 128], sizes = [256, 128], strides = [1, 1]} : vector<256x256xf32> to vector<256x128xf32>
    %100 = vector.extract_strided_slice %99 {offsets = [0, 64], sizes = [256, 64], strides = [1, 1]} : vector<256x128xf32> to vector<256x64xf32>
    %cst_31 = arith.constant 0.000000e+00 : f32
    %101 = vector.broadcast %cst_31 : f32 to vector<256x64xf32>
    %102 = arith.subf %101, %100 : vector<256x64xf32>
    %103 = vector.extract_strided_slice %99 {offsets = [0, 0], sizes = [256, 64], strides = [1, 1]} : vector<256x128xf32> to vector<256x64xf32>
    %104 = tpu.concatenate %102, %103 in 1 : vector<256x64xf32>, vector<256x64xf32> -> vector<256x128xf32>
    %105 = arith.mulf %99, %43 : vector<256x128xf32>
    %106 = arith.mulf %104, %44 : vector<256x128xf32>
    %107 = arith.addf %105, %106 : vector<256x128xf32>
    %108 = arith.truncf %107 : vector<256x128xf32> to vector<256x128xbf16>
    %109 = vector.extract_strided_slice %12 {offsets = [0, 128], sizes = [256, 128], strides = [1, 1]} : vector<256x256xf32> to vector<256x128xf32>
    %110 = arith.truncf %109 : vector<256x128xf32> to vector<256x128xbf16>
    %cst_32 = arith.constant dense<0.000000e+00> : vector<128x256xf32>
    %111 = tpu.matmul %98, %108, %cst_32 {dimension_numbers = #tpu.dot_dimension_numbers<[1], [1], [0], [0], [0, 0, 1, 0], [], []>} : vector<128x128xbf16>, vector<256x128xbf16>, vector<128x256xf32> -> vector<128x256xf32>
    %cst_33 = arith.constant 0.0883883461 : f32
    %112 = vector.broadcast %cst_33 : f32 to vector<128x256xf32>
    %113 = arith.mulf %111, %112 : vector<128x256xf32>
    %cst_34 = arith.constant -1.000000e+30 : f32
    %114 = vector.broadcast %cst_34 : f32 to vector<128x256xf32>
    %115 = arith.select %49, %113, %114 : vector<128x256xi1>, vector<128x256xf32>
    %cst_35 = arith.constant dense<0xFF800000> : vector<128xf32>
    %116 = vector.multi_reduction <maximumf>, %115, %cst_35 [1] : vector<128x256xf32> to vector<128xf32>
    %117 = vector.shape_cast %116 : vector<128xf32> to vector<128x1xf32>
    %118 = vector.broadcast %117 : vector<128x1xf32> to vector<128x256xf32>
    %119 = arith.subf %115, %118 : vector<128x256xf32>
    %120 = math.exp %119 : vector<128x256xf32>
    %cst_36 = arith.constant dense<0.000000e+00> : vector<128xf32>
    %121 = vector.multi_reduction <add>, %120, %cst_36 [1] : vector<128x256xf32> to vector<128xf32>
    %122 = vector.shape_cast %121 : vector<128xf32> to vector<128x1xf32>
    %123 = arith.truncf %120 : vector<128x256xf32> to vector<128x256xbf16>
    %cst_37 = arith.constant dense<0.000000e+00> : vector<128x128xf32>
    %124 = tpu.matmul %123, %110, %cst_37 {dimension_numbers = #tpu.dot_dimension_numbers<[1], [0], [0], [1], [0, 0, 1, 1], [], []>} : vector<128x256xbf16>, vector<256x128xbf16>, vector<128x128xf32> -> vector<128x128xf32>
    %125 = tpu.reciprocal %122 {approx = true} : vector<128x1xf32> -> vector<128x1xf32>
    %126 = vector.broadcast %125 : vector<128x1xf32> to vector<128x128xf32>
    %127 = arith.mulf %124, %126 : vector<128x128xf32>
    %128 = tpu.concatenate %88, %127 in 1 : vector<128x128xf32>, vector<128x128xf32> -> vector<128x256xf32>
    %129 = arith.truncf %128 : vector<128x256xf32> to vector<128x256xbf16>
    %c0_38 = arith.constant 0 : index
    %c0_39 = arith.constant 0 : index
    %130 = vector.load %arg7[%c0_38, %c0_39] : memref<256x256xbf16, #tpu.memory_space<vmem>>, vector<256x256xbf16>
    %cst_40 = arith.constant dense<0.000000e+00> : vector<128x256xf32>
    %131 = tpu.matmul %129, %130, %cst_40 {dimension_numbers = #tpu.dot_dimension_numbers<[1], [0], [0], [1], [0, 0, 1, 1], [], []>} : vector<128x256xbf16>, vector<256x256xbf16>, vector<128x256xf32> -> vector<128x256xf32>
    %c0_41 = arith.constant 0 : index
    %c0_42 = arith.constant 0 : index
    %132 = vector.load %arg8[%c0_41, %c0_42] : memref<1x256xf32, #tpu.memory_space<vmem>>, vector<1x256xf32>
    %133 = arith.mulf %131, %131 : vector<128x256xf32>
    %cst_43 = arith.constant dense<0.000000e+00> : vector<128xf32>
    %134 = vector.multi_reduction <add>, %133, %cst_43 [1] : vector<128x256xf32> to vector<128xf32>
    %135 = vector.shape_cast %134 : vector<128xf32> to vector<128x1xf32>
    %cst_44 = arith.constant 2.560000e+02 : f32
    %136 = vector.broadcast %cst_44 : f32 to vector<128x1xf32>
    %137 = arith.divf %135, %136 : vector<128x1xf32>
    %cst_45 = arith.constant 9.99999997E-7 : f32
    %138 = vector.broadcast %cst_45 : f32 to vector<128x1xf32>
    %139 = arith.addf %137, %138 : vector<128x1xf32>
    %140 = math.rsqrt %139 : vector<128x1xf32>
    %141 = vector.broadcast %140 : vector<128x1xf32> to vector<128x256xf32>
    %142 = arith.mulf %131, %141 : vector<128x256xf32>
    %143 = vector.broadcast %132 : vector<1x256xf32> to vector<128x256xf32>
    %144 = arith.mulf %142, %143 : vector<128x256xf32>
    %145 = arith.addf %144, %4 : vector<128x256xf32>
    %146 = arith.truncf %145 : vector<128x256xf32> to vector<128x256xbf16>
    %c0_46 = arith.constant 0 : index
    %c0_47 = arith.constant 0 : index
    %147 = vector.load %arg9[%c0_46, %c0_47] : memref<256x1024xbf16, #tpu.memory_space<vmem>>, vector<256x1024xbf16>
    %cst_48 = arith.constant dense<0.000000e+00> : vector<128x1024xf32>
    %148 = tpu.matmul %146, %147, %cst_48 {dimension_numbers = #tpu.dot_dimension_numbers<[1], [0], [0], [1], [0, 0, 1, 1], [], []>} : vector<128x256xbf16>, vector<256x1024xbf16>, vector<128x1024xf32> -> vector<128x1024xf32>
    %149 = vector.extract_strided_slice %148 {offsets = [0, 0], sizes = [128, 512], strides = [1, 1]} : vector<128x1024xf32> to vector<128x512xf32>
    %150 = vector.extract_strided_slice %148 {offsets = [0, 512], sizes = [128, 512], strides = [1, 1]} : vector<128x1024xf32> to vector<128x512xf32>
    %cst_49 = arith.constant 0.000000e+00 : f32
    %151 = vector.broadcast %cst_49 : f32 to vector<128x512xf32>
    %152 = arith.subf %151, %149 : vector<128x512xf32>
    %153 = math.exp %152 : vector<128x512xf32>
    %cst_50 = arith.constant 1.000000e+00 : f32
    %154 = vector.broadcast %cst_50 : f32 to vector<128x512xf32>
    %155 = arith.addf %154, %153 : vector<128x512xf32>
    %156 = tpu.reciprocal %155 {approx = true} : vector<128x512xf32> -> vector<128x512xf32>
    %157 = arith.mulf %149, %156 : vector<128x512xf32>
    %158 = arith.mulf %157, %150 : vector<128x512xf32>
    %159 = arith.truncf %158 : vector<128x512xf32> to vector<128x512xbf16>
    %c0_51 = arith.constant 0 : index
    %c0_52 = arith.constant 0 : index
    %160 = vector.load %arg10[%c0_51, %c0_52] : memref<512x256xbf16, #tpu.memory_space<vmem>>, vector<512x256xbf16>
    %cst_53 = arith.constant dense<0.000000e+00> : vector<128x256xf32>
    %161 = tpu.matmul %159, %160, %cst_53 {dimension_numbers = #tpu.dot_dimension_numbers<[1], [0], [0], [1], [0, 0, 1, 1], [], []>} : vector<128x512xbf16>, vector<512x256xbf16>, vector<128x256xf32> -> vector<128x256xf32>
    %c0_54 = arith.constant 0 : index
    %c0_55 = arith.constant 0 : index
    %162 = vector.load %arg11[%c0_54, %c0_55] : memref<1x256xf32, #tpu.memory_space<vmem>>, vector<1x256xf32>
    %163 = arith.mulf %161, %161 : vector<128x256xf32>
    %cst_56 = arith.constant dense<0.000000e+00> : vector<128xf32>
    %164 = vector.multi_reduction <add>, %163, %cst_56 [1] : vector<128x256xf32> to vector<128xf32>
    %165 = vector.shape_cast %164 : vector<128xf32> to vector<128x1xf32>
    %cst_57 = arith.constant 2.560000e+02 : f32
    %166 = vector.broadcast %cst_57 : f32 to vector<128x1xf32>
    %167 = arith.divf %165, %166 : vector<128x1xf32>
    %cst_58 = arith.constant 9.99999997E-7 : f32
    %168 = vector.broadcast %cst_58 : f32 to vector<128x1xf32>
    %169 = arith.addf %167, %168 : vector<128x1xf32>
    %170 = math.rsqrt %169 : vector<128x1xf32>
    %171 = vector.broadcast %170 : vector<128x1xf32> to vector<128x256xf32>
    %172 = arith.mulf %161, %171 : vector<128x256xf32>
    %173 = vector.broadcast %162 : vector<1x256xf32> to vector<128x256xf32>
    %174 = arith.mulf %172, %173 : vector<128x256xf32>
    %175 = arith.addf %174, %145 : vector<128x256xf32>
    %c0_59 = arith.constant 0 : index
    %c0_60 = arith.constant 0 : index
    %176 = vector.load %arg12[%c0_59, %c0_60] : memref<128x256xf32, #tpu.memory_space<vmem>>, vector<128x256xf32>
    tpu.vector_store %arg12[%c0_59, %c0_60], %175 {strides = array<i32>} : memref<128x256xf32, #tpu.memory_space<vmem>>, vector<128x256xf32>,
    return
  }
  func.func @transform_0(%arg0: i32) -> (i32, i32) {
    %c0_i32 = arith.constant 0 : i32
    %c0_i32_0 = arith.constant 0 : i32
    %c0_i32_1 = arith.constant 0 : i32
    return %c0_i32, %c0_i32_0 : i32, i32
  }
  func.func @transform_1(%arg0: i32) -> (i32, i32) {
    %c0_i32 = arith.constant 0 : i32
    %c0_i32_0 = arith.constant 0 : i32
    %c0_i32_1 = arith.constant 0 : i32
    return %c0_i32, %c0_i32_0 : i32, i32
  }
  func.func @transform_2(%arg0: i32) -> (i32, i32) {
    %c0_i32 = arith.constant 0 : i32
    %c0_i32_0 = arith.constant 0 : i32
    %c0_i32_1 = arith.constant 0 : i32
    return %c0_i32, %c0_i32_0 : i32, i32
  }
  func.func @transform_3(%arg0: i32) -> (i32, i32) {
    %c0_i32 = arith.constant 0 : i32
    %c0_i32_0 = arith.constant 0 : i32
    %c0_i32_1 = arith.constant 0 : i32
    return %c0_i32, %c0_i32_0 : i32, i32
  }
  func.func @transform_4(%arg0: i32) -> (i32, i32) {
    %c0_i32 = arith.constant 0 : i32
    %c0_i32_0 = arith.constant 0 : i32
    %c0_i32_1 = arith.constant 0 : i32
    return %c0_i32, %c0_i32_0 : i32, i32
  }
  func.func @transform_5(%arg0: i32) -> (i32, i32) {
    %c0_i32 = arith.constant 0 : i32
    %c0_i32_0 = arith.constant 0 : i32
    %c0_i32_1 = arith.constant 0 : i32
    return %c0_i32, %c0_i32_0 : i32, i32
  }
  func.func @transform_6(%arg0: i32) -> (i32, i32) {
    %c0_i32 = arith.constant 0 : i32
    %c0_i32_0 = arith.constant 0 : i32
    %c0_i32_1 = arith.constant 0 : i32
    return %c0_i32, %c0_i32_0 : i32, i32
  }
  func.func @transform_7(%arg0: i32) -> (i32, i32) {
    %c0_i32 = arith.constant 0 : i32
    %c0_i32_0 = arith.constant 0 : i32
    %c0_i32_1 = arith.constant 0 : i32
    return %c0_i32, %c0_i32_0 : i32, i32
  }
  func.func @transform_8(%arg0: i32) -> (i32, i32) {
    %c0_i32 = arith.constant 0 : i32
    %c0_i32_0 = arith.constant 0 : i32
    %c0_i32_1 = arith.constant 0 : i32
    return %c0_i32, %c0_i32_0 : i32, i32
  }
  func.func @transform_9(%arg0: i32) -> (i32, i32) {
    %c0_i32 = arith.constant 0 : i32
    %c0_i32_0 = arith.constant 0 : i32
    %c0_i32_1 = arith.constant 0 : i32
    return %c0_i32, %c0_i32_0 : i32, i32
  }
  func.func @transform_10(%arg0: i32) -> (i32, i32) {
    %c0_i32 = arith.constant 0 : i32
    %c0_i32_0 = arith.constant 0 : i32
    %c0_i32_1 = arith.constant 0 : i32
    return %c0_i32, %c0_i32_0 : i32, i32
  }
  func.func @transform_11(%arg0: i32) -> (i32, i32) {
    %c0_i32 = arith.constant 0 : i32
    %c0_i32_0 = arith.constant 0 : i32
    return %arg0, %c0_i32 : i32, i32
  }
}

</mosaic_0001>

<llo_original>
// kernel: olmo_decoder_layer.1
$region0: #{olmo_decoder_layer.1}
  #allocation0 [shape = 'u32[]', space=smem, size = 0x4, offset = 0x4, fixed_abs, tag = 'smem constant byte address 0x4 - core index']
  #allocation1 [shape = 'u32[72,128]{1,0:T(1,128)}', space=vmem, size = 0x9000, scoped, tag = 'internal scratch']
  %s0 = inlined_call_operand.hbm [shape: f32[256,256], index: 0, kind: input, shape index: {}]
  %s1 = inlined_call_operand.hbm [shape: bf16[256,768], index: 1, kind: input, shape index: {}]
  %s2 = inlined_call_operand.hbm [shape: f32[1,256], index: 2, kind: input, shape index: {}]
  %s3 = inlined_call_operand.vmem [shape: f32[1,256], index: 3, kind: input, shape index: {}]
  %s4 = inlined_call_operand.hbm [shape: f32[256,128], index: 4, kind: input, shape index: {}]
  %s5 = inlined_call_operand.hbm [shape: f32[256,128], index: 5, kind: input, shape index: {}]
  %s6 = inlined_call_operand.hbm [shape: bf16[256,256], index: 6, kind: input, shape index: {}]
  %s7 = inlined_call_operand.vmem [shape: f32[1,256], index: 7, kind: input, shape index: {}]
  %s8 = inlined_call_operand.hbm [shape: bf16[256,1024], index: 8, kind: input, shape index: {}]
  %s9 = inlined_call_operand.hbm [shape: bf16[512,256], index: 9, kind: input, shape index: {}]
  %s10 = inlined_call_operand.vmem [shape: f32[1,256], index: 10, kind: input, shape index: {}]
  %s11 = inlined_call_operand.hbm [shape: f32[256,256], index: 11, kind: output, shape index: {}]
  %s12 = sld [smem:[#allocation0]]
  $region109: #{olmo_decoder_layer.1} parent=0
    _
  %s14 = ssub.s32 1, %s12
  %s15 = scalar_select 0, %s14, %s12
  $region1: #{olmo_decoder_layer.1} parent=0
    #allocation2 [shape = 'u8[262144]{0}', space=vmem, size = 0x40000, scoped, tag = 'input window, operand 0, single buffered']
    #allocation3 [shape = 's32[2]{0}', space=sflag, size = 0x8, scoped, tag = 'scoped memory for olmo_decoder_layer.1']
    #allocation4 [shape = 's32[2]{0}', space=sflag, size = 0x8, scoped, tag = 'scoped memory for olmo_decoder_layer.1']
    #allocation5 [shape = 'u8[393216]{0}', space=vmem, size = 0x60000, scoped, tag = 'input window, operand 1, single buffered']
    #allocation6 [shape = 's32[1]{0}', space=sflag, size = 0x4, scoped, tag = 'scoped memory for olmo_decoder_layer.1']
    #allocation7 [shape = 'u8[1024]{0}', space=vmem, size = 0x400, scoped, tag = 'input window, operand 2, single buffered']
    #allocation8 [shape = 'u8[131072]{0}', space=vmem, size = 0x20000, scoped, tag = 'input window, operand 4, single buffered']
    #allocation9 [shape = 's32[1]{0}', space=sflag, size = 0x4, scoped, tag = 'scoped memory for olmo_decoder_layer.1']
    #allocation10 [shape = 'u8[131072]{0}', space=vmem, size = 0x20000, scoped, tag = 'input window, operand 5, single buffered']
    #allocation11 [shape = 'u8[131072]{0}', space=vmem, size = 0x20000, scoped, tag = 'input window, operand 6, single buffered']
    #allocation12 [shape = 's32[1]{0}', space=sflag, size = 0x4, scoped, tag = 'scoped memory for olmo_decoder_layer.1']
    #allocation13 [shape = 'u8[524288]{0}', space=vmem, size = 0x80000, scoped, tag = 'input window, operand 8, single buffered']
    #allocation14 [shape = 'u8[262144]{0}', space=vmem, size = 0x40000, scoped, tag = 'input window, operand 9, single buffered']
    #allocation15 [shape = 's32[1]{0}', space=sflag, size = 0x4, scoped, tag = 'scoped memory for olmo_decoder_layer.1']
    #allocation16 [shape = 'u8[262144]{0}', space=vmem, size = 0x40000, scoped, tag = 'output window, operand 0']
    %16 = vsyncpa [#allocation3], 0
    %17 = vsyncpa [#allocation6], 0
    %18 = vsyncpa [#allocation9], 0
    %19 = vsyncpa [#allocation12], 0
    %20 = vsyncpa [#allocation15], 0
    %21 = vsyncpa [#allocation4], 0
    %s22 = scalar_lea.sflag [#allocation4], 1
    %23 = vsyncpa %s22, 0
    loop: start=0, step=1, limit=4
    $region2: #{olmo_decoder_layer.1} parent=1 // loop_pre_header
      _
    $region3: #{olmo_decoder_layer.1} parent=1 // loop_header
      %s25 = sphi 0, %s29
      %p26 = scmp.ge.s32.totalorder %s25, 4
      %s33 = sphi 0, %s33
      %s35 = sphi 0, %s33
      %s36 = sphi 0, %s35
      %s50 = sphi 0, %s36
      %s54 = sphi 0, %s54
      %s56 = sphi 0, %s54
      %s57 = sphi 0, %s56
      %s71 = sphi 0, %s57
      %s75 = sphi 0, %s75
      %s77 = sphi 0, %s75
      %s78 = sphi 0, %s77
      %s92 = sphi 0, %s78
      %s96 = sphi 0, %s96
      %s98 = sphi 0, %s96
      %s99 = sphi 0, %s98
      %s113 = sphi 0, %s99
      %s117 = sphi 0, %s117
      %s119 = sphi 0, %s117
      %s120 = sphi 0, %s119
      %s134 = sphi 0, %s120
      %s138 = sphi 0, %s138
      %s140 = sphi 0, %s138
      %s141 = sphi 0, %s140
      %s155 = sphi 0, %s141
      %s159 = sphi 0, %s159
      %s161 = sphi 0, %s159
      %s162 = sphi 0, %s161
      %s176 = sphi 0, %s162
      %s180 = sphi 0, %s180
      %s182 = sphi 0, %s180
      %s183 = sphi 0, %s182
      %s197 = sphi 0, %s183
      %s201 = sphi 0, %s201
      %s203 = sphi 0, %s201
      %s204 = sphi 0, %s203
      %s218 = sphi 0, %s204
      %s222 = sphi 0, %s222
      %s224 = sphi 0, %s222
      %s225 = sphi 0, %s224
      %s239 = sphi 0, %s225
      %s243 = sphi 0, %s243
      %s245 = sphi 0, %s243
      %s246 = sphi 0, %s245
      %s260 = sphi 0, %s246
      %s266 = sphi 0, %s268
      %s269 = sphi 0, %s266
      %s270 = sphi 0, %s269
      %s286 = sphi 0, %s270
    $region4: #{olmo_decoder_layer.1} parent=1 // loop_header_branch
      %28 = sbr.rel (%p26) target = $region8
    $region5: #{olmo_decoder_layer.1} parent=1 // loop_body
      %s30 = ssub.s32 %s25, 1
      %s31 = ssub.s32 %s25, 2
      %s32 = sadd.s32 %s25, 1
      %s34 = sadd.s32 %s33, 1
      %p37 = scmp.eq.s32.totalorder %s25, 1
      %p38 = scmp.ne.s32.totalorder %s33, %s35
      %p39 = scmp.eq.s32.totalorder %s25, 0
      %p40 = por %p38, %p39
      %p41 = scmp.ne.s32.totalorder %s33, %s35
      %p42 = scmp.eq.s32.totalorder %s30, 1
      %p43 = por %p41, %p42
      %p44 = scmp.ne.s32.totalorder %s35, %s36
      %p45 = scmp.eq.s32.totalorder %s30, 0
      %p46 = por %p44, %p45
      %p47 = scmp.ne.s32.totalorder %s35, %s36
      %p48 = scmp.eq.s32.totalorder %s31, 1
      %p49 = por %p47, %p48
      %p51 = scmp.ne.s32.totalorder %s36, %s50
      %p52 = scmp.eq.s32.totalorder %s31, 0
      %p53 = por %p51, %p52
      %s55 = sadd.s32 %s54, 1
      %p58 = scmp.eq.s32.totalorder %s25, 1
      %p59 = scmp.ne.s32.totalorder %s54, %s56
      %p60 = scmp.eq.s32.totalorder %s25, 0
      %p61 = por %p59, %p60
      %p62 = scmp.ne.s32.totalorder %s54, %s56
      %p63 = scmp.eq.s32.totalorder %s30, 1
      %p64 = por %p62, %p63
      %p65 = scmp.ne.s32.totalorder %s56, %s57
      %p66 = scmp.eq.s32.totalorder %s30, 0
      %p67 = por %p65, %p66
      %p68 = scmp.ne.s32.totalorder %s56, %s57
      %p69 = scmp.eq.s32.totalorder %s31, 1
      %p70 = por %p68, %p69
      %p72 = scmp.ne.s32.totalorder %s57, %s71
      %p73 = scmp.eq.s32.totalorder %s31, 0
      %p74 = por %p72, %p73
      %s76 = sadd.s32 %s75, 1
      %p79 = scmp.eq.s32.totalorder %s25, 1
      %p80 = scmp.ne.s32.totalorder %s75, %s77
      %p81 = scmp.eq.s32.totalorder %s25, 0
      %p82 = por %p80, %p81
      %p83 = scmp.ne.s32.totalorder %s75, %s77
      %p84 = scmp.eq.s32.totalorder %s30, 1
      %p85 = por %p83, %p84
      %p86 = scmp.ne.s32.totalorder %s77, %s78
      %p87 = scmp.eq.s32.totalorder %s30, 0
      %p88 = por %p86, %p87
      %p89 = scmp.ne.s32.totalorder %s77, %s78
      %p90 = scmp.eq.s32.totalorder %s31, 1
      %p91 = por %p89, %p90
      %p93 = scmp.ne.s32.totalorder %s78, %s92
      %p94 = scmp.eq.s32.totalorder %s31, 0
      %p95 = por %p93, %p94
      %s97 = sadd.s32 %s96, 1
      %p100 = scmp.eq.s32.totalorder %s25, 1
      %p101 = scmp.ne.s32.totalorder %s96, %s98
      %p102 = scmp.eq.s32.totalorder %s25, 0
      %p103 = por %p101, %p102
      %p104 = scmp.ne.s32.totalorder %s96, %s98
      %p105 = scmp.eq.s32.totalorder %s30, 1
      %p106 = por %p104, %p105
      %p107 = scmp.ne.s32.totalorder %s98, %s99
      %p108 = scmp.eq.s32.totalorder %s30, 0
      %p109 = por %p107, %p108
      %p110 = scmp.ne.s32.totalorder %s98, %s99
      %p111 = scmp.eq.s32.totalorder %s31, 1
      %p112 = por %p110, %p111
      %p114 = scmp.ne.s32.totalorder %s99, %s113
      %p115 = scmp.eq.s32.totalorder %s31, 0
      %p116 = por %p114, %p115
      %s118 = sadd.s32 %s117, 1
      %p121 = scmp.eq.s32.totalorder %s25, 1
      %p122 = scmp.ne.s32.totalorder %s117, %s119
      %p123 = scmp.eq.s32.totalorder %s25, 0
      %p124 = por %p122, %p123
      %p125 = scmp.ne.s32.totalorder %s117, %s119
      %p126 = scmp.eq.s32.totalorder %s30, 1
      %p127 = por %p125, %p126
      %p128 = scmp.ne.s32.totalorder %s119, %s120
      %p129 = scmp.eq.s32.totalorder %s30, 0
      %p130 = por %p128, %p129
      %p131 = scmp.ne.s32.totalorder %s119, %s120
      %p132 = scmp.eq.s32.totalorder %s31, 1
      %p133 = por %p131, %p132
      %p135 = scmp.ne.s32.totalorder %s120, %s134
      %p136 = scmp.eq.s32.totalorder %s31, 0
      %p137 = por %p135, %p136
      %s139 = sadd.s32 %s138, 1
      %p142 = scmp.eq.s32.totalorder %s25, 1
      %p143 = scmp.ne.s32.totalorder %s138, %s140
      %p144 = scmp.eq.s32.totalorder %s25, 0
      %p145 = por %p143, %p144
      %p146 = scmp.ne.s32.totalorder %s138, %s140
      %p147 = scmp.eq.s32.totalorder %s30, 1
      %p148 = por %p146, %p147
      %p149 = scmp.ne.s32.totalorder %s140, %s141
      %p150 = scmp.eq.s32.totalorder %s30, 0
      %p151 = por %p149, %p150
      %p152 = scmp.ne.s32.totalorder %s140, %s141
      %p153 = scmp.eq.s32.totalorder %s31, 1
      %p154 = por %p152, %p153
      %p156 = scmp.ne.s32.totalorder %s141, %s155
      %p157 = scmp.eq.s32.totalorder %s31, 0
      %p158 = por %p156, %p157
      %s160 = sadd.s32 %s159, 1
      %p163 = scmp.eq.s32.totalorder %s25, 1
      %p164 = scmp.ne.s32.totalorder %s159, %s161
      %p165 = scmp.eq.s32.totalorder %s25, 0
      %p166 = por %p164, %p165
      %p167 = scmp.ne.s32.totalorder %s159, %s161
      %p168 = scmp.eq.s32.totalorder %s30, 1
      %p169 = por %p167, %p168
      %p170 = scmp.ne.s32.totalorder %s161, %s162
      %p171 = scmp.eq.s32.totalorder %s30, 0
      %p172 = por %p170, %p171
      %p173 = scmp.ne.s32.totalorder %s161, %s162
      %p174 = scmp.eq.s32.totalorder %s31, 1
      %p175 = por %p173, %p174
      %p177 = scmp.ne.s32.totalorder %s162, %s176
      %p178 = scmp.eq.s32.totalorder %s31, 0
      %p179 = por %p177, %p178
      %s181 = sadd.s32 %s180, 1
      %p184 = scmp.eq.s32.totalorder %s25, 1
      %p185 = scmp.ne.s32.totalorder %s180, %s182
      %p186 = scmp.eq.s32.totalorder %s25, 0
      %p187 = por %p185, %p186
      %p188 = scmp.ne.s32.totalorder %s180, %s182
      %p189 = scmp.eq.s32.totalorder %s30, 1
      %p190 = por %p188, %p189
      %p191 = scmp.ne.s32.totalorder %s182, %s183
      %p192 = scmp.eq.s32.totalorder %s30, 0
      %p193 = por %p191, %p192
      %p194 = scmp.ne.s32.totalorder %s182, %s183
      %p195 = scmp.eq.s32.totalorder %s31, 1
      %p196 = por %p194, %p195
      %p198 = scmp.ne.s32.totalorder %s183, %s197
      %p199 = scmp.eq.s32.totalorder %s31, 0
      %p200 = por %p198, %p199
      %s202 = sadd.s32 %s201, 1
      %p205 = scmp.eq.s32.totalorder %s25, 1
      %p206 = scmp.ne.s32.totalorder %s201, %s203
      %p207 = scmp.eq.s32.totalorder %s25, 0
      %p208 = por %p206, %p207
      %p209 = scmp.ne.s32.totalorder %s201, %s203
      %p210 = scmp.eq.s32.totalorder %s30, 1
      %p211 = por %p209, %p210
      %p212 = scmp.ne.s32.totalorder %s203, %s204
      %p213 = scmp.eq.s32.totalorder %s30, 0
      %p214 = por %p212, %p213
      %p215 = scmp.ne.s32.totalorder %s203, %s204
      %p216 = scmp.eq.s32.totalorder %s31, 1
      %p217 = por %p215, %p216
      %p219 = scmp.ne.s32.totalorder %s204, %s218
      %p220 = scmp.eq.s32.totalorder %s31, 0
      %p221 = por %p219, %p220
      %s223 = sadd.s32 %s222, 1
      %p226 = scmp.eq.s32.totalorder %s25, 1
      %p227 = scmp.ne.s32.totalorder %s222, %s224
      %p228 = scmp.eq.s32.totalorder %s25, 0
      %p229 = por %p227, %p228
      %p230 = scmp.ne.s32.totalorder %s222, %s224
      %p231 = scmp.eq.s32.totalorder %s30, 1
      %p232 = por %p230, %p231
      %p233 = scmp.ne.s32.totalorder %s224, %s225
      %p234 = scmp.eq.s32.totalorder %s30, 0
      %p235 = por %p233, %p234
      %p236 = scmp.ne.s32.totalorder %s224, %s225
      %p237 = scmp.eq.s32.totalorder %s31, 1
      %p238 = por %p236, %p237
      %p240 = scmp.ne.s32.totalorder %s225, %s239
      %p241 = scmp.eq.s32.totalorder %s31, 0
      %p242 = por %p240, %p241
      %s244 = sadd.s32 %s243, 1
      %p247 = scmp.eq.s32.totalorder %s25, 1
      %p248 = scmp.ne.s32.totalorder %s243, %s245
      %p249 = scmp.eq.s32.totalorder %s25, 0
      %p250 = por %p248, %p249
      %p251 = scmp.ne.s32.totalorder %s243, %s245
      %p252 = scmp.eq.s32.totalorder %s30, 1
      %p253 = por %p251, %p252
      %p254 = scmp.ne.s32.totalorder %s245, %s246
      %p255 = scmp.eq.s32.totalorder %s30, 0
      %p256 = por %p254, %p255
      %p257 = scmp.ne.s32.totalorder %s245, %s246
      %p258 = scmp.eq.s32.totalorder %s31, 1
      %p259 = por %p257, %p258
      %p261 = scmp.ne.s32.totalorder %s246, %s260
      %p262 = scmp.eq.s32.totalorder %s31, 0
      %p263 = por %p261, %p262
      %s264 = ssub.s32 %s25, %s32
      %p265 = scmp.eq.s32.totalorder %s264, 0
      %s267 = sadd.s32 %s266, 1
      %s268 = scalar_select %p265, %s266, %s267
      %p271 = pneg %p265
      %p272 = scmp.eq.s32.totalorder %s25, 1
      %p273 = por %p271, %p272
      %p274 = scmp.ne.s32.totalorder %s266, %s269
      %p275 = scmp.eq.s32.totalorder %s25, 0
      %p276 = por %p274, %p275
      %p277 = scmp.ne.s32.totalorder %s266, %s269
      %p278 = scmp.eq.s32.totalorder %s30, 1
      %p279 = por %p277, %p278
      %p280 = scmp.ne.s32.totalorder %s269, %s270
      %p281 = scmp.eq.s32.totalorder %s30, 0
      %p282 = por %p280, %p281
      %p283 = scmp.ne.s32.totalorder %s269, %s270
      %p284 = scmp.eq.s32.totalorder %s31, 1
      %p285 = por %p283, %p284
      %p287 = scmp.ne.s32.totalorder %s270, %s286
      %p288 = scmp.eq.s32.totalorder %s31, 0
      %p289 = por %p287, %p288
      %p290 = scmp.le.s32.totalorder 1, %s25
      %p291 = scmp.lt.s32.totalorder %s25, 3
      %p292 = pnand %p290, %p291
      %p293 = pneg %p292
      // Predicated region
      $region9: #{olmo_decoder_layer.1} parent=5 // pred_check
        _
      $region10: #{olmo_decoder_layer.1} parent=5 // pred_check_branch
        %295 = sbr.rel (%p292) target = $region12
      $region11: #{olmo_decoder_layer.1} parent=5 // pred_region
        %s296 = ssub.s32 %s25, 1
        // Predicated region
        $region13: #{olmo_decoder_layer.1} parent=11 // pred_check
          %p297 = pneg %p46
        $region14: #{olmo_decoder_layer.1} parent=11 // pred_check_branch
          %299 = sbr.rel (%p297) target = $region16
        $region15: #{olmo_decoder_layer.1} parent=11 // pred_region
          %301 = vsyncadd [#allocation3], 0
          %s302 = sshll.u32 %s0, 4
          %s303 = int_to_ptr.hbm [resolvable:$true] %s302
          %s304 = sshll.u32 [#allocation2], 4
          %s305 = int_to_ptr.vmem [resolvable:$true] %s304
          %310 = dma.hbm_to_vmem [thread:$0]  %s303, 8192, %s305, [#allocation3], 256, 256, 16
        $region16: #{olmo_decoder_layer.1} parent=11 // pred_fallthru
          _
        // Predicated region
        $region17: #{olmo_decoder_layer.1} parent=11 // pred_check
          %p311 = pneg %p67
        $region18: #{olmo_decoder_layer.1} parent=11 // pred_check_branch
          %313 = sbr.rel (%p311) target = $region20
        $region19: #{olmo_decoder_layer.1} parent=11 // pred_region
          %315 = vsyncadd [#allocation6], 0
          %s316 = sshll.u32 %s1, 4
          %s317 = int_to_ptr.hbm [resolvable:$true] %s316
          %s318 = sshll.u32 [#allocation5], 4
          %s319 = int_to_ptr.vmem [resolvable:$true] %s318
          %324 = dma.hbm_to_vmem [thread:$0]  %s317, 12288, %s319, [#allocation6], 384, 384, 24
        $region20: #{olmo_decoder_layer.1} parent=11 // pred_fallthru
          _
        // Predicated region
        $region21: #{olmo_decoder_layer.1} parent=11 // pred_check
          %p325 = pneg %p88
        $region22: #{olmo_decoder_layer.1} parent=11 // pred_check_branch
          %327 = sbr.rel (%p325) target = $region24
        $region23: #{olmo_decoder_layer.1} parent=11 // pred_region
          %329 = vsyncadd [#allocation6], 0
          %s331 = sshll.u32 %s2, 4
          %s332 = int_to_ptr.hbm [resolvable:$true] %s331
          %s333 = sshll.u32 [#allocation7], 4
          %s334 = int_to_ptr.vmem [resolvable:$true] %s333
          %336 = dma.hbm_to_vmem [thread:$0]  %s332, 32, %s334, [#allocation6]
        $region24: #{olmo_decoder_layer.1} parent=11 // pred_fallthru
          _
        // Predicated region
        $region25: #{olmo_decoder_layer.1} parent=11 // pred_check
          %p337 = pneg %p109
        $region26: #{olmo_decoder_layer.1} parent=11 // pred_check_branch
          %339 = sbr.rel (%p337) target = $region28
        $region27: #{olmo_decoder_layer.1} parent=11 // pred_region
          _
        $region28: #{olmo_decoder_layer.1} parent=11 // pred_fallthru
          _
        // Predicated region
        $region29: #{olmo_decoder_layer.1} parent=11 // pred_check
          %p340 = pneg %p130
        $region30: #{olmo_decoder_layer.1} parent=11 // pred_check_branch
          %342 = sbr.rel (%p340) target = $region32
        $region31: #{olmo_decoder_layer.1} parent=11 // pred_region
          %344 = vsyncadd [#allocation9], 0
          %s345 = sshll.u32 %s4, 4
          %s346 = int_to_ptr.hbm [resolvable:$true] %s345
          %s347 = sshll.u32 [#allocation8], 4
          %s348 = int_to_ptr.vmem [resolvable:$true] %s347
          %353 = dma.hbm_to_vmem [thread:$0]  %s346, 4096, %s348, [#allocation9], 128, 128, 8
        $region32: #{olmo_decoder_layer.1} parent=11 // pred_fallthru
          _
        // Predicated region
        $region33: #{olmo_decoder_layer.1} parent=11 // pred_check
          %p354 = pneg %p151
        $region34: #{olmo_decoder_layer.1} parent=11 // pred_check_branch
          %356 = sbr.rel (%p354) target = $region36
        $region35: #{olmo_decoder_layer.1} parent=11 // pred_region
          %358 = vsyncadd [#allocation9], 0
          %s359 = sshll.u32 %s5, 4
          %s360 = int_to_ptr.hbm [resolvable:$true] %s359
          %s361 = sshll.u32 [#allocation10], 4
          %s362 = int_to_ptr.vmem [resolvable:$true] %s361
          %367 = dma.hbm_to_vmem [thread:$0]  %s360, 4096, %s362, [#allocation9], 128, 128, 8
        $region36: #{olmo_decoder_layer.1} parent=11 // pred_fallthru
          _
        // Predicated region
        $region37: #{olmo_decoder_layer.1} parent=11 // pred_check
          %p368 = pneg %p172
        $region38: #{olmo_decoder_layer.1} parent=11 // pred_check_branch
          %370 = sbr.rel (%p368) target = $region40
        $region39: #{olmo_decoder_layer.1} parent=11 // pred_region
          %372 = vsyncadd [#allocation12], 0
          %s373 = sshll.u32 %s6, 4
          %s374 = int_to_ptr.hbm [resolvable:$true] %s373
          %s375 = sshll.u32 [#allocation11], 4
          %s376 = int_to_ptr.vmem [resolvable:$true] %s375
          %381 = dma.hbm_to_vmem [thread:$0]  %s374, 4096, %s376, [#allocation12], 128, 128, 8
        $region40: #{olmo_decoder_layer.1} parent=11 // pred_fallthru
          _
        // Predicated region
        $region41: #{olmo_decoder_layer.1} parent=11 // pred_check
          %p382 = pneg %p193
        $region42: #{olmo_decoder_layer.1} parent=11 // pred_check_branch
          %384 = sbr.rel (%p382) target = $region44
        $region43: #{olmo_decoder_layer.1} parent=11 // pred_region
          _
        $region44: #{olmo_decoder_layer.1} parent=11 // pred_fallthru
          _
        // Predicated region
        $region45: #{olmo_decoder_layer.1} parent=11 // pred_check
          %p385 = pneg %p214
        $region46: #{olmo_decoder_layer.1} parent=11 // pred_check_branch
          %387 = sbr.rel (%p385) target = $region48
        $region47: #{olmo_decoder_layer.1} parent=11 // pred_region
          %389 = vsyncadd [#allocation12], 0
          %s390 = sshll.u32 %s8, 4
          %s391 = int_to_ptr.hbm [resolvable:$true] %s390
          %s392 = sshll.u32 [#allocation13], 4
          %s393 = int_to_ptr.vmem [resolvable:$true] %s392
          %398 = dma.hbm_to_vmem [thread:$0]  %s391, 16384, %s393, [#allocation12], 512, 512, 32
        $region48: #{olmo_decoder_layer.1} parent=11 // pred_fallthru
          _
        // Predicated region
        $region49: #{olmo_decoder_layer.1} parent=11 // pred_check
          %p399 = pneg %p235
        $region50: #{olmo_decoder_layer.1} parent=11 // pred_check_branch
          %401 = sbr.rel (%p399) target = $region52
        $region51: #{olmo_decoder_layer.1} parent=11 // pred_region
          %403 = vsyncadd [#allocation15], 0
          %s404 = sshll.u32 %s9, 4
          %s405 = int_to_ptr.hbm [resolvable:$true] %s404
          %s406 = sshll.u32 [#allocation14], 4
          %s407 = int_to_ptr.vmem [resolvable:$true] %s406
          %412 = dma.hbm_to_vmem [thread:$0]  %s405, 8192, %s407, [#allocation15], 128, 128, 8
        $region52: #{olmo_decoder_layer.1} parent=11 // pred_fallthru
          _
        // Predicated region
        $region53: #{olmo_decoder_layer.1} parent=11 // pred_check
          %p413 = pneg %p256
        $region54: #{olmo_decoder_layer.1} parent=11 // pred_check_branch
          %415 = sbr.rel (%p413) target = $region56
        $region55: #{olmo_decoder_layer.1} parent=11 // pred_region
          _
        $region56: #{olmo_decoder_layer.1} parent=11 // pred_fallthru
          _
      $region12: #{olmo_decoder_layer.1} parent=5 // pred_fallthru
        _
      %p416 = scmp.lt.s32.totalorder %s25, 2
      // Predicated region
      $region57: #{olmo_decoder_layer.1} parent=5 // pred_check
        %p417 = pneg %p416
      $region58: #{olmo_decoder_layer.1} parent=5 // pred_check_branch
        %419 = sbr.rel (%p417) target = $region60
      $region59: #{olmo_decoder_layer.1} parent=5 // pred_region
        _
      $region60: #{olmo_decoder_layer.1} parent=5 // pred_fallthru
        _
      %p420 = scmp.le.s32.totalorder 1, %s25
      %p421 = scmp.lt.s32.totalorder %s25, 3
      %p422 = pnand %p420, %p421
      %p423 = pneg %p422
      // Predicated region
      $region61: #{olmo_decoder_layer.1} parent=5 // pred_check
        _
      $region62: #{olmo_decoder_layer.1} parent=5 // pred_check_branch
        %425 = sbr.rel (%p422) target = $region64
      $region63: #{olmo_decoder_layer.1} parent=5 // pred_region
        %s426 = ssub.s32 %s25, 1
        // Predicated region
        $region65: #{olmo_decoder_layer.1} parent=63 // pred_check
          %p427 = pneg %p46
        $region66: #{olmo_decoder_layer.1} parent=63 // pred_check_branch
          %429 = sbr.rel (%p427) target = $region68
        $region67: #{olmo_decoder_layer.1} parent=63 // pred_region
          %431 = dma.done [#allocation3], 8192
        $region68: #{olmo_decoder_layer.1} parent=63 // pred_fallthru
          _
        // Predicated region
        $region69: #{olmo_decoder_layer.1} parent=63 // pred_check
          %p432 = pneg %p67
        $region70: #{olmo_decoder_layer.1} parent=63 // pred_check_branch
          %434 = sbr.rel (%p432) target = $region72
        $region71: #{olmo_decoder_layer.1} parent=63 // pred_region
          %436 = dma.done [#allocation6], 12288
        $region72: #{olmo_decoder_layer.1} parent=63 // pred_fallthru
          _
        // Predicated region
        $region73: #{olmo_decoder_layer.1} parent=63 // pred_check
          %p437 = pneg %p88
        $region74: #{olmo_decoder_layer.1} parent=63 // pred_check_branch
          %439 = sbr.rel (%p437) target = $region76
        $region75: #{olmo_decoder_layer.1} parent=63 // pred_region
          %441 = dma.done [#allocation6], 32
        $region76: #{olmo_decoder_layer.1} parent=63 // pred_fallthru
          _
        // Predicated region
        $region77: #{olmo_decoder_layer.1} parent=63 // pred_check
          %p442 = pneg %p130
        $region78: #{olmo_decoder_layer.1} parent=63 // pred_check_branch
          %444 = sbr.rel (%p442) target = $region80
        $region79: #{olmo_decoder_layer.1} parent=63 // pred_region
          %446 = dma.done [#allocation9], 4096
        $region80: #{olmo_decoder_layer.1} parent=63 // pred_fallthru
          _
        // Predicated region
        $region81: #{olmo_decoder_layer.1} parent=63 // pred_check
          %p447 = pneg %p151
        $region82: #{olmo_decoder_layer.1} parent=63 // pred_check_branch
          %449 = sbr.rel (%p447) target = $region84
        $region83: #{olmo_decoder_layer.1} parent=63 // pred_region
          %451 = dma.done [#allocation9], 4096
        $region84: #{olmo_decoder_layer.1} parent=63 // pred_fallthru
          _
        // Predicated region
        $region85: #{olmo_decoder_layer.1} parent=63 // pred_check
          %p452 = pneg %p172
        $region86: #{olmo_decoder_layer.1} parent=63 // pred_check_branch
          %454 = sbr.rel (%p452) target = $region88
        $region87: #{olmo_decoder_layer.1} parent=63 // pred_region
          %456 = dma.done [#allocation12], 4096
        $region88: #{olmo_decoder_layer.1} parent=63 // pred_fallthru
          _
        // Predicated region
        $region89: #{olmo_decoder_layer.1} parent=63 // pred_check
          %p457 = pneg %p214
        $region90: #{olmo_decoder_layer.1} parent=63 // pred_check_branch
          %459 = sbr.rel (%p457) target = $region92
        $region91: #{olmo_decoder_layer.1} parent=63 // pred_region
          %461 = dma.done [#allocation12], 16384
        $region92: #{olmo_decoder_layer.1} parent=63 // pred_fallthru
          _
        // Predicated region
        $region93: #{olmo_decoder_layer.1} parent=63 // pred_check
          %p462 = pneg %p235
        $region94: #{olmo_decoder_layer.1} parent=63 // pred_check_branch
          %464 = sbr.rel (%p462) target = $region96
        $region95: #{olmo_decoder_layer.1} parent=63 // pred_region
          %466 = dma.done [#allocation15], 8192
        $region96: #{olmo_decoder_layer.1} parent=63 // pred_fallthru
          _
        %p467 = pneg %p46
        %p468 = pneg %p43
        %p469 = pneg %p67
        %p470 = pneg %p64
        %p471 = pneg %p88
        %p472 = pneg %p85
        %p473 = pneg %p109
        %p474 = pneg %p106
        %p475 = pneg %p130
        %p476 = pneg %p127
        %p477 = pneg %p151
        %p478 = pneg %p148
        %p479 = pneg %p172
        %p480 = pneg %p169
        %p481 = pneg %p193
        %p482 = pneg %p190
        %p483 = pneg %p214
        %p484 = pneg %p211
        %p485 = pneg %p235
        %p486 = pneg %p232
        %p487 = pneg %p256
        %p488 = pneg %p253
        %p489 = pneg %p282
        %p490 = pneg %p279
        %s491 = sand.u32 %s269, 1
        %s492 = scalar_lea.sflag [#allocation4], %s491
        %s493 = sand.u32 %s269, 1
        %s494 = smul.addr %s493, 256
        %s495 = scalar_lea.vmem [#allocation16], %s494
        %s496 = smul.u32 16, %s30
        %s497 = smul.u32 %s30, 128
        %v498 = vld [vmem:[#allocation2] sm:$0xff]
        %v499 = vld [vmem:[#allocation2 + $0x8] sm:$0xff]
        %v500 = vld [vmem:[#allocation2 + $0x10] sm:$0xff]
        %v501 = vld [vmem:[#allocation2 + $0x18] sm:$0xff]
        %v502 = vld [vmem:[#allocation2 + $0x20] sm:$0xff]
        %v503 = vld [vmem:[#allocation2 + $0x28] sm:$0xff]
        %v504 = vld [vmem:[#allocation2 + $0x30] sm:$0xff]
        %v505 = vld [vmem:[#allocation2 + $0x38] sm:$0xff]
        %v506 = vld [vmem:[#allocation2 + $0x40] sm:$0xff]
        %v507 = vld [vmem:[#allocation2 + $0x48] sm:$0xff]
        %v508 = vld [vmem:[#allocation2 + $0x50] sm:$0xff]
        %v509 = vld [vmem:[#allocation2 + $0x58] sm:$0xff]
        %v510 = vld [vmem:[#allocation2 + $0x60] sm:$0xff]
        %v511 = vld [vmem:[#allocation2 + $0x68] sm:$0xff]
        %v512 = vld [vmem:[#allocation2 + $0x70] sm:$0xff]
        %v513 = vld [vmem:[#allocation2 + $0x78] sm:$0xff]
        %v514 = vld [vmem:[#allocation2 + $0x80] sm:$0xff]
        %v515 = vld [vmem:[#allocation2 + $0x88] sm:$0xff]
        %v516 = vld [vmem:[#allocation2 + $0x90] sm:$0xff]
        %v517 = vld [vmem:[#allocation2 + $0x98] sm:$0xff]
        %v518 = vld [vmem:[#allocation2 + $0xa0] sm:$0xff]
        %v519 = vld [vmem:[#allocation2 + $0xa8] sm:$0xff]
        %v520 = vld [vmem:[#allocation2 + $0xb0] sm:$0xff]
        %v521 = vld [vmem:[#allocation2 + $0xb8] sm:$0xff]
        %v522 = vld [vmem:[#allocation2 + $0xc0] sm:$0xff]
        %v523 = vld [vmem:[#allocation2 + $0xc8] sm:$0xff]
        %v524 = vld [vmem:[#allocation2 + $0xd0] sm:$0xff]
        %v525 = vld [vmem:[#allocation2 + $0xd8] sm:$0xff]
        %v526 = vld [vmem:[#allocation2 + $0xe0] sm:$0xff]
        %v527 = vld [vmem:[#allocation2 + $0xe8] sm:$0xff]
        %v528 = vld [vmem:[#allocation2 + $0xf0] sm:$0xff]
        %v529 = vld [vmem:[#allocation2 + $0xf8] sm:$0xff]
        %v530 = vld [vmem:[#allocation2 + $0x100] sm:$0xff]
        %v531 = vld [vmem:[#allocation2 + $0x108] sm:$0xff]
        %v532 = vld [vmem:[#allocation2 + $0x110] sm:$0xff]
        %v533 = vld [vmem:[#allocation2 + $0x118] sm:$0xff]
        %v534 = vld [vmem:[#allocation2 + $0x120] sm:$0xff]
        %v535 = vld [vmem:[#allocation2 + $0x128] sm:$0xff]
        %v536 = vld [vmem:[#allocation2 + $0x130] sm:$0xff]
        %v537 = vld [vmem:[#allocation2 + $0x138] sm:$0xff]
        %v538 = vld [vmem:[#allocation2 + $0x140] sm:$0xff]
        %v539 = vld [vmem:[#allocation2 + $0x148] sm:$0xff]
        %v540 = vld [vmem:[#allocation2 + $0x150] sm:$0xff]
        %v541 = vld [vmem:[#allocation2 + $0x158] sm:$0xff]
        %v542 = vld [vmem:[#allocation2 + $0x160] sm:$0xff]
        %v543 = vld [vmem:[#allocation2 + $0x168] sm:$0xff]
        %v544 = vld [vmem:[#allocation2 + $0x170] sm:$0xff]
        %v545 = vld [vmem:[#allocation2 + $0x178] sm:$0xff]
        %v546 = vld [vmem:[#allocation2 + $0x180] sm:$0xff]
        %v547 = vld [vmem:[#allocation2 + $0x188] sm:$0xff]
        %v548 = vld [vmem:[#allocation2 + $0x190] sm:$0xff]
        %v549 = vld [vmem:[#allocation2 + $0x198] sm:$0xff]
        %v550 = vld [vmem:[#allocation2 + $0x1a0] sm:$0xff]
        %v551 = vld [vmem:[#allocation2 + $0x1a8] sm:$0xff]
        %v552 = vld [vmem:[#allocation2 + $0x1b0] sm:$0xff]
        %v553 = vld [vmem:[#allocation2 + $0x1b8] sm:$0xff]
        %v554 = vld [vmem:[#allocation2 + $0x1c0] sm:$0xff]
        %v555 = vld [vmem:[#allocation2 + $0x1c8] sm:$0xff]
        %v556 = vld [vmem:[#allocation2 + $0x1d0] sm:$0xff]
        %v557 = vld [vmem:[#allocation2 + $0x1d8] sm:$0xff]
        %v558 = vld [vmem:[#allocation2 + $0x1e0] sm:$0xff]
        %v559 = vld [vmem:[#allocation2 + $0x1e8] sm:$0xff]
        %v560 = vld [vmem:[#allocation2 + $0x1f0] sm:$0xff]
        %v561 = vld [vmem:[#allocation2 + $0x1f8] sm:$0xff]
        %s562 = sshra.s32 %s497, 3
        %s563 = sand.u32 %s497, 7
        %s564 = smul.u32 %s562, 2
        %s565 = smul.addr %s564, 8
        %s566 = scalar_lea.vmem [#allocation2], %s565
        %v567 = vld [vmem:[%s566] sm:$0xff]
        %v568 = vld [vmem:[%s566 + $0x8] sm:$0xff]
        %v569 = vld [vmem:[%s566 + $0x10] sm:$0xff]
        %v570 = vld [vmem:[%s566 + $0x18] sm:$0xff]
        %v571 = vld [vmem:[%s566 + $0x20] sm:$0xff]
        %v572 = vld [vmem:[%s566 + $0x28] sm:$0xff]
        %v573 = vld [vmem:[%s566 + $0x30] sm:$0xff]
        %v574 = vld [vmem:[%s566 + $0x38] sm:$0xff]
        %v575 = vld [vmem:[%s566 + $0x40] sm:$0xff]
        %v576 = vld [vmem:[%s566 + $0x48] sm:$0xff]
        %v577 = vld [vmem:[%s566 + $0x50] sm:$0xff]
        %v578 = vld [vmem:[%s566 + $0x58] sm:$0xff]
        %v579 = vld [vmem:[%s566 + $0x60] sm:$0xff]
        %v580 = vld [vmem:[%s566 + $0x68] sm:$0xff]
        %v581 = vld [vmem:[%s566 + $0x70] sm:$0xff]
        %v582 = vld [vmem:[%s566 + $0x78] sm:$0xff]
        %v583 = vld [vmem:[%s566 + $0x80] sm:$0xff]
        %v584 = vld [vmem:[%s566 + $0x88] sm:$0xff]
        %v585 = vld [vmem:[%s566 + $0x90] sm:$0xff]
        %v586 = vld [vmem:[%s566 + $0x98] sm:$0xff]
        %v587 = vld [vmem:[%s566 + $0xa0] sm:$0xff]
        %v588 = vld [vmem:[%s566 + $0xa8] sm:$0xff]
        %v589 = vld [vmem:[%s566 + $0xb0] sm:$0xff]
        %v590 = vld [vmem:[%s566 + $0xb8] sm:$0xff]
        %v591 = vld [vmem:[%s566 + $0xc0] sm:$0xff]
        %v592 = vld [vmem:[%s566 + $0xc8] sm:$0xff]
        %v593 = vld [vmem:[%s566 + $0xd0] sm:$0xff]
        %v594 = vld [vmem:[%s566 + $0xd8] sm:$0xff]
        %v595 = vld [vmem:[%s566 + $0xe0] sm:$0xff]
        %v596 = vld [vmem:[%s566 + $0xe8] sm:$0xff]
        %v597 = vld [vmem:[%s566 + $0xf0] sm:$0xff]
        %v598 = vld [vmem:[%s566 + $0xf8] sm:$0xff]
        %v599 = vpack.c.bf16 %v500, %v498
        %v600 = vpack.c.bf16 %v501, %v499
        %v601 = vpack.c.bf16 %v504, %v502
        %v602 = vpack.c.bf16 %v505, %v503
        %v603 = vpack.c.bf16 %v508, %v506
        %v604 = vpack.c.bf16 %v509, %v507
        %v605 = vpack.c.bf16 %v512, %v510
        %v606 = vpack.c.bf16 %v513, %v511
        %v607 = vpack.c.bf16 %v516, %v514
        %v608 = vpack.c.bf16 %v517, %v515
        %v609 = vpack.c.bf16 %v520, %v518
        %v610 = vpack.c.bf16 %v521, %v519
        %v611 = vpack.c.bf16 %v524, %v522
        %v612 = vpack.c.bf16 %v525, %v523
        %v613 = vpack.c.bf16 %v528, %v526
        %v614 = vpack.c.bf16 %v529, %v527
        %v615 = vpack.c.bf16 %v532, %v530
        %v616 = vpack.c.bf16 %v533, %v531
        %v617 = vpack.c.bf16 %v536, %v534
        %v618 = vpack.c.bf16 %v537, %v535
        %v619 = vpack.c.bf16 %v540, %v538
        %v620 = vpack.c.bf16 %v541, %v539
        %v621 = vpack.c.bf16 %v544, %v542
        %v622 = vpack.c.bf16 %v545, %v543
        %v623 = vpack.c.bf16 %v548, %v546
        %v624 = vpack.c.bf16 %v549, %v547
        %v625 = vpack.c.bf16 %v552, %v550
        %v626 = vpack.c.bf16 %v553, %v551
        %v627 = vpack.c.bf16 %v556, %v554
        %v628 = vpack.c.bf16 %v557, %v555
        %v629 = vpack.c.bf16 %v560, %v558
        %v630 = vpack.c.bf16 %v561, %v559
        %v631 = vpack.c.bf16 %v569, %v567
        %v632 = vpack.c.bf16 %v570, %v568
        %v633 = vpack.c.bf16 %v573, %v571
        %v634 = vpack.c.bf16 %v574, %v572
        %v635 = vpack.c.bf16 %v577, %v575
        %v636 = vpack.c.bf16 %v578, %v576
        %v637 = vpack.c.bf16 %v581, %v579
        %v638 = vpack.c.bf16 %v582, %v580
        %v639 = vpack.c.bf16 %v585, %v583
        %v640 = vpack.c.bf16 %v586, %v584
        %v641 = vpack.c.bf16 %v589, %v587
        %v642 = vpack.c.bf16 %v590, %v588
        %v643 = vpack.c.bf16 %v593, %v591
        %v644 = vpack.c.bf16 %v594, %v592
        %v645 = vpack.c.bf16 %v597, %v595
        %v646 = vpack.c.bf16 %v598, %v596
        %v647 = vld [vmem:[#allocation5] sm:$0xff]
        %v648 = vld [vmem:[#allocation5 + $0x18] sm:$0xff]
        %v649 = vld [vmem:[#allocation5 + $0x30] sm:$0xff]
        %v650 = vld [vmem:[#allocation5 + $0x48] sm:$0xff]
        %v651 = vld [vmem:[#allocation5 + $0x60] sm:$0xff]
        %v652 = vld [vmem:[#allocation5 + $0x78] sm:$0xff]
        %v653 = vld [vmem:[#allocation5 + $0x90] sm:$0xff]
        %v654 = vld [vmem:[#allocation5 + $0xa8] sm:$0xff]
        %v655 = vld [vmem:[#allocation5 + $0xc0] sm:$0xff]
        %v656 = vld [vmem:[#allocation5 + $0xd8] sm:$0xff]
        %v657 = vld [vmem:[#allocation5 + $0xf0] sm:$0xff]
        %v658 = vld [vmem:[#allocation5 + $0x108] sm:$0xff]
        %v659 = vld [vmem:[#allocation5 + $0x120] sm:$0xff]
        %v660 = vld [vmem:[#allocation5 + $0x138] sm:$0xff]
        %v661 = vld [vmem:[#allocation5 + $0x150] sm:$0xff]
        %v662 = vld [vmem:[#allocation5 + $0x168] sm:$0xff]
        %v663 = vld [vmem:[#allocation5 + $0x180] sm:$0xff]
        %v664 = vld [vmem:[#allocation5 + $0x198] sm:$0xff]
        %v665 = vld [vmem:[#allocation5 + $0x1b0] sm:$0xff]
        %v666 = vld [vmem:[#allocation5 + $0x1c8] sm:$0xff]
        %v667 = vld [vmem:[#allocation5 + $0x1e0] sm:$0xff]
        %v668 = vld [vmem:[#allocation5 + $0x1f8] sm:$0xff]
        %v669 = vld [vmem:[#allocation5 + $0x210] sm:$0xff]
        %v670 = vld [vmem:[#allocation5 + $0x228] sm:$0xff]
        %v671 = vld [vmem:[#allocation5 + $0x240] sm:$0xff]
        %v672 = vld [vmem:[#allocation5 + $0x258] sm:$0xff]
        %v673 = vld [vmem:[#allocation5 + $0x270] sm:$0xff]
        %v674 = vld [vmem:[#allocation5 + $0x288] sm:$0xff]
        %v675 = vld [vmem:[#allocation5 + $0x2a0] sm:$0xff]
        %v676 = vld [vmem:[#allocation5 + $0x2b8] sm:$0xff]
        %v677 = vld [vmem:[#allocation5 + $0x2d0] sm:$0xff]
        %v678 = vld [vmem:[#allocation5 + $0x2e8] sm:$0xff]
        %v711 = vunpack.c.l.b16 %v647
        %v712 = vunpack.c.h.b16 %v647
        %v713 = vunpack.c.l.b16 %v648
        %v714 = vunpack.c.h.b16 %v648
        %v715 = vunpack.c.l.b16 %v649
        %v716 = vunpack.c.h.b16 %v649
        %v717 = vunpack.c.l.b16 %v650
        %v718 = vunpack.c.h.b16 %v650
        %v719 = vunpack.c.l.b16 %v651
        %v720 = vunpack.c.h.b16 %v651
        %v721 = vunpack.c.l.b16 %v652
        %v722 = vunpack.c.h.b16 %v652
        %v723 = vunpack.c.l.b16 %v653
        %v724 = vunpack.c.h.b16 %v653
        %v725 = vunpack.c.l.b16 %v654
        %v726 = vunpack.c.h.b16 %v654
        %v727 = vunpack.c.l.b16 %v655
        %v728 = vunpack.c.h.b16 %v655
        %v729 = vunpack.c.l.b16 %v656
        %v730 = vunpack.c.h.b16 %v656
        %v731 = vunpack.c.l.b16 %v657
        %v732 = vunpack.c.h.b16 %v657
        %v733 = vunpack.c.l.b16 %v658
        %v734 = vunpack.c.h.b16 %v658
        %v735 = vunpack.c.l.b16 %v659
        %v736 = vunpack.c.h.b16 %v659
        %v737 = vunpack.c.l.b16 %v660
        %v738 = vunpack.c.h.b16 %v660
        %v739 = vunpack.c.l.b16 %v661
        %v740 = vunpack.c.h.b16 %v661
        %v741 = vunpack.c.l.b16 %v662
        %v742 = vunpack.c.h.b16 %v662
        %v743 = vunpack.c.l.b16 %v663
        %v744 = vunpack.c.h.b16 %v663
        %v745 = vunpack.c.l.b16 %v664
        %v746 = vunpack.c.h.b16 %v664
        %v747 = vunpack.c.l.b16 %v665
        %v748 = vunpack.c.h.b16 %v665
        %v749 = vunpack.c.l.b16 %v666
        %v750 = vunpack.c.h.b16 %v666
        %v751 = vunpack.c.l.b16 %v667
        %v752 = vunpack.c.h.b16 %v667
        %v753 = vunpack.c.l.b16 %v668
        %v754 = vunpack.c.h.b16 %v668
        %v755 = vunpack.c.l.b16 %v669
        %v756 = vunpack.c.h.b16 %v669
        %v757 = vunpack.c.l.b16 %v670
        %v758 = vunpack.c.h.b16 %v670
        %v759 = vunpack.c.l.b16 %v671
        %v760 = vunpack.c.h.b16 %v671
        %v761 = vunpack.c.l.b16 %v672
        %v762 = vunpack.c.h.b16 %v672
        %v763 = vunpack.c.l.b16 %v673
        %v764 = vunpack.c.h.b16 %v673
        %v765 = vunpack.c.l.b16 %v674
        %v766 = vunpack.c.h.b16 %v674
        %v767 = vunpack.c.l.b16 %v675
        %v768 = vunpack.c.h.b16 %v675
        %v769 = vunpack.c.l.b16 %v676
        %v770 = vunpack.c.h.b16 %v676
        %v771 = vunpack.c.l.b16 %v677
        %v772 = vunpack.c.h.b16 %v677
        %v773 = vunpack.c.l.b16 %v678
        %v774 = vunpack.c.h.b16 %v678
        %v775 = vpack.c.b16 %v713, %v711
        %v776 = vpack.c.b16 %v714, %v712
        %v777 = vpack.c.b16 %v717, %v715
        %v778 = vpack.c.b16 %v718, %v716
        %v779 = vpack.c.b16 %v721, %v719
        %v780 = vpack.c.b16 %v722, %v720
        %v781 = vpack.c.b16 %v725, %v723
        %v782 = vpack.c.b16 %v726, %v724
        %v783 = vpack.c.b16 %v729, %v727
        %v784 = vpack.c.b16 %v730, %v728
        %v785 = vpack.c.b16 %v733, %v731
        %v786 = vpack.c.b16 %v734, %v732
        %v787 = vpack.c.b16 %v737, %v735
        %v788 = vpack.c.b16 %v738, %v736
        %v789 = vpack.c.b16 %v741, %v739
        %v790 = vpack.c.b16 %v742, %v740
        %v791 = vpack.c.b16 %v745, %v743
        %v792 = vpack.c.b16 %v746, %v744
        %v793 = vpack.c.b16 %v749, %v747
        %v794 = vpack.c.b16 %v750, %v748
        %v795 = vpack.c.b16 %v753, %v751
        %v796 = vpack.c.b16 %v754, %v752
        %v797 = vpack.c.b16 %v757, %v755
        %v798 = vpack.c.b16 %v758, %v756
        %v799 = vpack.c.b16 %v761, %v759
        %v800 = vpack.c.b16 %v762, %v760
        %v801 = vpack.c.b16 %v765, %v763
        %v802 = vpack.c.b16 %v766, %v764
        %v803 = vpack.c.b16 %v769, %v767
        %v804 = vpack.c.b16 %v770, %v768
        %v805 = vpack.c.b16 %v773, %v771
        %v806 = vpack.c.b16 %v774, %v772
        %839 = vmatpush.bf16.msra.mxu0 %v789
        %840 = vmatpush.bf16.msra.mxu0 %v787
        %841 = vmatpush.bf16.msra.mxu0 %v785
        %842 = vmatpush.bf16.msra.mxu0 %v783
        %843 = vmatpush.bf16.msra.mxu0 %v781
        %844 = vmatpush.bf16.msra.mxu0 %v779
        %845 = vmatpush.bf16.msra.mxu0 %v777
        %846 = vmatpush.bf16.msra.mxu0 %v775
        %847 = vmatmul.bf16.gmra.mxu0 %v631
        %v848 = vpop.f32.mrf.mxu0
        %v849 = vadd.f32 0.0, %v848
        %v850 = vpop.f32.mrf.mxu0
        %v851 = vadd.f32 0.0, %v850
        %852 = vmatmul.bf16.gmra.mxu0 %v633
        %v853 = vpop.f32.mrf.mxu0
        %v854 = vadd.f32 0.0, %v853
        %v855 = vpop.f32.mrf.mxu0
        %v856 = vadd.f32 0.0, %v855
        %857 = vmatmul.bf16.gmra.mxu0 %v635
        %v858 = vpop.f32.mrf.mxu0
        %v859 = vadd.f32 0.0, %v858
        %v860 = vpop.f32.mrf.mxu0
        %v861 = vadd.f32 0.0, %v860
        %862 = vmatmul.bf16.gmra.mxu0 %v637
        %v863 = vpop.f32.mrf.mxu0
        %v864 = vadd.f32 0.0, %v863
        %v865 = vpop.f32.mrf.mxu0
        %v866 = vadd.f32 0.0, %v865
        %867 = vmatmul.bf16.gmra.mxu0 %v639
        %v868 = vpop.f32.mrf.mxu0
        %v869 = vadd.f32 0.0, %v868
        %v870 = vpop.f32.mrf.mxu0
        %v871 = vadd.f32 0.0, %v870
        %872 = vmatmul.bf16.gmra.mxu0 %v641
        %v873 = vpop.f32.mrf.mxu0
        %v874 = vadd.f32 0.0, %v873
        %v875 = vpop.f32.mrf.mxu0
        %v876 = vadd.f32 0.0, %v875
        %877 = vmatmul.bf16.gmra.mxu0 %v643
        %v878 = vpop.f32.mrf.mxu0
        %v879 = vadd.f32 0.0, %v878
        %v880 = vpop.f32.mrf.mxu0
        %v881 = vadd.f32 0.0, %v880
        %882 = vmatmul.bf16.gmra.mxu0 %v645
        %v883 = vpop.f32.mrf.mxu0
        %v884 = vadd.f32 0.0, %v883
        %v885 = vpop.f32.mrf.mxu0
        %v886 = vadd.f32 0.0, %v885
        %887 = vdwg.mxu0
        %888 = vmatpush.bf16.msra.mxu0 %v805
        %889 = vmatpush.bf16.msra.mxu0 %v803
        %890 = vmatpush.bf16.msra.mxu0 %v801
        %891 = vmatpush.bf16.msra.mxu0 %v799
        %892 = vmatpush.bf16.msra.mxu0 %v797
        %893 = vmatpush.bf16.msra.mxu0 %v795
        %894 = vmatpush.bf16.msra.mxu0 %v793
        %895 = vmatpush.bf16.msra.mxu0 %v791
        %896 = vmatmul.bf16.gmra.mxu0 %v632
        %v897 = vpop.f32.mrf.mxu0
        %v898 = vadd.f32 %v849, %v897
        %v899 = vpop.f32.mrf.mxu0
        %v900 = vadd.f32 %v851, %v899
        %901 = vmatmul.bf16.gmra.mxu0 %v634
        %v902 = vpop.f32.mrf.mxu0
        %v903 = vadd.f32 %v854, %v902
        %v904 = vpop.f32.mrf.mxu0
        %v905 = vadd.f32 %v856, %v904
        %906 = vmatmul.bf16.gmra.mxu0 %v636
        %v907 = vpop.f32.mrf.mxu0
        %v908 = vadd.f32 %v859, %v907
        %v909 = vpop.f32.mrf.mxu0
        %v910 = vadd.f32 %v861, %v909
        %911 = vmatmul.bf16.gmra.mxu0 %v638
        %v912 = vpop.f32.mrf.mxu0
        %v913 = vadd.f32 %v864, %v912
        %v914 = vpop.f32.mrf.mxu0
        %v915 = vadd.f32 %v866, %v914
        %916 = vmatmul.bf16.gmra.mxu0 %v640
        %v917 = vpop.f32.mrf.mxu0
        %v918 = vadd.f32 %v869, %v917
        %v919 = vpop.f32.mrf.mxu0
        %v920 = vadd.f32 %v871, %v919
        %921 = vmatmul.bf16.gmra.mxu0 %v642
        %v922 = vpop.f32.mrf.mxu0
        %v923 = vadd.f32 %v874, %v922
        %v924 = vpop.f32.mrf.mxu0
        %v925 = vadd.f32 %v876, %v924
        %926 = vmatmul.bf16.gmra.mxu0 %v644
        %v927 = vpop.f32.mrf.mxu0
        %v928 = vadd.f32 %v879, %v927
        %v929 = vpop.f32.mrf.mxu0
        %v930 = vadd.f32 %v881, %v929
        %931 = vmatmul.bf16.gmra.mxu0 %v646
        %v932 = vpop.f32.mrf.mxu0
        %v933 = vadd.f32 %v884, %v932
        %v934 = vpop.f32.mrf.mxu0
        %v935 = vadd.f32 %v886, %v934
        %936 = vdwg.mxu0
        %937 = vmatpush.bf16.msra.mxu0 %v790
        %938 = vmatpush.bf16.msra.mxu0 %v788
        %939 = vmatpush.bf16.msra.mxu0 %v786
        %940 = vmatpush.bf16.msra.mxu0 %v784
        %941 = vmatpush.bf16.msra.mxu0 %v782
        %942 = vmatpush.bf16.msra.mxu0 %v780
        %943 = vmatpush.bf16.msra.mxu0 %v778
        %944 = vmatpush.bf16.msra.mxu0 %v776
        %945 = vmatmul.bf16.gmra.mxu0 %v631
        %v946 = vpop.f32.mrf.mxu0
        %v947 = vadd.f32 0.0, %v946
        %v948 = vpop.f32.mrf.mxu0
        %v949 = vadd.f32 0.0, %v948
        %950 = vmatmul.bf16.gmra.mxu0 %v633
        %v951 = vpop.f32.mrf.mxu0
        %v952 = vadd.f32 0.0, %v951
        %v953 = vpop.f32.mrf.mxu0
        %v954 = vadd.f32 0.0, %v953
        %955 = vmatmul.bf16.gmra.mxu0 %v635
        %v956 = vpop.f32.mrf.mxu0
        %v957 = vadd.f32 0.0, %v956
        %v958 = vpop.f32.mrf.mxu0
        %v959 = vadd.f32 0.0, %v958
        %960 = vmatmul.bf16.gmra.mxu0 %v637
        %v961 = vpop.f32.mrf.mxu0
        %v962 = vadd.f32 0.0, %v961
        %v963 = vpop.f32.mrf.mxu0
        %v964 = vadd.f32 0.0, %v963
        %965 = vmatmul.bf16.gmra.mxu0 %v639
        %v966 = vpop.f32.mrf.mxu0
        %v967 = vadd.f32 0.0, %v966
        %v968 = vpop.f32.mrf.mxu0
        %v969 = vadd.f32 0.0, %v968
        %970 = vmatmul.bf16.gmra.mxu0 %v641
        %v971 = vpop.f32.mrf.mxu0
        %v972 = vadd.f32 0.0, %v971
        %v973 = vpop.f32.mrf.mxu0
        %v974 = vadd.f32 0.0, %v973
        %975 = vmatmul.bf16.gmra.mxu0 %v643
        %v976 = vpop.f32.mrf.mxu0
        %v977 = vadd.f32 0.0, %v976
        %v978 = vpop.f32.mrf.mxu0
        %v979 = vadd.f32 0.0, %v978
        %980 = vmatmul.bf16.gmra.mxu0 %v645
        %v981 = vpop.f32.mrf.mxu0
        %v982 = vadd.f32 0.0, %v981
        %v983 = vpop.f32.mrf.mxu0
        %v984 = vadd.f32 0.0, %v983
        %985 = vdwg.mxu0
        %986 = vmatpush.bf16.msra.mxu0 %v806
        %987 = vmatpush.bf16.msra.mxu0 %v804
        %988 = vmatpush.bf16.msra.mxu0 %v802
        %989 = vmatpush.bf16.msra.mxu0 %v800
        %990 = vmatpush.bf16.msra.mxu0 %v798
        %991 = vmatpush.bf16.msra.mxu0 %v796
        %992 = vmatpush.bf16.msra.mxu0 %v794
        %993 = vmatpush.bf16.msra.mxu0 %v792
        %994 = vmatmul.bf16.gmra.mxu0 %v632
        %v995 = vpop.f32.mrf.mxu0
        %v996 = vadd.f32 %v947, %v995
        %v997 = vpop.f32.mrf.mxu0
        %v998 = vadd.f32 %v949, %v997
        %999 = vmatmul.bf16.gmra.mxu0 %v634
        %v1000 = vpop.f32.mrf.mxu0
        %v1001 = vadd.f32 %v952, %v1000
        %v1002 = vpop.f32.mrf.mxu0
        %v1003 = vadd.f32 %v954, %v1002
        %1004 = vmatmul.bf16.gmra.mxu0 %v636
        %v1005 = vpop.f32.mrf.mxu0
        %v1006 = vadd.f32 %v957, %v1005
        %v1007 = vpop.f32.mrf.mxu0
        %v1008 = vadd.f32 %v959, %v1007
        %1009 = vmatmul.bf16.gmra.mxu0 %v638
        %v1010 = vpop.f32.mrf.mxu0
        %v1011 = vadd.f32 %v962, %v1010
        %v1012 = vpop.f32.mrf.mxu0
        %v1013 = vadd.f32 %v964, %v1012
        %1014 = vmatmul.bf16.gmra.mxu0 %v640
        %v1015 = vpop.f32.mrf.mxu0
        %v1016 = vadd.f32 %v967, %v1015
        %v1017 = vpop.f32.mrf.mxu0
        %v1018 = vadd.f32 %v969, %v1017
        %1019 = vmatmul.bf16.gmra.mxu0 %v642
        %v1020 = vpop.f32.mrf.mxu0
        %v1021 = vadd.f32 %v972, %v1020
        %v1022 = vpop.f32.mrf.mxu0
        %v1023 = vadd.f32 %v974, %v1022
        %1024 = vmatmul.bf16.gmra.mxu0 %v644
        %v1025 = vpop.f32.mrf.mxu0
        %v1026 = vadd.f32 %v977, %v1025
        %v1027 = vpop.f32.mrf.mxu0
        %v1028 = vadd.f32 %v979, %v1027
        %1029 = vmatmul.bf16.gmra.mxu0 %v646
        %v1030 = vpop.f32.mrf.mxu0
        %v1031 = vadd.f32 %v982, %v1030
        %v1032 = vpop.f32.mrf.mxu0
        %v1033 = vadd.f32 %v984, %v1032
        %1034 = vdwg.mxu0
        %v1035 = vld [vmem:[#allocation5 + $0x8] sm:$0xff]
        %v1036 = vld [vmem:[#allocation5 + $0x10] sm:$0xff]
        %v1037 = vld [vmem:[#allocation5 + $0x20] sm:$0xff]
        %v1038 = vld [vmem:[#allocation5 + $0x28] sm:$0xff]
        %v1039 = vld [vmem:[#allocation5 + $0x38] sm:$0xff]
        %v1040 = vld [vmem:[#allocation5 + $0x40] sm:$0xff]
        %v1041 = vld [vmem:[#allocation5 + $0x50] sm:$0xff]
        %v1042 = vld [vmem:[#allocation5 + $0x58] sm:$0xff]
        %v1043 = vld [vmem:[#allocation5 + $0x68] sm:$0xff]
        %v1044 = vld [vmem:[#allocation5 + $0x70] sm:$0xff]
        %v1045 = vld [vmem:[#allocation5 + $0x80] sm:$0xff]
        %v1046 = vld [vmem:[#allocation5 + $0x88] sm:$0xff]
        %v1047 = vld [vmem:[#allocation5 + $0x98] sm:$0xff]
        %v1048 = vld [vmem:[#allocation5 + $0xa0] sm:$0xff]
        %v1049 = vld [vmem:[#allocation5 + $0xb0] sm:$0xff]
        %v1050 = vld [vmem:[#allocation5 + $0xb8] sm:$0xff]
        %v1051 = vld [vmem:[#allocation5 + $0xc8] sm:$0xff]
        %v1052 = vld [vmem:[#allocation5 + $0xd0] sm:$0xff]
        %v1053 = vld [vmem:[#allocation5 + $0xe0] sm:$0xff]
        %v1054 = vld [vmem:[#allocation5 + $0xe8] sm:$0xff]
        %v1055 = vld [vmem:[#allocation5 + $0xf8] sm:$0xff]
        %v1056 = vld [vmem:[#allocation5 + $0x100] sm:$0xff]
        %v1057 = vld [vmem:[#allocation5 + $0x110] sm:$0xff]
        %v1058 = vld [vmem:[#allocation5 + $0x118] sm:$0xff]
        %v1059 = vld [vmem:[#allocation5 + $0x128] sm:$0xff]
        %v1060 = vld [vmem:[#allocation5 + $0x130] sm:$0xff]
        %v1061 = vld [vmem:[#allocation5 + $0x140] sm:$0xff]
        %v1062 = vld [vmem:[#allocation5 + $0x148] sm:$0xff]
        %v1063 = vld [vmem:[#allocation5 + $0x158] sm:$0xff]
        %v1064 = vld [vmem:[#allocation5 + $0x160] sm:$0xff]
        %v1065 = vld [vmem:[#allocation5 + $0x170] sm:$0xff]
        %v1066 = vld [vmem:[#allocation5 + $0x178] sm:$0xff]
        %v1067 = vld [vmem:[#allocation5 + $0x188] sm:$0xff]
        %v1068 = vld [vmem:[#allocation5 + $0x190] sm:$0xff]
        %v1069 = vld [vmem:[#allocation5 + $0x1a0] sm:$0xff]
        %v1070 = vld [vmem:[#allocation5 + $0x1a8] sm:$0xff]
        %v1071 = vld [vmem:[#allocation5 + $0x1b8] sm:$0xff]
        %v1072 = vld [vmem:[#allocation5 + $0x1c0] sm:$0xff]
        %v1073 = vld [vmem:[#allocation5 + $0x1d0] sm:$0xff]
        %v1074 = vld [vmem:[#allocation5 + $0x1d8] sm:$0xff]
        %v1075 = vld [vmem:[#allocation5 + $0x1e8] sm:$0xff]
        %v1076 = vld [vmem:[#allocation5 + $0x1f0] sm:$0xff]
        %v1077 = vld [vmem:[#allocation5 + $0x200] sm:$0xff]
        %v1078 = vld [vmem:[#allocation5 + $0x208] sm:$0xff]
        %v1079 = vld [vmem:[#allocation5 + $0x218] sm:$0xff]
        %v1080 = vld [vmem:[#allocation5 + $0x220] sm:$0xff]
        %v1081 = vld [vmem:[#allocation5 + $0x230] sm:$0xff]
        %v1082 = vld [vmem:[#allocation5 + $0x238] sm:$0xff]
        %v1083 = vld [vmem:[#allocation5 + $0x248] sm:$0xff]
        %v1084 = vld [vmem:[#allocation5 + $0x250] sm:$0xff]
        %v1085 = vld [vmem:[#allocation5 + $0x260] sm:$0xff]
        %v1086 = vld [vmem:[#allocation5 + $0x268] sm:$0xff]
        %v1087 = vld [vmem:[#allocation5 + $0x278] sm:$0xff]
        %v1088 = vld [vmem:[#allocation5 + $0x280] sm:$0xff]
        %v1089 = vld [vmem:[#allocation5 + $0x290] sm:$0xff]
        %v1090 = vld [vmem:[#allocation5 + $0x298] sm:$0xff]
        %v1091 = vld [vmem:[#allocation5 + $0x2a8] sm:$0xff]
        %v1092 = vld [vmem:[#allocation5 + $0x2b0] sm:$0xff]
        %v1093 = vld [vmem:[#allocation5 + $0x2c0] sm:$0xff]
        %v1094 = vld [vmem:[#allocation5 + $0x2c8] sm:$0xff]
        %v1095 = vld [vmem:[#allocation5 + $0x2d8] sm:$0xff]
        %v1096 = vld [vmem:[#allocation5 + $0x2e0] sm:$0xff]
        %v1097 = vld [vmem:[#allocation5 + $0x2f0] sm:$0xff]
        %v1098 = vld [vmem:[#allocation5 + $0x2f8] sm:$0xff]
        %v1163 = vunpack.c.l.b16 %v1035
        %v1164 = vunpack.c.h.b16 %v1035
        %v1165 = vunpack.c.l.b16 %v1036
        %v1166 = vunpack.c.h.b16 %v1036
        %v1167 = vunpack.c.l.b16 %v1037
        %v1168 = vunpack.c.h.b16 %v1037
        %v1169 = vunpack.c.l.b16 %v1038
        %v1170 = vunpack.c.h.b16 %v1038
        %v1171 = vunpack.c.l.b16 %v1039
        %v1172 = vunpack.c.h.b16 %v1039
        %v1173 = vunpack.c.l.b16 %v1040
        %v1174 = vunpack.c.h.b16 %v1040
        %v1175 = vunpack.c.l.b16 %v1041
        %v1176 = vunpack.c.h.b16 %v1041
        %v1177 = vunpack.c.l.b16 %v1042
        %v1178 = vunpack.c.h.b16 %v1042
        %v1179 = vunpack.c.l.b16 %v1043
        %v1180 = vunpack.c.h.b16 %v1043
        %v1181 = vunpack.c.l.b16 %v1044
        %v1182 = vunpack.c.h.b16 %v1044
        %v1183 = vunpack.c.l.b16 %v1045
        %v1184 = vunpack.c.h.b16 %v1045
        %v1185 = vunpack.c.l.b16 %v1046
        %v1186 = vunpack.c.h.b16 %v1046
        %v1187 = vunpack.c.l.b16 %v1047
        %v1188 = vunpack.c.h.b16 %v1047
        %v1189 = vunpack.c.l.b16 %v1048
        %v1190 = vunpack.c.h.b16 %v1048
        %v1191 = vunpack.c.l.b16 %v1049
        %v1192 = vunpack.c.h.b16 %v1049
        %v1193 = vunpack.c.l.b16 %v1050
        %v1194 = vunpack.c.h.b16 %v1050
        %v1195 = vunpack.c.l.b16 %v1051
        %v1196 = vunpack.c.h.b16 %v1051
        %v1197 = vunpack.c.l.b16 %v1052
        %v1198 = vunpack.c.h.b16 %v1052
        %v1199 = vunpack.c.l.b16 %v1053
        %v1200 = vunpack.c.h.b16 %v1053
        %v1201 = vunpack.c.l.b16 %v1054
        %v1202 = vunpack.c.h.b16 %v1054
        %v1203 = vunpack.c.l.b16 %v1055
        %v1204 = vunpack.c.h.b16 %v1055
        %v1205 = vunpack.c.l.b16 %v1056
        %v1206 = vunpack.c.h.b16 %v1056
        %v1207 = vunpack.c.l.b16 %v1057
        %v1208 = vunpack.c.h.b16 %v1057
        %v1209 = vunpack.c.l.b16 %v1058
        %v1210 = vunpack.c.h.b16 %v1058
        %v1211 = vunpack.c.l.b16 %v1059
        %v1212 = vunpack.c.h.b16 %v1059
        %v1213 = vunpack.c.l.b16 %v1060
        %v1214 = vunpack.c.h.b16 %v1060
        %v1215 = vunpack.c.l.b16 %v1061
        %v1216 = vunpack.c.h.b16 %v1061
        %v1217 = vunpack.c.l.b16 %v1062
        %v1218 = vunpack.c.h.b16 %v1062
        %v1219 = vunpack.c.l.b16 %v1063
        %v1220 = vunpack.c.h.b16 %v1063
        %v1221 = vunpack.c.l.b16 %v1064
        %v1222 = vunpack.c.h.b16 %v1064
        %v1223 = vunpack.c.l.b16 %v1065
        %v1224 = vunpack.c.h.b16 %v1065
        %v1225 = vunpack.c.l.b16 %v1066
        %v1226 = vunpack.c.h.b16 %v1066
        %v1227 = vunpack.c.l.b16 %v1067
        %v1228 = vunpack.c.h.b16 %v1067
        %v1229 = vunpack.c.l.b16 %v1068
        %v1230 = vunpack.c.h.b16 %v1068
        %v1231 = vunpack.c.l.b16 %v1069
        %v1232 = vunpack.c.h.b16 %v1069
        %v1233 = vunpack.c.l.b16 %v1070
        %v1234 = vunpack.c.h.b16 %v1070
        %v1235 = vunpack.c.l.b16 %v1071
        %v1236 = vunpack.c.h.b16 %v1071
        %v1237 = vunpack.c.l.b16 %v1072
        %v1238 = vunpack.c.h.b16 %v1072
        %v1239 = vunpack.c.l.b16 %v1073
        %v1240 = vunpack.c.h.b16 %v1073
        %v1241 = vunpack.c.l.b16 %v1074
        %v1242 = vunpack.c.h.b16 %v1074
        %v1243 = vunpack.c.l.b16 %v1075
        %v1244 = vunpack.c.h.b16 %v1075
        %v1245 = vunpack.c.l.b16 %v1076
        %v1246 = vunpack.c.h.b16 %v1076
        %v1247 = vunpack.c.l.b16 %v1077
        %v1248 = vunpack.c.h.b16 %v1077
        %v1249 = vunpack.c.l.b16 %v1078
        %v1250 = vunpack.c.h.b16 %v1078
        %v1251 = vunpack.c.l.b16 %v1079
        %v1252 = vunpack.c.h.b16 %v1079
        %v1253 = vunpack.c.l.b16 %v1080
        %v1254 = vunpack.c.h.b16 %v1080
        %v1255 = vunpack.c.l.b16 %v1081
        %v1256 = vunpack.c.h.b16 %v1081
        %v1257 = vunpack.c.l.b16 %v1082
        %v1258 = vunpack.c.h.b16 %v1082
        %v1259 = vunpack.c.l.b16 %v1083
        %v1260 = vunpack.c.h.b16 %v1083
        %v1261 = vunpack.c.l.b16 %v1084
        %v1262 = vunpack.c.h.b16 %v1084
        %v1263 = vunpack.c.l.b16 %v1085
        %v1264 = vunpack.c.h.b16 %v1085
        %v1265 = vunpack.c.l.b16 %v1086
        %v1266 = vunpack.c.h.b16 %v1086
        %v1267 = vunpack.c.l.b16 %v1087
        %v1268 = vunpack.c.h.b16 %v1087
        %v1269 = vunpack.c.l.b16 %v1088
        %v1270 = vunpack.c.h.b16 %v1088
        %v1271 = vunpack.c.l.b16 %v1089
        %v1272 = vunpack.c.h.b16 %v1089
        %v1273 = vunpack.c.l.b16 %v1090
        %v1274 = vunpack.c.h.b16 %v1090
        %v1275 = vunpack.c.l.b16 %v1091
        %v1276 = vunpack.c.h.b16 %v1091
        %v1277 = vunpack.c.l.b16 %v1092
        %v1278 = vunpack.c.h.b16 %v1092
        %v1279 = vunpack.c.l.b16 %v1093
        %v1280 = vunpack.c.h.b16 %v1093
        %v1281 = vunpack.c.l.b16 %v1094
        %v1282 = vunpack.c.h.b16 %v1094
        %v1283 = vunpack.c.l.b16 %v1095
        %v1284 = vunpack.c.h.b16 %v1095
        %v1285 = vunpack.c.l.b16 %v1096
        %v1286 = vunpack.c.h.b16 %v1096
        %v1287 = vunpack.c.l.b16 %v1097
        %v1288 = vunpack.c.h.b16 %v1097
        %v1289 = vunpack.c.l.b16 %v1098
        %v1290 = vunpack.c.h.b16 %v1098
        %v1291 = vpack.c.b16 %v1167, %v1163
        %v1292 = vpack.c.b16 %v1168, %v1164
        %v1293 = vpack.c.b16 %v1169, %v1165
        %v1294 = vpack.c.b16 %v1170, %v1166
        %v1295 = vpack.c.b16 %v1175, %v1171
        %v1296 = vpack.c.b16 %v1176, %v1172
        %v1297 = vpack.c.b16 %v1177, %v1173
        %v1298 = vpack.c.b16 %v1178, %v1174
        %v1299 = vpack.c.b16 %v1183, %v1179
        %v1300 = vpack.c.b16 %v1184, %v1180
        %v1301 = vpack.c.b16 %v1185, %v1181
        %v1302 = vpack.c.b16 %v1186, %v1182
        %v1303 = vpack.c.b16 %v1191, %v1187
        %v1304 = vpack.c.b16 %v1192, %v1188
        %v1305 = vpack.c.b16 %v1193, %v1189
        %v1306 = vpack.c.b16 %v1194, %v1190
        %v1307 = vpack.c.b16 %v1199, %v1195
        %v1308 = vpack.c.b16 %v1200, %v1196
        %v1309 = vpack.c.b16 %v1201, %v1197
        %v1310 = vpack.c.b16 %v1202, %v1198
        %v1311 = vpack.c.b16 %v1207, %v1203
        %v1312 = vpack.c.b16 %v1208, %v1204
        %v1313 = vpack.c.b16 %v1209, %v1205
        %v1314 = vpack.c.b16 %v1210, %v1206
        %v1315 = vpack.c.b16 %v1215, %v1211
        %v1316 = vpack.c.b16 %v1216, %v1212
        %v1317 = vpack.c.b16 %v1217, %v1213
        %v1318 = vpack.c.b16 %v1218, %v1214
        %v1319 = vpack.c.b16 %v1223, %v1219
        %v1320 = vpack.c.b16 %v1224, %v1220
        %v1321 = vpack.c.b16 %v1225, %v1221
        %v1322 = vpack.c.b16 %v1226, %v1222
        %v1323 = vpack.c.b16 %v1231, %v1227
        %v1324 = vpack.c.b16 %v1232, %v1228
        %v1325 = vpack.c.b16 %v1233, %v1229
        %v1326 = vpack.c.b16 %v1234, %v1230
        %v1327 = vpack.c.b16 %v1239, %v1235
        %v1328 = vpack.c.b16 %v1240, %v1236
        %v1329 = vpack.c.b16 %v1241, %v1237
        %v1330 = vpack.c.b16 %v1242, %v1238
        %v1331 = vpack.c.b16 %v1247, %v1243
        %v1332 = vpack.c.b16 %v1248, %v1244
        %v1333 = vpack.c.b16 %v1249, %v1245
        %v1334 = vpack.c.b16 %v1250, %v1246
        %v1335 = vpack.c.b16 %v1255, %v1251
        %v1336 = vpack.c.b16 %v1256, %v1252
        %v1337 = vpack.c.b16 %v1257, %v1253
        %v1338 = vpack.c.b16 %v1258, %v1254
        %v1339 = vpack.c.b16 %v1263, %v1259
        %v1340 = vpack.c.b16 %v1264, %v1260
        %v1341 = vpack.c.b16 %v1265, %v1261
        %v1342 = vpack.c.b16 %v1266, %v1262
        %v1343 = vpack.c.b16 %v1271, %v1267
        %v1344 = vpack.c.b16 %v1272, %v1268
        %v1345 = vpack.c.b16 %v1273, %v1269
        %v1346 = vpack.c.b16 %v1274, %v1270
        %v1347 = vpack.c.b16 %v1279, %v1275
        %v1348 = vpack.c.b16 %v1280, %v1276
        %v1349 = vpack.c.b16 %v1281, %v1277
        %v1350 = vpack.c.b16 %v1282, %v1278
        %v1351 = vpack.c.b16 %v1287, %v1283
        %v1352 = vpack.c.b16 %v1288, %v1284
        %v1353 = vpack.c.b16 %v1289, %v1285
        %v1354 = vpack.c.b16 %v1290, %v1286
        %1419 = vmatpush.bf16.msra.mxu0 %v1319
        %1420 = vmatpush.bf16.msra.mxu0 %v1315
        %1421 = vmatpush.bf16.msra.mxu0 %v1311
        %1422 = vmatpush.bf16.msra.mxu0 %v1307
        %1423 = vmatpush.bf16.msra.mxu0 %v1303
        %1424 = vmatpush.bf16.msra.mxu0 %v1299
        %1425 = vmatpush.bf16.msra.mxu0 %v1295
        %1426 = vmatpush.bf16.msra.mxu0 %v1291
        %1427 = vmatmul.bf16.gmra.mxu0 %v599
        %v1428 = vpop.f32.mrf.mxu0
        %v1429 = vadd.f32 0.0, %v1428
        %v1430 = vpop.f32.mrf.mxu0
        %v1431 = vadd.f32 0.0, %v1430
        %1432 = vmatmul.bf16.gmra.mxu0 %v601
        %v1433 = vpop.f32.mrf.mxu0
        %v1434 = vadd.f32 0.0, %v1433
        %v1435 = vpop.f32.mrf.mxu0
        %v1436 = vadd.f32 0.0, %v1435
        %1437 = vmatmul.bf16.gmra.mxu0 %v603
        %v1438 = vpop.f32.mrf.mxu0
        %v1439 = vadd.f32 0.0, %v1438
        %v1440 = vpop.f32.mrf.mxu0
        %v1441 = vadd.f32 0.0, %v1440
        %1442 = vmatmul.bf16.gmra.mxu0 %v605
        %v1443 = vpop.f32.mrf.mxu0
        %v1444 = vadd.f32 0.0, %v1443
        %v1445 = vpop.f32.mrf.mxu0
        %v1446 = vadd.f32 0.0, %v1445
        %1447 = vmatmul.bf16.gmra.mxu0 %v607
        %v1448 = vpop.f32.mrf.mxu0
        %v1449 = vadd.f32 0.0, %v1448
        %v1450 = vpop.f32.mrf.mxu0
        %v1451 = vadd.f32 0.0, %v1450
        %1452 = vmatmul.bf16.gmra.mxu0 %v609
        %v1453 = vpop.f32.mrf.mxu0
        %v1454 = vadd.f32 0.0, %v1453
        %v1455 = vpop.f32.mrf.mxu0
        %v1456 = vadd.f32 0.0, %v1455
        %1457 = vmatmul.bf16.gmra.mxu0 %v611
        %v1458 = vpop.f32.mrf.mxu0
        %v1459 = vadd.f32 0.0, %v1458
        %v1460 = vpop.f32.mrf.mxu0
        %v1461 = vadd.f32 0.0, %v1460
        %1462 = vmatmul.bf16.gmra.mxu0 %v613
        %v1463 = vpop.f32.mrf.mxu0
        %v1464 = vadd.f32 0.0, %v1463
        %v1465 = vpop.f32.mrf.mxu0
        %v1466 = vadd.f32 0.0, %v1465
        %1467 = vmatmul.bf16.gmra.mxu0 %v615
        %v1468 = vpop.f32.mrf.mxu0
        %v1469 = vadd.f32 0.0, %v1468
        %v1470 = vpop.f32.mrf.mxu0
        %v1471 = vadd.f32 0.0, %v1470
        %1472 = vmatmul.bf16.gmra.mxu0 %v617
        %v1473 = vpop.f32.mrf.mxu0
        %v1474 = vadd.f32 0.0, %v1473
        %v1475 = vpop.f32.mrf.mxu0
        %v1476 = vadd.f32 0.0, %v1475
        %1477 = vmatmul.bf16.gmra.mxu0 %v619
        %v1478 = vpop.f32.mrf.mxu0
        %v1479 = vadd.f32 0.0, %v1478
        %v1480 = vpop.f32.mrf.mxu0
        %v1481 = vadd.f32 0.0, %v1480
        %1482 = vmatmul.bf16.gmra.mxu0 %v621
        %v1483 = vpop.f32.mrf.mxu0
        %v1484 = vadd.f32 0.0, %v1483
        %v1485 = vpop.f32.mrf.mxu0
        %v1486 = vadd.f32 0.0, %v1485
        %1487 = vmatmul.bf16.gmra.mxu0 %v623
        %v1488 = vpop.f32.mrf.mxu0
        %v1489 = vadd.f32 0.0, %v1488
        %v1490 = vpop.f32.mrf.mxu0
        %v1491 = vadd.f32 0.0, %v1490
        %1492 = vmatmul.bf16.gmra.mxu0 %v625
        %v1493 = vpop.f32.mrf.mxu0
        %v1494 = vadd.f32 0.0, %v1493
        %v1495 = vpop.f32.mrf.mxu0
        %v1496 = vadd.f32 0.0, %v1495
        %1497 = vmatmul.bf16.gmra.mxu0 %v627
        %v1498 = vpop.f32.mrf.mxu0
        %v1499 = vadd.f32 0.0, %v1498
        %v1500 = vpop.f32.mrf.mxu0
        %v1501 = vadd.f32 0.0, %v1500
        %1502 = vmatmul.bf16.gmra.mxu0 %v629
        %v1503 = vpop.f32.mrf.mxu0
        %v1504 = vadd.f32 0.0, %v1503
        %v1505 = vpop.f32.mrf.mxu0
        %v1506 = vadd.f32 0.0, %v1505
        %1507 = vdwg.mxu0
        %1508 = vmatpush.bf16.msra.mxu0 %v1351
        %1509 = vmatpush.bf16.msra.mxu0 %v1347
        %1510 = vmatpush.bf16.msra.mxu0 %v1343
        %1511 = vmatpush.bf16.msra.mxu0 %v1339
        %1512 = vmatpush.bf16.msra.mxu0 %v1335
        %1513 = vmatpush.bf16.msra.mxu0 %v1331
        %1514 = vmatpush.bf16.msra.mxu0 %v1327
        %1515 = vmatpush.bf16.msra.mxu0 %v1323
        %1516 = vmatmul.bf16.gmra.mxu0 %v600
        %v1517 = vpop.f32.mrf.mxu0
        %v1518 = vadd.f32 %v1429, %v1517
        %v1519 = vpop.f32.mrf.mxu0
        %v1520 = vadd.f32 %v1431, %v1519
        %1521 = vmatmul.bf16.gmra.mxu0 %v602
        %v1522 = vpop.f32.mrf.mxu0
        %v1523 = vadd.f32 %v1434, %v1522
        %v1524 = vpop.f32.mrf.mxu0
        %v1525 = vadd.f32 %v1436, %v1524
        %1526 = vmatmul.bf16.gmra.mxu0 %v604
        %v1527 = vpop.f32.mrf.mxu0
        %v1528 = vadd.f32 %v1439, %v1527
        %v1529 = vpop.f32.mrf.mxu0
        %v1530 = vadd.f32 %v1441, %v1529
        %1531 = vmatmul.bf16.gmra.mxu0 %v606
        %v1532 = vpop.f32.mrf.mxu0
        %v1533 = vadd.f32 %v1444, %v1532
        %v1534 = vpop.f32.mrf.mxu0
        %v1535 = vadd.f32 %v1446, %v1534
        %1536 = vmatmul.bf16.gmra.mxu0 %v608
        %v1537 = vpop.f32.mrf.mxu0
        %v1538 = vadd.f32 %v1449, %v1537
        %v1539 = vpop.f32.mrf.mxu0
        %v1540 = vadd.f32 %v1451, %v1539
        %1541 = vmatmul.bf16.gmra.mxu0 %v610
        %v1542 = vpop.f32.mrf.mxu0
        %v1543 = vadd.f32 %v1454, %v1542
        %v1544 = vpop.f32.mrf.mxu0
        %v1545 = vadd.f32 %v1456, %v1544
        %1546 = vmatmul.bf16.gmra.mxu0 %v612
        %v1547 = vpop.f32.mrf.mxu0
        %v1548 = vadd.f32 %v1459, %v1547
        %v1549 = vpop.f32.mrf.mxu0
        %v1550 = vadd.f32 %v1461, %v1549
        %1551 = vmatmul.bf16.gmra.mxu0 %v614
        %v1552 = vpop.f32.mrf.mxu0
        %v1553 = vadd.f32 %v1464, %v1552
        %v1554 = vpop.f32.mrf.mxu0
        %v1555 = vadd.f32 %v1466, %v1554
        %1556 = vmatmul.bf16.gmra.mxu0 %v616
        %v1557 = vpop.f32.mrf.mxu0
        %v1558 = vadd.f32 %v1469, %v1557
        %v1559 = vpop.f32.mrf.mxu0
        %v1560 = vadd.f32 %v1471, %v1559
        %1561 = vmatmul.bf16.gmra.mxu0 %v618
        %v1562 = vpop.f32.mrf.mxu0
        %v1563 = vadd.f32 %v1474, %v1562
        %v1564 = vpop.f32.mrf.mxu0
        %v1565 = vadd.f32 %v1476, %v1564
        %1566 = vmatmul.bf16.gmra.mxu0 %v620
        %v1567 = vpop.f32.mrf.mxu0
        %v1568 = vadd.f32 %v1479, %v1567
        %v1569 = vpop.f32.mrf.mxu0
        %v1570 = vadd.f32 %v1481, %v1569
        %1571 = vmatmul.bf16.gmra.mxu0 %v622
        %v1572 = vpop.f32.mrf.mxu0
        %v1573 = vadd.f32 %v1484, %v1572
        %v1574 = vpop.f32.mrf.mxu0
        %v1575 = vadd.f32 %v1486, %v1574
        %1576 = vmatmul.bf16.gmra.mxu0 %v624
        %v1577 = vpop.f32.mrf.mxu0
        %v1578 = vadd.f32 %v1489, %v1577
        %v1579 = vpop.f32.mrf.mxu0
        %v1580 = vadd.f32 %v1491, %v1579
        %1581 = vmatmul.bf16.gmra.mxu0 %v626
        %v1582 = vpop.f32.mrf.mxu0
        %v1583 = vadd.f32 %v1494, %v1582
        %v1584 = vpop.f32.mrf.mxu0
        %v1585 = vadd.f32 %v1496, %v1584
        %1586 = vmatmul.bf16.gmra.mxu0 %v628
        %v1587 = vpop.f32.mrf.mxu0
        %v1588 = vadd.f32 %v1499, %v1587
        %v1589 = vpop.f32.mrf.mxu0
        %v1590 = vadd.f32 %v1501, %v1589
        %1591 = vmatmul.bf16.gmra.mxu0 %v630
        %v1592 = vpop.f32.mrf.mxu0
        %v1593 = vadd.f32 %v1504, %v1592
        %v1594 = vpop.f32.mrf.mxu0
        %v1595 = vadd.f32 %v1506, %v1594
        %1596 = vdwg.mxu0
        %1597 = vmatpush.bf16.msra.mxu0 %v1320
        %1598 = vmatpush.bf16.msra.mxu0 %v1316
        %1599 = vmatpush.bf16.msra.mxu0 %v1312
        %1600 = vmatpush.bf16.msra.mxu0 %v1308
        %1601 = vmatpush.bf16.msra.mxu0 %v1304
        %1602 = vmatpush.bf16.msra.mxu0 %v1300
        %1603 = vmatpush.bf16.msra.mxu0 %v1296
        %1604 = vmatpush.bf16.msra.mxu0 %v1292
        %1605 = vmatmul.bf16.gmra.mxu0 %v599
        %v1606 = vpop.f32.mrf.mxu0
        %v1607 = vadd.f32 0.0, %v1606
        %v1608 = vpop.f32.mrf.mxu0
        %v1609 = vadd.f32 0.0, %v1608
        %1610 = vmatmul.bf16.gmra.mxu0 %v601
        %v1611 = vpop.f32.mrf.mxu0
        %v1612 = vadd.f32 0.0, %v1611
        %v1613 = vpop.f32.mrf.mxu0
        %v1614 = vadd.f32 0.0, %v1613
        %1615 = vmatmul.bf16.gmra.mxu0 %v603
        %v1616 = vpop.f32.mrf.mxu0
        %v1617 = vadd.f32 0.0, %v1616
        %v1618 = vpop.f32.mrf.mxu0
        %v1619 = vadd.f32 0.0, %v1618
        %1620 = vmatmul.bf16.gmra.mxu0 %v605
        %v1621 = vpop.f32.mrf.mxu0
        %v1622 = vadd.f32 0.0, %v1621
        %v1623 = vpop.f32.mrf.mxu0
        %v1624 = vadd.f32 0.0, %v1623
        %1625 = vmatmul.bf16.gmra.mxu0 %v607
        %v1626 = vpop.f32.mrf.mxu0
        %v1627 = vadd.f32 0.0, %v1626
        %v1628 = vpop.f32.mrf.mxu0
        %v1629 = vadd.f32 0.0, %v1628
        %1630 = vmatmul.bf16.gmra.mxu0 %v609
        %v1631 = vpop.f32.mrf.mxu0
        %v1632 = vadd.f32 0.0, %v1631
        %v1633 = vpop.f32.mrf.mxu0
        %v1634 = vadd.f32 0.0, %v1633
        %1635 = vmatmul.bf16.gmra.mxu0 %v611
        %v1636 = vpop.f32.mrf.mxu0
        %v1637 = vadd.f32 0.0, %v1636
        %v1638 = vpop.f32.mrf.mxu0
        %v1639 = vadd.f32 0.0, %v1638
        %1640 = vmatmul.bf16.gmra.mxu0 %v613
        %v1641 = vpop.f32.mrf.mxu0
        %v1642 = vadd.f32 0.0, %v1641
        %v1643 = vpop.f32.mrf.mxu0
        %v1644 = vadd.f32 0.0, %v1643
        %1645 = vmatmul.bf16.gmra.mxu0 %v615
        %v1646 = vpop.f32.mrf.mxu0
        %v1647 = vadd.f32 0.0, %v1646
        %v1648 = vpop.f32.mrf.mxu0
        %v1649 = vadd.f32 0.0, %v1648
        %1650 = vmatmul.bf16.gmra.mxu0 %v617
        %v1651 = vpop.f32.mrf.mxu0
        %v1652 = vadd.f32 0.0, %v1651
        %v1653 = vpop.f32.mrf.mxu0
        %v1654 = vadd.f32 0.0, %v1653
        %1655 = vmatmul.bf16.gmra.mxu0 %v619
        %v1656 = vpop.f32.mrf.mxu0
        %v1657 = vadd.f32 0.0, %v1656
        %v1658 = vpop.f32.mrf.mxu0
        %v1659 = vadd.f32 0.0, %v1658
        %1660 = vmatmul.bf16.gmra.mxu0 %v621
        %v1661 = vpop.f32.mrf.mxu0
        %v1662 = vadd.f32 0.0, %v1661
        %v1663 = vpop.f32.mrf.mxu0
        %v1664 = vadd.f32 0.0, %v1663
        %1665 = vmatmul.bf16.gmra.mxu0 %v623
        %v1666 = vpop.f32.mrf.mxu0
        %v1667 = vadd.f32 0.0, %v1666
        %v1668 = vpop.f32.mrf.mxu0
        %v1669 = vadd.f32 0.0, %v1668
        %1670 = vmatmul.bf16.gmra.mxu0 %v625
        %v1671 = vpop.f32.mrf.mxu0
        %v1672 = vadd.f32 0.0, %v1671
        %v1673 = vpop.f32.mrf.mxu0
        %v1674 = vadd.f32 0.0, %v1673
        %1675 = vmatmul.bf16.gmra.mxu0 %v627
        %v1676 = vpop.f32.mrf.mxu0
        %v1677 = vadd.f32 0.0, %v1676
        %v1678 = vpop.f32.mrf.mxu0
        %v1679 = vadd.f32 0.0, %v1678
        %1680 = vmatmul.bf16.gmra.mxu0 %v629
        %v1681 = vpop.f32.mrf.mxu0
        %v1682 = vadd.f32 0.0, %v1681
        %v1683 = vpop.f32.mrf.mxu0
        %v1684 = vadd.f32 0.0, %v1683
        %1685 = vdwg.mxu0
        %1686 = vmatpush.bf16.msra.mxu0 %v1352
        %1687 = vmatpush.bf16.msra.mxu0 %v1348
        %1688 = vmatpush.bf16.msra.mxu0 %v1344
        %1689 = vmatpush.bf16.msra.mxu0 %v1340
        %1690 = vmatpush.bf16.msra.mxu0 %v1336
        %1691 = vmatpush.bf16.msra.mxu0 %v1332
        %1692 = vmatpush.bf16.msra.mxu0 %v1328
        %1693 = vmatpush.bf16.msra.mxu0 %v1324
        %1694 = vmatmul.bf16.gmra.mxu0 %v600
        %v1695 = vpop.f32.mrf.mxu0
        %v1696 = vadd.f32 %v1607, %v1695
        %v1697 = vpop.f32.mrf.mxu0
        %v1698 = vadd.f32 %v1609, %v1697
        %1699 = vmatmul.bf16.gmra.mxu0 %v602
        %v1700 = vpop.f32.mrf.mxu0
        %v1701 = vadd.f32 %v1612, %v1700
        %v1702 = vpop.f32.mrf.mxu0
        %v1703 = vadd.f32 %v1614, %v1702
        %1704 = vmatmul.bf16.gmra.mxu0 %v604
        %v1705 = vpop.f32.mrf.mxu0
        %v1706 = vadd.f32 %v1617, %v1705
        %v1707 = vpop.f32.mrf.mxu0
        %v1708 = vadd.f32 %v1619, %v1707
        %1709 = vmatmul.bf16.gmra.mxu0 %v606
        %v1710 = vpop.f32.mrf.mxu0
        %v1711 = vadd.f32 %v1622, %v1710
        %v1712 = vpop.f32.mrf.mxu0
        %v1713 = vadd.f32 %v1624, %v1712
        %1714 = vmatmul.bf16.gmra.mxu0 %v608
        %v1715 = vpop.f32.mrf.mxu0
        %v1716 = vadd.f32 %v1627, %v1715
        %v1717 = vpop.f32.mrf.mxu0
        %v1718 = vadd.f32 %v1629, %v1717
        %1719 = vmatmul.bf16.gmra.mxu0 %v610
        %v1720 = vpop.f32.mrf.mxu0
        %v1721 = vadd.f32 %v1632, %v1720
        %v1722 = vpop.f32.mrf.mxu0
        %v1723 = vadd.f32 %v1634, %v1722
        %1724 = vmatmul.bf16.gmra.mxu0 %v612
        %v1725 = vpop.f32.mrf.mxu0
        %v1726 = vadd.f32 %v1637, %v1725
        %v1727 = vpop.f32.mrf.mxu0
        %v1728 = vadd.f32 %v1639, %v1727
        %1729 = vmatmul.bf16.gmra.mxu0 %v614
        %v1730 = vpop.f32.mrf.mxu0
        %v1731 = vadd.f32 %v1642, %v1730
        %v1732 = vpop.f32.mrf.mxu0
        %v1733 = vadd.f32 %v1644, %v1732
        %1734 = vmatmul.bf16.gmra.mxu0 %v616
        %v1735 = vpop.f32.mrf.mxu0
        %v1736 = vadd.f32 %v1647, %v1735
        %v1737 = vpop.f32.mrf.mxu0
        %v1738 = vadd.f32 %v1649, %v1737
        %1739 = vmatmul.bf16.gmra.mxu0 %v618
        %v1740 = vpop.f32.mrf.mxu0
        %v1741 = vadd.f32 %v1652, %v1740
        %v1742 = vpop.f32.mrf.mxu0
        %v1743 = vadd.f32 %v1654, %v1742
        %1744 = vmatmul.bf16.gmra.mxu0 %v620
        %v1745 = vpop.f32.mrf.mxu0
        %v1746 = vadd.f32 %v1657, %v1745
        %v1747 = vpop.f32.mrf.mxu0
        %v1748 = vadd.f32 %v1659, %v1747
        %1749 = vmatmul.bf16.gmra.mxu0 %v622
        %v1750 = vpop.f32.mrf.mxu0
        %v1751 = vadd.f32 %v1662, %v1750
        %v1752 = vpop.f32.mrf.mxu0
        %v1753 = vadd.f32 %v1664, %v1752
        %1754 = vmatmul.bf16.gmra.mxu0 %v624
        %v1755 = vpop.f32.mrf.mxu0
        %v1756 = vadd.f32 %v1667, %v1755
        %v1757 = vpop.f32.mrf.mxu0
        %v1758 = vadd.f32 %v1669, %v1757
        %1759 = vmatmul.bf16.gmra.mxu0 %v626
        %v1760 = vpop.f32.mrf.mxu0
        %v1761 = vadd.f32 %v1672, %v1760
        %v1762 = vpop.f32.mrf.mxu0
        %v1763 = vadd.f32 %v1674, %v1762
        %1764 = vmatmul.bf16.gmra.mxu0 %v628
        %v1765 = vpop.f32.mrf.mxu0
        %v1766 = vadd.f32 %v1677, %v1765
        %v1767 = vpop.f32.mrf.mxu0
        %v1768 = vadd.f32 %v1679, %v1767
        %1769 = vmatmul.bf16.gmra.mxu0 %v630
        %v1770 = vpop.f32.mrf.mxu0
        %v1771 = vadd.f32 %v1682, %v1770
        %v1772 = vpop.f32.mrf.mxu0
        %v1773 = vadd.f32 %v1684, %v1772
        %1774 = vdwg.mxu0
        %1775 = vmatpush.bf16.msra.mxu0 %v1321
        %1776 = vmatpush.bf16.msra.mxu0 %v1317
        %1777 = vmatpush.bf16.msra.mxu0 %v1313
        %1778 = vmatpush.bf16.msra.mxu0 %v1309
        %1779 = vmatpush.bf16.msra.mxu0 %v1305
        %1780 = vmatpush.bf16.msra.mxu0 %v1301
        %1781 = vmatpush.bf16.msra.mxu0 %v1297
        %1782 = vmatpush.bf16.msra.mxu0 %v1293
        %1783 = vmatmul.bf16.gmra.mxu0 %v599
        %v1784 = vpop.f32.mrf.mxu0
        %v1785 = vadd.f32 0.0, %v1784
        %v1786 = vpop.f32.mrf.mxu0
        %v1787 = vadd.f32 0.0, %v1786
        %1788 = vmatmul.bf16.gmra.mxu0 %v601
        %v1789 = vpop.f32.mrf.mxu0
        %v1790 = vadd.f32 0.0, %v1789
        %v1791 = vpop.f32.mrf.mxu0
        %v1792 = vadd.f32 0.0, %v1791
        %1793 = vmatmul.bf16.gmra.mxu0 %v603
        %v1794 = vpop.f32.mrf.mxu0
        %v1795 = vadd.f32 0.0, %v1794
        %v1796 = vpop.f32.mrf.mxu0
        %v1797 = vadd.f32 0.0, %v1796
        %1798 = vmatmul.bf16.gmra.mxu0 %v605
        %v1799 = vpop.f32.mrf.mxu0
        %v1800 = vadd.f32 0.0, %v1799
        %v1801 = vpop.f32.mrf.mxu0
        %v1802 = vadd.f32 0.0, %v1801
        %1803 = vmatmul.bf16.gmra.mxu0 %v607
        %v1804 = vpop.f32.mrf.mxu0
        %v1805 = vadd.f32 0.0, %v1804
        %v1806 = vpop.f32.mrf.mxu0
        %v1807 = vadd.f32 0.0, %v1806
        %1808 = vmatmul.bf16.gmra.mxu0 %v609
        %v1809 = vpop.f32.mrf.mxu0
        %v1810 = vadd.f32 0.0, %v1809
        %v1811 = vpop.f32.mrf.mxu0
        %v1812 = vadd.f32 0.0, %v1811
        %1813 = vmatmul.bf16.gmra.mxu0 %v611
        %v1814 = vpop.f32.mrf.mxu0
        %v1815 = vadd.f32 0.0, %v1814
        %v1816 = vpop.f32.mrf.mxu0
        %v1817 = vadd.f32 0.0, %v1816
        %1818 = vmatmul.bf16.gmra.mxu0 %v613
        %v1819 = vpop.f32.mrf.mxu0
        %v1820 = vadd.f32 0.0, %v1819
        %v1821 = vpop.f32.mrf.mxu0
        %v1822 = vadd.f32 0.0, %v1821
        %1823 = vmatmul.bf16.gmra.mxu0 %v615
        %v1824 = vpop.f32.mrf.mxu0
        %v1825 = vadd.f32 0.0, %v1824
        %v1826 = vpop.f32.mrf.mxu0
        %v1827 = vadd.f32 0.0, %v1826
        %1828 = vmatmul.bf16.gmra.mxu0 %v617
        %v1829 = vpop.f32.mrf.mxu0
        %v1830 = vadd.f32 0.0, %v1829
        %v1831 = vpop.f32.mrf.mxu0
        %v1832 = vadd.f32 0.0, %v1831
        %1833 = vmatmul.bf16.gmra.mxu0 %v619
        %v1834 = vpop.f32.mrf.mxu0
        %v1835 = vadd.f32 0.0, %v1834
        %v1836 = vpop.f32.mrf.mxu0
        %v1837 = vadd.f32 0.0, %v1836
        %1838 = vmatmul.bf16.gmra.mxu0 %v621
        %v1839 = vpop.f32.mrf.mxu0
        %v1840 = vadd.f32 0.0, %v1839
        %v1841 = vpop.f32.mrf.mxu0
        %v1842 = vadd.f32 0.0, %v1841
        %1843 = vmatmul.bf16.gmra.mxu0 %v623
        %v1844 = vpop.f32.mrf.mxu0
        %v1845 = vadd.f32 0.0, %v1844
        %v1846 = vpop.f32.mrf.mxu0
        %v1847 = vadd.f32 0.0, %v1846
        %1848 = vmatmul.bf16.gmra.mxu0 %v625
        %v1849 = vpop.f32.mrf.mxu0
        %v1850 = vadd.f32 0.0, %v1849
        %v1851 = vpop.f32.mrf.mxu0
        %v1852 = vadd.f32 0.0, %v1851
        %1853 = vmatmul.bf16.gmra.mxu0 %v627
        %v1854 = vpop.f32.mrf.mxu0
        %v1855 = vadd.f32 0.0, %v1854
        %v1856 = vpop.f32.mrf.mxu0
        %v1857 = vadd.f32 0.0, %v1856
        %1858 = vmatmul.bf16.gmra.mxu0 %v629
        %v1859 = vpop.f32.mrf.mxu0
        %v1860 = vadd.f32 0.0, %v1859
        %v1861 = vpop.f32.mrf.mxu0
        %v1862 = vadd.f32 0.0, %v1861
        %1863 = vdwg.mxu0
        %1864 = vmatpush.bf16.msra.mxu0 %v1353
        %1865 = vmatpush.bf16.msra.mxu0 %v1349
        %1866 = vmatpush.bf16.msra.mxu0 %v1345
        %1867 = vmatpush.bf16.msra.mxu0 %v1341
        %1868 = vmatpush.bf16.msra.mxu0 %v1337
        %1869 = vmatpush.bf16.msra.mxu0 %v1333
        %1870 = vmatpush.bf16.msra.mxu0 %v1329
        %1871 = vmatpush.bf16.msra.mxu0 %v1325
        %1872 = vmatmul.bf16.gmra.mxu0 %v600
        %v1873 = vpop.f32.mrf.mxu0
        %v1874 = vadd.f32 %v1785, %v1873
        %v1875 = vpop.f32.mrf.mxu0
        %v1876 = vadd.f32 %v1787, %v1875
        %1877 = vmatmul.bf16.gmra.mxu0 %v602
        %v1878 = vpop.f32.mrf.mxu0
        %v1879 = vadd.f32 %v1790, %v1878
        %v1880 = vpop.f32.mrf.mxu0
        %v1881 = vadd.f32 %v1792, %v1880
        %1882 = vmatmul.bf16.gmra.mxu0 %v604
        %v1883 = vpop.f32.mrf.mxu0
        %v1884 = vadd.f32 %v1795, %v1883
        %v1885 = vpop.f32.mrf.mxu0
        %v1886 = vadd.f32 %v1797, %v1885
        %1887 = vmatmul.bf16.gmra.mxu0 %v606
        %v1888 = vpop.f32.mrf.mxu0
        %v1889 = vadd.f32 %v1800, %v1888
        %v1890 = vpop.f32.mrf.mxu0
        %v1891 = vadd.f32 %v1802, %v1890
        %1892 = vmatmul.bf16.gmra.mxu0 %v608
        %v1893 = vpop.f32.mrf.mxu0
        %v1894 = vadd.f32 %v1805, %v1893
        %v1895 = vpop.f32.mrf.mxu0
        %v1896 = vadd.f32 %v1807, %v1895
        %1897 = vmatmul.bf16.gmra.mxu0 %v610
        %v1898 = vpop.f32.mrf.mxu0
        %v1899 = vadd.f32 %v1810, %v1898
        %v1900 = vpop.f32.mrf.mxu0
        %v1901 = vadd.f32 %v1812, %v1900
        %1902 = vmatmul.bf16.gmra.mxu0 %v612
        %v1903 = vpop.f32.mrf.mxu0
        %v1904 = vadd.f32 %v1815, %v1903
        %v1905 = vpop.f32.mrf.mxu0
        %v1906 = vadd.f32 %v1817, %v1905
        %1907 = vmatmul.bf16.gmra.mxu0 %v614
        %v1908 = vpop.f32.mrf.mxu0
        %v1909 = vadd.f32 %v1820, %v1908
        %v1910 = vpop.f32.mrf.mxu0
        %v1911 = vadd.f32 %v1822, %v1910
        %1912 = vmatmul.bf16.gmra.mxu0 %v616
        %v1913 = vpop.f32.mrf.mxu0
        %v1914 = vadd.f32 %v1825, %v1913
        %v1915 = vpop.f32.mrf.mxu0
        %v1916 = vadd.f32 %v1827, %v1915
        %1917 = vmatmul.bf16.gmra.mxu0 %v618
        %v1918 = vpop.f32.mrf.mxu0
        %v1919 = vadd.f32 %v1830, %v1918
        %v1920 = vpop.f32.mrf.mxu0
        %v1921 = vadd.f32 %v1832, %v1920
        %1922 = vmatmul.bf16.gmra.mxu0 %v620
        %v1923 = vpop.f32.mrf.mxu0
        %v1924 = vadd.f32 %v1835, %v1923
        %v1925 = vpop.f32.mrf.mxu0
        %v1926 = vadd.f32 %v1837, %v1925
        %1927 = vmatmul.bf16.gmra.mxu0 %v622
        %v1928 = vpop.f32.mrf.mxu0
        %v1929 = vadd.f32 %v1840, %v1928
        %v1930 = vpop.f32.mrf.mxu0
        %v1931 = vadd.f32 %v1842, %v1930
        %1932 = vmatmul.bf16.gmra.mxu0 %v624
        %v1933 = vpop.f32.mrf.mxu0
        %v1934 = vadd.f32 %v1845, %v1933
        %v1935 = vpop.f32.mrf.mxu0
        %v1936 = vadd.f32 %v1847, %v1935
        %1937 = vmatmul.bf16.gmra.mxu0 %v626
        %v1938 = vpop.f32.mrf.mxu0
        %v1939 = vadd.f32 %v1850, %v1938
        %v1940 = vpop.f32.mrf.mxu0
        %v1941 = vadd.f32 %v1852, %v1940
        %1942 = vmatmul.bf16.gmra.mxu0 %v628
        %v1943 = vpop.f32.mrf.mxu0
        %v1944 = vadd.f32 %v1855, %v1943
        %v1945 = vpop.f32.mrf.mxu0
        %v1946 = vadd.f32 %v1857, %v1945
        %1947 = vmatmul.bf16.gmra.mxu0 %v630
        %v1948 = vpop.f32.mrf.mxu0
        %v1949 = vadd.f32 %v1860, %v1948
        %v1950 = vpop.f32.mrf.mxu0
        %v1951 = vadd.f32 %v1862, %v1950
        %1952 = vdwg.mxu0
        %1953 = vmatpush.bf16.msra.mxu0 %v1322
        %1954 = vmatpush.bf16.msra.mxu0 %v1318
        %1955 = vmatpush.bf16.msra.mxu0 %v1314
        %1956 = vmatpush.bf16.msra.mxu0 %v1310
        %1957 = vmatpush.bf16.msra.mxu0 %v1306
        %1958 = vmatpush.bf16.msra.mxu0 %v1302
        %1959 = vmatpush.bf16.msra.mxu0 %v1298
        %1960 = vmatpush.bf16.msra.mxu0 %v1294
        %1961 = vmatmul.bf16.gmra.mxu0 %v599
        %v1962 = vpop.f32.mrf.mxu0
        %v1963 = vadd.f32 0.0, %v1962
        %v1964 = vpop.f32.mrf.mxu0
        %v1965 = vadd.f32 0.0, %v1964
        %1966 = vmatmul.bf16.gmra.mxu0 %v601
        %v1967 = vpop.f32.mrf.mxu0
        %v1968 = vadd.f32 0.0, %v1967
        %v1969 = vpop.f32.mrf.mxu0
        %v1970 = vadd.f32 0.0, %v1969
        %1971 = vmatmul.bf16.gmra.mxu0 %v603
        %v1972 = vpop.f32.mrf.mxu0
        %v1973 = vadd.f32 0.0, %v1972
        %v1974 = vpop.f32.mrf.mxu0
        %v1975 = vadd.f32 0.0, %v1974
        %1976 = vmatmul.bf16.gmra.mxu0 %v605
        %v1977 = vpop.f32.mrf.mxu0
        %v1978 = vadd.f32 0.0, %v1977
        %v1979 = vpop.f32.mrf.mxu0
        %v1980 = vadd.f32 0.0, %v1979
        %1981 = vmatmul.bf16.gmra.mxu0 %v607
        %v1982 = vpop.f32.mrf.mxu0
        %v1983 = vadd.f32 0.0, %v1982
        %v1984 = vpop.f32.mrf.mxu0
        %v1985 = vadd.f32 0.0, %v1984
        %1986 = vmatmul.bf16.gmra.mxu0 %v609
        %v1987 = vpop.f32.mrf.mxu0
        %v1988 = vadd.f32 0.0, %v1987
        %v1989 = vpop.f32.mrf.mxu0
        %v1990 = vadd.f32 0.0, %v1989
        %1991 = vmatmul.bf16.gmra.mxu0 %v611
        %v1992 = vpop.f32.mrf.mxu0
        %v1993 = vadd.f32 0.0, %v1992
        %v1994 = vpop.f32.mrf.mxu0
        %v1995 = vadd.f32 0.0, %v1994
        %1996 = vmatmul.bf16.gmra.mxu0 %v613
        %v1997 = vpop.f32.mrf.mxu0
        %v1998 = vadd.f32 0.0, %v1997
        %v1999 = vpop.f32.mrf.mxu0
        %v2000 = vadd.f32 0.0, %v1999
        %2001 = vmatmul.bf16.gmra.mxu0 %v615
        %v2002 = vpop.f32.mrf.mxu0
        %v2003 = vadd.f32 0.0, %v2002
        %v2004 = vpop.f32.mrf.mxu0
        %v2005 = vadd.f32 0.0, %v2004
        %2006 = vmatmul.bf16.gmra.mxu0 %v617
        %v2007 = vpop.f32.mrf.mxu0
        %v2008 = vadd.f32 0.0, %v2007
        %v2009 = vpop.f32.mrf.mxu0
        %v2010 = vadd.f32 0.0, %v2009
        %2011 = vmatmul.bf16.gmra.mxu0 %v619
        %v2012 = vpop.f32.mrf.mxu0
        %v2013 = vadd.f32 0.0, %v2012
        %v2014 = vpop.f32.mrf.mxu0
        %v2015 = vadd.f32 0.0, %v2014
        %2016 = vmatmul.bf16.gmra.mxu0 %v621
        %v2017 = vpop.f32.mrf.mxu0
        %v2018 = vadd.f32 0.0, %v2017
        %v2019 = vpop.f32.mrf.mxu0
        %v2020 = vadd.f32 0.0, %v2019
        %2021 = vmatmul.bf16.gmra.mxu0 %v623
        %v2022 = vpop.f32.mrf.mxu0
        %v2023 = vadd.f32 0.0, %v2022
        %v2024 = vpop.f32.mrf.mxu0
        %v2025 = vadd.f32 0.0, %v2024
        %2026 = vmatmul.bf16.gmra.mxu0 %v625
        %v2027 = vpop.f32.mrf.mxu0
        %v2028 = vadd.f32 0.0, %v2027
        %v2029 = vpop.f32.mrf.mxu0
        %v2030 = vadd.f32 0.0, %v2029
        %2031 = vmatmul.bf16.gmra.mxu0 %v627
        %v2032 = vpop.f32.mrf.mxu0
        %v2033 = vadd.f32 0.0, %v2032
        %v2034 = vpop.f32.mrf.mxu0
        %v2035 = vadd.f32 0.0, %v2034
        %2036 = vmatmul.bf16.gmra.mxu0 %v629
        %v2037 = vpop.f32.mrf.mxu0
        %v2038 = vadd.f32 0.0, %v2037
        %v2039 = vpop.f32.mrf.mxu0
        %v2040 = vadd.f32 0.0, %v2039
        %2041 = vdwg.mxu0
        %2042 = vmatpush.bf16.msra.mxu0 %v1354
        %2043 = vmatpush.bf16.msra.mxu0 %v1350
        %2044 = vmatpush.bf16.msra.mxu0 %v1346
        %2045 = vmatpush.bf16.msra.mxu0 %v1342
        %2046 = vmatpush.bf16.msra.mxu0 %v1338
        %2047 = vmatpush.bf16.msra.mxu0 %v1334
        %2048 = vmatpush.bf16.msra.mxu0 %v1330
        %2049 = vmatpush.bf16.msra.mxu0 %v1326
        %2050 = vmatmul.bf16.gmra.mxu0 %v600
        %v2051 = vpop.f32.mrf.mxu0
        %v2052 = vadd.f32 %v1963, %v2051
        %v2053 = vpop.f32.mrf.mxu0
        %v2054 = vadd.f32 %v1965, %v2053
        %2055 = vmatmul.bf16.gmra.mxu0 %v602
        %v2056 = vpop.f32.mrf.mxu0
        %v2057 = vadd.f32 %v1968, %v2056
        %v2058 = vpop.f32.mrf.mxu0
        %v2059 = vadd.f32 %v1970, %v2058
        %2060 = vmatmul.bf16.gmra.mxu0 %v604
        %v2061 = vpop.f32.mrf.mxu0
        %v2062 = vadd.f32 %v1973, %v2061
        %v2063 = vpop.f32.mrf.mxu0
        %v2064 = vadd.f32 %v1975, %v2063
        %2065 = vmatmul.bf16.gmra.mxu0 %v606
        %v2066 = vpop.f32.mrf.mxu0
        %v2067 = vadd.f32 %v1978, %v2066
        %v2068 = vpop.f32.mrf.mxu0
        %v2069 = vadd.f32 %v1980, %v2068
        %2070 = vmatmul.bf16.gmra.mxu0 %v608
        %v2071 = vpop.f32.mrf.mxu0
        %v2072 = vadd.f32 %v1983, %v2071
        %v2073 = vpop.f32.mrf.mxu0
        %v2074 = vadd.f32 %v1985, %v2073
        %2075 = vmatmul.bf16.gmra.mxu0 %v610
        %v2076 = vpop.f32.mrf.mxu0
        %v2077 = vadd.f32 %v1988, %v2076
        %v2078 = vpop.f32.mrf.mxu0
        %v2079 = vadd.f32 %v1990, %v2078
        %2080 = vmatmul.bf16.gmra.mxu0 %v612
        %v2081 = vpop.f32.mrf.mxu0
        %v2082 = vadd.f32 %v1993, %v2081
        %v2083 = vpop.f32.mrf.mxu0
        %v2084 = vadd.f32 %v1995, %v2083
        %2085 = vmatmul.bf16.gmra.mxu0 %v614
        %v2086 = vpop.f32.mrf.mxu0
        %v2087 = vadd.f32 %v1998, %v2086
        %v2088 = vpop.f32.mrf.mxu0
        %v2089 = vadd.f32 %v2000, %v2088
        %2090 = vmatmul.bf16.gmra.mxu0 %v616
        %v2091 = vpop.f32.mrf.mxu0
        %v2092 = vadd.f32 %v2003, %v2091
        %v2093 = vpop.f32.mrf.mxu0
        %v2094 = vadd.f32 %v2005, %v2093
        %2095 = vmatmul.bf16.gmra.mxu0 %v618
        %v2096 = vpop.f32.mrf.mxu0
        %v2097 = vadd.f32 %v2008, %v2096
        %v2098 = vpop.f32.mrf.mxu0
        %v2099 = vadd.f32 %v2010, %v2098
        %2100 = vmatmul.bf16.gmra.mxu0 %v620
        %v2101 = vpop.f32.mrf.mxu0
        %v2102 = vadd.f32 %v2013, %v2101
        %v2103 = vpop.f32.mrf.mxu0
        %v2104 = vadd.f32 %v2015, %v2103
        %2105 = vmatmul.bf16.gmra.mxu0 %v622
        %v2106 = vpop.f32.mrf.mxu0
        %v2107 = vadd.f32 %v2018, %v2106
        %v2108 = vpop.f32.mrf.mxu0
        %v2109 = vadd.f32 %v2020, %v2108
        %2110 = vmatmul.bf16.gmra.mxu0 %v624
        %v2111 = vpop.f32.mrf.mxu0
        %v2112 = vadd.f32 %v2023, %v2111
        %v2113 = vpop.f32.mrf.mxu0
        %v2114 = vadd.f32 %v2025, %v2113
        %2115 = vmatmul.bf16.gmra.mxu0 %v626
        %v2116 = vpop.f32.mrf.mxu0
        %v2117 = vadd.f32 %v2028, %v2116
        %v2118 = vpop.f32.mrf.mxu0
        %v2119 = vadd.f32 %v2030, %v2118
        %2120 = vmatmul.bf16.gmra.mxu0 %v628
        %v2121 = vpop.f32.mrf.mxu0
        %v2122 = vadd.f32 %v2033, %v2121
        %v2123 = vpop.f32.mrf.mxu0
        %v2124 = vadd.f32 %v2035, %v2123
        %2125 = vmatmul.bf16.gmra.mxu0 %v630
        %v2126 = vpop.f32.mrf.mxu0
        %v2127 = vadd.f32 %v2038, %v2126
        %v2128 = vpop.f32.mrf.mxu0
        %v2129 = vadd.f32 %v2040, %v2128
        %2130 = vdwg.mxu0
        %v2131 = vld [vmem:[#allocation7] sm:$0x3]
        %v2132 = vmul.f32 %v898, %v898
        %v2133 = vmul.f32 %v996, %v996
        %v2134 = vmul.f32 %v900, %v900
        %v2135 = vmul.f32 %v998, %v998
        %v2136 = vmul.f32 %v903, %v903
        %v2137 = vmul.f32 %v1001, %v1001
        %v2138 = vmul.f32 %v905, %v905
        %v2139 = vmul.f32 %v1003, %v1003
        %v2140 = vmul.f32 %v908, %v908
        %v2141 = vmul.f32 %v1006, %v1006
        %v2142 = vmul.f32 %v910, %v910
        %v2143 = vmul.f32 %v1008, %v1008
        %v2144 = vmul.f32 %v913, %v913
        %v2145 = vmul.f32 %v1011, %v1011
        %v2146 = vmul.f32 %v915, %v915
        %v2147 = vmul.f32 %v1013, %v1013
        %v2148 = vmul.f32 %v918, %v918
        %v2149 = vmul.f32 %v1016, %v1016
        %v2150 = vmul.f32 %v920, %v920
        %v2151 = vmul.f32 %v1018, %v1018
        %v2152 = vmul.f32 %v923, %v923
        %v2153 = vmul.f32 %v1021, %v1021
        %v2154 = vmul.f32 %v925, %v925
        %v2155 = vmul.f32 %v1023, %v1023
        %v2156 = vmul.f32 %v928, %v928
        %v2157 = vmul.f32 %v1026, %v1026
        %v2158 = vmul.f32 %v930, %v930
        %v2159 = vmul.f32 %v1028, %v1028
        %v2160 = vmul.f32 %v933, %v933
        %v2161 = vmul.f32 %v1031, %v1031
        %v2162 = vmul.f32 %v935, %v935
        %v2163 = vmul.f32 %v1033, %v1033
        %v2164 = vadd.f32 %v2132, %v2133
        %2165 = vadd.xlane.f32.xlu0 %v2164
        %v2166 = vpop.xlane.xlu0 %2165
        %v2167 = vadd.f32 %v2134, %v2135
        %2168 = vadd.xlane.f32.xlu0 %v2167
        %v2169 = vpop.xlane.xlu0 %2168
        %v2170 = vadd.f32 %v2136, %v2137
        %2171 = vadd.xlane.f32.xlu0 %v2170
        %v2172 = vpop.xlane.xlu0 %2171
        %v2173 = vadd.f32 %v2138, %v2139
        %2174 = vadd.xlane.f32.xlu0 %v2173
        %v2175 = vpop.xlane.xlu0 %2174
        %v2176 = vadd.f32 %v2140, %v2141
        %2177 = vadd.xlane.f32.xlu0 %v2176
        %v2178 = vpop.xlane.xlu0 %2177
        %v2179 = vadd.f32 %v2142, %v2143
        %2180 = vadd.xlane.f32.xlu0 %v2179
        %v2181 = vpop.xlane.xlu0 %2180
        %v2182 = vadd.f32 %v2144, %v2145
        %2183 = vadd.xlane.f32.xlu0 %v2182
        %v2184 = vpop.xlane.xlu0 %2183
        %v2185 = vadd.f32 %v2146, %v2147
        %2186 = vadd.xlane.f32.xlu0 %v2185
        %v2187 = vpop.xlane.xlu0 %2186
        %v2188 = vadd.f32 %v2148, %v2149
        %2189 = vadd.xlane.f32.xlu0 %v2188
        %v2190 = vpop.xlane.xlu0 %2189
        %v2191 = vadd.f32 %v2150, %v2151
        %2192 = vadd.xlane.f32.xlu0 %v2191
        %v2193 = vpop.xlane.xlu0 %2192
        %v2194 = vadd.f32 %v2152, %v2153
        %2195 = vadd.xlane.f32.xlu0 %v2194
        %v2196 = vpop.xlane.xlu0 %2195
        %v2197 = vadd.f32 %v2154, %v2155
        %2198 = vadd.xlane.f32.xlu0 %v2197
        %v2199 = vpop.xlane.xlu0 %2198
        %v2200 = vadd.f32 %v2156, %v2157
        %2201 = vadd.xlane.f32.xlu0 %v2200
        %v2202 = vpop.xlane.xlu0 %2201
        %v2203 = vadd.f32 %v2158, %v2159
        %2204 = vadd.xlane.f32.xlu0 %v2203
        %v2205 = vpop.xlane.xlu0 %2204
        %v2206 = vadd.f32 %v2160, %v2161
        %2207 = vadd.xlane.f32.xlu0 %v2206
        %v2208 = vpop.xlane.xlu0 %2207
        %v2209 = vadd.f32 %v2162, %v2163
        %2210 = vadd.xlane.f32.xlu0 %v2209
        %v2211 = vpop.xlane.xlu0 %2210
        %v2212 = vrcp.pop 256.0
        %v2213 = vmul.f32 256.0, %v2212
        %v2214 = vsub.f32 1.0, %v2213
        %v2215 = vmul.f32 %v2212, %v2214
        %v2216 = vadd.f32 %v2212, %v2215
        %vm2217 = vweird.f32 %v2212
        %v2218 = vsel %vm2217, %v2212, %v2216
        %v2219 = vmul.f32 %v2166, %v2218
        %v2220 = vmul.f32 %v2169, %v2218
        %v2221 = vmul.f32 %v2172, %v2218
        %v2222 = vmul.f32 %v2175, %v2218
        %v2223 = vmul.f32 %v2178, %v2218
        %v2224 = vmul.f32 %v2181, %v2218
        %v2225 = vmul.f32 %v2184, %v2218
        %v2226 = vmul.f32 %v2187, %v2218
        %v2227 = vmul.f32 %v2190, %v2218
        %v2228 = vmul.f32 %v2193, %v2218
        %v2229 = vmul.f32 %v2196, %v2218
        %v2230 = vmul.f32 %v2199, %v2218
        %v2231 = vmul.f32 %v2202, %v2218
        %v2232 = vmul.f32 %v2205, %v2218
        %v2233 = vmul.f32 %v2208, %v2218
        %v2234 = vmul.f32 %v2211, %v2218
        %v2235 = vadd.f32 %v2219, 1e-06
        %v2236 = vadd.f32 %v2220, 1e-06
        %v2237 = vadd.f32 %v2221, 1e-06
        %v2238 = vadd.f32 %v2222, 1e-06
        %v2239 = vadd.f32 %v2223, 1e-06
        %v2240 = vadd.f32 %v2224, 1e-06
        %v2241 = vadd.f32 %v2225, 1e-06
        %v2242 = vadd.f32 %v2226, 1e-06
        %v2243 = vadd.f32 %v2227, 1e-06
        %v2244 = vadd.f32 %v2228, 1e-06
        %v2245 = vadd.f32 %v2229, 1e-06
        %v2246 = vadd.f32 %v2230, 1e-06
        %v2247 = vadd.f32 %v2231, 1e-06
        %v2248 = vadd.f32 %v2232, 1e-06
        %v2249 = vadd.f32 %v2233, 1e-06
        %v2250 = vadd.f32 %v2234, 1e-06
        %v2251 = vrsqrt.pop %v2235
        %v2252 = vmul.f32 %v2251, %v2235
        %v2253 = vmul.f32 %v2252, %v2251
        %v2254 = vmul.f32 0.5, %v2253
        %v2255 = vsub.f32 1.5, %v2254
        %v2256 = vmul.f32 %v2251, %v2255
        %vm2257 = vweird.f32 %v2235
        %vm2258 = vweird.f32 %v2251
        %vm2259 = vmor %vm2257, %vm2258
        %v2260 = vsel %vm2259, %v2251, %v2256
        %v2261 = vrsqrt.pop %v2236
        %v2262 = vmul.f32 %v2261, %v2236
        %v2263 = vmul.f32 %v2262, %v2261
        %v2264 = vmul.f32 0.5, %v2263
        %v2265 = vsub.f32 1.5, %v2264
        %v2266 = vmul.f32 %v2261, %v2265
        %vm2267 = vweird.f32 %v2236
        %vm2268 = vweird.f32 %v2261
        %vm2269 = vmor %vm2267, %vm2268
        %v2270 = vsel %vm2269, %v2261, %v2266
        %v2271 = vrsqrt.pop %v2237
        %v2272 = vmul.f32 %v2271, %v2237
        %v2273 = vmul.f32 %v2272, %v2271
        %v2274 = vmul.f32 0.5, %v2273
        %v2275 = vsub.f32 1.5, %v2274
        %v2276 = vmul.f32 %v2271, %v2275
        %vm2277 = vweird.f32 %v2237
        %vm2278 = vweird.f32 %v2271
        %vm2279 = vmor %vm2277, %vm2278
        %v2280 = vsel %vm2279, %v2271, %v2276
        %v2281 = vrsqrt.pop %v2238
        %v2282 = vmul.f32 %v2281, %v2238
        %v2283 = vmul.f32 %v2282, %v2281
        %v2284 = vmul.f32 0.5, %v2283
        %v2285 = vsub.f32 1.5, %v2284
        %v2286 = vmul.f32 %v2281, %v2285
        %vm2287 = vweird.f32 %v2238
        %vm2288 = vweird.f32 %v2281
        %vm2289 = vmor %vm2287, %vm2288
        %v2290 = vsel %vm2289, %v2281, %v2286
        %v2291 = vrsqrt.pop %v2239
        %v2292 = vmul.f32 %v2291, %v2239
        %v2293 = vmul.f32 %v2292, %v2291
        %v2294 = vmul.f32 0.5, %v2293
        %v2295 = vsub.f32 1.5, %v2294
        %v2296 = vmul.f32 %v2291, %v2295
        %vm2297 = vweird.f32 %v2239
        %vm2298 = vweird.f32 %v2291
        %vm2299 = vmor %vm2297, %vm2298
        %v2300 = vsel %vm2299, %v2291, %v2296
        %v2301 = vrsqrt.pop %v2240
        %v2302 = vmul.f32 %v2301, %v2240
        %v2303 = vmul.f32 %v2302, %v2301
        %v2304 = vmul.f32 0.5, %v2303
        %v2305 = vsub.f32 1.5, %v2304
        %v2306 = vmul.f32 %v2301, %v2305
        %vm2307 = vweird.f32 %v2240
        %vm2308 = vweird.f32 %v2301
        %vm2309 = vmor %vm2307, %vm2308
        %v2310 = vsel %vm2309, %v2301, %v2306
        %v2311 = vrsqrt.pop %v2241
        %v2312 = vmul.f32 %v2311, %v2241
        %v2313 = vmul.f32 %v2312, %v2311
        %v2314 = vmul.f32 0.5, %v2313
        %v2315 = vsub.f32 1.5, %v2314
        %v2316 = vmul.f32 %v2311, %v2315
        %vm2317 = vweird.f32 %v2241
        %vm2318 = vweird.f32 %v2311
        %vm2319 = vmor %vm2317, %vm2318
        %v2320 = vsel %vm2319, %v2311, %v2316
        %v2321 = vrsqrt.pop %v2242
        %v2322 = vmul.f32 %v2321, %v2242
        %v2323 = vmul.f32 %v2322, %v2321
        %v2324 = vmul.f32 0.5, %v2323
        %v2325 = vsub.f32 1.5, %v2324
        %v2326 = vmul.f32 %v2321, %v2325
        %vm2327 = vweird.f32 %v2242
        %vm2328 = vweird.f32 %v2321
        %vm2329 = vmor %vm2327, %vm2328
        %v2330 = vsel %vm2329, %v2321, %v2326
        %v2331 = vrsqrt.pop %v2243
        %v2332 = vmul.f32 %v2331, %v2243
        %v2333 = vmul.f32 %v2332, %v2331
        %v2334 = vmul.f32 0.5, %v2333
        %v2335 = vsub.f32 1.5, %v2334
        %v2336 = vmul.f32 %v2331, %v2335
        %vm2337 = vweird.f32 %v2243
        %vm2338 = vweird.f32 %v2331
        %vm2339 = vmor %vm2337, %vm2338
        %v2340 = vsel %vm2339, %v2331, %v2336
        %v2341 = vrsqrt.pop %v2244
        %v2342 = vmul.f32 %v2341, %v2244
        %v2343 = vmul.f32 %v2342, %v2341
        %v2344 = vmul.f32 0.5, %v2343
        %v2345 = vsub.f32 1.5, %v2344
        %v2346 = vmul.f32 %v2341, %v2345
        %vm2347 = vweird.f32 %v2244
        %vm2348 = vweird.f32 %v2341
        %vm2349 = vmor %vm2347, %vm2348
        %v2350 = vsel %vm2349, %v2341, %v2346
        %v2351 = vrsqrt.pop %v2245
        %v2352 = vmul.f32 %v2351, %v2245
        %v2353 = vmul.f32 %v2352, %v2351
        %v2354 = vmul.f32 0.5, %v2353
        %v2355 = vsub.f32 1.5, %v2354
        %v2356 = vmul.f32 %v2351, %v2355
        %vm2357 = vweird.f32 %v2245
        %vm2358 = vweird.f32 %v2351
        %vm2359 = vmor %vm2357, %vm2358
        %v2360 = vsel %vm2359, %v2351, %v2356
        %v2361 = vrsqrt.pop %v2246
        %v2362 = vmul.f32 %v2361, %v2246
        %v2363 = vmul.f32 %v2362, %v2361
        %v2364 = vmul.f32 0.5, %v2363
        %v2365 = vsub.f32 1.5, %v2364
        %v2366 = vmul.f32 %v2361, %v2365
        %vm2367 = vweird.f32 %v2246
        %vm2368 = vweird.f32 %v2361
        %vm2369 = vmor %vm2367, %vm2368
        %v2370 = vsel %vm2369, %v2361, %v2366
        %v2371 = vrsqrt.pop %v2247
        %v2372 = vmul.f32 %v2371, %v2247
        %v2373 = vmul.f32 %v2372, %v2371
        %v2374 = vmul.f32 0.5, %v2373
        %v2375 = vsub.f32 1.5, %v2374
        %v2376 = vmul.f32 %v2371, %v2375
        %vm2377 = vweird.f32 %v2247
        %vm2378 = vweird.f32 %v2371
        %vm2379 = vmor %vm2377, %vm2378
        %v2380 = vsel %vm2379, %v2371, %v2376
        %v2381 = vrsqrt.pop %v2248
        %v2382 = vmul.f32 %v2381, %v2248
        %v2383 = vmul.f32 %v2382, %v2381
        %v2384 = vmul.f32 0.5, %v2383
        %v2385 = vsub.f32 1.5, %v2384
        %v2386 = vmul.f32 %v2381, %v2385
        %vm2387 = vweird.f32 %v2248
        %vm2388 = vweird.f32 %v2381
        %vm2389 = vmor %vm2387, %vm2388
        %v2390 = vsel %vm2389, %v2381, %v2386
        %v2391 = vrsqrt.pop %v2249
        %v2392 = vmul.f32 %v2391, %v2249
        %v2393 = vmul.f32 %v2392, %v2391
        %v2394 = vmul.f32 0.5, %v2393
        %v2395 = vsub.f32 1.5, %v2394
        %v2396 = vmul.f32 %v2391, %v2395
        %vm2397 = vweird.f32 %v2249
        %vm2398 = vweird.f32 %v2391
        %vm2399 = vmor %vm2397, %vm2398
        %v2400 = vsel %vm2399, %v2391, %v2396
        %v2401 = vrsqrt.pop %v2250
        %v2402 = vmul.f32 %v2401, %v2250
        %v2403 = vmul.f32 %v2402, %v2401
        %v2404 = vmul.f32 0.5, %v2403
        %v2405 = vsub.f32 1.5, %v2404
        %v2406 = vmul.f32 %v2401, %v2405
        %vm2407 = vweird.f32 %v2250
        %vm2408 = vweird.f32 %v2401
        %vm2409 = vmor %vm2407, %vm2408
        %v2410 = vsel %vm2409, %v2401, %v2406
        %v2411 = vmul.f32 %v898, %v2260
        %v2412 = vmul.f32 %v996, %v2260
        %v2413 = vmul.f32 %v900, %v2270
        %v2414 = vmul.f32 %v998, %v2270
        %v2415 = vmul.f32 %v903, %v2280
        %v2416 = vmul.f32 %v1001, %v2280
        %v2417 = vmul.f32 %v905, %v2290
        %v2418 = vmul.f32 %v1003, %v2290
        %v2419 = vmul.f32 %v908, %v2300
        %v2420 = vmul.f32 %v1006, %v2300
        %v2421 = vmul.f32 %v910, %v2310
        %v2422 = vmul.f32 %v1008, %v2310
        %v2423 = vmul.f32 %v913, %v2320
        %v2424 = vmul.f32 %v1011, %v2320
        %v2425 = vmul.f32 %v915, %v2330
        %v2426 = vmul.f32 %v1013, %v2330
        %v2427 = vmul.f32 %v918, %v2340
        %v2428 = vmul.f32 %v1016, %v2340
        %v2429 = vmul.f32 %v920, %v2350
        %v2430 = vmul.f32 %v1018, %v2350
        %v2431 = vmul.f32 %v923, %v2360
        %v2432 = vmul.f32 %v1021, %v2360
        %v2433 = vmul.f32 %v925, %v2370
        %v2434 = vmul.f32 %v1023, %v2370
        %v2435 = vmul.f32 %v928, %v2380
        %v2436 = vmul.f32 %v1026, %v2380
        %v2437 = vmul.f32 %v930, %v2390
        %v2438 = vmul.f32 %v1028, %v2390
        %v2439 = vmul.f32 %v933, %v2400
        %v2440 = vmul.f32 %v1031, %v2400
        %v2441 = vmul.f32 %v935, %v2410
        %v2442 = vmul.f32 %v1033, %v2410
        %v2444 = vperm.slane %v2131, 0
        %v2445 = vperm.slane %v2131, 1
        %v2448 = vmul.f32 %v2411, %v2444
        %v2449 = vmul.f32 %v2412, %v2445
        %v2450 = vmul.f32 %v2413, %v2444
        %v2451 = vmul.f32 %v2414, %v2445
        %v2452 = vmul.f32 %v2415, %v2444
        %v2453 = vmul.f32 %v2416, %v2445
        %v2454 = vmul.f32 %v2417, %v2444
        %v2455 = vmul.f32 %v2418, %v2445
        %v2456 = vmul.f32 %v2419, %v2444
        %v2457 = vmul.f32 %v2420, %v2445
        %v2458 = vmul.f32 %v2421, %v2444
        %v2459 = vmul.f32 %v2422, %v2445
        %v2460 = vmul.f32 %v2423, %v2444
        %v2461 = vmul.f32 %v2424, %v2445
        %v2462 = vmul.f32 %v2425, %v2444
        %v2463 = vmul.f32 %v2426, %v2445
        %v2464 = vmul.f32 %v2427, %v2444
        %v2465 = vmul.f32 %v2428, %v2445
        %v2466 = vmul.f32 %v2429, %v2444
        %v2467 = vmul.f32 %v2430, %v2445
        %v2468 = vmul.f32 %v2431, %v2444
        %v2469 = vmul.f32 %v2432, %v2445
        %v2470 = vmul.f32 %v2433, %v2444
        %v2471 = vmul.f32 %v2434, %v2445
        %v2472 = vmul.f32 %v2435, %v2444
        %v2473 = vmul.f32 %v2436, %v2445
        %v2474 = vmul.f32 %v2437, %v2444
        %v2475 = vmul.f32 %v2438, %v2445
        %v2476 = vmul.f32 %v2439, %v2444
        %v2477 = vmul.f32 %v2440, %v2445
        %v2478 = vmul.f32 %v2441, %v2444
        %v2479 = vmul.f32 %v2442, %v2445
        %v2480 = vld [vmem:[%s3] sm:$0x3]
        %v2481 = vmul.f32 %v1518, %v1518
        %v2482 = vmul.f32 %v1696, %v1696
        %v2483 = vmul.f32 %v1520, %v1520
        %v2484 = vmul.f32 %v1698, %v1698
        %v2485 = vmul.f32 %v1523, %v1523
        %v2486 = vmul.f32 %v1701, %v1701
        %v2487 = vmul.f32 %v1525, %v1525
        %v2488 = vmul.f32 %v1703, %v1703
        %v2489 = vmul.f32 %v1528, %v1528
        %v2490 = vmul.f32 %v1706, %v1706
        %v2491 = vmul.f32 %v1530, %v1530
        %v2492 = vmul.f32 %v1708, %v1708
        %v2493 = vmul.f32 %v1533, %v1533
        %v2494 = vmul.f32 %v1711, %v1711
        %v2495 = vmul.f32 %v1535, %v1535
        %v2496 = vmul.f32 %v1713, %v1713
        %v2497 = vmul.f32 %v1538, %v1538
        %v2498 = vmul.f32 %v1716, %v1716
        %v2499 = vmul.f32 %v1540, %v1540
        %v2500 = vmul.f32 %v1718, %v1718
        %v2501 = vmul.f32 %v1543, %v1543
        %v2502 = vmul.f32 %v1721, %v1721
        %v2503 = vmul.f32 %v1545, %v1545
        %v2504 = vmul.f32 %v1723, %v1723
        %v2505 = vmul.f32 %v1548, %v1548
        %v2506 = vmul.f32 %v1726, %v1726
        %v2507 = vmul.f32 %v1550, %v1550
        %v2508 = vmul.f32 %v1728, %v1728
        %v2509 = vmul.f32 %v1553, %v1553
        %v2510 = vmul.f32 %v1731, %v1731
        %v2511 = vmul.f32 %v1555, %v1555
        %v2512 = vmul.f32 %v1733, %v1733
        %v2513 = vmul.f32 %v1558, %v1558
        %v2514 = vmul.f32 %v1736, %v1736
        %v2515 = vmul.f32 %v1560, %v1560
        %v2516 = vmul.f32 %v1738, %v1738
        %v2517 = vmul.f32 %v1563, %v1563
        %v2518 = vmul.f32 %v1741, %v1741
        %v2519 = vmul.f32 %v1565, %v1565
        %v2520 = vmul.f32 %v1743, %v1743
        %v2521 = vmul.f32 %v1568, %v1568
        %v2522 = vmul.f32 %v1746, %v1746
        %v2523 = vmul.f32 %v1570, %v1570
        %v2524 = vmul.f32 %v1748, %v1748
        %v2525 = vmul.f32 %v1573, %v1573
        %v2526 = vmul.f32 %v1751, %v1751
        %v2527 = vmul.f32 %v1575, %v1575
        %v2528 = vmul.f32 %v1753, %v1753
        %v2529 = vmul.f32 %v1578, %v1578
        %v2530 = vmul.f32 %v1756, %v1756
        %v2531 = vmul.f32 %v1580, %v1580
        %v2532 = vmul.f32 %v1758, %v1758
        %v2533 = vmul.f32 %v1583, %v1583
        %v2534 = vmul.f32 %v1761, %v1761
        %v2535 = vmul.f32 %v1585, %v1585
        %v2536 = vmul.f32 %v1763, %v1763
        %v2537 = vmul.f32 %v1588, %v1588
        %v2538 = vmul.f32 %v1766, %v1766
        %v2539 = vmul.f32 %v1590, %v1590
        %v2540 = vmul.f32 %v1768, %v1768
        %v2541 = vmul.f32 %v1593, %v1593
        %v2542 = vmul.f32 %v1771, %v1771
        %v2543 = vmul.f32 %v1595, %v1595
        %v2544 = vmul.f32 %v1773, %v1773
        %v2545 = vadd.f32 %v2481, %v2482
        %2546 = vadd.xlane.f32.xlu0 %v2545
        %v2547 = vpop.xlane.xlu0 %2546
        %v2548 = vadd.f32 %v2483, %v2484
        %2549 = vadd.xlane.f32.xlu0 %v2548
        %v2550 = vpop.xlane.xlu0 %2549
        %v2551 = vadd.f32 %v2485, %v2486
        %2552 = vadd.xlane.f32.xlu0 %v2551
        %v2553 = vpop.xlane.xlu0 %2552
        %v2554 = vadd.f32 %v2487, %v2488
        %2555 = vadd.xlane.f32.xlu0 %v2554
        %v2556 = vpop.xlane.xlu0 %2555
        %v2557 = vadd.f32 %v2489, %v2490
        %2558 = vadd.xlane.f32.xlu0 %v2557
        %v2559 = vpop.xlane.xlu0 %2558
        %v2560 = vadd.f32 %v2491, %v2492
        %2561 = vadd.xlane.f32.xlu0 %v2560
        %v2562 = vpop.xlane.xlu0 %2561
        %v2563 = vadd.f32 %v2493, %v2494
        %2564 = vadd.xlane.f32.xlu0 %v2563
        %v2565 = vpop.xlane.xlu0 %2564
        %v2566 = vadd.f32 %v2495, %v2496
        %2567 = vadd.xlane.f32.xlu0 %v2566
        %v2568 = vpop.xlane.xlu0 %2567
        %v2569 = vadd.f32 %v2497, %v2498
        %2570 = vadd.xlane.f32.xlu0 %v2569
        %v2571 = vpop.xlane.xlu0 %2570
        %v2572 = vadd.f32 %v2499, %v2500
        %2573 = vadd.xlane.f32.xlu0 %v2572
        %v2574 = vpop.xlane.xlu0 %2573
        %v2575 = vadd.f32 %v2501, %v2502
        %2576 = vadd.xlane.f32.xlu0 %v2575
        %v2577 = vpop.xlane.xlu0 %2576
        %v2578 = vadd.f32 %v2503, %v2504
        %2579 = vadd.xlane.f32.xlu0 %v2578
        %v2580 = vpop.xlane.xlu0 %2579
        %v2581 = vadd.f32 %v2505, %v2506
        %2582 = vadd.xlane.f32.xlu0 %v2581
        %v2583 = vpop.xlane.xlu0 %2582
        %v2584 = vadd.f32 %v2507, %v2508
        %2585 = vadd.xlane.f32.xlu0 %v2584
        %v2586 = vpop.xlane.xlu0 %2585
        %v2587 = vadd.f32 %v2509, %v2510
        %2588 = vadd.xlane.f32.xlu0 %v2587
        %v2589 = vpop.xlane.xlu0 %2588
        %v2590 = vadd.f32 %v2511, %v2512
        %2591 = vadd.xlane.f32.xlu0 %v2590
        %v2592 = vpop.xlane.xlu0 %2591
        %v2593 = vadd.f32 %v2513, %v2514
        %2594 = vadd.xlane.f32.xlu0 %v2593
        %v2595 = vpop.xlane.xlu0 %2594
        %v2596 = vadd.f32 %v2515, %v2516
        %2597 = vadd.xlane.f32.xlu0 %v2596
        %v2598 = vpop.xlane.xlu0 %2597
        %v2599 = vadd.f32 %v2517, %v2518
        %2600 = vadd.xlane.f32.xlu0 %v2599
        %v2601 = vpop.xlane.xlu0 %2600
        %v2602 = vadd.f32 %v2519, %v2520
        %2603 = vadd.xlane.f32.xlu0 %v2602
        %v2604 = vpop.xlane.xlu0 %2603
        %v2605 = vadd.f32 %v2521, %v2522
        %2606 = vadd.xlane.f32.xlu0 %v2605
        %v2607 = vpop.xlane.xlu0 %2606
        %v2608 = vadd.f32 %v2523, %v2524
        %2609 = vadd.xlane.f32.xlu0 %v2608
        %v2610 = vpop.xlane.xlu0 %2609
        %v2611 = vadd.f32 %v2525, %v2526
        %2612 = vadd.xlane.f32.xlu0 %v2611
        %v2613 = vpop.xlane.xlu0 %2612
        %v2614 = vadd.f32 %v2527, %v2528
        %2615 = vadd.xlane.f32.xlu0 %v2614
        %v2616 = vpop.xlane.xlu0 %2615
        %v2617 = vadd.f32 %v2529, %v2530
        %2618 = vadd.xlane.f32.xlu0 %v2617
        %v2619 = vpop.xlane.xlu0 %2618
        %v2620 = vadd.f32 %v2531, %v2532
        %2621 = vadd.xlane.f32.xlu0 %v2620
        %v2622 = vpop.xlane.xlu0 %2621
        %v2623 = vadd.f32 %v2533, %v2534
        %2624 = vadd.xlane.f32.xlu0 %v2623
        %v2625 = vpop.xlane.xlu0 %2624
        %v2626 = vadd.f32 %v2535, %v2536
        %2627 = vadd.xlane.f32.xlu0 %v2626
        %v2628 = vpop.xlane.xlu0 %2627
        %v2629 = vadd.f32 %v2537, %v2538
        %2630 = vadd.xlane.f32.xlu0 %v2629
        %v2631 = vpop.xlane.xlu0 %2630
        %v2632 = vadd.f32 %v2539, %v2540
        %2633 = vadd.xlane.f32.xlu0 %v2632
        %v2634 = vpop.xlane.xlu0 %2633
        %v2635 = vadd.f32 %v2541, %v2542
        %2636 = vadd.xlane.f32.xlu0 %v2635
        %v2637 = vpop.xlane.xlu0 %2636
        %v2638 = vadd.f32 %v2543, %v2544
        %2639 = vadd.xlane.f32.xlu0 %v2638
        %v2640 = vpop.xlane.xlu0 %2639
        %v2641 = vmul.f32 %v2547, %v2218
        %v2642 = vmul.f32 %v2550, %v2218
        %v2643 = vmul.f32 %v2553, %v2218
        %v2644 = vmul.f32 %v2556, %v2218
        %v2645 = vmul.f32 %v2559, %v2218
        %v2646 = vmul.f32 %v2562, %v2218
        %v2647 = vmul.f32 %v2565, %v2218
        %v2648 = vmul.f32 %v2568, %v2218
        %v2649 = vmul.f32 %v2571, %v2218
        %v2650 = vmul.f32 %v2574, %v2218
        %v2651 = vmul.f32 %v2577, %v2218
        %v2652 = vmul.f32 %v2580, %v2218
        %v2653 = vmul.f32 %v2583, %v2218
        %v2654 = vmul.f32 %v2586, %v2218
        %v2655 = vmul.f32 %v2589, %v2218
        %v2656 = vmul.f32 %v2592, %v2218
        %v2657 = vmul.f32 %v2595, %v2218
        %v2658 = vmul.f32 %v2598, %v2218
        %v2659 = vmul.f32 %v2601, %v2218
        %v2660 = vmul.f32 %v2604, %v2218
        %v2661 = vmul.f32 %v2607, %v2218
        %v2662 = vmul.f32 %v2610, %v2218
        %v2663 = vmul.f32 %v2613, %v2218
        %v2664 = vmul.f32 %v2616, %v2218
        %v2665 = vmul.f32 %v2619, %v2218
        %v2666 = vmul.f32 %v2622, %v2218
        %v2667 = vmul.f32 %v2625, %v2218
        %v2668 = vmul.f32 %v2628, %v2218
        %v2669 = vmul.f32 %v2631, %v2218
        %v2670 = vmul.f32 %v2634, %v2218
        %v2671 = vmul.f32 %v2637, %v2218
        %v2672 = vmul.f32 %v2640, %v2218
        %v2673 = vadd.f32 %v2641, 1e-06
        %v2674 = vadd.f32 %v2642, 1e-06
        %v2675 = vadd.f32 %v2643, 1e-06
        %v2676 = vadd.f32 %v2644, 1e-06
        %v2677 = vadd.f32 %v2645, 1e-06
        %v2678 = vadd.f32 %v2646, 1e-06
        %v2679 = vadd.f32 %v2647, 1e-06
        %v2680 = vadd.f32 %v2648, 1e-06
        %v2681 = vadd.f32 %v2649, 1e-06
        %v2682 = vadd.f32 %v2650, 1e-06
        %v2683 = vadd.f32 %v2651, 1e-06
        %v2684 = vadd.f32 %v2652, 1e-06
        %v2685 = vadd.f32 %v2653, 1e-06
        %v2686 = vadd.f32 %v2654, 1e-06
        %v2687 = vadd.f32 %v2655, 1e-06
        %v2688 = vadd.f32 %v2656, 1e-06
        %v2689 = vadd.f32 %v2657, 1e-06
        %v2690 = vadd.f32 %v2658, 1e-06
        %v2691 = vadd.f32 %v2659, 1e-06
        %v2692 = vadd.f32 %v2660, 1e-06
        %v2693 = vadd.f32 %v2661, 1e-06
        %v2694 = vadd.f32 %v2662, 1e-06
        %v2695 = vadd.f32 %v2663, 1e-06
        %v2696 = vadd.f32 %v2664, 1e-06
        %v2697 = vadd.f32 %v2665, 1e-06
        %v2698 = vadd.f32 %v2666, 1e-06
        %v2699 = vadd.f32 %v2667, 1e-06
        %v2700 = vadd.f32 %v2668, 1e-06
        %v2701 = vadd.f32 %v2669, 1e-06
        %v2702 = vadd.f32 %v2670, 1e-06
        %v2703 = vadd.f32 %v2671, 1e-06
        %v2704 = vadd.f32 %v2672, 1e-06
        %v2705 = vrsqrt.pop %v2673
        %v2706 = vmul.f32 %v2705, %v2673
        %v2707 = vmul.f32 %v2706, %v2705
        %v2708 = vmul.f32 0.5, %v2707
        %v2709 = vsub.f32 1.5, %v2708
        %v2710 = vmul.f32 %v2705, %v2709
        %vm2711 = vweird.f32 %v2673
        %vm2712 = vweird.f32 %v2705
        %vm2713 = vmor %vm2711, %vm2712
        %v2714 = vsel %vm2713, %v2705, %v2710
        %v2715 = vrsqrt.pop %v2674
        %v2716 = vmul.f32 %v2715, %v2674
        %v2717 = vmul.f32 %v2716, %v2715
        %v2718 = vmul.f32 0.5, %v2717
        %v2719 = vsub.f32 1.5, %v2718
        %v2720 = vmul.f32 %v2715, %v2719
        %vm2721 = vweird.f32 %v2674
        %vm2722 = vweird.f32 %v2715
        %vm2723 = vmor %vm2721, %vm2722
        %v2724 = vsel %vm2723, %v2715, %v2720
        %v2725 = vrsqrt.pop %v2675
        %v2726 = vmul.f32 %v2725, %v2675
        %v2727 = vmul.f32 %v2726, %v2725
        %v2728 = vmul.f32 0.5, %v2727
        %v2729 = vsub.f32 1.5, %v2728
        %v2730 = vmul.f32 %v2725, %v2729
        %vm2731 = vweird.f32 %v2675
        %vm2732 = vweird.f32 %v2725
        %vm2733 = vmor %vm2731, %vm2732
        %v2734 = vsel %vm2733, %v2725, %v2730
        %v2735 = vrsqrt.pop %v2676
        %v2736 = vmul.f32 %v2735, %v2676
        %v2737 = vmul.f32 %v2736, %v2735
        %v2738 = vmul.f32 0.5, %v2737
        %v2739 = vsub.f32 1.5, %v2738
        %v2740 = vmul.f32 %v2735, %v2739
        %vm2741 = vweird.f32 %v2676
        %vm2742 = vweird.f32 %v2735
        %vm2743 = vmor %vm2741, %vm2742
        %v2744 = vsel %vm2743, %v2735, %v2740
        %v2745 = vrsqrt.pop %v2677
        %v2746 = vmul.f32 %v2745, %v2677
        %v2747 = vmul.f32 %v2746, %v2745
        %v2748 = vmul.f32 0.5, %v2747
        %v2749 = vsub.f32 1.5, %v2748
        %v2750 = vmul.f32 %v2745, %v2749
        %vm2751 = vweird.f32 %v2677
        %vm2752 = vweird.f32 %v2745
        %vm2753 = vmor %vm2751, %vm2752
        %v2754 = vsel %vm2753, %v2745, %v2750
        %v2755 = vrsqrt.pop %v2678
        %v2756 = vmul.f32 %v2755, %v2678
        %v2757 = vmul.f32 %v2756, %v2755
        %v2758 = vmul.f32 0.5, %v2757
        %v2759 = vsub.f32 1.5, %v2758
        %v2760 = vmul.f32 %v2755, %v2759
        %vm2761 = vweird.f32 %v2678
        %vm2762 = vweird.f32 %v2755
        %vm2763 = vmor %vm2761, %vm2762
        %v2764 = vsel %vm2763, %v2755, %v2760
        %v2765 = vrsqrt.pop %v2679
        %v2766 = vmul.f32 %v2765, %v2679
        %v2767 = vmul.f32 %v2766, %v2765
        %v2768 = vmul.f32 0.5, %v2767
        %v2769 = vsub.f32 1.5, %v2768
        %v2770 = vmul.f32 %v2765, %v2769
        %vm2771 = vweird.f32 %v2679
        %vm2772 = vweird.f32 %v2765
        %vm2773 = vmor %vm2771, %vm2772
        %v2774 = vsel %vm2773, %v2765, %v2770
        %v2775 = vrsqrt.pop %v2680
        %v2776 = vmul.f32 %v2775, %v2680
        %v2777 = vmul.f32 %v2776, %v2775
        %v2778 = vmul.f32 0.5, %v2777
        %v2779 = vsub.f32 1.5, %v2778
        %v2780 = vmul.f32 %v2775, %v2779
        %vm2781 = vweird.f32 %v2680
        %vm2782 = vweird.f32 %v2775
        %vm2783 = vmor %vm2781, %vm2782
        %v2784 = vsel %vm2783, %v2775, %v2780
        %v2785 = vrsqrt.pop %v2681
        %v2786 = vmul.f32 %v2785, %v2681
        %v2787 = vmul.f32 %v2786, %v2785
        %v2788 = vmul.f32 0.5, %v2787
        %v2789 = vsub.f32 1.5, %v2788
        %v2790 = vmul.f32 %v2785, %v2789
        %vm2791 = vweird.f32 %v2681
        %vm2792 = vweird.f32 %v2785
        %vm2793 = vmor %vm2791, %vm2792
        %v2794 = vsel %vm2793, %v2785, %v2790
        %v2795 = vrsqrt.pop %v2682
        %v2796 = vmul.f32 %v2795, %v2682
        %v2797 = vmul.f32 %v2796, %v2795
        %v2798 = vmul.f32 0.5, %v2797
        %v2799 = vsub.f32 1.5, %v2798
        %v2800 = vmul.f32 %v2795, %v2799
        %vm2801 = vweird.f32 %v2682
        %vm2802 = vweird.f32 %v2795
        %vm2803 = vmor %vm2801, %vm2802
        %v2804 = vsel %vm2803, %v2795, %v2800
        %v2805 = vrsqrt.pop %v2683
        %v2806 = vmul.f32 %v2805, %v2683
        %v2807 = vmul.f32 %v2806, %v2805
        %v2808 = vmul.f32 0.5, %v2807
        %v2809 = vsub.f32 1.5, %v2808
        %v2810 = vmul.f32 %v2805, %v2809
        %vm2811 = vweird.f32 %v2683
        %vm2812 = vweird.f32 %v2805
        %vm2813 = vmor %vm2811, %vm2812
        %v2814 = vsel %vm2813, %v2805, %v2810
        %v2815 = vrsqrt.pop %v2684
        %v2816 = vmul.f32 %v2815, %v2684
        %v2817 = vmul.f32 %v2816, %v2815
        %v2818 = vmul.f32 0.5, %v2817
        %v2819 = vsub.f32 1.5, %v2818
        %v2820 = vmul.f32 %v2815, %v2819
        %vm2821 = vweird.f32 %v2684
        %vm2822 = vweird.f32 %v2815
        %vm2823 = vmor %vm2821, %vm2822
        %v2824 = vsel %vm2823, %v2815, %v2820
        %v2825 = vrsqrt.pop %v2685
        %v2826 = vmul.f32 %v2825, %v2685
        %v2827 = vmul.f32 %v2826, %v2825
        %v2828 = vmul.f32 0.5, %v2827
        %v2829 = vsub.f32 1.5, %v2828
        %v2830 = vmul.f32 %v2825, %v2829
        %vm2831 = vweird.f32 %v2685
        %vm2832 = vweird.f32 %v2825
        %vm2833 = vmor %vm2831, %vm2832
        %v2834 = vsel %vm2833, %v2825, %v2830
        %v2835 = vrsqrt.pop %v2686
        %v2836 = vmul.f32 %v2835, %v2686
        %v2837 = vmul.f32 %v2836, %v2835
        %v2838 = vmul.f32 0.5, %v2837
        %v2839 = vsub.f32 1.5, %v2838
        %v2840 = vmul.f32 %v2835, %v2839
        %vm2841 = vweird.f32 %v2686
        %vm2842 = vweird.f32 %v2835
        %vm2843 = vmor %vm2841, %vm2842
        %v2844 = vsel %vm2843, %v2835, %v2840
        %v2845 = vrsqrt.pop %v2687
        %v2846 = vmul.f32 %v2845, %v2687
        %v2847 = vmul.f32 %v2846, %v2845
        %v2848 = vmul.f32 0.5, %v2847
        %v2849 = vsub.f32 1.5, %v2848
        %v2850 = vmul.f32 %v2845, %v2849
        %vm2851 = vweird.f32 %v2687
        %vm2852 = vweird.f32 %v2845
        %vm2853 = vmor %vm2851, %vm2852
        %v2854 = vsel %vm2853, %v2845, %v2850
        %v2855 = vrsqrt.pop %v2688
        %v2856 = vmul.f32 %v2855, %v2688
        %v2857 = vmul.f32 %v2856, %v2855
        %v2858 = vmul.f32 0.5, %v2857
        %v2859 = vsub.f32 1.5, %v2858
        %v2860 = vmul.f32 %v2855, %v2859
        %vm2861 = vweird.f32 %v2688
        %vm2862 = vweird.f32 %v2855
        %vm2863 = vmor %vm2861, %vm2862
        %v2864 = vsel %vm2863, %v2855, %v2860
        %v2865 = vrsqrt.pop %v2689
        %v2866 = vmul.f32 %v2865, %v2689
        %v2867 = vmul.f32 %v2866, %v2865
        %v2868 = vmul.f32 0.5, %v2867
        %v2869 = vsub.f32 1.5, %v2868
        %v2870 = vmul.f32 %v2865, %v2869
        %vm2871 = vweird.f32 %v2689
        %vm2872 = vweird.f32 %v2865
        %vm2873 = vmor %vm2871, %vm2872
        %v2874 = vsel %vm2873, %v2865, %v2870
        %v2875 = vrsqrt.pop %v2690
        %v2876 = vmul.f32 %v2875, %v2690
        %v2877 = vmul.f32 %v2876, %v2875
        %v2878 = vmul.f32 0.5, %v2877
        %v2879 = vsub.f32 1.5, %v2878
        %v2880 = vmul.f32 %v2875, %v2879
        %vm2881 = vweird.f32 %v2690
        %vm2882 = vweird.f32 %v2875
        %vm2883 = vmor %vm2881, %vm2882
        %v2884 = vsel %vm2883, %v2875, %v2880
        %v2885 = vrsqrt.pop %v2691
        %v2886 = vmul.f32 %v2885, %v2691
        %v2887 = vmul.f32 %v2886, %v2885
        %v2888 = vmul.f32 0.5, %v2887
        %v2889 = vsub.f32 1.5, %v2888
        %v2890 = vmul.f32 %v2885, %v2889
        %vm2891 = vweird.f32 %v2691
        %vm2892 = vweird.f32 %v2885
        %vm2893 = vmor %vm2891, %vm2892
        %v2894 = vsel %vm2893, %v2885, %v2890
        %v2895 = vrsqrt.pop %v2692
        %v2896 = vmul.f32 %v2895, %v2692
        %v2897 = vmul.f32 %v2896, %v2895
        %v2898 = vmul.f32 0.5, %v2897
        %v2899 = vsub.f32 1.5, %v2898
        %v2900 = vmul.f32 %v2895, %v2899
        %vm2901 = vweird.f32 %v2692
        %vm2902 = vweird.f32 %v2895
        %vm2903 = vmor %vm2901, %vm2902
        %v2904 = vsel %vm2903, %v2895, %v2900
        %v2905 = vrsqrt.pop %v2693
        %v2906 = vmul.f32 %v2905, %v2693
        %v2907 = vmul.f32 %v2906, %v2905
        %v2908 = vmul.f32 0.5, %v2907
        %v2909 = vsub.f32 1.5, %v2908
        %v2910 = vmul.f32 %v2905, %v2909
        %vm2911 = vweird.f32 %v2693
        %vm2912 = vweird.f32 %v2905
        %vm2913 = vmor %vm2911, %vm2912
        %v2914 = vsel %vm2913, %v2905, %v2910
        %v2915 = vrsqrt.pop %v2694
        %v2916 = vmul.f32 %v2915, %v2694
        %v2917 = vmul.f32 %v2916, %v2915
        %v2918 = vmul.f32 0.5, %v2917
        %v2919 = vsub.f32 1.5, %v2918
        %v2920 = vmul.f32 %v2915, %v2919
        %vm2921 = vweird.f32 %v2694
        %vm2922 = vweird.f32 %v2915
        %vm2923 = vmor %vm2921, %vm2922
        %v2924 = vsel %vm2923, %v2915, %v2920
        %v2925 = vrsqrt.pop %v2695
        %v2926 = vmul.f32 %v2925, %v2695
        %v2927 = vmul.f32 %v2926, %v2925
        %v2928 = vmul.f32 0.5, %v2927
        %v2929 = vsub.f32 1.5, %v2928
        %v2930 = vmul.f32 %v2925, %v2929
        %vm2931 = vweird.f32 %v2695
        %vm2932 = vweird.f32 %v2925
        %vm2933 = vmor %vm2931, %vm2932
        %v2934 = vsel %vm2933, %v2925, %v2930
        %v2935 = vrsqrt.pop %v2696
        %v2936 = vmul.f32 %v2935, %v2696
        %v2937 = vmul.f32 %v2936, %v2935
        %v2938 = vmul.f32 0.5, %v2937
        %v2939 = vsub.f32 1.5, %v2938
        %v2940 = vmul.f32 %v2935, %v2939
        %vm2941 = vweird.f32 %v2696
        %vm2942 = vweird.f32 %v2935
        %vm2943 = vmor %vm2941, %vm2942
        %v2944 = vsel %vm2943, %v2935, %v2940
        %v2945 = vrsqrt.pop %v2697
        %v2946 = vmul.f32 %v2945, %v2697
        %v2947 = vmul.f32 %v2946, %v2945
        %v2948 = vmul.f32 0.5, %v2947
        %v2949 = vsub.f32 1.5, %v2948
        %v2950 = vmul.f32 %v2945, %v2949
        %vm2951 = vweird.f32 %v2697
        %vm2952 = vweird.f32 %v2945
        %vm2953 = vmor %vm2951, %vm2952
        %v2954 = vsel %vm2953, %v2945, %v2950
        %v2955 = vrsqrt.pop %v2698
        %v2956 = vmul.f32 %v2955, %v2698
        %v2957 = vmul.f32 %v2956, %v2955
        %v2958 = vmul.f32 0.5, %v2957
        %v2959 = vsub.f32 1.5, %v2958
        %v2960 = vmul.f32 %v2955, %v2959
        %vm2961 = vweird.f32 %v2698
        %vm2962 = vweird.f32 %v2955
        %vm2963 = vmor %vm2961, %vm2962
        %v2964 = vsel %vm2963, %v2955, %v2960
        %v2965 = vrsqrt.pop %v2699
        %v2966 = vmul.f32 %v2965, %v2699
        %v2967 = vmul.f32 %v2966, %v2965
        %v2968 = vmul.f32 0.5, %v2967
        %v2969 = vsub.f32 1.5, %v2968
        %v2970 = vmul.f32 %v2965, %v2969
        %vm2971 = vweird.f32 %v2699
        %vm2972 = vweird.f32 %v2965
        %vm2973 = vmor %vm2971, %vm2972
        %v2974 = vsel %vm2973, %v2965, %v2970
        %v2975 = vrsqrt.pop %v2700
        %v2976 = vmul.f32 %v2975, %v2700
        %v2977 = vmul.f32 %v2976, %v2975
        %v2978 = vmul.f32 0.5, %v2977
        %v2979 = vsub.f32 1.5, %v2978
        %v2980 = vmul.f32 %v2975, %v2979
        %vm2981 = vweird.f32 %v2700
        %vm2982 = vweird.f32 %v2975
        %vm2983 = vmor %vm2981, %vm2982
        %v2984 = vsel %vm2983, %v2975, %v2980
        %v2985 = vrsqrt.pop %v2701
        %v2986 = vmul.f32 %v2985, %v2701
        %v2987 = vmul.f32 %v2986, %v2985
        %v2988 = vmul.f32 0.5, %v2987
        %v2989 = vsub.f32 1.5, %v2988
        %v2990 = vmul.f32 %v2985, %v2989
        %vm2991 = vweird.f32 %v2701
        %vm2992 = vweird.f32 %v2985
        %vm2993 = vmor %vm2991, %vm2992
        %v2994 = vsel %vm2993, %v2985, %v2990
        %v2995 = vrsqrt.pop %v2702
        %v2996 = vmul.f32 %v2995, %v2702
        %v2997 = vmul.f32 %v2996, %v2995
        %v2998 = vmul.f32 0.5, %v2997
        %v2999 = vsub.f32 1.5, %v2998
        %v3000 = vmul.f32 %v2995, %v2999
        %vm3001 = vweird.f32 %v2702
        %vm3002 = vweird.f32 %v2995
        %vm3003 = vmor %vm3001, %vm3002
        %v3004 = vsel %vm3003, %v2995, %v3000
        %v3005 = vrsqrt.pop %v2703
        %v3006 = vmul.f32 %v3005, %v2703
        %v3007 = vmul.f32 %v3006, %v3005
        %v3008 = vmul.f32 0.5, %v3007
        %v3009 = vsub.f32 1.5, %v3008
        %v3010 = vmul.f32 %v3005, %v3009
        %vm3011 = vweird.f32 %v2703
        %vm3012 = vweird.f32 %v3005
        %vm3013 = vmor %vm3011, %vm3012
        %v3014 = vsel %vm3013, %v3005, %v3010
        %v3015 = vrsqrt.pop %v2704
        %v3016 = vmul.f32 %v3015, %v2704
        %v3017 = vmul.f32 %v3016, %v3015
        %v3018 = vmul.f32 0.5, %v3017
        %v3019 = vsub.f32 1.5, %v3018
        %v3020 = vmul.f32 %v3015, %v3019
        %vm3021 = vweird.f32 %v2704
        %vm3022 = vweird.f32 %v3015
        %vm3023 = vmor %vm3021, %vm3022
        %v3024 = vsel %vm3023, %v3015, %v3020
        %v3025 = vmul.f32 %v1518, %v2714
        %v3026 = vmul.f32 %v1696, %v2714
        %v3027 = vmul.f32 %v1520, %v2724
        %v3028 = vmul.f32 %v1698, %v2724
        %v3029 = vmul.f32 %v1523, %v2734
        %v3030 = vmul.f32 %v1701, %v2734
        %v3031 = vmul.f32 %v1525, %v2744
        %v3032 = vmul.f32 %v1703, %v2744
        %v3033 = vmul.f32 %v1528, %v2754
        %v3034 = vmul.f32 %v1706, %v2754
        %v3035 = vmul.f32 %v1530, %v2764
        %v3036 = vmul.f32 %v1708, %v2764
        %v3037 = vmul.f32 %v1533, %v2774
        %v3038 = vmul.f32 %v1711, %v2774
        %v3039 = vmul.f32 %v1535, %v2784
        %v3040 = vmul.f32 %v1713, %v2784
        %v3041 = vmul.f32 %v1538, %v2794
        %v3042 = vmul.f32 %v1716, %v2794
        %v3043 = vmul.f32 %v1540, %v2804
        %v3044 = vmul.f32 %v1718, %v2804
        %v3045 = vmul.f32 %v1543, %v2814
        %v3046 = vmul.f32 %v1721, %v2814
        %v3047 = vmul.f32 %v1545, %v2824
        %v3048 = vmul.f32 %v1723, %v2824
        %v3049 = vmul.f32 %v1548, %v2834
        %v3050 = vmul.f32 %v1726, %v2834
        %v3051 = vmul.f32 %v1550, %v2844
        %v3052 = vmul.f32 %v1728, %v2844
        %v3053 = vmul.f32 %v1553, %v2854
        %v3054 = vmul.f32 %v1731, %v2854
        %v3055 = vmul.f32 %v1555, %v2864
        %v3056 = vmul.f32 %v1733, %v2864
        %v3057 = vmul.f32 %v1558, %v2874
        %v3058 = vmul.f32 %v1736, %v2874
        %v3059 = vmul.f32 %v1560, %v2884
        %v3060 = vmul.f32 %v1738, %v2884
        %v3061 = vmul.f32 %v1563, %v2894
        %v3062 = vmul.f32 %v1741, %v2894
        %v3063 = vmul.f32 %v1565, %v2904
        %v3064 = vmul.f32 %v1743, %v2904
        %v3065 = vmul.f32 %v1568, %v2914
        %v3066 = vmul.f32 %v1746, %v2914
        %v3067 = vmul.f32 %v1570, %v2924
        %v3068 = vmul.f32 %v1748, %v2924
        %v3069 = vmul.f32 %v1573, %v2934
        %v3070 = vmul.f32 %v1751, %v2934
        %v3071 = vmul.f32 %v1575, %v2944
        %v3072 = vmul.f32 %v1753, %v2944
        %v3073 = vmul.f32 %v1578, %v2954
        %v3074 = vmul.f32 %v1756, %v2954
        %v3075 = vmul.f32 %v1580, %v2964
        %v3076 = vmul.f32 %v1758, %v2964
        %v3077 = vmul.f32 %v1583, %v2974
        %v3078 = vmul.f32 %v1761, %v2974
        %v3079 = vmul.f32 %v1585, %v2984
        %v3080 = vmul.f32 %v1763, %v2984
        %v3081 = vmul.f32 %v1588, %v2994
        %v3082 = vmul.f32 %v1766, %v2994
        %v3083 = vmul.f32 %v1590, %v3004
        %v3084 = vmul.f32 %v1768, %v3004
        %v3085 = vmul.f32 %v1593, %v3014
        %v3086 = vmul.f32 %v1771, %v3014
        %v3087 = vmul.f32 %v1595, %v3024
        %v3088 = vmul.f32 %v1773, %v3024
        %v3090 = vperm.slane %v2480, 0
        %v3091 = vperm.slane %v2480, 1
        %v3094 = vmul.f32 %v3025, %v3090
        %v3095 = vmul.f32 %v3026, %v3091
        %v3096 = vmul.f32 %v3027, %v3090
        %v3097 = vmul.f32 %v3028, %v3091
        %v3098 = vmul.f32 %v3029, %v3090
        %v3099 = vmul.f32 %v3030, %v3091
        %v3100 = vmul.f32 %v3031, %v3090
        %v3101 = vmul.f32 %v3032, %v3091
        %v3102 = vmul.f32 %v3033, %v3090
        %v3103 = vmul.f32 %v3034, %v3091
        %v3104 = vmul.f32 %v3035, %v3090
        %v3105 = vmul.f32 %v3036, %v3091
        %v3106 = vmul.f32 %v3037, %v3090
        %v3107 = vmul.f32 %v3038, %v3091
        %v3108 = vmul.f32 %v3039, %v3090
        %v3109 = vmul.f32 %v3040, %v3091
        %v3110 = vmul.f32 %v3041, %v3090
        %v3111 = vmul.f32 %v3042, %v3091
        %v3112 = vmul.f32 %v3043, %v3090
        %v3113 = vmul.f32 %v3044, %v3091
        %v3114 = vmul.f32 %v3045, %v3090
        %v3115 = vmul.f32 %v3046, %v3091
        %v3116 = vmul.f32 %v3047, %v3090
        %v3117 = vmul.f32 %v3048, %v3091
        %v3118 = vmul.f32 %v3049, %v3090
        %v3119 = vmul.f32 %v3050, %v3091
        %v3120 = vmul.f32 %v3051, %v3090
        %v3121 = vmul.f32 %v3052, %v3091
        %v3122 = vmul.f32 %v3053, %v3090
        %v3123 = vmul.f32 %v3054, %v3091
        %v3124 = vmul.f32 %v3055, %v3090
        %v3125 = vmul.f32 %v3056, %v3091
        %v3126 = vmul.f32 %v3057, %v3090
        %v3127 = vmul.f32 %v3058, %v3091
        %v3128 = vmul.f32 %v3059, %v3090
        %v3129 = vmul.f32 %v3060, %v3091
        %v3130 = vmul.f32 %v3061, %v3090
        %v3131 = vmul.f32 %v3062, %v3091
        %v3132 = vmul.f32 %v3063, %v3090
        %v3133 = vmul.f32 %v3064, %v3091
        %v3134 = vmul.f32 %v3065, %v3090
        %v3135 = vmul.f32 %v3066, %v3091
        %v3136 = vmul.f32 %v3067, %v3090
        %v3137 = vmul.f32 %v3068, %v3091
        %v3138 = vmul.f32 %v3069, %v3090
        %v3139 = vmul.f32 %v3070, %v3091
        %v3140 = vmul.f32 %v3071, %v3090
        %v3141 = vmul.f32 %v3072, %v3091
        %v3142 = vmul.f32 %v3073, %v3090
        %v3143 = vmul.f32 %v3074, %v3091
        %v3144 = vmul.f32 %v3075, %v3090
        %v3145 = vmul.f32 %v3076, %v3091
        %v3146 = vmul.f32 %v3077, %v3090
        %v3147 = vmul.f32 %v3078, %v3091
        %v3148 = vmul.f32 %v3079, %v3090
        %v3149 = vmul.f32 %v3080, %v3091
        %v3150 = vmul.f32 %v3081, %v3090
        %v3151 = vmul.f32 %v3082, %v3091
        %v3152 = vmul.f32 %v3083, %v3090
        %v3153 = vmul.f32 %v3084, %v3091
        %v3154 = vmul.f32 %v3085, %v3090
        %v3155 = vmul.f32 %v3086, %v3091
        %v3156 = vmul.f32 %v3087, %v3090
        %v3157 = vmul.f32 %v3088, %v3091
        %s3158 = scalar_lea.vmem [#allocation8], %s497
        %v3159 = vld [vmem:[%s3158] sm:$0xff]
        %v3160 = vld [vmem:[%s3158 + $0x8] sm:$0xff]
        %v3161 = vld [vmem:[%s3158 + $0x10] sm:$0xff]
        %v3162 = vld [vmem:[%s3158 + $0x18] sm:$0xff]
        %v3163 = vld [vmem:[%s3158 + $0x20] sm:$0xff]
        %v3164 = vld [vmem:[%s3158 + $0x28] sm:$0xff]
        %v3165 = vld [vmem:[%s3158 + $0x30] sm:$0xff]
        %v3166 = vld [vmem:[%s3158 + $0x38] sm:$0xff]
        %v3167 = vld [vmem:[%s3158 + $0x40] sm:$0xff]
        %v3168 = vld [vmem:[%s3158 + $0x48] sm:$0xff]
        %v3169 = vld [vmem:[%s3158 + $0x50] sm:$0xff]
        %v3170 = vld [vmem:[%s3158 + $0x58] sm:$0xff]
        %v3171 = vld [vmem:[%s3158 + $0x60] sm:$0xff]
        %v3172 = vld [vmem:[%s3158 + $0x68] sm:$0xff]
        %v3173 = vld [vmem:[%s3158 + $0x70] sm:$0xff]
        %v3174 = vld [vmem:[%s3158 + $0x78] sm:$0xff]
        %s3175 = scalar_lea.vmem [#allocation10], %s497
        %v3176 = vld [vmem:[%s3175] sm:$0xff]
        %v3177 = vld [vmem:[%s3175 + $0x8] sm:$0xff]
        %v3178 = vld [vmem:[%s3175 + $0x10] sm:$0xff]
        %v3179 = vld [vmem:[%s3175 + $0x18] sm:$0xff]
        %v3180 = vld [vmem:[%s3175 + $0x20] sm:$0xff]
        %v3181 = vld [vmem:[%s3175 + $0x28] sm:$0xff]
        %v3182 = vld [vmem:[%s3175 + $0x30] sm:$0xff]
        %v3183 = vld [vmem:[%s3175 + $0x38] sm:$0xff]
        %v3184 = vld [vmem:[%s3175 + $0x40] sm:$0xff]
        %v3185 = vld [vmem:[%s3175 + $0x48] sm:$0xff]
        %v3186 = vld [vmem:[%s3175 + $0x50] sm:$0xff]
        %v3187 = vld [vmem:[%s3175 + $0x58] sm:$0xff]
        %v3188 = vld [vmem:[%s3175 + $0x60] sm:$0xff]
        %v3189 = vld [vmem:[%s3175 + $0x68] sm:$0xff]
        %v3190 = vld [vmem:[%s3175 + $0x70] sm:$0xff]
        %v3191 = vld [vmem:[%s3175 + $0x78] sm:$0xff]
        %v3192 = vld [vmem:[#allocation8] sm:$0xff]
        %v3193 = vld [vmem:[#allocation8 + $0x8] sm:$0xff]
        %v3194 = vld [vmem:[#allocation8 + $0x10] sm:$0xff]
        %v3195 = vld [vmem:[#allocation8 + $0x18] sm:$0xff]
        %v3196 = vld [vmem:[#allocation8 + $0x20] sm:$0xff]
        %v3197 = vld [vmem:[#allocation8 + $0x28] sm:$0xff]
        %v3198 = vld [vmem:[#allocation8 + $0x30] sm:$0xff]
        %v3199 = vld [vmem:[#allocation8 + $0x38] sm:$0xff]
        %v3200 = vld [vmem:[#allocation8 + $0x40] sm:$0xff]
        %v3201 = vld [vmem:[#allocation8 + $0x48] sm:$0xff]
        %v3202 = vld [vmem:[#allocation8 + $0x50] sm:$0xff]
        %v3203 = vld [vmem:[#allocation8 + $0x58] sm:$0xff]
        %v3204 = vld [vmem:[#allocation8 + $0x60] sm:$0xff]
        %v3205 = vld [vmem:[#allocation8 + $0x68] sm:$0xff]
        %v3206 = vld [vmem:[#allocation8 + $0x70] sm:$0xff]
        %v3207 = vld [vmem:[#allocation8 + $0x78] sm:$0xff]
        %v3208 = vld [vmem:[#allocation8 + $0x80] sm:$0xff]
        %v3209 = vld [vmem:[#allocation8 + $0x88] sm:$0xff]
        %v3210 = vld [vmem:[#allocation8 + $0x90] sm:$0xff]
        %v3211 = vld [vmem:[#allocation8 + $0x98] sm:$0xff]
        %v3212 = vld [vmem:[#allocation8 + $0xa0] sm:$0xff]
        %v3213 = vld [vmem:[#allocation8 + $0xa8] sm:$0xff]
        %v3214 = vld [vmem:[#allocation8 + $0xb0] sm:$0xff]
        %v3215 = vld [vmem:[#allocation8 + $0xb8] sm:$0xff]
        %v3216 = vld [vmem:[#allocation8 + $0xc0] sm:$0xff]
        %v3217 = vld [vmem:[#allocation8 + $0xc8] sm:$0xff]
        %v3218 = vld [vmem:[#allocation8 + $0xd0] sm:$0xff]
        %v3219 = vld [vmem:[#allocation8 + $0xd8] sm:$0xff]
        %v3220 = vld [vmem:[#allocation8 + $0xe0] sm:$0xff]
        %v3221 = vld [vmem:[#allocation8 + $0xe8] sm:$0xff]
        %v3222 = vld [vmem:[#allocation8 + $0xf0] sm:$0xff]
        %v3223 = vld [vmem:[#allocation8 + $0xf8] sm:$0xff]
        %v3224 = vld [vmem:[#allocation10] sm:$0xff]
        %v3225 = vld [vmem:[#allocation10 + $0x8] sm:$0xff]
        %v3226 = vld [vmem:[#allocation10 + $0x10] sm:$0xff]
        %v3227 = vld [vmem:[#allocation10 + $0x18] sm:$0xff]
        %v3228 = vld [vmem:[#allocation10 + $0x20] sm:$0xff]
        %v3229 = vld [vmem:[#allocation10 + $0x28] sm:$0xff]
        %v3230 = vld [vmem:[#allocation10 + $0x30] sm:$0xff]
        %v3231 = vld [vmem:[#allocation10 + $0x38] sm:$0xff]
        %v3232 = vld [vmem:[#allocation10 + $0x40] sm:$0xff]
        %v3233 = vld [vmem:[#allocation10 + $0x48] sm:$0xff]
        %v3234 = vld [vmem:[#allocation10 + $0x50] sm:$0xff]
        %v3235 = vld [vmem:[#allocation10 + $0x58] sm:$0xff]
        %v3236 = vld [vmem:[#allocation10 + $0x60] sm:$0xff]
        %v3237 = vld [vmem:[#allocation10 + $0x68] sm:$0xff]
        %v3238 = vld [vmem:[#allocation10 + $0x70] sm:$0xff]
        %v3239 = vld [vmem:[#allocation10 + $0x78] sm:$0xff]
        %v3240 = vld [vmem:[#allocation10 + $0x80] sm:$0xff]
        %v3241 = vld [vmem:[#allocation10 + $0x88] sm:$0xff]
        %v3242 = vld [vmem:[#allocation10 + $0x90] sm:$0xff]
        %v3243 = vld [vmem:[#allocation10 + $0x98] sm:$0xff]
        %v3244 = vld [vmem:[#allocation10 + $0xa0] sm:$0xff]
        %v3245 = vld [vmem:[#allocation10 + $0xa8] sm:$0xff]
        %v3246 = vld [vmem:[#allocation10 + $0xb0] sm:$0xff]
        %v3247 = vld [vmem:[#allocation10 + $0xb8] sm:$0xff]
        %v3248 = vld [vmem:[#allocation10 + $0xc0] sm:$0xff]
        %v3249 = vld [vmem:[#allocation10 + $0xc8] sm:$0xff]
        %v3250 = vld [vmem:[#allocation10 + $0xd0] sm:$0xff]
        %v3251 = vld [vmem:[#allocation10 + $0xd8] sm:$0xff]
        %v3252 = vld [vmem:[#allocation10 + $0xe0] sm:$0xff]
        %v3253 = vld [vmem:[#allocation10 + $0xe8] sm:$0xff]
        %v3254 = vld [vmem:[#allocation10 + $0xf0] sm:$0xff]
        %v3255 = vld [vmem:[#allocation10 + $0xf8] sm:$0xff]
        %v3256 = vlaneseq
        %v3257 = vshrl.u32 %v3256, 7
        %v3258 = vadd.s32 %v3257, 8
        %v3259 = vadd.s32 %v3257, 16
        %v3260 = vadd.s32 %v3257, 24
        %v3261 = vadd.s32 %v3257, 32
        %v3262 = vadd.s32 %v3257, 40
        %v3263 = vadd.s32 %v3257, 48
        %v3264 = vadd.s32 %v3257, 56
        %v3265 = vadd.s32 %v3257, 64
        %v3266 = vadd.s32 %v3257, 72
        %v3267 = vadd.s32 %v3257, 80
        %v3268 = vadd.s32 %v3257, 88
        %v3269 = vadd.s32 %v3257, 96
        %v3270 = vadd.s32 %v3257, 104
        %v3271 = vadd.s32 %v3257, 112
        %v3272 = vadd.s32 %v3257, 120
        %v3273 = vstv %s497
        %v3274 = vadd.s32 %v3257, %v3273
        %v3275 = vadd.s32 %v3258, %v3273
        %v3276 = vadd.s32 %v3259, %v3273
        %v3277 = vadd.s32 %v3260, %v3273
        %v3278 = vadd.s32 %v3261, %v3273
        %v3279 = vadd.s32 %v3262, %v3273
        %v3280 = vadd.s32 %v3263, %v3273
        %v3281 = vadd.s32 %v3264, %v3273
        %v3282 = vadd.s32 %v3265, %v3273
        %v3283 = vadd.s32 %v3266, %v3273
        %v3284 = vadd.s32 %v3267, %v3273
        %v3285 = vadd.s32 %v3268, %v3273
        %v3286 = vadd.s32 %v3269, %v3273
        %v3287 = vadd.s32 %v3270, %v3273
        %v3288 = vadd.s32 %v3271, %v3273
        %v3289 = vadd.s32 %v3272, %v3273
        %v3290 = vlaneseq
        %v3291 = vand.u32 %v3290, 127
        %v3292 = vadd.s32 %v3291, 128
        %vm3293 = vcmp.ge.s32.totalorder %v3274, %v3291
        %vm3294 = vcmp.ge.s32.totalorder %v3274, %v3292
        %vm3295 = vcmp.ge.s32.totalorder %v3275, %v3291
        %vm3296 = vcmp.ge.s32.totalorder %v3275, %v3292
        %vm3297 = vcmp.ge.s32.totalorder %v3276, %v3291
        %vm3298 = vcmp.ge.s32.totalorder %v3276, %v3292
        %vm3299 = vcmp.ge.s32.totalorder %v3277, %v3291
        %vm3300 = vcmp.ge.s32.totalorder %v3277, %v3292
        %vm3301 = vcmp.ge.s32.totalorder %v3278, %v3291
        %vm3302 = vcmp.ge.s32.totalorder %v3278, %v3292
        %vm3303 = vcmp.ge.s32.totalorder %v3279, %v3291
        %vm3304 = vcmp.ge.s32.totalorder %v3279, %v3292
        %vm3305 = vcmp.ge.s32.totalorder %v3280, %v3291
        %vm3306 = vcmp.ge.s32.totalorder %v3280, %v3292
        %vm3307 = vcmp.ge.s32.totalorder %v3281, %v3291
        %vm3308 = vcmp.ge.s32.totalorder %v3281, %v3292
        %vm3309 = vcmp.ge.s32.totalorder %v3282, %v3291
        %vm3310 = vcmp.ge.s32.totalorder %v3282, %v3292
        %vm3311 = vcmp.ge.s32.totalorder %v3283, %v3291
        %vm3312 = vcmp.ge.s32.totalorder %v3283, %v3292
        %vm3313 = vcmp.ge.s32.totalorder %v3284, %v3291
        %vm3314 = vcmp.ge.s32.totalorder %v3284, %v3292
        %vm3315 = vcmp.ge.s32.totalorder %v3285, %v3291
        %vm3316 = vcmp.ge.s32.totalorder %v3285, %v3292
        %vm3317 = vcmp.ge.s32.totalorder %v3286, %v3291
        %vm3318 = vcmp.ge.s32.totalorder %v3286, %v3292
        %vm3319 = vcmp.ge.s32.totalorder %v3287, %v3291
        %vm3320 = vcmp.ge.s32.totalorder %v3287, %v3292
        %vm3321 = vcmp.ge.s32.totalorder %v3288, %v3291
        %vm3322 = vcmp.ge.s32.totalorder %v3288, %v3292
        %vm3323 = vcmp.ge.s32.totalorder %v3289, %v3291
        %vm3324 = vcmp.ge.s32.totalorder %v3289, %v3292
        %v3325 = vsub.f32 0.0, %v2448
        %v3326 = vsub.f32 0.0, %v2450
        %v3327 = vsub.f32 0.0, %v2452
        %v3328 = vsub.f32 0.0, %v2454
        %v3329 = vsub.f32 0.0, %v2456
        %v3330 = vsub.f32 0.0, %v2458
        %v3331 = vsub.f32 0.0, %v2460
        %v3332 = vsub.f32 0.0, %v2462
        %v3333 = vsub.f32 0.0, %v2464
        %v3334 = vsub.f32 0.0, %v2466
        %v3335 = vsub.f32 0.0, %v2468
        %v3336 = vsub.f32 0.0, %v2470
        %v3337 = vsub.f32 0.0, %v2472
        %v3338 = vsub.f32 0.0, %v2474
        %v3339 = vsub.f32 0.0, %v2476
        %v3340 = vsub.f32 0.0, %v2478
        %3357 = vrot.lane.b32.xlu0 %v3325, 64
        %v3358 = vpop.permute.xlu0 %3357
        %3359 = vrot.lane.b32.xlu0 %v3326, 64
        %v3360 = vpop.permute.xlu0 %3359
        %3361 = vrot.lane.b32.xlu0 %v3327, 64
        %v3362 = vpop.permute.xlu0 %3361
        %3363 = vrot.lane.b32.xlu0 %v3328, 64
        %v3364 = vpop.permute.xlu0 %3363
        %3365 = vrot.lane.b32.xlu0 %v3329, 64
        %v3366 = vpop.permute.xlu0 %3365
        %3367 = vrot.lane.b32.xlu0 %v3330, 64
        %v3368 = vpop.permute.xlu0 %3367
        %3369 = vrot.lane.b32.xlu0 %v3331, 64
        %v3370 = vpop.permute.xlu0 %3369
        %3371 = vrot.lane.b32.xlu0 %v3332, 64
        %v3372 = vpop.permute.xlu0 %3371
        %3373 = vrot.lane.b32.xlu0 %v3333, 64
        %v3374 = vpop.permute.xlu0 %3373
        %3375 = vrot.lane.b32.xlu0 %v3334, 64
        %v3376 = vpop.permute.xlu0 %3375
        %3377 = vrot.lane.b32.xlu0 %v3335, 64
        %v3378 = vpop.permute.xlu0 %3377
        %3379 = vrot.lane.b32.xlu0 %v3336, 64
        %v3380 = vpop.permute.xlu0 %3379
        %3381 = vrot.lane.b32.xlu0 %v3337, 64
        %v3382 = vpop.permute.xlu0 %3381
        %3383 = vrot.lane.b32.xlu0 %v3338, 64
        %v3384 = vpop.permute.xlu0 %3383
        %3385 = vrot.lane.b32.xlu0 %v3339, 64
        %v3386 = vpop.permute.xlu0 %3385
        %3387 = vrot.lane.b32.xlu0 %v3340, 64
        %v3388 = vpop.permute.xlu0 %3387
        %3421 = vrot.lane.b32.xlu0 %v2448, 64
        %v3422 = vpop.permute.xlu0 %3421
        %3423 = vrot.lane.b32.xlu0 %v2450, 64
        %v3424 = vpop.permute.xlu0 %3423
        %3425 = vrot.lane.b32.xlu0 %v2452, 64
        %v3426 = vpop.permute.xlu0 %3425
        %3427 = vrot.lane.b32.xlu0 %v2454, 64
        %v3428 = vpop.permute.xlu0 %3427
        %3429 = vrot.lane.b32.xlu0 %v2456, 64
        %v3430 = vpop.permute.xlu0 %3429
        %3431 = vrot.lane.b32.xlu0 %v2458, 64
        %v3432 = vpop.permute.xlu0 %3431
        %3433 = vrot.lane.b32.xlu0 %v2460, 64
        %v3434 = vpop.permute.xlu0 %3433
        %3435 = vrot.lane.b32.xlu0 %v2462, 64
        %v3436 = vpop.permute.xlu0 %3435
        %3437 = vrot.lane.b32.xlu0 %v2464, 64
        %v3438 = vpop.permute.xlu0 %3437
        %3439 = vrot.lane.b32.xlu0 %v2466, 64
        %v3440 = vpop.permute.xlu0 %3439
        %3441 = vrot.lane.b32.xlu0 %v2468, 64
        %v3442 = vpop.permute.xlu0 %3441
        %3443 = vrot.lane.b32.xlu0 %v2470, 64
        %v3444 = vpop.permute.xlu0 %3443
        %3445 = vrot.lane.b32.xlu0 %v2472, 64
        %v3446 = vpop.permute.xlu0 %3445
        %3447 = vrot.lane.b32.xlu0 %v2474, 64
        %v3448 = vpop.permute.xlu0 %3447
        %3449 = vrot.lane.b32.xlu0 %v2476, 64
        %v3450 = vpop.permute.xlu0 %3449
        %3451 = vrot.lane.b32.xlu0 %v2478, 64
        %v3452 = vpop.permute.xlu0 %3451
        %vm3469 = vcmask 523264
        %v3470 = vsel %vm3469, %v3358, %v3422
        %v3471 = vsel %vm3469, %v3360, %v3424
        %v3472 = vsel %vm3469, %v3362, %v3426
        %v3473 = vsel %vm3469, %v3364, %v3428
        %v3474 = vsel %vm3469, %v3366, %v3430
        %v3475 = vsel %vm3469, %v3368, %v3432
        %v3476 = vsel %vm3469, %v3370, %v3434
        %v3477 = vsel %vm3469, %v3372, %v3436
        %v3478 = vsel %vm3469, %v3374, %v3438
        %v3479 = vsel %vm3469, %v3376, %v3440
        %v3480 = vsel %vm3469, %v3378, %v3442
        %v3481 = vsel %vm3469, %v3380, %v3444
        %v3482 = vsel %vm3469, %v3382, %v3446
        %v3483 = vsel %vm3469, %v3384, %v3448
        %v3484 = vsel %vm3469, %v3386, %v3450
        %v3485 = vsel %vm3469, %v3388, %v3452
        %v3486 = vmul.f32 %v2448, %v3159
        %v3487 = vmul.f32 %v2450, %v3160
        %v3488 = vmul.f32 %v2452, %v3161
        %v3489 = vmul.f32 %v2454, %v3162
        %v3490 = vmul.f32 %v2456, %v3163
        %v3491 = vmul.f32 %v2458, %v3164
        %v3492 = vmul.f32 %v2460, %v3165
        %v3493 = vmul.f32 %v2462, %v3166
        %v3494 = vmul.f32 %v2464, %v3167
        %v3495 = vmul.f32 %v2466, %v3168
        %v3496 = vmul.f32 %v2468, %v3169
        %v3497 = vmul.f32 %v2470, %v3170
        %v3498 = vmul.f32 %v2472, %v3171
        %v3499 = vmul.f32 %v2474, %v3172
        %v3500 = vmul.f32 %v2476, %v3173
        %v3501 = vmul.f32 %v2478, %v3174
        %v3502 = vmul.f32 %v3470, %v3176
        %v3503 = vmul.f32 %v3471, %v3177
        %v3504 = vmul.f32 %v3472, %v3178
        %v3505 = vmul.f32 %v3473, %v3179
        %v3506 = vmul.f32 %v3474, %v3180
        %v3507 = vmul.f32 %v3475, %v3181
        %v3508 = vmul.f32 %v3476, %v3182
        %v3509 = vmul.f32 %v3477, %v3183
        %v3510 = vmul.f32 %v3478, %v3184
        %v3511 = vmul.f32 %v3479, %v3185
        %v3512 = vmul.f32 %v3480, %v3186
        %v3513 = vmul.f32 %v3481, %v3187
        %v3514 = vmul.f32 %v3482, %v3188
        %v3515 = vmul.f32 %v3483, %v3189
        %v3516 = vmul.f32 %v3484, %v3190
        %v3517 = vmul.f32 %v3485, %v3191
        %v3518 = vadd.f32 %v3486, %v3502
        %v3519 = vadd.f32 %v3487, %v3503
        %v3520 = vadd.f32 %v3488, %v3504
        %v3521 = vadd.f32 %v3489, %v3505
        %v3522 = vadd.f32 %v3490, %v3506
        %v3523 = vadd.f32 %v3491, %v3507
        %v3524 = vadd.f32 %v3492, %v3508
        %v3525 = vadd.f32 %v3493, %v3509
        %v3526 = vadd.f32 %v3494, %v3510
        %v3527 = vadd.f32 %v3495, %v3511
        %v3528 = vadd.f32 %v3496, %v3512
        %v3529 = vadd.f32 %v3497, %v3513
        %v3530 = vadd.f32 %v3498, %v3514
        %v3531 = vadd.f32 %v3499, %v3515
        %v3532 = vadd.f32 %v3500, %v3516
        %v3533 = vadd.f32 %v3501, %v3517
        %v3534 = vpack.c.bf16 %v3519, %v3518
        %v3535 = vpack.c.bf16 %v3521, %v3520
        %v3536 = vpack.c.bf16 %v3523, %v3522
        %v3537 = vpack.c.bf16 %v3525, %v3524
        %v3538 = vpack.c.bf16 %v3527, %v3526
        %v3539 = vpack.c.bf16 %v3529, %v3528
        %v3540 = vpack.c.bf16 %v3531, %v3530
        %v3541 = vpack.c.bf16 %v3533, %v3532
        %v3542 = vsub.f32 0.0, %v3094
        %v3543 = vsub.f32 0.0, %v3096
        %v3544 = vsub.f32 0.0, %v3098
        %v3545 = vsub.f32 0.0, %v3100
        %v3546 = vsub.f32 0.0, %v3102
        %v3547 = vsub.f32 0.0, %v3104
        %v3548 = vsub.f32 0.0, %v3106
        %v3549 = vsub.f32 0.0, %v3108
        %v3550 = vsub.f32 0.0, %v3110
        %v3551 = vsub.f32 0.0, %v3112
        %v3552 = vsub.f32 0.0, %v3114
        %v3553 = vsub.f32 0.0, %v3116
        %v3554 = vsub.f32 0.0, %v3118
        %v3555 = vsub.f32 0.0, %v3120
        %v3556 = vsub.f32 0.0, %v3122
        %v3557 = vsub.f32 0.0, %v3124
        %v3558 = vsub.f32 0.0, %v3126
        %v3559 = vsub.f32 0.0, %v3128
        %v3560 = vsub.f32 0.0, %v3130
        %v3561 = vsub.f32 0.0, %v3132
        %v3562 = vsub.f32 0.0, %v3134
        %v3563 = vsub.f32 0.0, %v3136
        %v3564 = vsub.f32 0.0, %v3138
        %v3565 = vsub.f32 0.0, %v3140
        %v3566 = vsub.f32 0.0, %v3142
        %v3567 = vsub.f32 0.0, %v3144
        %v3568 = vsub.f32 0.0, %v3146
        %v3569 = vsub.f32 0.0, %v3148
        %v3570 = vsub.f32 0.0, %v3150
        %v3571 = vsub.f32 0.0, %v3152
        %v3572 = vsub.f32 0.0, %v3154
        %v3573 = vsub.f32 0.0, %v3156
        %3606 = vrot.lane.b32.xlu0 %v3542, 64
        %v3607 = vpop.permute.xlu0 %3606
        %3608 = vrot.lane.b32.xlu0 %v3543, 64
        %v3609 = vpop.permute.xlu0 %3608
        %3610 = vrot.lane.b32.xlu0 %v3544, 64
        %v3611 = vpop.permute.xlu0 %3610
        %3612 = vrot.lane.b32.xlu0 %v3545, 64
        %v3613 = vpop.permute.xlu0 %3612
        %3614 = vrot.lane.b32.xlu0 %v3546, 64
        %v3615 = vpop.permute.xlu0 %3614
        %3616 = vrot.lane.b32.xlu0 %v3547, 64
        %v3617 = vpop.permute.xlu0 %3616
        %3618 = vrot.lane.b32.xlu0 %v3548, 64
        %v3619 = vpop.permute.xlu0 %3618
        %3620 = vrot.lane.b32.xlu0 %v3549, 64
        %v3621 = vpop.permute.xlu0 %3620
        %3622 = vrot.lane.b32.xlu0 %v3550, 64
        %v3623 = vpop.permute.xlu0 %3622
        %3624 = vrot.lane.b32.xlu0 %v3551, 64
        %v3625 = vpop.permute.xlu0 %3624
        %3626 = vrot.lane.b32.xlu0 %v3552, 64
        %v3627 = vpop.permute.xlu0 %3626
        %3628 = vrot.lane.b32.xlu0 %v3553, 64
        %v3629 = vpop.permute.xlu0 %3628
        %3630 = vrot.lane.b32.xlu0 %v3554, 64
        %v3631 = vpop.permute.xlu0 %3630
        %3632 = vrot.lane.b32.xlu0 %v3555, 64
        %v3633 = vpop.permute.xlu0 %3632
        %3634 = vrot.lane.b32.xlu0 %v3556, 64
        %v3635 = vpop.permute.xlu0 %3634
        %3636 = vrot.lane.b32.xlu0 %v3557, 64
        %v3637 = vpop.permute.xlu0 %3636
        %3638 = vrot.lane.b32.xlu0 %v3558, 64
        %v3639 = vpop.permute.xlu0 %3638
        %3640 = vrot.lane.b32.xlu0 %v3559, 64
        %v3641 = vpop.permute.xlu0 %3640
        %3642 = vrot.lane.b32.xlu0 %v3560, 64
        %v3643 = vpop.permute.xlu0 %3642
        %3644 = vrot.lane.b32.xlu0 %v3561, 64
        %v3645 = vpop.permute.xlu0 %3644
        %3646 = vrot.lane.b32.xlu0 %v3562, 64
        %v3647 = vpop.permute.xlu0 %3646
        %3648 = vrot.lane.b32.xlu0 %v3563, 64
        %v3649 = vpop.permute.xlu0 %3648
        %3650 = vrot.lane.b32.xlu0 %v3564, 64
        %v3651 = vpop.permute.xlu0 %3650
        %3652 = vrot.lane.b32.xlu0 %v3565, 64
        %v3653 = vpop.permute.xlu0 %3652
        %3654 = vrot.lane.b32.xlu0 %v3566, 64
        %v3655 = vpop.permute.xlu0 %3654
        %3656 = vrot.lane.b32.xlu0 %v3567, 64
        %v3657 = vpop.permute.xlu0 %3656
        %3658 = vrot.lane.b32.xlu0 %v3568, 64
        %v3659 = vpop.permute.xlu0 %3658
        %3660 = vrot.lane.b32.xlu0 %v3569, 64
        %v3661 = vpop.permute.xlu0 %3660
        %3662 = vrot.lane.b32.xlu0 %v3570, 64
        %v3663 = vpop.permute.xlu0 %3662
        %3664 = vrot.lane.b32.xlu0 %v3571, 64
        %v3665 = vpop.permute.xlu0 %3664
        %3666 = vrot.lane.b32.xlu0 %v3572, 64
        %v3667 = vpop.permute.xlu0 %3666
        %3668 = vrot.lane.b32.xlu0 %v3573, 64
        %v3669 = vpop.permute.xlu0 %3668
        %3734 = vrot.lane.b32.xlu0 %v3094, 64
        %v3735 = vpop.permute.xlu0 %3734
        %3736 = vrot.lane.b32.xlu0 %v3096, 64
        %v3737 = vpop.permute.xlu0 %3736
        %3738 = vrot.lane.b32.xlu0 %v3098, 64
        %v3739 = vpop.permute.xlu0 %3738
        %3740 = vrot.lane.b32.xlu0 %v3100, 64
        %v3741 = vpop.permute.xlu0 %3740
        %3742 = vrot.lane.b32.xlu0 %v3102, 64
        %v3743 = vpop.permute.xlu0 %3742
        %3744 = vrot.lane.b32.xlu0 %v3104, 64
        %v3745 = vpop.permute.xlu0 %3744
        %3746 = vrot.lane.b32.xlu0 %v3106, 64
        %v3747 = vpop.permute.xlu0 %3746
        %3748 = vrot.lane.b32.xlu0 %v3108, 64
        %v3749 = vpop.permute.xlu0 %3748
        %3750 = vrot.lane.b32.xlu0 %v3110, 64
        %v3751 = vpop.permute.xlu0 %3750
        %3752 = vrot.lane.b32.xlu0 %v3112, 64
        %v3753 = vpop.permute.xlu0 %3752
        %3754 = vrot.lane.b32.xlu0 %v3114, 64
        %v3755 = vpop.permute.xlu0 %3754
        %3756 = vrot.lane.b32.xlu0 %v3116, 64
        %v3757 = vpop.permute.xlu0 %3756
        %3758 = vrot.lane.b32.xlu0 %v3118, 64
        %v3759 = vpop.permute.xlu0 %3758
        %3760 = vrot.lane.b32.xlu0 %v3120, 64
        %v3761 = vpop.permute.xlu0 %3760
        %3762 = vrot.lane.b32.xlu0 %v3122, 64
        %v3763 = vpop.permute.xlu0 %3762
        %3764 = vrot.lane.b32.xlu0 %v3124, 64
        %v3765 = vpop.permute.xlu0 %3764
        %3766 = vrot.lane.b32.xlu0 %v3126, 64
        %v3767 = vpop.permute.xlu0 %3766
        %3768 = vrot.lane.b32.xlu0 %v3128, 64
        %v3769 = vpop.permute.xlu0 %3768
        %3770 = vrot.lane.b32.xlu0 %v3130, 64
        %v3771 = vpop.permute.xlu0 %3770
        %3772 = vrot.lane.b32.xlu0 %v3132, 64
        %v3773 = vpop.permute.xlu0 %3772
        %3774 = vrot.lane.b32.xlu0 %v3134, 64
        %v3775 = vpop.permute.xlu0 %3774
        %3776 = vrot.lane.b32.xlu0 %v3136, 64
        %v3777 = vpop.permute.xlu0 %3776
        %3778 = vrot.lane.b32.xlu0 %v3138, 64
        %v3779 = vpop.permute.xlu0 %3778
        %3780 = vrot.lane.b32.xlu0 %v3140, 64
        %v3781 = vpop.permute.xlu0 %3780
        %3782 = vrot.lane.b32.xlu0 %v3142, 64
        %v3783 = vpop.permute.xlu0 %3782
        %3784 = vrot.lane.b32.xlu0 %v3144, 64
        %v3785 = vpop.permute.xlu0 %3784
        %3786 = vrot.lane.b32.xlu0 %v3146, 64
        %v3787 = vpop.permute.xlu0 %3786
        %3788 = vrot.lane.b32.xlu0 %v3148, 64
        %v3789 = vpop.permute.xlu0 %3788
        %3790 = vrot.lane.b32.xlu0 %v3150, 64
        %v3791 = vpop.permute.xlu0 %3790
        %3792 = vrot.lane.b32.xlu0 %v3152, 64
        %v3793 = vpop.permute.xlu0 %3792
        %3794 = vrot.lane.b32.xlu0 %v3154, 64
        %v3795 = vpop.permute.xlu0 %3794
        %3796 = vrot.lane.b32.xlu0 %v3156, 64
        %v3797 = vpop.permute.xlu0 %3796
        %v3830 = vsel %vm3469, %v3607, %v3735
        %v3831 = vsel %vm3469, %v3609, %v3737
        %v3832 = vsel %vm3469, %v3611, %v3739
        %v3833 = vsel %vm3469, %v3613, %v3741
        %v3834 = vsel %vm3469, %v3615, %v3743
        %v3835 = vsel %vm3469, %v3617, %v3745
        %v3836 = vsel %vm3469, %v3619, %v3747
        %v3837 = vsel %vm3469, %v3621, %v3749
        %v3838 = vsel %vm3469, %v3623, %v3751
        %v3839 = vsel %vm3469, %v3625, %v3753
        %v3840 = vsel %vm3469, %v3627, %v3755
        %v3841 = vsel %vm3469, %v3629, %v3757
        %v3842 = vsel %vm3469, %v3631, %v3759
        %v3843 = vsel %vm3469, %v3633, %v3761
        %v3844 = vsel %vm3469, %v3635, %v3763
        %v3845 = vsel %vm3469, %v3637, %v3765
        %v3846 = vsel %vm3469, %v3639, %v3767
        %v3847 = vsel %vm3469, %v3641, %v3769
        %v3848 = vsel %vm3469, %v3643, %v3771
        %v3849 = vsel %vm3469, %v3645, %v3773
        %v3850 = vsel %vm3469, %v3647, %v3775
        %v3851 = vsel %vm3469, %v3649, %v3777
        %v3852 = vsel %vm3469, %v3651, %v3779
        %v3853 = vsel %vm3469, %v3653, %v3781
        %v3854 = vsel %vm3469, %v3655, %v3783
        %v3855 = vsel %vm3469, %v3657, %v3785
        %v3856 = vsel %vm3469, %v3659, %v3787
        %v3857 = vsel %vm3469, %v3661, %v3789
        %v3858 = vsel %vm3469, %v3663, %v3791
        %v3859 = vsel %vm3469, %v3665, %v3793
        %v3860 = vsel %vm3469, %v3667, %v3795
        %v3861 = vsel %vm3469, %v3669, %v3797
        %v3862 = vmul.f32 %v3094, %v3192
        %v3863 = vmul.f32 %v3096, %v3193
        %v3864 = vmul.f32 %v3098, %v3194
        %v3865 = vmul.f32 %v3100, %v3195
        %v3866 = vmul.f32 %v3102, %v3196
        %v3867 = vmul.f32 %v3104, %v3197
        %v3868 = vmul.f32 %v3106, %v3198
        %v3869 = vmul.f32 %v3108, %v3199
        %v3870 = vmul.f32 %v3110, %v3200
        %v3871 = vmul.f32 %v3112, %v3201
        %v3872 = vmul.f32 %v3114, %v3202
        %v3873 = vmul.f32 %v3116, %v3203
        %v3874 = vmul.f32 %v3118, %v3204
        %v3875 = vmul.f32 %v3120, %v3205
        %v3876 = vmul.f32 %v3122, %v3206
        %v3877 = vmul.f32 %v3124, %v3207
        %v3878 = vmul.f32 %v3126, %v3208
        %v3879 = vmul.f32 %v3128, %v3209
        %v3880 = vmul.f32 %v3130, %v3210
        %v3881 = vmul.f32 %v3132, %v3211
        %v3882 = vmul.f32 %v3134, %v3212
        %v3883 = vmul.f32 %v3136, %v3213
        %v3884 = vmul.f32 %v3138, %v3214
        %v3885 = vmul.f32 %v3140, %v3215
        %v3886 = vmul.f32 %v3142, %v3216
        %v3887 = vmul.f32 %v3144, %v3217
        %v3888 = vmul.f32 %v3146, %v3218
        %v3889 = vmul.f32 %v3148, %v3219
        %v3890 = vmul.f32 %v3150, %v3220
        %v3891 = vmul.f32 %v3152, %v3221
        %v3892 = vmul.f32 %v3154, %v3222
        %v3893 = vmul.f32 %v3156, %v3223
        %v3894 = vmul.f32 %v3830, %v3224
        %v3895 = vmul.f32 %v3831, %v3225
        %v3896 = vmul.f32 %v3832, %v3226
        %v3897 = vmul.f32 %v3833, %v3227
        %v3898 = vmul.f32 %v3834, %v3228
        %v3899 = vmul.f32 %v3835, %v3229
        %v3900 = vmul.f32 %v3836, %v3230
        %v3901 = vmul.f32 %v3837, %v3231
        %v3902 = vmul.f32 %v3838, %v3232
        %v3903 = vmul.f32 %v3839, %v3233
        %v3904 = vmul.f32 %v3840, %v3234
        %v3905 = vmul.f32 %v3841, %v3235
        %v3906 = vmul.f32 %v3842, %v3236
        %v3907 = vmul.f32 %v3843, %v3237
        %v3908 = vmul.f32 %v3844, %v3238
        %v3909 = vmul.f32 %v3845, %v3239
        %v3910 = vmul.f32 %v3846, %v3240
        %v3911 = vmul.f32 %v3847, %v3241
        %v3912 = vmul.f32 %v3848, %v3242
        %v3913 = vmul.f32 %v3849, %v3243
        %v3914 = vmul.f32 %v3850, %v3244
        %v3915 = vmul.f32 %v3851, %v3245
        %v3916 = vmul.f32 %v3852, %v3246
        %v3917 = vmul.f32 %v3853, %v3247
        %v3918 = vmul.f32 %v3854, %v3248
        %v3919 = vmul.f32 %v3855, %v3249
        %v3920 = vmul.f32 %v3856, %v3250
        %v3921 = vmul.f32 %v3857, %v3251
        %v3922 = vmul.f32 %v3858, %v3252
        %v3923 = vmul.f32 %v3859, %v3253
        %v3924 = vmul.f32 %v3860, %v3254
        %v3925 = vmul.f32 %v3861, %v3255
        %v3926 = vadd.f32 %v3862, %v3894
        %v3927 = vadd.f32 %v3863, %v3895
        %v3928 = vadd.f32 %v3864, %v3896
        %v3929 = vadd.f32 %v3865, %v3897
        %v3930 = vadd.f32 %v3866, %v3898
        %v3931 = vadd.f32 %v3867, %v3899
        %v3932 = vadd.f32 %v3868, %v3900
        %v3933 = vadd.f32 %v3869, %v3901
        %v3934 = vadd.f32 %v3870, %v3902
        %v3935 = vadd.f32 %v3871, %v3903
        %v3936 = vadd.f32 %v3872, %v3904
        %v3937 = vadd.f32 %v3873, %v3905
        %v3938 = vadd.f32 %v3874, %v3906
        %v3939 = vadd.f32 %v3875, %v3907
        %v3940 = vadd.f32 %v3876, %v3908
        %v3941 = vadd.f32 %v3877, %v3909
        %v3942 = vadd.f32 %v3878, %v3910
        %v3943 = vadd.f32 %v3879, %v3911
        %v3944 = vadd.f32 %v3880, %v3912
        %v3945 = vadd.f32 %v3881, %v3913
        %v3946 = vadd.f32 %v3882, %v3914
        %v3947 = vadd.f32 %v3883, %v3915
        %v3948 = vadd.f32 %v3884, %v3916
        %v3949 = vadd.f32 %v3885, %v3917
        %v3950 = vadd.f32 %v3886, %v3918
        %v3951 = vadd.f32 %v3887, %v3919
        %v3952 = vadd.f32 %v3888, %v3920
        %v3953 = vadd.f32 %v3889, %v3921
        %v3954 = vadd.f32 %v3890, %v3922
        %v3955 = vadd.f32 %v3891, %v3923
        %v3956 = vadd.f32 %v3892, %v3924
        %v3957 = vadd.f32 %v3893, %v3925
        %v3958 = vpack.c.bf16 %v3927, %v3926
        %v3959 = vpack.c.bf16 %v3929, %v3928
        %v3960 = vpack.c.bf16 %v3931, %v3930
        %v3961 = vpack.c.bf16 %v3933, %v3932
        %v3962 = vpack.c.bf16 %v3935, %v3934
        %v3963 = vpack.c.bf16 %v3937, %v3936
        %v3964 = vpack.c.bf16 %v3939, %v3938
        %v3965 = vpack.c.bf16 %v3941, %v3940
        %v3966 = vpack.c.bf16 %v3943, %v3942
        %v3967 = vpack.c.bf16 %v3945, %v3944
        %v3968 = vpack.c.bf16 %v3947, %v3946
        %v3969 = vpack.c.bf16 %v3949, %v3948
        %v3970 = vpack.c.bf16 %v3951, %v3950
        %v3971 = vpack.c.bf16 %v3953, %v3952
        %v3972 = vpack.c.bf16 %v3955, %v3954
        %v3973 = vpack.c.bf16 %v3957, %v3956
        %v3974 = vpack.c.bf16 %v1876, %v1874
        %v3975 = vpack.c.bf16 %v1881, %v1879
        %v3976 = vpack.c.bf16 %v1886, %v1884
        %v3977 = vpack.c.bf16 %v1891, %v1889
        %v3978 = vpack.c.bf16 %v1896, %v1894
        %v3979 = vpack.c.bf16 %v1901, %v1899
        %v3980 = vpack.c.bf16 %v1906, %v1904
        %v3981 = vpack.c.bf16 %v1911, %v1909
        %v3982 = vpack.c.bf16 %v1916, %v1914
        %v3983 = vpack.c.bf16 %v1921, %v1919
        %v3984 = vpack.c.bf16 %v1926, %v1924
        %v3985 = vpack.c.bf16 %v1931, %v1929
        %v3986 = vpack.c.bf16 %v1936, %v1934
        %v3987 = vpack.c.bf16 %v1941, %v1939
        %v3988 = vpack.c.bf16 %v1946, %v1944
        %v3989 = vpack.c.bf16 %v1951, %v1949
        %3990 = vmatpush.bf16.xpose.msra.mxu0 %v3965
        %3991 = vmatpush.bf16.xpose.msra.mxu0 %v3964
        %3992 = vmatpush.bf16.xpose.msra.mxu0 %v3963
        %3993 = vmatpush.bf16.xpose.msra.mxu0 %v3962
        %3994 = vmatpush.bf16.xpose.msra.mxu0 %v3961
        %3995 = vmatpush.bf16.xpose.msra.mxu0 %v3960
        %3996 = vmatpush.bf16.xpose.msra.mxu0 %v3959
        %3997 = vmatpush.bf16.xpose.msra.mxu0 %v3958
        %3998 = vmatmul.bf16.gmra.mxu0 %v3534
        %v3999 = vpop.f32.mrf.mxu0
        %v4000 = vadd.f32 0.0, %v3999
        %v4001 = vpop.f32.mrf.mxu0
        %v4002 = vadd.f32 0.0, %v4001
        %4003 = vmatmul.bf16.gmra.mxu0 %v3535
        %v4004 = vpop.f32.mrf.mxu0
        %v4005 = vadd.f32 0.0, %v4004
        %v4006 = vpop.f32.mrf.mxu0
        %v4007 = vadd.f32 0.0, %v4006
        %4008 = vmatmul.bf16.gmra.mxu0 %v3536
        %v4009 = vpop.f32.mrf.mxu0
        %v4010 = vadd.f32 0.0, %v4009
        %v4011 = vpop.f32.mrf.mxu0
        %v4012 = vadd.f32 0.0, %v4011
        %4013 = vmatmul.bf16.gmra.mxu0 %v3537
        %v4014 = vpop.f32.mrf.mxu0
        %v4015 = vadd.f32 0.0, %v4014
        %v4016 = vpop.f32.mrf.mxu0
        %v4017 = vadd.f32 0.0, %v4016
        %4018 = vmatmul.bf16.gmra.mxu0 %v3538
        %v4019 = vpop.f32.mrf.mxu0
        %v4020 = vadd.f32 0.0, %v4019
        %v4021 = vpop.f32.mrf.mxu0
        %v4022 = vadd.f32 0.0, %v4021
        %4023 = vmatmul.bf16.gmra.mxu0 %v3539
        %v4024 = vpop.f32.mrf.mxu0
        %v4025 = vadd.f32 0.0, %v4024
        %v4026 = vpop.f32.mrf.mxu0
        %v4027 = vadd.f32 0.0, %v4026
        %4028 = vmatmul.bf16.gmra.mxu0 %v3540
        %v4029 = vpop.f32.mrf.mxu0
        %v4030 = vadd.f32 0.0, %v4029
        %v4031 = vpop.f32.mrf.mxu0
        %v4032 = vadd.f32 0.0, %v4031
        %4033 = vmatmul.bf16.gmra.mxu0 %v3541
        %v4034 = vpop.f32.mrf.mxu0
        %v4035 = vadd.f32 0.0, %v4034
        %v4036 = vpop.f32.mrf.mxu0
        %v4037 = vadd.f32 0.0, %v4036
        %4038 = vdwg.mxu0
        %4039 = vmatpush.bf16.xpose.msra.mxu0 %v3973
        %4040 = vmatpush.bf16.xpose.msra.mxu0 %v3972
        %4041 = vmatpush.bf16.xpose.msra.mxu0 %v3971
        %4042 = vmatpush.bf16.xpose.msra.mxu0 %v3970
        %4043 = vmatpush.bf16.xpose.msra.mxu0 %v3969
        %4044 = vmatpush.bf16.xpose.msra.mxu0 %v3968
        %4045 = vmatpush.bf16.xpose.msra.mxu0 %v3967
        %4046 = vmatpush.bf16.xpose.msra.mxu0 %v3966
        %4047 = vmatmul.bf16.gmra.mxu0 %v3534
        %v4048 = vpop.f32.mrf.mxu0
        %v4049 = vadd.f32 0.0, %v4048
        %v4050 = vpop.f32.mrf.mxu0
        %v4051 = vadd.f32 0.0, %v4050
        %4052 = vmatmul.bf16.gmra.mxu0 %v3535
        %v4053 = vpop.f32.mrf.mxu0
        %v4054 = vadd.f32 0.0, %v4053
        %v4055 = vpop.f32.mrf.mxu0
        %v4056 = vadd.f32 0.0, %v4055
        %4057 = vmatmul.bf16.gmra.mxu0 %v3536
        %v4058 = vpop.f32.mrf.mxu0
        %v4059 = vadd.f32 0.0, %v4058
        %v4060 = vpop.f32.mrf.mxu0
        %v4061 = vadd.f32 0.0, %v4060
        %4062 = vmatmul.bf16.gmra.mxu0 %v3537
        %v4063 = vpop.f32.mrf.mxu0
        %v4064 = vadd.f32 0.0, %v4063
        %v4065 = vpop.f32.mrf.mxu0
        %v4066 = vadd.f32 0.0, %v4065
        %4067 = vmatmul.bf16.gmra.mxu0 %v3538
        %v4068 = vpop.f32.mrf.mxu0
        %v4069 = vadd.f32 0.0, %v4068
        %v4070 = vpop.f32.mrf.mxu0
        %v4071 = vadd.f32 0.0, %v4070
        %4072 = vmatmul.bf16.gmra.mxu0 %v3539
        %v4073 = vpop.f32.mrf.mxu0
        %v4074 = vadd.f32 0.0, %v4073
        %v4075 = vpop.f32.mrf.mxu0
        %v4076 = vadd.f32 0.0, %v4075
        %4077 = vmatmul.bf16.gmra.mxu0 %v3540
        %v4078 = vpop.f32.mrf.mxu0
        %v4079 = vadd.f32 0.0, %v4078
        %v4080 = vpop.f32.mrf.mxu0
        %v4081 = vadd.f32 0.0, %v4080
        %4082 = vmatmul.bf16.gmra.mxu0 %v3541
        %v4083 = vpop.f32.mrf.mxu0
        %v4084 = vadd.f32 0.0, %v4083
        %v4085 = vpop.f32.mrf.mxu0
        %v4086 = vadd.f32 0.0, %v4085
        %4087 = vdwg.mxu0
        %v4088 = vmul.f32 %v4000, 0.088388346
        %v4089 = vmul.f32 %v4049, 0.088388346
        %v4090 = vmul.f32 %v4002, 0.088388346
        %v4091 = vmul.f32 %v4051, 0.088388346
        %v4092 = vmul.f32 %v4005, 0.088388346
        %v4093 = vmul.f32 %v4054, 0.088388346
        %v4094 = vmul.f32 %v4007, 0.088388346
        %v4095 = vmul.f32 %v4056, 0.088388346
        %v4096 = vmul.f32 %v4010, 0.088388346
        %v4097 = vmul.f32 %v4059, 0.088388346
        %v4098 = vmul.f32 %v4012, 0.088388346
        %v4099 = vmul.f32 %v4061, 0.088388346
        %v4100 = vmul.f32 %v4015, 0.088388346
        %v4101 = vmul.f32 %v4064, 0.088388346
        %v4102 = vmul.f32 %v4017, 0.088388346
        %v4103 = vmul.f32 %v4066, 0.088388346
        %v4104 = vmul.f32 %v4020, 0.088388346
        %v4105 = vmul.f32 %v4069, 0.088388346
        %v4106 = vmul.f32 %v4022, 0.088388346
        %v4107 = vmul.f32 %v4071, 0.088388346
        %v4108 = vmul.f32 %v4025, 0.088388346
        %v4109 = vmul.f32 %v4074, 0.088388346
        %v4110 = vmul.f32 %v4027, 0.088388346
        %v4111 = vmul.f32 %v4076, 0.088388346
        %v4112 = vmul.f32 %v4030, 0.088388346
        %v4113 = vmul.f32 %v4079, 0.088388346
        %v4114 = vmul.f32 %v4032, 0.088388346
        %v4115 = vmul.f32 %v4081, 0.088388346
        %v4116 = vmul.f32 %v4035, 0.088388346
        %v4117 = vmul.f32 %v4084, 0.088388346
        %v4118 = vmul.f32 %v4037, 0.088388346
        %v4119 = vmul.f32 %v4086, 0.088388346
        %v4120 = vsel %vm3293, %v4088, -1e+30
        %v4121 = vsel %vm3294, %v4089, -1e+30
        %v4122 = vsel %vm3295, %v4090, -1e+30
        %v4123 = vsel %vm3296, %v4091, -1e+30
        %v4124 = vsel %vm3297, %v4092, -1e+30
        %v4125 = vsel %vm3298, %v4093, -1e+30
        %v4126 = vsel %vm3299, %v4094, -1e+30
        %v4127 = vsel %vm3300, %v4095, -1e+30
        %v4128 = vsel %vm3301, %v4096, -1e+30
        %v4129 = vsel %vm3302, %v4097, -1e+30
        %v4130 = vsel %vm3303, %v4098, -1e+30
        %v4131 = vsel %vm3304, %v4099, -1e+30
        %v4132 = vsel %vm3305, %v4100, -1e+30
        %v4133 = vsel %vm3306, %v4101, -1e+30
        %v4134 = vsel %vm3307, %v4102, -1e+30
        %v4135 = vsel %vm3308, %v4103, -1e+30
        %v4136 = vsel %vm3309, %v4104, -1e+30
        %v4137 = vsel %vm3310, %v4105, -1e+30
        %v4138 = vsel %vm3311, %v4106, -1e+30
        %v4139 = vsel %vm3312, %v4107, -1e+30
        %v4140 = vsel %vm3313, %v4108, -1e+30
        %v4141 = vsel %vm3314, %v4109, -1e+30
        %v4142 = vsel %vm3315, %v4110, -1e+30
        %v4143 = vsel %vm3316, %v4111, -1e+30
        %v4144 = vsel %vm3317, %v4112, -1e+30
        %v4145 = vsel %vm3318, %v4113, -1e+30
        %v4146 = vsel %vm3319, %v4114, -1e+30
        %v4147 = vsel %vm3320, %v4115, -1e+30
        %v4148 = vsel %vm3321, %v4116, -1e+30
        %v4149 = vsel %vm3322, %v4117, -1e+30
        %v4150 = vsel %vm3323, %v4118, -1e+30
        %v4151 = vsel %vm3324, %v4119, -1e+30
        %v4152 = vmax.f32 %v4120, %v4121
        %4153 = vmax.xlane.f32.xlu0 %v4152
        %v4154 = vpop.xlane.xlu0 %4153
        %v4155 = vmax.f32 %v4122, %v4123
        %4156 = vmax.xlane.f32.xlu0 %v4155
        %v4157 = vpop.xlane.xlu0 %4156
        %v4158 = vmax.f32 %v4124, %v4125
        %4159 = vmax.xlane.f32.xlu0 %v4158
        %v4160 = vpop.xlane.xlu0 %4159
        %v4161 = vmax.f32 %v4126, %v4127
        %4162 = vmax.xlane.f32.xlu0 %v4161
        %v4163 = vpop.xlane.xlu0 %4162
        %v4164 = vmax.f32 %v4128, %v4129
        %4165 = vmax.xlane.f32.xlu0 %v4164
        %v4166 = vpop.xlane.xlu0 %4165
        %v4167 = vmax.f32 %v4130, %v4131
        %4168 = vmax.xlane.f32.xlu0 %v4167
        %v4169 = vpop.xlane.xlu0 %4168
        %v4170 = vmax.f32 %v4132, %v4133
        %4171 = vmax.xlane.f32.xlu0 %v4170
        %v4172 = vpop.xlane.xlu0 %4171
        %v4173 = vmax.f32 %v4134, %v4135
        %4174 = vmax.xlane.f32.xlu0 %v4173
        %v4175 = vpop.xlane.xlu0 %4174
        %v4176 = vmax.f32 %v4136, %v4137
        %4177 = vmax.xlane.f32.xlu0 %v4176
        %v4178 = vpop.xlane.xlu0 %4177
        %v4179 = vmax.f32 %v4138, %v4139
        %4180 = vmax.xlane.f32.xlu0 %v4179
        %v4181 = vpop.xlane.xlu0 %4180
        %v4182 = vmax.f32 %v4140, %v4141
        %4183 = vmax.xlane.f32.xlu0 %v4182
        %v4184 = vpop.xlane.xlu0 %4183
        %v4185 = vmax.f32 %v4142, %v4143
        %4186 = vmax.xlane.f32.xlu0 %v4185
        %v4187 = vpop.xlane.xlu0 %4186
        %v4188 = vmax.f32 %v4144, %v4145
        %4189 = vmax.xlane.f32.xlu0 %v4188
        %v4190 = vpop.xlane.xlu0 %4189
        %v4191 = vmax.f32 %v4146, %v4147
        %4192 = vmax.xlane.f32.xlu0 %v4191
        %v4193 = vpop.xlane.xlu0 %4192
        %v4194 = vmax.f32 %v4148, %v4149
        %4195 = vmax.xlane.f32.xlu0 %v4194
        %v4196 = vpop.xlane.xlu0 %4195
        %v4197 = vmax.f32 %v4150, %v4151
        %4198 = vmax.xlane.f32.xlu0 %v4197
        %v4199 = vpop.xlane.xlu0 %4198
        %v4200 = vsub.f32 %v4120, %v4154
        %v4201 = vsub.f32 %v4121, %v4154
        %v4202 = vsub.f32 %v4122, %v4157
        %v4203 = vsub.f32 %v4123, %v4157
        %v4204 = vsub.f32 %v4124, %v4160
        %v4205 = vsub.f32 %v4125, %v4160
        %v4206 = vsub.f32 %v4126, %v4163
        %v4207 = vsub.f32 %v4127, %v4163
        %v4208 = vsub.f32 %v4128, %v4166
        %v4209 = vsub.f32 %v4129, %v4166
        %v4210 = vsub.f32 %v4130, %v4169
        %v4211 = vsub.f32 %v4131, %v4169
        %v4212 = vsub.f32 %v4132, %v4172
        %v4213 = vsub.f32 %v4133, %v4172
        %v4214 = vsub.f32 %v4134, %v4175
        %v4215 = vsub.f32 %v4135, %v4175
        %v4216 = vsub.f32 %v4136, %v4178
        %v4217 = vsub.f32 %v4137, %v4178
        %v4218 = vsub.f32 %v4138, %v4181
        %v4219 = vsub.f32 %v4139, %v4181
        %v4220 = vsub.f32 %v4140, %v4184
        %v4221 = vsub.f32 %v4141, %v4184
        %v4222 = vsub.f32 %v4142, %v4187
        %v4223 = vsub.f32 %v4143, %v4187
        %v4224 = vsub.f32 %v4144, %v4190
        %v4225 = vsub.f32 %v4145, %v4190
        %v4226 = vsub.f32 %v4146, %v4193
        %v4227 = vsub.f32 %v4147, %v4193
        %v4228 = vsub.f32 %v4148, %v4196
        %v4229 = vsub.f32 %v4149, %v4196
        %v4230 = vsub.f32 %v4150, %v4199
        %v4231 = vsub.f32 %v4151, %v4199
        %v4232 = vmul.f32 %v4200, 1.442695
        %v4233 = vpow.pop %v4232
        %v4234 = vmul.f32 %v4201, 1.442695
        %v4235 = vpow.pop %v4234
        %v4236 = vmul.f32 %v4202, 1.442695
        %v4237 = vpow.pop %v4236
        %v4238 = vmul.f32 %v4203, 1.442695
        %v4239 = vpow.pop %v4238
        %v4240 = vmul.f32 %v4204, 1.442695
        %v4241 = vpow.pop %v4240
        %v4242 = vmul.f32 %v4205, 1.442695
        %v4243 = vpow.pop %v4242
        %v4244 = vmul.f32 %v4206, 1.442695
        %v4245 = vpow.pop %v4244
        %v4246 = vmul.f32 %v4207, 1.442695
        %v4247 = vpow.pop %v4246
        %v4248 = vmul.f32 %v4208, 1.442695
        %v4249 = vpow.pop %v4248
        %v4250 = vmul.f32 %v4209, 1.442695
        %v4251 = vpow.pop %v4250
        %v4252 = vmul.f32 %v4210, 1.442695
        %v4253 = vpow.pop %v4252
        %v4254 = vmul.f32 %v4211, 1.442695
        %v4255 = vpow.pop %v4254
        %v4256 = vmul.f32 %v4212, 1.442695
        %v4257 = vpow.pop %v4256
        %v4258 = vmul.f32 %v4213, 1.442695
        %v4259 = vpow.pop %v4258
        %v4260 = vmul.f32 %v4214, 1.442695
        %v4261 = vpow.pop %v4260
        %v4262 = vmul.f32 %v4215, 1.442695
        %v4263 = vpow.pop %v4262
        %v4264 = vmul.f32 %v4216, 1.442695
        %v4265 = vpow.pop %v4264
        %v4266 = vmul.f32 %v4217, 1.442695
        %v4267 = vpow.pop %v4266
        %v4268 = vmul.f32 %v4218, 1.442695
        %v4269 = vpow.pop %v4268
        %v4270 = vmul.f32 %v4219, 1.442695
        %v4271 = vpow.pop %v4270
        %v4272 = vmul.f32 %v4220, 1.442695
        %v4273 = vpow.pop %v4272
        %v4274 = vmul.f32 %v4221, 1.442695
        %v4275 = vpow.pop %v4274
        %v4276 = vmul.f32 %v4222, 1.442695
        %v4277 = vpow.pop %v4276
        %v4278 = vmul.f32 %v4223, 1.442695
        %v4279 = vpow.pop %v4278
        %v4280 = vmul.f32 %v4224, 1.442695
        %v4281 = vpow.pop %v4280
        %v4282 = vmul.f32 %v4225, 1.442695
        %v4283 = vpow.pop %v4282
        %v4284 = vmul.f32 %v4226, 1.442695
        %v4285 = vpow.pop %v4284
        %v4286 = vmul.f32 %v4227, 1.442695
        %v4287 = vpow.pop %v4286
        %v4288 = vmul.f32 %v4228, 1.442695
        %v4289 = vpow.pop %v4288
        %v4290 = vmul.f32 %v4229, 1.442695
        %v4291 = vpow.pop %v4290
        %v4292 = vmul.f32 %v4230, 1.442695
        %v4293 = vpow.pop %v4292
        %v4294 = vmul.f32 %v4231, 1.442695
        %v4295 = vpow.pop %v4294
        %v4296 = vadd.f32 %v4233, %v4235
        %4297 = vadd.xlane.f32.xlu0 %v4296
        %v4298 = vpop.xlane.xlu0 %4297
        %v4299 = vadd.f32 %v4237, %v4239
        %4300 = vadd.xlane.f32.xlu0 %v4299
        %v4301 = vpop.xlane.xlu0 %4300
        %v4302 = vadd.f32 %v4241, %v4243
        %4303 = vadd.xlane.f32.xlu0 %v4302
        %v4304 = vpop.xlane.xlu0 %4303
        %v4305 = vadd.f32 %v4245, %v4247
        %4306 = vadd.xlane.f32.xlu0 %v4305
        %v4307 = vpop.xlane.xlu0 %4306
        %v4308 = vadd.f32 %v4249, %v4251
        %4309 = vadd.xlane.f32.xlu0 %v4308
        %v4310 = vpop.xlane.xlu0 %4309
        %v4311 = vadd.f32 %v4253, %v4255
        %4312 = vadd.xlane.f32.xlu0 %v4311
        %v4313 = vpop.xlane.xlu0 %4312
        %v4314 = vadd.f32 %v4257, %v4259
        %4315 = vadd.xlane.f32.xlu0 %v4314
        %v4316 = vpop.xlane.xlu0 %4315
        %v4317 = vadd.f32 %v4261, %v4263
        %4318 = vadd.xlane.f32.xlu0 %v4317
        %v4319 = vpop.xlane.xlu0 %4318
        %v4320 = vadd.f32 %v4265, %v4267
        %4321 = vadd.xlane.f32.xlu0 %v4320
        %v4322 = vpop.xlane.xlu0 %4321
        %v4323 = vadd.f32 %v4269, %v4271
        %4324 = vadd.xlane.f32.xlu0 %v4323
        %v4325 = vpop.xlane.xlu0 %4324
        %v4326 = vadd.f32 %v4273, %v4275
        %4327 = vadd.xlane.f32.xlu0 %v4326
        %v4328 = vpop.xlane.xlu0 %4327
        %v4329 = vadd.f32 %v4277, %v4279
        %4330 = vadd.xlane.f32.xlu0 %v4329
        %v4331 = vpop.xlane.xlu0 %4330
        %v4332 = vadd.f32 %v4281, %v4283
        %4333 = vadd.xlane.f32.xlu0 %v4332
        %v4334 = vpop.xlane.xlu0 %4333
        %v4335 = vadd.f32 %v4285, %v4287
        %4336 = vadd.xlane.f32.xlu0 %v4335
        %v4337 = vpop.xlane.xlu0 %4336
        %v4338 = vadd.f32 %v4289, %v4291
        %4339 = vadd.xlane.f32.xlu0 %v4338
        %v4340 = vpop.xlane.xlu0 %4339
        %v4341 = vadd.f32 %v4293, %v4295
        %4342 = vadd.xlane.f32.xlu0 %v4341
        %v4343 = vpop.xlane.xlu0 %4342
        %v4344 = vpack.c.bf16 %v4237, %v4233
        %v4345 = vpack.c.bf16 %v4239, %v4235
        %v4346 = vpack.c.bf16 %v4245, %v4241
        %v4347 = vpack.c.bf16 %v4247, %v4243
        %v4348 = vpack.c.bf16 %v4253, %v4249
        %v4349 = vpack.c.bf16 %v4255, %v4251
        %v4350 = vpack.c.bf16 %v4261, %v4257
        %v4351 = vpack.c.bf16 %v4263, %v4259
        %v4352 = vpack.c.bf16 %v4269, %v4265
        %v4353 = vpack.c.bf16 %v4271, %v4267
        %v4354 = vpack.c.bf16 %v4277, %v4273
        %v4355 = vpack.c.bf16 %v4279, %v4275
        %v4356 = vpack.c.bf16 %v4285, %v4281
        %v4357 = vpack.c.bf16 %v4287, %v4283
        %v4358 = vpack.c.bf16 %v4293, %v4289
        %v4359 = vpack.c.bf16 %v4295, %v4291
        %4360 = vmatpush.bf16.msra.mxu0 %v3981
        %4361 = vmatpush.bf16.msra.mxu0 %v3980
        %4362 = vmatpush.bf16.msra.mxu0 %v3979
        %4363 = vmatpush.bf16.msra.mxu0 %v3978
        %4364 = vmatpush.bf16.msra.mxu0 %v3977
        %4365 = vmatpush.bf16.msra.mxu0 %v3976
        %4366 = vmatpush.bf16.msra.mxu0 %v3975
        %4367 = vmatpush.bf16.msra.mxu0 %v3974
        %4368 = vmatmul.bf16.gmra.mxu0 %v4344
        %v4369 = vpop.f32.mrf.mxu0
        %v4370 = vadd.f32 0.0, %v4369
        %v4371 = vpop.f32.mrf.mxu0
        %v4372 = vadd.f32 0.0, %v4371
        %4373 = vmatmul.bf16.gmra.mxu0 %v4346
        %v4374 = vpop.f32.mrf.mxu0
        %v4375 = vadd.f32 0.0, %v4374
        %v4376 = vpop.f32.mrf.mxu0
        %v4377 = vadd.f32 0.0, %v4376
        %4378 = vmatmul.bf16.gmra.mxu0 %v4348
        %v4379 = vpop.f32.mrf.mxu0
        %v4380 = vadd.f32 0.0, %v4379
        %v4381 = vpop.f32.mrf.mxu0
        %v4382 = vadd.f32 0.0, %v4381
        %4383 = vmatmul.bf16.gmra.mxu0 %v4350
        %v4384 = vpop.f32.mrf.mxu0
        %v4385 = vadd.f32 0.0, %v4384
        %v4386 = vpop.f32.mrf.mxu0
        %v4387 = vadd.f32 0.0, %v4386
        %4388 = vmatmul.bf16.gmra.mxu0 %v4352
        %v4389 = vpop.f32.mrf.mxu0
        %v4390 = vadd.f32 0.0, %v4389
        %v4391 = vpop.f32.mrf.mxu0
        %v4392 = vadd.f32 0.0, %v4391
        %4393 = vmatmul.bf16.gmra.mxu0 %v4354
        %v4394 = vpop.f32.mrf.mxu0
        %v4395 = vadd.f32 0.0, %v4394
        %v4396 = vpop.f32.mrf.mxu0
        %v4397 = vadd.f32 0.0, %v4396
        %4398 = vmatmul.bf16.gmra.mxu0 %v4356
        %v4399 = vpop.f32.mrf.mxu0
        %v4400 = vadd.f32 0.0, %v4399
        %v4401 = vpop.f32.mrf.mxu0
        %v4402 = vadd.f32 0.0, %v4401
        %4403 = vmatmul.bf16.gmra.mxu0 %v4358
        %v4404 = vpop.f32.mrf.mxu0
        %v4405 = vadd.f32 0.0, %v4404
        %v4406 = vpop.f32.mrf.mxu0
        %v4407 = vadd.f32 0.0, %v4406
        %4408 = vdwg.mxu0
        %4409 = vmatpush.bf16.msra.mxu0 %v3989
        %4410 = vmatpush.bf16.msra.mxu0 %v3988
        %4411 = vmatpush.bf16.msra.mxu0 %v3987
        %4412 = vmatpush.bf16.msra.mxu0 %v3986
        %4413 = vmatpush.bf16.msra.mxu0 %v3985
        %4414 = vmatpush.bf16.msra.mxu0 %v3984
        %4415 = vmatpush.bf16.msra.mxu0 %v3983
        %4416 = vmatpush.bf16.msra.mxu0 %v3982
        %4417 = vmatmul.bf16.gmra.mxu0 %v4345
        %v4418 = vpop.f32.mrf.mxu0
        %v4419 = vadd.f32 %v4370, %v4418
        %v4420 = vpop.f32.mrf.mxu0
        %v4421 = vadd.f32 %v4372, %v4420
        %4422 = vmatmul.bf16.gmra.mxu0 %v4347
        %v4423 = vpop.f32.mrf.mxu0
        %v4424 = vadd.f32 %v4375, %v4423
        %v4425 = vpop.f32.mrf.mxu0
        %v4426 = vadd.f32 %v4377, %v4425
        %4427 = vmatmul.bf16.gmra.mxu0 %v4349
        %v4428 = vpop.f32.mrf.mxu0
        %v4429 = vadd.f32 %v4380, %v4428
        %v4430 = vpop.f32.mrf.mxu0
        %v4431 = vadd.f32 %v4382, %v4430
        %4432 = vmatmul.bf16.gmra.mxu0 %v4351
        %v4433 = vpop.f32.mrf.mxu0
        %v4434 = vadd.f32 %v4385, %v4433
        %v4435 = vpop.f32.mrf.mxu0
        %v4436 = vadd.f32 %v4387, %v4435
        %4437 = vmatmul.bf16.gmra.mxu0 %v4353
        %v4438 = vpop.f32.mrf.mxu0
        %v4439 = vadd.f32 %v4390, %v4438
        %v4440 = vpop.f32.mrf.mxu0
        %v4441 = vadd.f32 %v4392, %v4440
        %4442 = vmatmul.bf16.gmra.mxu0 %v4355
        %v4443 = vpop.f32.mrf.mxu0
        %v4444 = vadd.f32 %v4395, %v4443
        %v4445 = vpop.f32.mrf.mxu0
        %v4446 = vadd.f32 %v4397, %v4445
        %4447 = vmatmul.bf16.gmra.mxu0 %v4357
        %v4448 = vpop.f32.mrf.mxu0
        %v4449 = vadd.f32 %v4400, %v4448
        %v4450 = vpop.f32.mrf.mxu0
        %v4451 = vadd.f32 %v4402, %v4450
        %4452 = vmatmul.bf16.gmra.mxu0 %v4359
        %v4453 = vpop.f32.mrf.mxu0
        %v4454 = vadd.f32 %v4405, %v4453
        %v4455 = vpop.f32.mrf.mxu0
        %v4456 = vadd.f32 %v4407, %v4455
        %4457 = vdwg.mxu0
        %v4458 = vrcp.pop %v4298
        %v4459 = vrcp.pop %v4301
        %v4460 = vrcp.pop %v4304
        %v4461 = vrcp.pop %v4307
        %v4462 = vrcp.pop %v4310
        %v4463 = vrcp.pop %v4313
        %v4464 = vrcp.pop %v4316
        %v4465 = vrcp.pop %v4319
        %v4466 = vrcp.pop %v4322
        %v4467 = vrcp.pop %v4325
        %v4468 = vrcp.pop %v4328
        %v4469 = vrcp.pop %v4331
        %v4470 = vrcp.pop %v4334
        %v4471 = vrcp.pop %v4337
        %v4472 = vrcp.pop %v4340
        %v4473 = vrcp.pop %v4343
        %v4474 = vmul.f32 %v4419, %v4458
        %v4475 = vmul.f32 %v4421, %v4459
        %v4476 = vmul.f32 %v4424, %v4460
        %v4477 = vmul.f32 %v4426, %v4461
        %v4478 = vmul.f32 %v4429, %v4462
        %v4479 = vmul.f32 %v4431, %v4463
        %v4480 = vmul.f32 %v4434, %v4464
        %v4481 = vmul.f32 %v4436, %v4465
        %v4482 = vmul.f32 %v4439, %v4466
        %v4483 = vmul.f32 %v4441, %v4467
        %v4484 = vmul.f32 %v4444, %v4468
        %v4485 = vmul.f32 %v4446, %v4469
        %v4486 = vmul.f32 %v4449, %v4470
        %v4487 = vmul.f32 %v4451, %v4471
        %v4488 = vmul.f32 %v4454, %v4472
        %v4489 = vmul.f32 %v4456, %v4473
        %v4490 = vsub.f32 0.0, %v2449
        %v4491 = vsub.f32 0.0, %v2451
        %v4492 = vsub.f32 0.0, %v2453
        %v4493 = vsub.f32 0.0, %v2455
        %v4494 = vsub.f32 0.0, %v2457
        %v4495 = vsub.f32 0.0, %v2459
        %v4496 = vsub.f32 0.0, %v2461
        %v4497 = vsub.f32 0.0, %v2463
        %v4498 = vsub.f32 0.0, %v2465
        %v4499 = vsub.f32 0.0, %v2467
        %v4500 = vsub.f32 0.0, %v2469
        %v4501 = vsub.f32 0.0, %v2471
        %v4502 = vsub.f32 0.0, %v2473
        %v4503 = vsub.f32 0.0, %v2475
        %v4504 = vsub.f32 0.0, %v2477
        %v4505 = vsub.f32 0.0, %v2479
        %4522 = vrot.lane.b32.xlu0 %v4490, 64
        %v4523 = vpop.permute.xlu0 %4522
        %4524 = vrot.lane.b32.xlu0 %v4491, 64
        %v4525 = vpop.permute.xlu0 %4524
        %4526 = vrot.lane.b32.xlu0 %v4492, 64
        %v4527 = vpop.permute.xlu0 %4526
        %4528 = vrot.lane.b32.xlu0 %v4493, 64
        %v4529 = vpop.permute.xlu0 %4528
        %4530 = vrot.lane.b32.xlu0 %v4494, 64
        %v4531 = vpop.permute.xlu0 %4530
        %4532 = vrot.lane.b32.xlu0 %v4495, 64
        %v4533 = vpop.permute.xlu0 %4532
        %4534 = vrot.lane.b32.xlu0 %v4496, 64
        %v4535 = vpop.permute.xlu0 %4534
        %4536 = vrot.lane.b32.xlu0 %v4497, 64
        %v4537 = vpop.permute.xlu0 %4536
        %4538 = vrot.lane.b32.xlu0 %v4498, 64
        %v4539 = vpop.permute.xlu0 %4538
        %4540 = vrot.lane.b32.xlu0 %v4499, 64
        %v4541 = vpop.permute.xlu0 %4540
        %4542 = vrot.lane.b32.xlu0 %v4500, 64
        %v4543 = vpop.permute.xlu0 %4542
        %4544 = vrot.lane.b32.xlu0 %v4501, 64
        %v4545 = vpop.permute.xlu0 %4544
        %4546 = vrot.lane.b32.xlu0 %v4502, 64
        %v4547 = vpop.permute.xlu0 %4546
        %4548 = vrot.lane.b32.xlu0 %v4503, 64
        %v4549 = vpop.permute.xlu0 %4548
        %4550 = vrot.lane.b32.xlu0 %v4504, 64
        %v4551 = vpop.permute.xlu0 %4550
        %4552 = vrot.lane.b32.xlu0 %v4505, 64
        %v4553 = vpop.permute.xlu0 %4552
        %4586 = vrot.lane.b32.xlu0 %v2449, 64
        %v4587 = vpop.permute.xlu0 %4586
        %4588 = vrot.lane.b32.xlu0 %v2451, 64
        %v4589 = vpop.permute.xlu0 %4588
        %4590 = vrot.lane.b32.xlu0 %v2453, 64
        %v4591 = vpop.permute.xlu0 %4590
        %4592 = vrot.lane.b32.xlu0 %v2455, 64
        %v4593 = vpop.permute.xlu0 %4592
        %4594 = vrot.lane.b32.xlu0 %v2457, 64
        %v4595 = vpop.permute.xlu0 %4594
        %4596 = vrot.lane.b32.xlu0 %v2459, 64
        %v4597 = vpop.permute.xlu0 %4596
        %4598 = vrot.lane.b32.xlu0 %v2461, 64
        %v4599 = vpop.permute.xlu0 %4598
        %4600 = vrot.lane.b32.xlu0 %v2463, 64
        %v4601 = vpop.permute.xlu0 %4600
        %4602 = vrot.lane.b32.xlu0 %v2465, 64
        %v4603 = vpop.permute.xlu0 %4602
        %4604 = vrot.lane.b32.xlu0 %v2467, 64
        %v4605 = vpop.permute.xlu0 %4604
        %4606 = vrot.lane.b32.xlu0 %v2469, 64
        %v4607 = vpop.permute.xlu0 %4606
        %4608 = vrot.lane.b32.xlu0 %v2471, 64
        %v4609 = vpop.permute.xlu0 %4608
        %4610 = vrot.lane.b32.xlu0 %v2473, 64
        %v4611 = vpop.permute.xlu0 %4610
        %4612 = vrot.lane.b32.xlu0 %v2475, 64
        %v4613 = vpop.permute.xlu0 %4612
        %4614 = vrot.lane.b32.xlu0 %v2477, 64
        %v4615 = vpop.permute.xlu0 %4614
        %4616 = vrot.lane.b32.xlu0 %v2479, 64
        %v4617 = vpop.permute.xlu0 %4616
        %v4634 = vsel %vm3469, %v4523, %v4587
        %v4635 = vsel %vm3469, %v4525, %v4589
        %v4636 = vsel %vm3469, %v4527, %v4591
        %v4637 = vsel %vm3469, %v4529, %v4593
        %v4638 = vsel %vm3469, %v4531, %v4595
        %v4639 = vsel %vm3469, %v4533, %v4597
        %v4640 = vsel %vm3469, %v4535, %v4599
        %v4641 = vsel %vm3469, %v4537, %v4601
        %v4642 = vsel %vm3469, %v4539, %v4603
        %v4643 = vsel %vm3469, %v4541, %v4605
        %v4644 = vsel %vm3469, %v4543, %v4607
        %v4645 = vsel %vm3469, %v4545, %v4609
        %v4646 = vsel %vm3469, %v4547, %v4611
        %v4647 = vsel %vm3469, %v4549, %v4613
        %v4648 = vsel %vm3469, %v4551, %v4615
        %v4649 = vsel %vm3469, %v4553, %v4617
        %v4650 = vmul.f32 %v2449, %v3159
        %v4651 = vmul.f32 %v2451, %v3160
        %v4652 = vmul.f32 %v2453, %v3161
        %v4653 = vmul.f32 %v2455, %v3162
        %v4654 = vmul.f32 %v2457, %v3163
        %v4655 = vmul.f32 %v2459, %v3164
        %v4656 = vmul.f32 %v2461, %v3165
        %v4657 = vmul.f32 %v2463, %v3166
        %v4658 = vmul.f32 %v2465, %v3167
        %v4659 = vmul.f32 %v2467, %v3168
        %v4660 = vmul.f32 %v2469, %v3169
        %v4661 = vmul.f32 %v2471, %v3170
        %v4662 = vmul.f32 %v2473, %v3171
        %v4663 = vmul.f32 %v2475, %v3172
        %v4664 = vmul.f32 %v2477, %v3173
        %v4665 = vmul.f32 %v2479, %v3174
        %v4666 = vmul.f32 %v4634, %v3176
        %v4667 = vmul.f32 %v4635, %v3177
        %v4668 = vmul.f32 %v4636, %v3178
        %v4669 = vmul.f32 %v4637, %v3179
        %v4670 = vmul.f32 %v4638, %v3180
        %v4671 = vmul.f32 %v4639, %v3181
        %v4672 = vmul.f32 %v4640, %v3182
        %v4673 = vmul.f32 %v4641, %v3183
        %v4674 = vmul.f32 %v4642, %v3184
        %v4675 = vmul.f32 %v4643, %v3185
        %v4676 = vmul.f32 %v4644, %v3186
        %v4677 = vmul.f32 %v4645, %v3187
        %v4678 = vmul.f32 %v4646, %v3188
        %v4679 = vmul.f32 %v4647, %v3189
        %v4680 = vmul.f32 %v4648, %v3190
        %v4681 = vmul.f32 %v4649, %v3191
        %v4682 = vadd.f32 %v4650, %v4666
        %v4683 = vadd.f32 %v4651, %v4667
        %v4684 = vadd.f32 %v4652, %v4668
        %v4685 = vadd.f32 %v4653, %v4669
        %v4686 = vadd.f32 %v4654, %v4670
        %v4687 = vadd.f32 %v4655, %v4671
        %v4688 = vadd.f32 %v4656, %v4672
        %v4689 = vadd.f32 %v4657, %v4673
        %v4690 = vadd.f32 %v4658, %v4674
        %v4691 = vadd.f32 %v4659, %v4675
        %v4692 = vadd.f32 %v4660, %v4676
        %v4693 = vadd.f32 %v4661, %v4677
        %v4694 = vadd.f32 %v4662, %v4678
        %v4695 = vadd.f32 %v4663, %v4679
        %v4696 = vadd.f32 %v4664, %v4680
        %v4697 = vadd.f32 %v4665, %v4681
        %v4698 = vpack.c.bf16 %v4683, %v4682
        %v4699 = vpack.c.bf16 %v4685, %v4684
        %v4700 = vpack.c.bf16 %v4687, %v4686
        %v4701 = vpack.c.bf16 %v4689, %v4688
        %v4702 = vpack.c.bf16 %v4691, %v4690
        %v4703 = vpack.c.bf16 %v4693, %v4692
        %v4704 = vpack.c.bf16 %v4695, %v4694
        %v4705 = vpack.c.bf16 %v4697, %v4696
        %v4706 = vsub.f32 0.0, %v3095
        %v4707 = vsub.f32 0.0, %v3097
        %v4708 = vsub.f32 0.0, %v3099
        %v4709 = vsub.f32 0.0, %v3101
        %v4710 = vsub.f32 0.0, %v3103
        %v4711 = vsub.f32 0.0, %v3105
        %v4712 = vsub.f32 0.0, %v3107
        %v4713 = vsub.f32 0.0, %v3109
        %v4714 = vsub.f32 0.0, %v3111
        %v4715 = vsub.f32 0.0, %v3113
        %v4716 = vsub.f32 0.0, %v3115
        %v4717 = vsub.f32 0.0, %v3117
        %v4718 = vsub.f32 0.0, %v3119
        %v4719 = vsub.f32 0.0, %v3121
        %v4720 = vsub.f32 0.0, %v3123
        %v4721 = vsub.f32 0.0, %v3125
        %v4722 = vsub.f32 0.0, %v3127
        %v4723 = vsub.f32 0.0, %v3129
        %v4724 = vsub.f32 0.0, %v3131
        %v4725 = vsub.f32 0.0, %v3133
        %v4726 = vsub.f32 0.0, %v3135
        %v4727 = vsub.f32 0.0, %v3137
        %v4728 = vsub.f32 0.0, %v3139
        %v4729 = vsub.f32 0.0, %v3141
        %v4730 = vsub.f32 0.0, %v3143
        %v4731 = vsub.f32 0.0, %v3145
        %v4732 = vsub.f32 0.0, %v3147
        %v4733 = vsub.f32 0.0, %v3149
        %v4734 = vsub.f32 0.0, %v3151
        %v4735 = vsub.f32 0.0, %v3153
        %v4736 = vsub.f32 0.0, %v3155
        %v4737 = vsub.f32 0.0, %v3157
        %4770 = vrot.lane.b32.xlu0 %v4706, 64
        %v4771 = vpop.permute.xlu0 %4770
        %4772 = vrot.lane.b32.xlu0 %v4707, 64
        %v4773 = vpop.permute.xlu0 %4772
        %4774 = vrot.lane.b32.xlu0 %v4708, 64
        %v4775 = vpop.permute.xlu0 %4774
        %4776 = vrot.lane.b32.xlu0 %v4709, 64
        %v4777 = vpop.permute.xlu0 %4776
        %4778 = vrot.lane.b32.xlu0 %v4710, 64
        %v4779 = vpop.permute.xlu0 %4778
        %4780 = vrot.lane.b32.xlu0 %v4711, 64
        %v4781 = vpop.permute.xlu0 %4780
        %4782 = vrot.lane.b32.xlu0 %v4712, 64
        %v4783 = vpop.permute.xlu0 %4782
        %4784 = vrot.lane.b32.xlu0 %v4713, 64
        %v4785 = vpop.permute.xlu0 %4784
        %4786 = vrot.lane.b32.xlu0 %v4714, 64
        %v4787 = vpop.permute.xlu0 %4786
        %4788 = vrot.lane.b32.xlu0 %v4715, 64
        %v4789 = vpop.permute.xlu0 %4788
        %4790 = vrot.lane.b32.xlu0 %v4716, 64
        %v4791 = vpop.permute.xlu0 %4790
        %4792 = vrot.lane.b32.xlu0 %v4717, 64
        %v4793 = vpop.permute.xlu0 %4792
        %4794 = vrot.lane.b32.xlu0 %v4718, 64
        %v4795 = vpop.permute.xlu0 %4794
        %4796 = vrot.lane.b32.xlu0 %v4719, 64
        %v4797 = vpop.permute.xlu0 %4796
        %4798 = vrot.lane.b32.xlu0 %v4720, 64
        %v4799 = vpop.permute.xlu0 %4798
        %4800 = vrot.lane.b32.xlu0 %v4721, 64
        %v4801 = vpop.permute.xlu0 %4800
        %4802 = vrot.lane.b32.xlu0 %v4722, 64
        %v4803 = vpop.permute.xlu0 %4802
        %4804 = vrot.lane.b32.xlu0 %v4723, 64
        %v4805 = vpop.permute.xlu0 %4804
        %4806 = vrot.lane.b32.xlu0 %v4724, 64
        %v4807 = vpop.permute.xlu0 %4806
        %4808 = vrot.lane.b32.xlu0 %v4725, 64
        %v4809 = vpop.permute.xlu0 %4808
        %4810 = vrot.lane.b32.xlu0 %v4726, 64
        %v4811 = vpop.permute.xlu0 %4810
        %4812 = vrot.lane.b32.xlu0 %v4727, 64
        %v4813 = vpop.permute.xlu0 %4812
        %4814 = vrot.lane.b32.xlu0 %v4728, 64
        %v4815 = vpop.permute.xlu0 %4814
        %4816 = vrot.lane.b32.xlu0 %v4729, 64
        %v4817 = vpop.permute.xlu0 %4816
        %4818 = vrot.lane.b32.xlu0 %v4730, 64
        %v4819 = vpop.permute.xlu0 %4818
        %4820 = vrot.lane.b32.xlu0 %v4731, 64
        %v4821 = vpop.permute.xlu0 %4820
        %4822 = vrot.lane.b32.xlu0 %v4732, 64
        %v4823 = vpop.permute.xlu0 %4822
        %4824 = vrot.lane.b32.xlu0 %v4733, 64
        %v4825 = vpop.permute.xlu0 %4824
        %4826 = vrot.lane.b32.xlu0 %v4734, 64
        %v4827 = vpop.permute.xlu0 %4826
        %4828 = vrot.lane.b32.xlu0 %v4735, 64
        %v4829 = vpop.permute.xlu0 %4828
        %4830 = vrot.lane.b32.xlu0 %v4736, 64
        %v4831 = vpop.permute.xlu0 %4830
        %4832 = vrot.lane.b32.xlu0 %v4737, 64
        %v4833 = vpop.permute.xlu0 %4832
        %4898 = vrot.lane.b32.xlu0 %v3095, 64
        %v4899 = vpop.permute.xlu0 %4898
        %4900 = vrot.lane.b32.xlu0 %v3097, 64
        %v4901 = vpop.permute.xlu0 %4900
        %4902 = vrot.lane.b32.xlu0 %v3099, 64
        %v4903 = vpop.permute.xlu0 %4902
        %4904 = vrot.lane.b32.xlu0 %v3101, 64
        %v4905 = vpop.permute.xlu0 %4904
        %4906 = vrot.lane.b32.xlu0 %v3103, 64
        %v4907 = vpop.permute.xlu0 %4906
        %4908 = vrot.lane.b32.xlu0 %v3105, 64
        %v4909 = vpop.permute.xlu0 %4908
        %4910 = vrot.lane.b32.xlu0 %v3107, 64
        %v4911 = vpop.permute.xlu0 %4910
        %4912 = vrot.lane.b32.xlu0 %v3109, 64
        %v4913 = vpop.permute.xlu0 %4912
        %4914 = vrot.lane.b32.xlu0 %v3111, 64
        %v4915 = vpop.permute.xlu0 %4914
        %4916 = vrot.lane.b32.xlu0 %v3113, 64
        %v4917 = vpop.permute.xlu0 %4916
        %4918 = vrot.lane.b32.xlu0 %v3115, 64
        %v4919 = vpop.permute.xlu0 %4918
        %4920 = vrot.lane.b32.xlu0 %v3117, 64
        %v4921 = vpop.permute.xlu0 %4920
        %4922 = vrot.lane.b32.xlu0 %v3119, 64
        %v4923 = vpop.permute.xlu0 %4922
        %4924 = vrot.lane.b32.xlu0 %v3121, 64
        %v4925 = vpop.permute.xlu0 %4924
        %4926 = vrot.lane.b32.xlu0 %v3123, 64
        %v4927 = vpop.permute.xlu0 %4926
        %4928 = vrot.lane.b32.xlu0 %v3125, 64
        %v4929 = vpop.permute.xlu0 %4928
        %4930 = vrot.lane.b32.xlu0 %v3127, 64
        %v4931 = vpop.permute.xlu0 %4930
        %4932 = vrot.lane.b32.xlu0 %v3129, 64
        %v4933 = vpop.permute.xlu0 %4932
        %4934 = vrot.lane.b32.xlu0 %v3131, 64
        %v4935 = vpop.permute.xlu0 %4934
        %4936 = vrot.lane.b32.xlu0 %v3133, 64
        %v4937 = vpop.permute.xlu0 %4936
        %4938 = vrot.lane.b32.xlu0 %v3135, 64
        %v4939 = vpop.permute.xlu0 %4938
        %4940 = vrot.lane.b32.xlu0 %v3137, 64
        %v4941 = vpop.permute.xlu0 %4940
        %4942 = vrot.lane.b32.xlu0 %v3139, 64
        %v4943 = vpop.permute.xlu0 %4942
        %4944 = vrot.lane.b32.xlu0 %v3141, 64
        %v4945 = vpop.permute.xlu0 %4944
        %4946 = vrot.lane.b32.xlu0 %v3143, 64
        %v4947 = vpop.permute.xlu0 %4946
        %4948 = vrot.lane.b32.xlu0 %v3145, 64
        %v4949 = vpop.permute.xlu0 %4948
        %4950 = vrot.lane.b32.xlu0 %v3147, 64
        %v4951 = vpop.permute.xlu0 %4950
        %4952 = vrot.lane.b32.xlu0 %v3149, 64
        %v4953 = vpop.permute.xlu0 %4952
        %4954 = vrot.lane.b32.xlu0 %v3151, 64
        %v4955 = vpop.permute.xlu0 %4954
        %4956 = vrot.lane.b32.xlu0 %v3153, 64
        %v4957 = vpop.permute.xlu0 %4956
        %4958 = vrot.lane.b32.xlu0 %v3155, 64
        %v4959 = vpop.permute.xlu0 %4958
        %4960 = vrot.lane.b32.xlu0 %v3157, 64
        %v4961 = vpop.permute.xlu0 %4960
        %v4994 = vsel %vm3469, %v4771, %v4899
        %v4995 = vsel %vm3469, %v4773, %v4901
        %v4996 = vsel %vm3469, %v4775, %v4903
        %v4997 = vsel %vm3469, %v4777, %v4905
        %v4998 = vsel %vm3469, %v4779, %v4907
        %v4999 = vsel %vm3469, %v4781, %v4909
        %v5000 = vsel %vm3469, %v4783, %v4911
        %v5001 = vsel %vm3469, %v4785, %v4913
        %v5002 = vsel %vm3469, %v4787, %v4915
        %v5003 = vsel %vm3469, %v4789, %v4917
        %v5004 = vsel %vm3469, %v4791, %v4919
        %v5005 = vsel %vm3469, %v4793, %v4921
        %v5006 = vsel %vm3469, %v4795, %v4923
        %v5007 = vsel %vm3469, %v4797, %v4925
        %v5008 = vsel %vm3469, %v4799, %v4927
        %v5009 = vsel %vm3469, %v4801, %v4929
        %v5010 = vsel %vm3469, %v4803, %v4931
        %v5011 = vsel %vm3469, %v4805, %v4933
        %v5012 = vsel %vm3469, %v4807, %v4935
        %v5013 = vsel %vm3469, %v4809, %v4937
        %v5014 = vsel %vm3469, %v4811, %v4939
        %v5015 = vsel %vm3469, %v4813, %v4941
        %v5016 = vsel %vm3469, %v4815, %v4943
        %v5017 = vsel %vm3469, %v4817, %v4945
        %v5018 = vsel %vm3469, %v4819, %v4947
        %v5019 = vsel %vm3469, %v4821, %v4949
        %v5020 = vsel %vm3469, %v4823, %v4951
        %v5021 = vsel %vm3469, %v4825, %v4953
        %v5022 = vsel %vm3469, %v4827, %v4955
        %v5023 = vsel %vm3469, %v4829, %v4957
        %v5024 = vsel %vm3469, %v4831, %v4959
        %v5025 = vsel %vm3469, %v4833, %v4961
        %v5026 = vmul.f32 %v3095, %v3192
        %v5027 = vmul.f32 %v3097, %v3193
        %v5028 = vmul.f32 %v3099, %v3194
        %v5029 = vmul.f32 %v3101, %v3195
        %v5030 = vmul.f32 %v3103, %v3196
        %v5031 = vmul.f32 %v3105, %v3197
        %v5032 = vmul.f32 %v3107, %v3198
        %v5033 = vmul.f32 %v3109, %v3199
        %v5034 = vmul.f32 %v3111, %v3200
        %v5035 = vmul.f32 %v3113, %v3201
        %v5036 = vmul.f32 %v3115, %v3202
        %v5037 = vmul.f32 %v3117, %v3203
        %v5038 = vmul.f32 %v3119, %v3204
        %v5039 = vmul.f32 %v3121, %v3205
        %v5040 = vmul.f32 %v3123, %v3206
        %v5041 = vmul.f32 %v3125, %v3207
        %v5042 = vmul.f32 %v3127, %v3208
        %v5043 = vmul.f32 %v3129, %v3209
        %v5044 = vmul.f32 %v3131, %v3210
        %v5045 = vmul.f32 %v3133, %v3211
        %v5046 = vmul.f32 %v3135, %v3212
        %v5047 = vmul.f32 %v3137, %v3213
        %v5048 = vmul.f32 %v3139, %v3214
        %v5049 = vmul.f32 %v3141, %v3215
        %v5050 = vmul.f32 %v3143, %v3216
        %v5051 = vmul.f32 %v3145, %v3217
        %v5052 = vmul.f32 %v3147, %v3218
        %v5053 = vmul.f32 %v3149, %v3219
        %v5054 = vmul.f32 %v3151, %v3220
        %v5055 = vmul.f32 %v3153, %v3221
        %v5056 = vmul.f32 %v3155, %v3222
        %v5057 = vmul.f32 %v3157, %v3223
        %v5058 = vmul.f32 %v4994, %v3224
        %v5059 = vmul.f32 %v4995, %v3225
        %v5060 = vmul.f32 %v4996, %v3226
        %v5061 = vmul.f32 %v4997, %v3227
        %v5062 = vmul.f32 %v4998, %v3228
        %v5063 = vmul.f32 %v4999, %v3229
        %v5064 = vmul.f32 %v5000, %v3230
        %v5065 = vmul.f32 %v5001, %v3231
        %v5066 = vmul.f32 %v5002, %v3232
        %v5067 = vmul.f32 %v5003, %v3233
        %v5068 = vmul.f32 %v5004, %v3234
        %v5069 = vmul.f32 %v5005, %v3235
        %v5070 = vmul.f32 %v5006, %v3236
        %v5071 = vmul.f32 %v5007, %v3237
        %v5072 = vmul.f32 %v5008, %v3238
        %v5073 = vmul.f32 %v5009, %v3239
        %v5074 = vmul.f32 %v5010, %v3240
        %v5075 = vmul.f32 %v5011, %v3241
        %v5076 = vmul.f32 %v5012, %v3242
        %v5077 = vmul.f32 %v5013, %v3243
        %v5078 = vmul.f32 %v5014, %v3244
        %v5079 = vmul.f32 %v5015, %v3245
        %v5080 = vmul.f32 %v5016, %v3246
        %v5081 = vmul.f32 %v5017, %v3247
        %v5082 = vmul.f32 %v5018, %v3248
        %v5083 = vmul.f32 %v5019, %v3249
        %v5084 = vmul.f32 %v5020, %v3250
        %v5085 = vmul.f32 %v5021, %v3251
        %v5086 = vmul.f32 %v5022, %v3252
        %v5087 = vmul.f32 %v5023, %v3253
        %v5088 = vmul.f32 %v5024, %v3254
        %v5089 = vmul.f32 %v5025, %v3255
        %v5090 = vadd.f32 %v5026, %v5058
        %v5091 = vadd.f32 %v5027, %v5059
        %v5092 = vadd.f32 %v5028, %v5060
        %v5093 = vadd.f32 %v5029, %v5061
        %v5094 = vadd.f32 %v5030, %v5062
        %v5095 = vadd.f32 %v5031, %v5063
        %v5096 = vadd.f32 %v5032, %v5064
        %v5097 = vadd.f32 %v5033, %v5065
        %v5098 = vadd.f32 %v5034, %v5066
        %v5099 = vadd.f32 %v5035, %v5067
        %v5100 = vadd.f32 %v5036, %v5068
        %v5101 = vadd.f32 %v5037, %v5069
        %v5102 = vadd.f32 %v5038, %v5070
        %v5103 = vadd.f32 %v5039, %v5071
        %v5104 = vadd.f32 %v5040, %v5072
        %v5105 = vadd.f32 %v5041, %v5073
        %v5106 = vadd.f32 %v5042, %v5074
        %v5107 = vadd.f32 %v5043, %v5075
        %v5108 = vadd.f32 %v5044, %v5076
        %v5109 = vadd.f32 %v5045, %v5077
        %v5110 = vadd.f32 %v5046, %v5078
        %v5111 = vadd.f32 %v5047, %v5079
        %v5112 = vadd.f32 %v5048, %v5080
        %v5113 = vadd.f32 %v5049, %v5081
        %v5114 = vadd.f32 %v5050, %v5082
        %v5115 = vadd.f32 %v5051, %v5083
        %v5116 = vadd.f32 %v5052, %v5084
        %v5117 = vadd.f32 %v5053, %v5085
        %v5118 = vadd.f32 %v5054, %v5086
        %v5119 = vadd.f32 %v5055, %v5087
        %v5120 = vadd.f32 %v5056, %v5088
        %v5121 = vadd.f32 %v5057, %v5089
        %v5122 = vpack.c.bf16 %v5091, %v5090
        %v5123 = vpack.c.bf16 %v5093, %v5092
        %v5124 = vpack.c.bf16 %v5095, %v5094
        %v5125 = vpack.c.bf16 %v5097, %v5096
        %v5126 = vpack.c.bf16 %v5099, %v5098
        %v5127 = vpack.c.bf16 %v5101, %v5100
        %v5128 = vpack.c.bf16 %v5103, %v5102
        %v5129 = vpack.c.bf16 %v5105, %v5104
        %v5130 = vpack.c.bf16 %v5107, %v5106
        %v5131 = vpack.c.bf16 %v5109, %v5108
        %v5132 = vpack.c.bf16 %v5111, %v5110
        %v5133 = vpack.c.bf16 %v5113, %v5112
        %v5134 = vpack.c.bf16 %v5115, %v5114
        %v5135 = vpack.c.bf16 %v5117, %v5116
        %v5136 = vpack.c.bf16 %v5119, %v5118
        %v5137 = vpack.c.bf16 %v5121, %v5120
        %v5138 = vpack.c.bf16 %v2054, %v2052
        %v5139 = vpack.c.bf16 %v2059, %v2057
        %v5140 = vpack.c.bf16 %v2064, %v2062
        %v5141 = vpack.c.bf16 %v2069, %v2067
        %v5142 = vpack.c.bf16 %v2074, %v2072
        %v5143 = vpack.c.bf16 %v2079, %v2077
        %v5144 = vpack.c.bf16 %v2084, %v2082
        %v5145 = vpack.c.bf16 %v2089, %v2087
        %v5146 = vpack.c.bf16 %v2094, %v2092
        %v5147 = vpack.c.bf16 %v2099, %v2097
        %v5148 = vpack.c.bf16 %v2104, %v2102
        %v5149 = vpack.c.bf16 %v2109, %v2107
        %v5150 = vpack.c.bf16 %v2114, %v2112
        %v5151 = vpack.c.bf16 %v2119, %v2117
        %v5152 = vpack.c.bf16 %v2124, %v2122
        %v5153 = vpack.c.bf16 %v2129, %v2127
        %5154 = vmatpush.bf16.xpose.msra.mxu0 %v5129
        %5155 = vmatpush.bf16.xpose.msra.mxu0 %v5128
        %5156 = vmatpush.bf16.xpose.msra.mxu0 %v5127
        %5157 = vmatpush.bf16.xpose.msra.mxu0 %v5126
        %5158 = vmatpush.bf16.xpose.msra.mxu0 %v5125
        %5159 = vmatpush.bf16.xpose.msra.mxu0 %v5124
        %5160 = vmatpush.bf16.xpose.msra.mxu0 %v5123
        %5161 = vmatpush.bf16.xpose.msra.mxu0 %v5122
        %5162 = vmatmul.bf16.gmra.mxu0 %v4698
        %v5163 = vpop.f32.mrf.mxu0
        %v5164 = vadd.f32 0.0, %v5163
        %v5165 = vpop.f32.mrf.mxu0
        %v5166 = vadd.f32 0.0, %v5165
        %5167 = vmatmul.bf16.gmra.mxu0 %v4699
        %v5168 = vpop.f32.mrf.mxu0
        %v5169 = vadd.f32 0.0, %v5168
        %v5170 = vpop.f32.mrf.mxu0
        %v5171 = vadd.f32 0.0, %v5170
        %5172 = vmatmul.bf16.gmra.mxu0 %v4700
        %v5173 = vpop.f32.mrf.mxu0
        %v5174 = vadd.f32 0.0, %v5173
        %v5175 = vpop.f32.mrf.mxu0
        %v5176 = vadd.f32 0.0, %v5175
        %5177 = vmatmul.bf16.gmra.mxu0 %v4701
        %v5178 = vpop.f32.mrf.mxu0
        %v5179 = vadd.f32 0.0, %v5178
        %v5180 = vpop.f32.mrf.mxu0
        %v5181 = vadd.f32 0.0, %v5180
        %5182 = vmatmul.bf16.gmra.mxu0 %v4702
        %v5183 = vpop.f32.mrf.mxu0
        %v5184 = vadd.f32 0.0, %v5183
        %v5185 = vpop.f32.mrf.mxu0
        %v5186 = vadd.f32 0.0, %v5185
        %5187 = vmatmul.bf16.gmra.mxu0 %v4703
        %v5188 = vpop.f32.mrf.mxu0
        %v5189 = vadd.f32 0.0, %v5188
        %v5190 = vpop.f32.mrf.mxu0
        %v5191 = vadd.f32 0.0, %v5190
        %5192 = vmatmul.bf16.gmra.mxu0 %v4704
        %v5193 = vpop.f32.mrf.mxu0
        %v5194 = vadd.f32 0.0, %v5193
        %v5195 = vpop.f32.mrf.mxu0
        %v5196 = vadd.f32 0.0, %v5195
        %5197 = vmatmul.bf16.gmra.mxu0 %v4705
        %v5198 = vpop.f32.mrf.mxu0
        %v5199 = vadd.f32 0.0, %v5198
        %v5200 = vpop.f32.mrf.mxu0
        %v5201 = vadd.f32 0.0, %v5200
        %5202 = vdwg.mxu0
        %5203 = vmatpush.bf16.xpose.msra.mxu0 %v5137
        %5204 = vmatpush.bf16.xpose.msra.mxu0 %v5136
        %5205 = vmatpush.bf16.xpose.msra.mxu0 %v5135
        %5206 = vmatpush.bf16.xpose.msra.mxu0 %v5134
        %5207 = vmatpush.bf16.xpose.msra.mxu0 %v5133
        %5208 = vmatpush.bf16.xpose.msra.mxu0 %v5132
        %5209 = vmatpush.bf16.xpose.msra.mxu0 %v5131
        %5210 = vmatpush.bf16.xpose.msra.mxu0 %v5130
        %5211 = vmatmul.bf16.gmra.mxu0 %v4698
        %v5212 = vpop.f32.mrf.mxu0
        %v5213 = vadd.f32 0.0, %v5212
        %v5214 = vpop.f32.mrf.mxu0
        %v5215 = vadd.f32 0.0, %v5214
        %5216 = vmatmul.bf16.gmra.mxu0 %v4699
        %v5217 = vpop.f32.mrf.mxu0
        %v5218 = vadd.f32 0.0, %v5217
        %v5219 = vpop.f32.mrf.mxu0
        %v5220 = vadd.f32 0.0, %v5219
        %5221 = vmatmul.bf16.gmra.mxu0 %v4700
        %v5222 = vpop.f32.mrf.mxu0
        %v5223 = vadd.f32 0.0, %v5222
        %v5224 = vpop.f32.mrf.mxu0
        %v5225 = vadd.f32 0.0, %v5224
        %5226 = vmatmul.bf16.gmra.mxu0 %v4701
        %v5227 = vpop.f32.mrf.mxu0
        %v5228 = vadd.f32 0.0, %v5227
        %v5229 = vpop.f32.mrf.mxu0
        %v5230 = vadd.f32 0.0, %v5229
        %5231 = vmatmul.bf16.gmra.mxu0 %v4702
        %v5232 = vpop.f32.mrf.mxu0
        %v5233 = vadd.f32 0.0, %v5232
        %v5234 = vpop.f32.mrf.mxu0
        %v5235 = vadd.f32 0.0, %v5234
        %5236 = vmatmul.bf16.gmra.mxu0 %v4703
        %v5237 = vpop.f32.mrf.mxu0
        %v5238 = vadd.f32 0.0, %v5237
        %v5239 = vpop.f32.mrf.mxu0
        %v5240 = vadd.f32 0.0, %v5239
        %5241 = vmatmul.bf16.gmra.mxu0 %v4704
        %v5242 = vpop.f32.mrf.mxu0
        %v5243 = vadd.f32 0.0, %v5242
        %v5244 = vpop.f32.mrf.mxu0
        %v5245 = vadd.f32 0.0, %v5244
        %5246 = vmatmul.bf16.gmra.mxu0 %v4705
        %v5247 = vpop.f32.mrf.mxu0
        %v5248 = vadd.f32 0.0, %v5247
        %v5249 = vpop.f32.mrf.mxu0
        %v5250 = vadd.f32 0.0, %v5249
        %5251 = vdwg.mxu0
        %v5252 = vmul.f32 %v5164, 0.088388346
        %v5253 = vmul.f32 %v5213, 0.088388346
        %v5254 = vmul.f32 %v5166, 0.088388346
        %v5255 = vmul.f32 %v5215, 0.088388346
        %v5256 = vmul.f32 %v5169, 0.088388346
        %v5257 = vmul.f32 %v5218, 0.088388346
        %v5258 = vmul.f32 %v5171, 0.088388346
        %v5259 = vmul.f32 %v5220, 0.088388346
        %v5260 = vmul.f32 %v5174, 0.088388346
        %v5261 = vmul.f32 %v5223, 0.088388346
        %v5262 = vmul.f32 %v5176, 0.088388346
        %v5263 = vmul.f32 %v5225, 0.088388346
        %v5264 = vmul.f32 %v5179, 0.088388346
        %v5265 = vmul.f32 %v5228, 0.088388346
        %v5266 = vmul.f32 %v5181, 0.088388346
        %v5267 = vmul.f32 %v5230, 0.088388346
        %v5268 = vmul.f32 %v5184, 0.088388346
        %v5269 = vmul.f32 %v5233, 0.088388346
        %v5270 = vmul.f32 %v5186, 0.088388346
        %v5271 = vmul.f32 %v5235, 0.088388346
        %v5272 = vmul.f32 %v5189, 0.088388346
        %v5273 = vmul.f32 %v5238, 0.088388346
        %v5274 = vmul.f32 %v5191, 0.088388346
        %v5275 = vmul.f32 %v5240, 0.088388346
        %v5276 = vmul.f32 %v5194, 0.088388346
        %v5277 = vmul.f32 %v5243, 0.088388346
        %v5278 = vmul.f32 %v5196, 0.088388346
        %v5279 = vmul.f32 %v5245, 0.088388346
        %v5280 = vmul.f32 %v5199, 0.088388346
        %v5281 = vmul.f32 %v5248, 0.088388346
        %v5282 = vmul.f32 %v5201, 0.088388346
        %v5283 = vmul.f32 %v5250, 0.088388346
        %v5284 = vsel %vm3293, %v5252, -1e+30
        %v5285 = vsel %vm3294, %v5253, -1e+30
        %v5286 = vsel %vm3295, %v5254, -1e+30
        %v5287 = vsel %vm3296, %v5255, -1e+30
        %v5288 = vsel %vm3297, %v5256, -1e+30
        %v5289 = vsel %vm3298, %v5257, -1e+30
        %v5290 = vsel %vm3299, %v5258, -1e+30
        %v5291 = vsel %vm3300, %v5259, -1e+30
        %v5292 = vsel %vm3301, %v5260, -1e+30
        %v5293 = vsel %vm3302, %v5261, -1e+30
        %v5294 = vsel %vm3303, %v5262, -1e+30
        %v5295 = vsel %vm3304, %v5263, -1e+30
        %v5296 = vsel %vm3305, %v5264, -1e+30
        %v5297 = vsel %vm3306, %v5265, -1e+30
        %v5298 = vsel %vm3307, %v5266, -1e+30
        %v5299 = vsel %vm3308, %v5267, -1e+30
        %v5300 = vsel %vm3309, %v5268, -1e+30
        %v5301 = vsel %vm3310, %v5269, -1e+30
        %v5302 = vsel %vm3311, %v5270, -1e+30
        %v5303 = vsel %vm3312, %v5271, -1e+30
        %v5304 = vsel %vm3313, %v5272, -1e+30
        %v5305 = vsel %vm3314, %v5273, -1e+30
        %v5306 = vsel %vm3315, %v5274, -1e+30
        %v5307 = vsel %vm3316, %v5275, -1e+30
        %v5308 = vsel %vm3317, %v5276, -1e+30
        %v5309 = vsel %vm3318, %v5277, -1e+30
        %v5310 = vsel %vm3319, %v5278, -1e+30
        %v5311 = vsel %vm3320, %v5279, -1e+30
        %v5312 = vsel %vm3321, %v5280, -1e+30
        %v5313 = vsel %vm3322, %v5281, -1e+30
        %v5314 = vsel %vm3323, %v5282, -1e+30
        %v5315 = vsel %vm3324, %v5283, -1e+30
        %v5316 = vmax.f32 %v5284, %v5285
        %5317 = vmax.xlane.f32.xlu0 %v5316
        %v5318 = vpop.xlane.xlu0 %5317
        %v5319 = vmax.f32 %v5286, %v5287
        %5320 = vmax.xlane.f32.xlu0 %v5319
        %v5321 = vpop.xlane.xlu0 %5320
        %v5322 = vmax.f32 %v5288, %v5289
        %5323 = vmax.xlane.f32.xlu0 %v5322
        %v5324 = vpop.xlane.xlu0 %5323
        %v5325 = vmax.f32 %v5290, %v5291
        %5326 = vmax.xlane.f32.xlu0 %v5325
        %v5327 = vpop.xlane.xlu0 %5326
        %v5328 = vmax.f32 %v5292, %v5293
        %5329 = vmax.xlane.f32.xlu0 %v5328
        %v5330 = vpop.xlane.xlu0 %5329
        %v5331 = vmax.f32 %v5294, %v5295
        %5332 = vmax.xlane.f32.xlu0 %v5331
        %v5333 = vpop.xlane.xlu0 %5332
        %v5334 = vmax.f32 %v5296, %v5297
        %5335 = vmax.xlane.f32.xlu0 %v5334
        %v5336 = vpop.xlane.xlu0 %5335
        %v5337 = vmax.f32 %v5298, %v5299
        %5338 = vmax.xlane.f32.xlu0 %v5337
        %v5339 = vpop.xlane.xlu0 %5338
        %v5340 = vmax.f32 %v5300, %v5301
        %5341 = vmax.xlane.f32.xlu0 %v5340
        %v5342 = vpop.xlane.xlu0 %5341
        %v5343 = vmax.f32 %v5302, %v5303
        %5344 = vmax.xlane.f32.xlu0 %v5343
        %v5345 = vpop.xlane.xlu0 %5344
        %v5346 = vmax.f32 %v5304, %v5305
        %5347 = vmax.xlane.f32.xlu0 %v5346
        %v5348 = vpop.xlane.xlu0 %5347
        %v5349 = vmax.f32 %v5306, %v5307
        %5350 = vmax.xlane.f32.xlu0 %v5349
        %v5351 = vpop.xlane.xlu0 %5350
        %v5352 = vmax.f32 %v5308, %v5309
        %5353 = vmax.xlane.f32.xlu0 %v5352
        %v5354 = vpop.xlane.xlu0 %5353
        %v5355 = vmax.f32 %v5310, %v5311
        %5356 = vmax.xlane.f32.xlu0 %v5355
        %v5357 = vpop.xlane.xlu0 %5356
        %v5358 = vmax.f32 %v5312, %v5313
        %5359 = vmax.xlane.f32.xlu0 %v5358
        %v5360 = vpop.xlane.xlu0 %5359
        %v5361 = vmax.f32 %v5314, %v5315
        %5362 = vmax.xlane.f32.xlu0 %v5361
        %v5363 = vpop.xlane.xlu0 %5362
        %v5364 = vsub.f32 %v5284, %v5318
        %v5365 = vsub.f32 %v5285, %v5318
        %v5366 = vsub.f32 %v5286, %v5321
        %v5367 = vsub.f32 %v5287, %v5321
        %v5368 = vsub.f32 %v5288, %v5324
        %v5369 = vsub.f32 %v5289, %v5324
        %v5370 = vsub.f32 %v5290, %v5327
        %v5371 = vsub.f32 %v5291, %v5327
        %v5372 = vsub.f32 %v5292, %v5330
        %v5373 = vsub.f32 %v5293, %v5330
        %v5374 = vsub.f32 %v5294, %v5333
        %v5375 = vsub.f32 %v5295, %v5333
        %v5376 = vsub.f32 %v5296, %v5336
        %v5377 = vsub.f32 %v5297, %v5336
        %v5378 = vsub.f32 %v5298, %v5339
        %v5379 = vsub.f32 %v5299, %v5339
        %v5380 = vsub.f32 %v5300, %v5342
        %v5381 = vsub.f32 %v5301, %v5342
        %v5382 = vsub.f32 %v5302, %v5345
        %v5383 = vsub.f32 %v5303, %v5345
        %v5384 = vsub.f32 %v5304, %v5348
        %v5385 = vsub.f32 %v5305, %v5348
        %v5386 = vsub.f32 %v5306, %v5351
        %v5387 = vsub.f32 %v5307, %v5351
        %v5388 = vsub.f32 %v5308, %v5354
        %v5389 = vsub.f32 %v5309, %v5354
        %v5390 = vsub.f32 %v5310, %v5357
        %v5391 = vsub.f32 %v5311, %v5357
        %v5392 = vsub.f32 %v5312, %v5360
        %v5393 = vsub.f32 %v5313, %v5360
        %v5394 = vsub.f32 %v5314, %v5363
        %v5395 = vsub.f32 %v5315, %v5363
        %v5396 = vmul.f32 %v5364, 1.442695
        %v5397 = vpow.pop %v5396
        %v5398 = vmul.f32 %v5365, 1.442695
        %v5399 = vpow.pop %v5398
        %v5400 = vmul.f32 %v5366, 1.442695
        %v5401 = vpow.pop %v5400
        %v5402 = vmul.f32 %v5367, 1.442695
        %v5403 = vpow.pop %v5402
        %v5404 = vmul.f32 %v5368, 1.442695
        %v5405 = vpow.pop %v5404
        %v5406 = vmul.f32 %v5369, 1.442695
        %v5407 = vpow.pop %v5406
        %v5408 = vmul.f32 %v5370, 1.442695
        %v5409 = vpow.pop %v5408
        %v5410 = vmul.f32 %v5371, 1.442695
        %v5411 = vpow.pop %v5410
        %v5412 = vmul.f32 %v5372, 1.442695
        %v5413 = vpow.pop %v5412
        %v5414 = vmul.f32 %v5373, 1.442695
        %v5415 = vpow.pop %v5414
        %v5416 = vmul.f32 %v5374, 1.442695
        %v5417 = vpow.pop %v5416
        %v5418 = vmul.f32 %v5375, 1.442695
        %v5419 = vpow.pop %v5418
        %v5420 = vmul.f32 %v5376, 1.442695
        %v5421 = vpow.pop %v5420
        %v5422 = vmul.f32 %v5377, 1.442695
        %v5423 = vpow.pop %v5422
        %v5424 = vmul.f32 %v5378, 1.442695
        %v5425 = vpow.pop %v5424
        %v5426 = vmul.f32 %v5379, 1.442695
        %v5427 = vpow.pop %v5426
        %v5428 = vmul.f32 %v5380, 1.442695
        %v5429 = vpow.pop %v5428
        %v5430 = vmul.f32 %v5381, 1.442695
        %v5431 = vpow.pop %v5430
        %v5432 = vmul.f32 %v5382, 1.442695
        %v5433 = vpow.pop %v5432
        %v5434 = vmul.f32 %v5383, 1.442695
        %v5435 = vpow.pop %v5434
        %v5436 = vmul.f32 %v5384, 1.442695
        %v5437 = vpow.pop %v5436
        %v5438 = vmul.f32 %v5385, 1.442695
        %v5439 = vpow.pop %v5438
        %v5440 = vmul.f32 %v5386, 1.442695
        %v5441 = vpow.pop %v5440
        %v5442 = vmul.f32 %v5387, 1.442695
        %v5443 = vpow.pop %v5442
        %v5444 = vmul.f32 %v5388, 1.442695
        %v5445 = vpow.pop %v5444
        %v5446 = vmul.f32 %v5389, 1.442695
        %v5447 = vpow.pop %v5446
        %v5448 = vmul.f32 %v5390, 1.442695
        %v5449 = vpow.pop %v5448
        %v5450 = vmul.f32 %v5391, 1.442695
        %v5451 = vpow.pop %v5450
        %v5452 = vmul.f32 %v5392, 1.442695
        %v5453 = vpow.pop %v5452
        %v5454 = vmul.f32 %v5393, 1.442695
        %v5455 = vpow.pop %v5454
        %v5456 = vmul.f32 %v5394, 1.442695
        %v5457 = vpow.pop %v5456
        %v5458 = vmul.f32 %v5395, 1.442695
        %v5459 = vpow.pop %v5458
        %v5460 = vadd.f32 %v5397, %v5399
        %5461 = vadd.xlane.f32.xlu0 %v5460
        %v5462 = vpop.xlane.xlu0 %5461
        %v5463 = vadd.f32 %v5401, %v5403
        %5464 = vadd.xlane.f32.xlu0 %v5463
        %v5465 = vpop.xlane.xlu0 %5464
        %v5466 = vadd.f32 %v5405, %v5407
        %5467 = vadd.xlane.f32.xlu0 %v5466
        %v5468 = vpop.xlane.xlu0 %5467
        %v5469 = vadd.f32 %v5409, %v5411
        %5470 = vadd.xlane.f32.xlu0 %v5469
        %v5471 = vpop.xlane.xlu0 %5470
        %v5472 = vadd.f32 %v5413, %v5415
        %5473 = vadd.xlane.f32.xlu0 %v5472
        %v5474 = vpop.xlane.xlu0 %5473
        %v5475 = vadd.f32 %v5417, %v5419
        %5476 = vadd.xlane.f32.xlu0 %v5475
        %v5477 = vpop.xlane.xlu0 %5476
        %v5478 = vadd.f32 %v5421, %v5423
        %5479 = vadd.xlane.f32.xlu0 %v5478
        %v5480 = vpop.xlane.xlu0 %5479
        %v5481 = vadd.f32 %v5425, %v5427
        %5482 = vadd.xlane.f32.xlu0 %v5481
        %v5483 = vpop.xlane.xlu0 %5482
        %v5484 = vadd.f32 %v5429, %v5431
        %5485 = vadd.xlane.f32.xlu0 %v5484
        %v5486 = vpop.xlane.xlu0 %5485
        %v5487 = vadd.f32 %v5433, %v5435
        %5488 = vadd.xlane.f32.xlu0 %v5487
        %v5489 = vpop.xlane.xlu0 %5488
        %v5490 = vadd.f32 %v5437, %v5439
        %5491 = vadd.xlane.f32.xlu0 %v5490
        %v5492 = vpop.xlane.xlu0 %5491
        %v5493 = vadd.f32 %v5441, %v5443
        %5494 = vadd.xlane.f32.xlu0 %v5493
        %v5495 = vpop.xlane.xlu0 %5494
        %v5496 = vadd.f32 %v5445, %v5447
        %5497 = vadd.xlane.f32.xlu0 %v5496
        %v5498 = vpop.xlane.xlu0 %5497
        %v5499 = vadd.f32 %v5449, %v5451
        %5500 = vadd.xlane.f32.xlu0 %v5499
        %v5501 = vpop.xlane.xlu0 %5500
        %v5502 = vadd.f32 %v5453, %v5455
        %5503 = vadd.xlane.f32.xlu0 %v5502
        %v5504 = vpop.xlane.xlu0 %5503
        %v5505 = vadd.f32 %v5457, %v5459
        %5506 = vadd.xlane.f32.xlu0 %v5505
        %v5507 = vpop.xlane.xlu0 %5506
        %v5508 = vpack.c.bf16 %v5401, %v5397
        %v5509 = vpack.c.bf16 %v5403, %v5399
        %v5510 = vpack.c.bf16 %v5409, %v5405
        %v5511 = vpack.c.bf16 %v5411, %v5407
        %v5512 = vpack.c.bf16 %v5417, %v5413
        %v5513 = vpack.c.bf16 %v5419, %v5415
        %v5514 = vpack.c.bf16 %v5425, %v5421
        %v5515 = vpack.c.bf16 %v5427, %v5423
        %v5516 = vpack.c.bf16 %v5433, %v5429
        %v5517 = vpack.c.bf16 %v5435, %v5431
        %v5518 = vpack.c.bf16 %v5441, %v5437
        %v5519 = vpack.c.bf16 %v5443, %v5439
        %v5520 = vpack.c.bf16 %v5449, %v5445
        %v5521 = vpack.c.bf16 %v5451, %v5447
        %v5522 = vpack.c.bf16 %v5457, %v5453
        %v5523 = vpack.c.bf16 %v5459, %v5455
        %5524 = vmatpush.bf16.msra.mxu0 %v5145
        %5525 = vmatpush.bf16.msra.mxu0 %v5144
        %5526 = vmatpush.bf16.msra.mxu0 %v5143
        %5527 = vmatpush.bf16.msra.mxu0 %v5142
        %5528 = vmatpush.bf16.msra.mxu0 %v5141
        %5529 = vmatpush.bf16.msra.mxu0 %v5140
        %5530 = vmatpush.bf16.msra.mxu0 %v5139
        %5531 = vmatpush.bf16.msra.mxu0 %v5138
        %5532 = vmatmul.bf16.gmra.mxu0 %v5508
        %v5533 = vpop.f32.mrf.mxu0
        %v5534 = vadd.f32 0.0, %v5533
        %v5535 = vpop.f32.mrf.mxu0
        %v5536 = vadd.f32 0.0, %v5535
        %5537 = vmatmul.bf16.gmra.mxu0 %v5510
        %v5538 = vpop.f32.mrf.mxu0
        %v5539 = vadd.f32 0.0, %v5538
        %v5540 = vpop.f32.mrf.mxu0
        %v5541 = vadd.f32 0.0, %v5540
        %5542 = vmatmul.bf16.gmra.mxu0 %v5512
        %v5543 = vpop.f32.mrf.mxu0
        %v5544 = vadd.f32 0.0, %v5543
        %v5545 = vpop.f32.mrf.mxu0
        %v5546 = vadd.f32 0.0, %v5545
        %5547 = vmatmul.bf16.gmra.mxu0 %v5514
        %v5548 = vpop.f32.mrf.mxu0
        %v5549 = vadd.f32 0.0, %v5548
        %v5550 = vpop.f32.mrf.mxu0
        %v5551 = vadd.f32 0.0, %v5550
        %5552 = vmatmul.bf16.gmra.mxu0 %v5516
        %v5553 = vpop.f32.mrf.mxu0
        %v5554 = vadd.f32 0.0, %v5553
        %v5555 = vpop.f32.mrf.mxu0
        %v5556 = vadd.f32 0.0, %v5555
        %5557 = vmatmul.bf16.gmra.mxu0 %v5518
        %v5558 = vpop.f32.mrf.mxu0
        %v5559 = vadd.f32 0.0, %v5558
        %v5560 = vpop.f32.mrf.mxu0
        %v5561 = vadd.f32 0.0, %v5560
        %5562 = vmatmul.bf16.gmra.mxu0 %v5520
        %v5563 = vpop.f32.mrf.mxu0
        %v5564 = vadd.f32 0.0, %v5563
        %v5565 = vpop.f32.mrf.mxu0
        %v5566 = vadd.f32 0.0, %v5565
        %5567 = vmatmul.bf16.gmra.mxu0 %v5522
        %v5568 = vpop.f32.mrf.mxu0
        %v5569 = vadd.f32 0.0, %v5568
        %v5570 = vpop.f32.mrf.mxu0
        %v5571 = vadd.f32 0.0, %v5570
        %5572 = vdwg.mxu0
        %5573 = vmatpush.bf16.msra.mxu0 %v5153
        %5574 = vmatpush.bf16.msra.mxu0 %v5152
        %5575 = vmatpush.bf16.msra.mxu0 %v5151
        %5576 = vmatpush.bf16.msra.mxu0 %v5150
        %5577 = vmatpush.bf16.msra.mxu0 %v5149
        %5578 = vmatpush.bf16.msra.mxu0 %v5148
        %5579 = vmatpush.bf16.msra.mxu0 %v5147
        %5580 = vmatpush.bf16.msra.mxu0 %v5146
        %5581 = vmatmul.bf16.gmra.mxu0 %v5509
        %v5582 = vpop.f32.mrf.mxu0
        %v5583 = vadd.f32 %v5534, %v5582
        %v5584 = vpop.f32.mrf.mxu0
        %v5585 = vadd.f32 %v5536, %v5584
        %5586 = vmatmul.bf16.gmra.mxu0 %v5511
        %v5587 = vpop.f32.mrf.mxu0
        %v5588 = vadd.f32 %v5539, %v5587
        %v5589 = vpop.f32.mrf.mxu0
        %v5590 = vadd.f32 %v5541, %v5589
        %5591 = vmatmul.bf16.gmra.mxu0 %v5513
        %v5592 = vpop.f32.mrf.mxu0
        %v5593 = vadd.f32 %v5544, %v5592
        %v5594 = vpop.f32.mrf.mxu0
        %v5595 = vadd.f32 %v5546, %v5594
        %5596 = vmatmul.bf16.gmra.mxu0 %v5515
        %v5597 = vpop.f32.mrf.mxu0
        %v5598 = vadd.f32 %v5549, %v5597
        %v5599 = vpop.f32.mrf.mxu0
        %v5600 = vadd.f32 %v5551, %v5599
        %5601 = vmatmul.bf16.gmra.mxu0 %v5517
        %v5602 = vpop.f32.mrf.mxu0
        %v5603 = vadd.f32 %v5554, %v5602
        %v5604 = vpop.f32.mrf.mxu0
        %v5605 = vadd.f32 %v5556, %v5604
        %5606 = vmatmul.bf16.gmra.mxu0 %v5519
        %v5607 = vpop.f32.mrf.mxu0
        %v5608 = vadd.f32 %v5559, %v5607
        %v5609 = vpop.f32.mrf.mxu0
        %v5610 = vadd.f32 %v5561, %v5609
        %5611 = vmatmul.bf16.gmra.mxu0 %v5521
        %v5612 = vpop.f32.mrf.mxu0
        %v5613 = vadd.f32 %v5564, %v5612
        %v5614 = vpop.f32.mrf.mxu0
        %v5615 = vadd.f32 %v5566, %v5614
        %5616 = vmatmul.bf16.gmra.mxu0 %v5523
        %v5617 = vpop.f32.mrf.mxu0
        %v5618 = vadd.f32 %v5569, %v5617
        %v5619 = vpop.f32.mrf.mxu0
        %v5620 = vadd.f32 %v5571, %v5619
        %5621 = vdwg.mxu0
        %v5622 = vrcp.pop %v5462
        %v5623 = vrcp.pop %v5465
        %v5624 = vrcp.pop %v5468
        %v5625 = vrcp.pop %v5471
        %v5626 = vrcp.pop %v5474
        %v5627 = vrcp.pop %v5477
        %v5628 = vrcp.pop %v5480
        %v5629 = vrcp.pop %v5483
        %v5630 = vrcp.pop %v5486
        %v5631 = vrcp.pop %v5489
        %v5632 = vrcp.pop %v5492
        %v5633 = vrcp.pop %v5495
        %v5634 = vrcp.pop %v5498
        %v5635 = vrcp.pop %v5501
        %v5636 = vrcp.pop %v5504
        %v5637 = vrcp.pop %v5507
        %v5638 = vmul.f32 %v5583, %v5622
        %v5639 = vmul.f32 %v5585, %v5623
        %v5640 = vmul.f32 %v5588, %v5624
        %v5641 = vmul.f32 %v5590, %v5625
        %v5642 = vmul.f32 %v5593, %v5626
        %v5643 = vmul.f32 %v5595, %v5627
        %v5644 = vmul.f32 %v5598, %v5628
        %v5645 = vmul.f32 %v5600, %v5629
        %v5646 = vmul.f32 %v5603, %v5630
        %v5647 = vmul.f32 %v5605, %v5631
        %v5648 = vmul.f32 %v5608, %v5632
        %v5649 = vmul.f32 %v5610, %v5633
        %v5650 = vmul.f32 %v5613, %v5634
        %v5651 = vmul.f32 %v5615, %v5635
        %v5652 = vmul.f32 %v5618, %v5636
        %v5653 = vmul.f32 %v5620, %v5637
        %v5654 = vpack.c.bf16 %v4475, %v4474
        %v5655 = vpack.c.bf16 %v5639, %v5638
        %v5656 = vpack.c.bf16 %v4477, %v4476
        %v5657 = vpack.c.bf16 %v5641, %v5640
        %v5658 = vpack.c.bf16 %v4479, %v4478
        %v5659 = vpack.c.bf16 %v5643, %v5642
        %v5660 = vpack.c.bf16 %v4481, %v4480
        %v5661 = vpack.c.bf16 %v5645, %v5644
        %v5662 = vpack.c.bf16 %v4483, %v4482
        %v5663 = vpack.c.bf16 %v5647, %v5646
        %v5664 = vpack.c.bf16 %v4485, %v4484
        %v5665 = vpack.c.bf16 %v5649, %v5648
        %v5666 = vpack.c.bf16 %v4487, %v4486
        %v5667 = vpack.c.bf16 %v5651, %v5650
        %v5668 = vpack.c.bf16 %v4489, %v4488
        %v5669 = vpack.c.bf16 %v5653, %v5652
        %v5670 = vld [vmem:[#allocation11] sm:$0xff]
        %v5671 = vld [vmem:[#allocation11 + $0x8] sm:$0xff]
        %v5672 = vld [vmem:[#allocation11 + $0x10] sm:$0xff]
        %v5673 = vld [vmem:[#allocation11 + $0x18] sm:$0xff]
        %v5674 = vld [vmem:[#allocation11 + $0x20] sm:$0xff]
        %v5675 = vld [vmem:[#allocation11 + $0x28] sm:$0xff]
        %v5676 = vld [vmem:[#allocation11 + $0x30] sm:$0xff]
        %v5677 = vld [vmem:[#allocation11 + $0x38] sm:$0xff]
        %v5678 = vld [vmem:[#allocation11 + $0x40] sm:$0xff]
        %v5679 = vld [vmem:[#allocation11 + $0x48] sm:$0xff]
        %v5680 = vld [vmem:[#allocation11 + $0x50] sm:$0xff]
        %v5681 = vld [vmem:[#allocation11 + $0x58] sm:$0xff]
        %v5682 = vld [vmem:[#allocation11 + $0x60] sm:$0xff]
        %v5683 = vld [vmem:[#allocation11 + $0x68] sm:$0xff]
        %v5684 = vld [vmem:[#allocation11 + $0x70] sm:$0xff]
        %v5685 = vld [vmem:[#allocation11 + $0x78] sm:$0xff]
        %v5686 = vld [vmem:[#allocation11 + $0x80] sm:$0xff]
        %v5687 = vld [vmem:[#allocation11 + $0x88] sm:$0xff]
        %v5688 = vld [vmem:[#allocation11 + $0x90] sm:$0xff]
        %v5689 = vld [vmem:[#allocation11 + $0x98] sm:$0xff]
        %v5690 = vld [vmem:[#allocation11 + $0xa0] sm:$0xff]
        %v5691 = vld [vmem:[#allocation11 + $0xa8] sm:$0xff]
        %v5692 = vld [vmem:[#allocation11 + $0xb0] sm:$0xff]
        %v5693 = vld [vmem:[#allocation11 + $0xb8] sm:$0xff]
        %v5694 = vld [vmem:[#allocation11 + $0xc0] sm:$0xff]
        %v5695 = vld [vmem:[#allocation11 + $0xc8] sm:$0xff]
        %v5696 = vld [vmem:[#allocation11 + $0xd0] sm:$0xff]
        %v5697 = vld [vmem:[#allocation11 + $0xd8] sm:$0xff]
        %v5698 = vld [vmem:[#allocation11 + $0xe0] sm:$0xff]
        %v5699 = vld [vmem:[#allocation11 + $0xe8] sm:$0xff]
        %v5700 = vld [vmem:[#allocation11 + $0xf0] sm:$0xff]
        %v5701 = vld [vmem:[#allocation11 + $0xf8] sm:$0xff]
        %v5734 = vunpack.c.l.b16 %v5670
        %v5735 = vunpack.c.h.b16 %v5670
        %v5736 = vunpack.c.l.b16 %v5671
        %v5737 = vunpack.c.h.b16 %v5671
        %v5738 = vunpack.c.l.b16 %v5672
        %v5739 = vunpack.c.h.b16 %v5672
        %v5740 = vunpack.c.l.b16 %v5673
        %v5741 = vunpack.c.h.b16 %v5673
        %v5742 = vunpack.c.l.b16 %v5674
        %v5743 = vunpack.c.h.b16 %v5674
        %v5744 = vunpack.c.l.b16 %v5675
        %v5745 = vunpack.c.h.b16 %v5675
        %v5746 = vunpack.c.l.b16 %v5676
        %v5747 = vunpack.c.h.b16 %v5676
        %v5748 = vunpack.c.l.b16 %v5677
        %v5749 = vunpack.c.h.b16 %v5677
        %v5750 = vunpack.c.l.b16 %v5678
        %v5751 = vunpack.c.h.b16 %v5678
        %v5752 = vunpack.c.l.b16 %v5679
        %v5753 = vunpack.c.h.b16 %v5679
        %v5754 = vunpack.c.l.b16 %v5680
        %v5755 = vunpack.c.h.b16 %v5680
        %v5756 = vunpack.c.l.b16 %v5681
        %v5757 = vunpack.c.h.b16 %v5681
        %v5758 = vunpack.c.l.b16 %v5682
        %v5759 = vunpack.c.h.b16 %v5682
        %v5760 = vunpack.c.l.b16 %v5683
        %v5761 = vunpack.c.h.b16 %v5683
        %v5762 = vunpack.c.l.b16 %v5684
        %v5763 = vunpack.c.h.b16 %v5684
        %v5764 = vunpack.c.l.b16 %v5685
        %v5765 = vunpack.c.h.b16 %v5685
        %v5766 = vunpack.c.l.b16 %v5686
        %v5767 = vunpack.c.h.b16 %v5686
        %v5768 = vunpack.c.l.b16 %v5687
        %v5769 = vunpack.c.h.b16 %v5687
        %v5770 = vunpack.c.l.b16 %v5688
        %v5771 = vunpack.c.h.b16 %v5688
        %v5772 = vunpack.c.l.b16 %v5689
        %v5773 = vunpack.c.h.b16 %v5689
        %v5774 = vunpack.c.l.b16 %v5690
        %v5775 = vunpack.c.h.b16 %v5690
        %v5776 = vunpack.c.l.b16 %v5691
        %v5777 = vunpack.c.h.b16 %v5691
        %v5778 = vunpack.c.l.b16 %v5692
        %v5779 = vunpack.c.h.b16 %v5692
        %v5780 = vunpack.c.l.b16 %v5693
        %v5781 = vunpack.c.h.b16 %v5693
        %v5782 = vunpack.c.l.b16 %v5694
        %v5783 = vunpack.c.h.b16 %v5694
        %v5784 = vunpack.c.l.b16 %v5695
        %v5785 = vunpack.c.h.b16 %v5695
        %v5786 = vunpack.c.l.b16 %v5696
        %v5787 = vunpack.c.h.b16 %v5696
        %v5788 = vunpack.c.l.b16 %v5697
        %v5789 = vunpack.c.h.b16 %v5697
        %v5790 = vunpack.c.l.b16 %v5698
        %v5791 = vunpack.c.h.b16 %v5698
        %v5792 = vunpack.c.l.b16 %v5699
        %v5793 = vunpack.c.h.b16 %v5699
        %v5794 = vunpack.c.l.b16 %v5700
        %v5795 = vunpack.c.h.b16 %v5700
        %v5796 = vunpack.c.l.b16 %v5701
        %v5797 = vunpack.c.h.b16 %v5701
        %v5798 = vpack.c.b16 %v5736, %v5734
        %v5799 = vpack.c.b16 %v5737, %v5735
        %v5800 = vpack.c.b16 %v5740, %v5738
        %v5801 = vpack.c.b16 %v5741, %v5739
        %v5802 = vpack.c.b16 %v5744, %v5742
        %v5803 = vpack.c.b16 %v5745, %v5743
        %v5804 = vpack.c.b16 %v5748, %v5746
        %v5805 = vpack.c.b16 %v5749, %v5747
        %v5806 = vpack.c.b16 %v5752, %v5750
        %v5807 = vpack.c.b16 %v5753, %v5751
        %v5808 = vpack.c.b16 %v5756, %v5754
        %v5809 = vpack.c.b16 %v5757, %v5755
        %v5810 = vpack.c.b16 %v5760, %v5758
        %v5811 = vpack.c.b16 %v5761, %v5759
        %v5812 = vpack.c.b16 %v5764, %v5762
        %v5813 = vpack.c.b16 %v5765, %v5763
        %v5814 = vpack.c.b16 %v5768, %v5766
        %v5815 = vpack.c.b16 %v5769, %v5767
        %v5816 = vpack.c.b16 %v5772, %v5770
        %v5817 = vpack.c.b16 %v5773, %v5771
        %v5818 = vpack.c.b16 %v5776, %v5774
        %v5819 = vpack.c.b16 %v5777, %v5775
        %v5820 = vpack.c.b16 %v5780, %v5778
        %v5821 = vpack.c.b16 %v5781, %v5779
        %v5822 = vpack.c.b16 %v5784, %v5782
        %v5823 = vpack.c.b16 %v5785, %v5783
        %v5824 = vpack.c.b16 %v5788, %v5786
        %v5825 = vpack.c.b16 %v5789, %v5787
        %v5826 = vpack.c.b16 %v5792, %v5790
        %v5827 = vpack.c.b16 %v5793, %v5791
        %v5828 = vpack.c.b16 %v5796, %v5794
        %v5829 = vpack.c.b16 %v5797, %v5795
        %5862 = vmatpush.bf16.msra.mxu0 %v5812
        %5863 = vmatpush.bf16.msra.mxu0 %v5810
        %5864 = vmatpush.bf16.msra.mxu0 %v5808
        %5865 = vmatpush.bf16.msra.mxu0 %v5806
        %5866 = vmatpush.bf16.msra.mxu0 %v5804
        %5867 = vmatpush.bf16.msra.mxu0 %v5802
        %5868 = vmatpush.bf16.msra.mxu0 %v5800
        %5869 = vmatpush.bf16.msra.mxu0 %v5798
        %5870 = vmatmul.bf16.gmra.mxu0 %v5654
        %v5871 = vpop.f32.mrf.mxu0
        %v5872 = vadd.f32 0.0, %v5871
        %v5873 = vpop.f32.mrf.mxu0
        %v5874 = vadd.f32 0.0, %v5873
        %5875 = vmatmul.bf16.gmra.mxu0 %v5656
        %v5876 = vpop.f32.mrf.mxu0
        %v5877 = vadd.f32 0.0, %v5876
        %v5878 = vpop.f32.mrf.mxu0
        %v5879 = vadd.f32 0.0, %v5878
        %5880 = vmatmul.bf16.gmra.mxu0 %v5658
        %v5881 = vpop.f32.mrf.mxu0
        %v5882 = vadd.f32 0.0, %v5881
        %v5883 = vpop.f32.mrf.mxu0
        %v5884 = vadd.f32 0.0, %v5883
        %5885 = vmatmul.bf16.gmra.mxu0 %v5660
        %v5886 = vpop.f32.mrf.mxu0
        %v5887 = vadd.f32 0.0, %v5886
        %v5888 = vpop.f32.mrf.mxu0
        %v5889 = vadd.f32 0.0, %v5888
        %5890 = vmatmul.bf16.gmra.mxu0 %v5662
        %v5891 = vpop.f32.mrf.mxu0
        %v5892 = vadd.f32 0.0, %v5891
        %v5893 = vpop.f32.mrf.mxu0
        %v5894 = vadd.f32 0.0, %v5893
        %5895 = vmatmul.bf16.gmra.mxu0 %v5664
        %v5896 = vpop.f32.mrf.mxu0
        %v5897 = vadd.f32 0.0, %v5896
        %v5898 = vpop.f32.mrf.mxu0
        %v5899 = vadd.f32 0.0, %v5898
        %5900 = vmatmul.bf16.gmra.mxu0 %v5666
        %v5901 = vpop.f32.mrf.mxu0
        %v5902 = vadd.f32 0.0, %v5901
        %v5903 = vpop.f32.mrf.mxu0
        %v5904 = vadd.f32 0.0, %v5903
        %5905 = vmatmul.bf16.gmra.mxu0 %v5668
        %v5906 = vpop.f32.mrf.mxu0
        %v5907 = vadd.f32 0.0, %v5906
        %v5908 = vpop.f32.mrf.mxu0
        %v5909 = vadd.f32 0.0, %v5908
        %5910 = vdwg.mxu0
        %5911 = vmatpush.bf16.msra.mxu0 %v5828
        %5912 = vmatpush.bf16.msra.mxu0 %v5826
        %5913 = vmatpush.bf16.msra.mxu0 %v5824
        %5914 = vmatpush.bf16.msra.mxu0 %v5822
        %5915 = vmatpush.bf16.msra.mxu0 %v5820
        %5916 = vmatpush.bf16.msra.mxu0 %v5818
        %5917 = vmatpush.bf16.msra.mxu0 %v5816
        %5918 = vmatpush.bf16.msra.mxu0 %v5814
        %5919 = vmatmul.bf16.gmra.mxu0 %v5655
        %v5920 = vpop.f32.mrf.mxu0
        %v5921 = vadd.f32 %v5872, %v5920
        %v5922 = vpop.f32.mrf.mxu0
        %v5923 = vadd.f32 %v5874, %v5922
        %5924 = vmatmul.bf16.gmra.mxu0 %v5657
        %v5925 = vpop.f32.mrf.mxu0
        %v5926 = vadd.f32 %v5877, %v5925
        %v5927 = vpop.f32.mrf.mxu0
        %v5928 = vadd.f32 %v5879, %v5927
        %5929 = vmatmul.bf16.gmra.mxu0 %v5659
        %v5930 = vpop.f32.mrf.mxu0
        %v5931 = vadd.f32 %v5882, %v5930
        %v5932 = vpop.f32.mrf.mxu0
        %v5933 = vadd.f32 %v5884, %v5932
        %5934 = vmatmul.bf16.gmra.mxu0 %v5661
        %v5935 = vpop.f32.mrf.mxu0
        %v5936 = vadd.f32 %v5887, %v5935
        %v5937 = vpop.f32.mrf.mxu0
        %v5938 = vadd.f32 %v5889, %v5937
        %5939 = vmatmul.bf16.gmra.mxu0 %v5663
        %v5940 = vpop.f32.mrf.mxu0
        %v5941 = vadd.f32 %v5892, %v5940
        %v5942 = vpop.f32.mrf.mxu0
        %v5943 = vadd.f32 %v5894, %v5942
        %5944 = vmatmul.bf16.gmra.mxu0 %v5665
        %v5945 = vpop.f32.mrf.mxu0
        %v5946 = vadd.f32 %v5897, %v5945
        %v5947 = vpop.f32.mrf.mxu0
        %v5948 = vadd.f32 %v5899, %v5947
        %5949 = vmatmul.bf16.gmra.mxu0 %v5667
        %v5950 = vpop.f32.mrf.mxu0
        %v5951 = vadd.f32 %v5902, %v5950
        %v5952 = vpop.f32.mrf.mxu0
        %v5953 = vadd.f32 %v5904, %v5952
        %5954 = vmatmul.bf16.gmra.mxu0 %v5669
        %v5955 = vpop.f32.mrf.mxu0
        %v5956 = vadd.f32 %v5907, %v5955
        %v5957 = vpop.f32.mrf.mxu0
        %v5958 = vadd.f32 %v5909, %v5957
        %5959 = vdwg.mxu0
        %5960 = vmatpush.bf16.msra.mxu0 %v5813
        %5961 = vmatpush.bf16.msra.mxu0 %v5811
        %5962 = vmatpush.bf16.msra.mxu0 %v5809
        %5963 = vmatpush.bf16.msra.mxu0 %v5807
        %5964 = vmatpush.bf16.msra.mxu0 %v5805
        %5965 = vmatpush.bf16.msra.mxu0 %v5803
        %5966 = vmatpush.bf16.msra.mxu0 %v5801
        %5967 = vmatpush.bf16.msra.mxu0 %v5799
        %5968 = vmatmul.bf16.gmra.mxu0 %v5654
        %v5969 = vpop.f32.mrf.mxu0
        %v5970 = vadd.f32 0.0, %v5969
        %v5971 = vpop.f32.mrf.mxu0
        %v5972 = vadd.f32 0.0, %v5971
        %5973 = vmatmul.bf16.gmra.mxu0 %v5656
        %v5974 = vpop.f32.mrf.mxu0
        %v5975 = vadd.f32 0.0, %v5974
        %v5976 = vpop.f32.mrf.mxu0
        %v5977 = vadd.f32 0.0, %v5976
        %5978 = vmatmul.bf16.gmra.mxu0 %v5658
        %v5979 = vpop.f32.mrf.mxu0
        %v5980 = vadd.f32 0.0, %v5979
        %v5981 = vpop.f32.mrf.mxu0
        %v5982 = vadd.f32 0.0, %v5981
        %5983 = vmatmul.bf16.gmra.mxu0 %v5660
        %v5984 = vpop.f32.mrf.mxu0
        %v5985 = vadd.f32 0.0, %v5984
        %v5986 = vpop.f32.mrf.mxu0
        %v5987 = vadd.f32 0.0, %v5986
        %5988 = vmatmul.bf16.gmra.mxu0 %v5662
        %v5989 = vpop.f32.mrf.mxu0
        %v5990 = vadd.f32 0.0, %v5989
        %v5991 = vpop.f32.mrf.mxu0
        %v5992 = vadd.f32 0.0, %v5991
        %5993 = vmatmul.bf16.gmra.mxu0 %v5664
        %v5994 = vpop.f32.mrf.mxu0
        %v5995 = vadd.f32 0.0, %v5994
        %v5996 = vpop.f32.mrf.mxu0
        %v5997 = vadd.f32 0.0, %v5996
        %5998 = vmatmul.bf16.gmra.mxu0 %v5666
        %v5999 = vpop.f32.mrf.mxu0
        %v6000 = vadd.f32 0.0, %v5999
        %v6001 = vpop.f32.mrf.mxu0
        %v6002 = vadd.f32 0.0, %v6001
        %6003 = vmatmul.bf16.gmra.mxu0 %v5668
        %v6004 = vpop.f32.mrf.mxu0
        %v6005 = vadd.f32 0.0, %v6004
        %v6006 = vpop.f32.mrf.mxu0
        %v6007 = vadd.f32 0.0, %v6006
        %6008 = vdwg.mxu0
        %6009 = vmatpush.bf16.msra.mxu0 %v5829
        %6010 = vmatpush.bf16.msra.mxu0 %v5827
        %6011 = vmatpush.bf16.msra.mxu0 %v5825
        %6012 = vmatpush.bf16.msra.mxu0 %v5823
        %6013 = vmatpush.bf16.msra.mxu0 %v5821
        %6014 = vmatpush.bf16.msra.mxu0 %v5819
        %6015 = vmatpush.bf16.msra.mxu0 %v5817
        %6016 = vmatpush.bf16.msra.mxu0 %v5815
        %6017 = vmatmul.bf16.gmra.mxu0 %v5655
        %v6018 = vpop.f32.mrf.mxu0
        %v6019 = vadd.f32 %v5970, %v6018
        %v6020 = vpop.f32.mrf.mxu0
        %v6021 = vadd.f32 %v5972, %v6020
        %6022 = vmatmul.bf16.gmra.mxu0 %v5657
        %v6023 = vpop.f32.mrf.mxu0
        %v6024 = vadd.f32 %v5975, %v6023
        %v6025 = vpop.f32.mrf.mxu0
        %v6026 = vadd.f32 %v5977, %v6025
        %6027 = vmatmul.bf16.gmra.mxu0 %v5659
        %v6028 = vpop.f32.mrf.mxu0
        %v6029 = vadd.f32 %v5980, %v6028
        %v6030 = vpop.f32.mrf.mxu0
        %v6031 = vadd.f32 %v5982, %v6030
        %6032 = vmatmul.bf16.gmra.mxu0 %v5661
        %v6033 = vpop.f32.mrf.mxu0
        %v6034 = vadd.f32 %v5985, %v6033
        %v6035 = vpop.f32.mrf.mxu0
        %v6036 = vadd.f32 %v5987, %v6035
        %6037 = vmatmul.bf16.gmra.mxu0 %v5663
        %v6038 = vpop.f32.mrf.mxu0
        %v6039 = vadd.f32 %v5990, %v6038
        %v6040 = vpop.f32.mrf.mxu0
        %v6041 = vadd.f32 %v5992, %v6040
        %6042 = vmatmul.bf16.gmra.mxu0 %v5665
        %v6043 = vpop.f32.mrf.mxu0
        %v6044 = vadd.f32 %v5995, %v6043
        %v6045 = vpop.f32.mrf.mxu0
        %v6046 = vadd.f32 %v5997, %v6045
        %6047 = vmatmul.bf16.gmra.mxu0 %v5667
        %v6048 = vpop.f32.mrf.mxu0
        %v6049 = vadd.f32 %v6000, %v6048
        %v6050 = vpop.f32.mrf.mxu0
        %v6051 = vadd.f32 %v6002, %v6050
        %6052 = vmatmul.bf16.gmra.mxu0 %v5669
        %v6053 = vpop.f32.mrf.mxu0
        %v6054 = vadd.f32 %v6005, %v6053
        %v6055 = vpop.f32.mrf.mxu0
        %v6056 = vadd.f32 %v6007, %v6055
        %6057 = vdwg.mxu0
        %v6058 = vld [vmem:[%s7] sm:$0x3]
        %v6059 = vmul.f32 %v5921, %v5921
        %v6060 = vmul.f32 %v6019, %v6019
        %v6061 = vmul.f32 %v5923, %v5923
        %v6062 = vmul.f32 %v6021, %v6021
        %v6063 = vmul.f32 %v5926, %v5926
        %v6064 = vmul.f32 %v6024, %v6024
        %v6065 = vmul.f32 %v5928, %v5928
        %v6066 = vmul.f32 %v6026, %v6026
        %v6067 = vmul.f32 %v5931, %v5931
        %v6068 = vmul.f32 %v6029, %v6029
        %v6069 = vmul.f32 %v5933, %v5933
        %v6070 = vmul.f32 %v6031, %v6031
        %v6071 = vmul.f32 %v5936, %v5936
        %v6072 = vmul.f32 %v6034, %v6034
        %v6073 = vmul.f32 %v5938, %v5938
        %v6074 = vmul.f32 %v6036, %v6036
        %v6075 = vmul.f32 %v5941, %v5941
        %v6076 = vmul.f32 %v6039, %v6039
        %v6077 = vmul.f32 %v5943, %v5943
        %v6078 = vmul.f32 %v6041, %v6041
        %v6079 = vmul.f32 %v5946, %v5946
        %v6080 = vmul.f32 %v6044, %v6044
        %v6081 = vmul.f32 %v5948, %v5948
        %v6082 = vmul.f32 %v6046, %v6046
        %v6083 = vmul.f32 %v5951, %v5951
        %v6084 = vmul.f32 %v6049, %v6049
        %v6085 = vmul.f32 %v5953, %v5953
        %v6086 = vmul.f32 %v6051, %v6051
        %v6087 = vmul.f32 %v5956, %v5956
        %v6088 = vmul.f32 %v6054, %v6054
        %v6089 = vmul.f32 %v5958, %v5958
        %v6090 = vmul.f32 %v6056, %v6056
        %v6091 = vadd.f32 %v6059, %v6060
        %6092 = vadd.xlane.f32.xlu0 %v6091
        %v6093 = vpop.xlane.xlu0 %6092
        %v6094 = vadd.f32 %v6061, %v6062
        %6095 = vadd.xlane.f32.xlu0 %v6094
        %v6096 = vpop.xlane.xlu0 %6095
        %v6097 = vadd.f32 %v6063, %v6064
        %6098 = vadd.xlane.f32.xlu0 %v6097
        %v6099 = vpop.xlane.xlu0 %6098
        %v6100 = vadd.f32 %v6065, %v6066
        %6101 = vadd.xlane.f32.xlu0 %v6100
        %v6102 = vpop.xlane.xlu0 %6101
        %v6103 = vadd.f32 %v6067, %v6068
        %6104 = vadd.xlane.f32.xlu0 %v6103
        %v6105 = vpop.xlane.xlu0 %6104
        %v6106 = vadd.f32 %v6069, %v6070
        %6107 = vadd.xlane.f32.xlu0 %v6106
        %v6108 = vpop.xlane.xlu0 %6107
        %v6109 = vadd.f32 %v6071, %v6072
        %6110 = vadd.xlane.f32.xlu0 %v6109
        %v6111 = vpop.xlane.xlu0 %6110
        %v6112 = vadd.f32 %v6073, %v6074
        %6113 = vadd.xlane.f32.xlu0 %v6112
        %v6114 = vpop.xlane.xlu0 %6113
        %v6115 = vadd.f32 %v6075, %v6076
        %6116 = vadd.xlane.f32.xlu0 %v6115
        %v6117 = vpop.xlane.xlu0 %6116
        %v6118 = vadd.f32 %v6077, %v6078
        %6119 = vadd.xlane.f32.xlu0 %v6118
        %v6120 = vpop.xlane.xlu0 %6119
        %v6121 = vadd.f32 %v6079, %v6080
        %6122 = vadd.xlane.f32.xlu0 %v6121
        %v6123 = vpop.xlane.xlu0 %6122
        %v6124 = vadd.f32 %v6081, %v6082
        %6125 = vadd.xlane.f32.xlu0 %v6124
        %v6126 = vpop.xlane.xlu0 %6125
        %v6127 = vadd.f32 %v6083, %v6084
        %6128 = vadd.xlane.f32.xlu0 %v6127
        %v6129 = vpop.xlane.xlu0 %6128
        %v6130 = vadd.f32 %v6085, %v6086
        %6131 = vadd.xlane.f32.xlu0 %v6130
        %v6132 = vpop.xlane.xlu0 %6131
        %v6133 = vadd.f32 %v6087, %v6088
        %6134 = vadd.xlane.f32.xlu0 %v6133
        %v6135 = vpop.xlane.xlu0 %6134
        %v6136 = vadd.f32 %v6089, %v6090
        %6137 = vadd.xlane.f32.xlu0 %v6136
        %v6138 = vpop.xlane.xlu0 %6137
        %v6139 = vmul.f32 %v6093, %v2218
        %v6140 = vmul.f32 %v6096, %v2218
        %v6141 = vmul.f32 %v6099, %v2218
        %v6142 = vmul.f32 %v6102, %v2218
        %v6143 = vmul.f32 %v6105, %v2218
        %v6144 = vmul.f32 %v6108, %v2218
        %v6145 = vmul.f32 %v6111, %v2218
        %v6146 = vmul.f32 %v6114, %v2218
        %v6147 = vmul.f32 %v6117, %v2218
        %v6148 = vmul.f32 %v6120, %v2218
        %v6149 = vmul.f32 %v6123, %v2218
        %v6150 = vmul.f32 %v6126, %v2218
        %v6151 = vmul.f32 %v6129, %v2218
        %v6152 = vmul.f32 %v6132, %v2218
        %v6153 = vmul.f32 %v6135, %v2218
        %v6154 = vmul.f32 %v6138, %v2218
        %v6155 = vadd.f32 %v6139, 1e-06
        %v6156 = vadd.f32 %v6140, 1e-06
        %v6157 = vadd.f32 %v6141, 1e-06
        %v6158 = vadd.f32 %v6142, 1e-06
        %v6159 = vadd.f32 %v6143, 1e-06
        %v6160 = vadd.f32 %v6144, 1e-06
        %v6161 = vadd.f32 %v6145, 1e-06
        %v6162 = vadd.f32 %v6146, 1e-06
        %v6163 = vadd.f32 %v6147, 1e-06
        %v6164 = vadd.f32 %v6148, 1e-06
        %v6165 = vadd.f32 %v6149, 1e-06
        %v6166 = vadd.f32 %v6150, 1e-06
        %v6167 = vadd.f32 %v6151, 1e-06
        %v6168 = vadd.f32 %v6152, 1e-06
        %v6169 = vadd.f32 %v6153, 1e-06
        %v6170 = vadd.f32 %v6154, 1e-06
        %v6171 = vrsqrt.pop %v6155
        %v6172 = vmul.f32 %v6171, %v6155
        %v6173 = vmul.f32 %v6172, %v6171
        %v6174 = vmul.f32 0.5, %v6173
        %v6175 = vsub.f32 1.5, %v6174
        %v6176 = vmul.f32 %v6171, %v6175
        %vm6177 = vweird.f32 %v6155
        %vm6178 = vweird.f32 %v6171
        %vm6179 = vmor %vm6177, %vm6178
        %v6180 = vsel %vm6179, %v6171, %v6176
        %v6181 = vrsqrt.pop %v6156
        %v6182 = vmul.f32 %v6181, %v6156
        %v6183 = vmul.f32 %v6182, %v6181
        %v6184 = vmul.f32 0.5, %v6183
        %v6185 = vsub.f32 1.5, %v6184
        %v6186 = vmul.f32 %v6181, %v6185
        %vm6187 = vweird.f32 %v6156
        %vm6188 = vweird.f32 %v6181
        %vm6189 = vmor %vm6187, %vm6188
        %v6190 = vsel %vm6189, %v6181, %v6186
        %v6191 = vrsqrt.pop %v6157
        %v6192 = vmul.f32 %v6191, %v6157
        %v6193 = vmul.f32 %v6192, %v6191
        %v6194 = vmul.f32 0.5, %v6193
        %v6195 = vsub.f32 1.5, %v6194
        %v6196 = vmul.f32 %v6191, %v6195
        %vm6197 = vweird.f32 %v6157
        %vm6198 = vweird.f32 %v6191
        %vm6199 = vmor %vm6197, %vm6198
        %v6200 = vsel %vm6199, %v6191, %v6196
        %v6201 = vrsqrt.pop %v6158
        %v6202 = vmul.f32 %v6201, %v6158
        %v6203 = vmul.f32 %v6202, %v6201
        %v6204 = vmul.f32 0.5, %v6203
        %v6205 = vsub.f32 1.5, %v6204
        %v6206 = vmul.f32 %v6201, %v6205
        %vm6207 = vweird.f32 %v6158
        %vm6208 = vweird.f32 %v6201
        %vm6209 = vmor %vm6207, %vm6208
        %v6210 = vsel %vm6209, %v6201, %v6206
        %v6211 = vrsqrt.pop %v6159
        %v6212 = vmul.f32 %v6211, %v6159
        %v6213 = vmul.f32 %v6212, %v6211
        %v6214 = vmul.f32 0.5, %v6213
        %v6215 = vsub.f32 1.5, %v6214
        %v6216 = vmul.f32 %v6211, %v6215
        %vm6217 = vweird.f32 %v6159
        %vm6218 = vweird.f32 %v6211
        %vm6219 = vmor %vm6217, %vm6218
        %v6220 = vsel %vm6219, %v6211, %v6216
        %v6221 = vrsqrt.pop %v6160
        %v6222 = vmul.f32 %v6221, %v6160
        %v6223 = vmul.f32 %v6222, %v6221
        %v6224 = vmul.f32 0.5, %v6223
        %v6225 = vsub.f32 1.5, %v6224
        %v6226 = vmul.f32 %v6221, %v6225
        %vm6227 = vweird.f32 %v6160
        %vm6228 = vweird.f32 %v6221
        %vm6229 = vmor %vm6227, %vm6228
        %v6230 = vsel %vm6229, %v6221, %v6226
        %v6231 = vrsqrt.pop %v6161
        %v6232 = vmul.f32 %v6231, %v6161
        %v6233 = vmul.f32 %v6232, %v6231
        %v6234 = vmul.f32 0.5, %v6233
        %v6235 = vsub.f32 1.5, %v6234
        %v6236 = vmul.f32 %v6231, %v6235
        %vm6237 = vweird.f32 %v6161
        %vm6238 = vweird.f32 %v6231
        %vm6239 = vmor %vm6237, %vm6238
        %v6240 = vsel %vm6239, %v6231, %v6236
        %v6241 = vrsqrt.pop %v6162
        %v6242 = vmul.f32 %v6241, %v6162
        %v6243 = vmul.f32 %v6242, %v6241
        %v6244 = vmul.f32 0.5, %v6243
        %v6245 = vsub.f32 1.5, %v6244
        %v6246 = vmul.f32 %v6241, %v6245
        %vm6247 = vweird.f32 %v6162
        %vm6248 = vweird.f32 %v6241
        %vm6249 = vmor %vm6247, %vm6248
        %v6250 = vsel %vm6249, %v6241, %v6246
        %v6251 = vrsqrt.pop %v6163
        %v6252 = vmul.f32 %v6251, %v6163
        %v6253 = vmul.f32 %v6252, %v6251
        %v6254 = vmul.f32 0.5, %v6253
        %v6255 = vsub.f32 1.5, %v6254
        %v6256 = vmul.f32 %v6251, %v6255
        %vm6257 = vweird.f32 %v6163
        %vm6258 = vweird.f32 %v6251
        %vm6259 = vmor %vm6257, %vm6258
        %v6260 = vsel %vm6259, %v6251, %v6256
        %v6261 = vrsqrt.pop %v6164
        %v6262 = vmul.f32 %v6261, %v6164
        %v6263 = vmul.f32 %v6262, %v6261
        %v6264 = vmul.f32 0.5, %v6263
        %v6265 = vsub.f32 1.5, %v6264
        %v6266 = vmul.f32 %v6261, %v6265
        %vm6267 = vweird.f32 %v6164
        %vm6268 = vweird.f32 %v6261
        %vm6269 = vmor %vm6267, %vm6268
        %v6270 = vsel %vm6269, %v6261, %v6266
        %v6271 = vrsqrt.pop %v6165
        %v6272 = vmul.f32 %v6271, %v6165
        %v6273 = vmul.f32 %v6272, %v6271
        %v6274 = vmul.f32 0.5, %v6273
        %v6275 = vsub.f32 1.5, %v6274
        %v6276 = vmul.f32 %v6271, %v6275
        %vm6277 = vweird.f32 %v6165
        %vm6278 = vweird.f32 %v6271
        %vm6279 = vmor %vm6277, %vm6278
        %v6280 = vsel %vm6279, %v6271, %v6276
        %v6281 = vrsqrt.pop %v6166
        %v6282 = vmul.f32 %v6281, %v6166
        %v6283 = vmul.f32 %v6282, %v6281
        %v6284 = vmul.f32 0.5, %v6283
        %v6285 = vsub.f32 1.5, %v6284
        %v6286 = vmul.f32 %v6281, %v6285
        %vm6287 = vweird.f32 %v6166
        %vm6288 = vweird.f32 %v6281
        %vm6289 = vmor %vm6287, %vm6288
        %v6290 = vsel %vm6289, %v6281, %v6286
        %v6291 = vrsqrt.pop %v6167
        %v6292 = vmul.f32 %v6291, %v6167
        %v6293 = vmul.f32 %v6292, %v6291
        %v6294 = vmul.f32 0.5, %v6293
        %v6295 = vsub.f32 1.5, %v6294
        %v6296 = vmul.f32 %v6291, %v6295
        %vm6297 = vweird.f32 %v6167
        %vm6298 = vweird.f32 %v6291
        %vm6299 = vmor %vm6297, %vm6298
        %v6300 = vsel %vm6299, %v6291, %v6296
        %v6301 = vrsqrt.pop %v6168
        %v6302 = vmul.f32 %v6301, %v6168
        %v6303 = vmul.f32 %v6302, %v6301
        %v6304 = vmul.f32 0.5, %v6303
        %v6305 = vsub.f32 1.5, %v6304
        %v6306 = vmul.f32 %v6301, %v6305
        %vm6307 = vweird.f32 %v6168
        %vm6308 = vweird.f32 %v6301
        %vm6309 = vmor %vm6307, %vm6308
        %v6310 = vsel %vm6309, %v6301, %v6306
        %v6311 = vrsqrt.pop %v6169
        %v6312 = vmul.f32 %v6311, %v6169
        %v6313 = vmul.f32 %v6312, %v6311
        %v6314 = vmul.f32 0.5, %v6313
        %v6315 = vsub.f32 1.5, %v6314
        %v6316 = vmul.f32 %v6311, %v6315
        %vm6317 = vweird.f32 %v6169
        %vm6318 = vweird.f32 %v6311
        %vm6319 = vmor %vm6317, %vm6318
        %v6320 = vsel %vm6319, %v6311, %v6316
        %v6321 = vrsqrt.pop %v6170
        %v6322 = vmul.f32 %v6321, %v6170
        %v6323 = vmul.f32 %v6322, %v6321
        %v6324 = vmul.f32 0.5, %v6323
        %v6325 = vsub.f32 1.5, %v6324
        %v6326 = vmul.f32 %v6321, %v6325
        %vm6327 = vweird.f32 %v6170
        %vm6328 = vweird.f32 %v6321
        %vm6329 = vmor %vm6327, %vm6328
        %v6330 = vsel %vm6329, %v6321, %v6326
        %v6331 = vmul.f32 %v5921, %v6180
        %v6332 = vmul.f32 %v6019, %v6180
        %v6333 = vmul.f32 %v5923, %v6190
        %v6334 = vmul.f32 %v6021, %v6190
        %v6335 = vmul.f32 %v5926, %v6200
        %v6336 = vmul.f32 %v6024, %v6200
        %v6337 = vmul.f32 %v5928, %v6210
        %v6338 = vmul.f32 %v6026, %v6210
        %v6339 = vmul.f32 %v5931, %v6220
        %v6340 = vmul.f32 %v6029, %v6220
        %v6341 = vmul.f32 %v5933, %v6230
        %v6342 = vmul.f32 %v6031, %v6230
        %v6343 = vmul.f32 %v5936, %v6240
        %v6344 = vmul.f32 %v6034, %v6240
        %v6345 = vmul.f32 %v5938, %v6250
        %v6346 = vmul.f32 %v6036, %v6250
        %v6347 = vmul.f32 %v5941, %v6260
        %v6348 = vmul.f32 %v6039, %v6260
        %v6349 = vmul.f32 %v5943, %v6270
        %v6350 = vmul.f32 %v6041, %v6270
        %v6351 = vmul.f32 %v5946, %v6280
        %v6352 = vmul.f32 %v6044, %v6280
        %v6353 = vmul.f32 %v5948, %v6290
        %v6354 = vmul.f32 %v6046, %v6290
        %v6355 = vmul.f32 %v5951, %v6300
        %v6356 = vmul.f32 %v6049, %v6300
        %v6357 = vmul.f32 %v5953, %v6310
        %v6358 = vmul.f32 %v6051, %v6310
        %v6359 = vmul.f32 %v5956, %v6320
        %v6360 = vmul.f32 %v6054, %v6320
        %v6361 = vmul.f32 %v5958, %v6330
        %v6362 = vmul.f32 %v6056, %v6330
        %v6364 = vperm.slane %v6058, 0
        %v6365 = vperm.slane %v6058, 1
        %v6368 = vmul.f32 %v6331, %v6364
        %v6369 = vmul.f32 %v6332, %v6365
        %v6370 = vmul.f32 %v6333, %v6364
        %v6371 = vmul.f32 %v6334, %v6365
        %v6372 = vmul.f32 %v6335, %v6364
        %v6373 = vmul.f32 %v6336, %v6365
        %v6374 = vmul.f32 %v6337, %v6364
        %v6375 = vmul.f32 %v6338, %v6365
        %v6376 = vmul.f32 %v6339, %v6364
        %v6377 = vmul.f32 %v6340, %v6365
        %v6378 = vmul.f32 %v6341, %v6364
        %v6379 = vmul.f32 %v6342, %v6365
        %v6380 = vmul.f32 %v6343, %v6364
        %v6381 = vmul.f32 %v6344, %v6365
        %v6382 = vmul.f32 %v6345, %v6364
        %v6383 = vmul.f32 %v6346, %v6365
        %v6384 = vmul.f32 %v6347, %v6364
        %v6385 = vmul.f32 %v6348, %v6365
        %v6386 = vmul.f32 %v6349, %v6364
        %v6387 = vmul.f32 %v6350, %v6365
        %v6388 = vmul.f32 %v6351, %v6364
        %v6389 = vmul.f32 %v6352, %v6365
        %v6390 = vmul.f32 %v6353, %v6364
        %v6391 = vmul.f32 %v6354, %v6365
        %v6392 = vmul.f32 %v6355, %v6364
        %v6393 = vmul.f32 %v6356, %v6365
        %v6394 = vmul.f32 %v6357, %v6364
        %v6395 = vmul.f32 %v6358, %v6365
        %v6396 = vmul.f32 %v6359, %v6364
        %v6397 = vmul.f32 %v6360, %v6365
        %v6398 = vmul.f32 %v6361, %v6364
        %v6399 = vmul.f32 %v6362, %v6365
        %v6400 = vadd.f32 %v6368, %v567
        %v6401 = vadd.f32 %v6369, %v568
        %v6402 = vadd.f32 %v6370, %v569
        %v6403 = vadd.f32 %v6371, %v570
        %v6404 = vadd.f32 %v6372, %v571
        %v6405 = vadd.f32 %v6373, %v572
        %v6406 = vadd.f32 %v6374, %v573
        %v6407 = vadd.f32 %v6375, %v574
        %v6408 = vadd.f32 %v6376, %v575
        %v6409 = vadd.f32 %v6377, %v576
        %v6410 = vadd.f32 %v6378, %v577
        %v6411 = vadd.f32 %v6379, %v578
        %v6412 = vadd.f32 %v6380, %v579
        %v6413 = vadd.f32 %v6381, %v580
        %v6414 = vadd.f32 %v6382, %v581
        %v6415 = vadd.f32 %v6383, %v582
        %v6416 = vadd.f32 %v6384, %v583
        %v6417 = vadd.f32 %v6385, %v584
        %v6418 = vadd.f32 %v6386, %v585
        %v6419 = vadd.f32 %v6387, %v586
        %v6420 = vadd.f32 %v6388, %v587
        %v6421 = vadd.f32 %v6389, %v588
        %v6422 = vadd.f32 %v6390, %v589
        %v6423 = vadd.f32 %v6391, %v590
        %v6424 = vadd.f32 %v6392, %v591
        %v6425 = vadd.f32 %v6393, %v592
        %v6426 = vadd.f32 %v6394, %v593
        %v6427 = vadd.f32 %v6395, %v594
        %v6428 = vadd.f32 %v6396, %v595
        %v6429 = vadd.f32 %v6397, %v596
        %v6430 = vadd.f32 %v6398, %v597
        %v6431 = vadd.f32 %v6399, %v598
        %v6432 = vpack.c.bf16 %v6402, %v6400
        %v6433 = vpack.c.bf16 %v6403, %v6401
        %v6434 = vpack.c.bf16 %v6406, %v6404
        %v6435 = vpack.c.bf16 %v6407, %v6405
        %v6436 = vpack.c.bf16 %v6410, %v6408
        %v6437 = vpack.c.bf16 %v6411, %v6409
        %v6438 = vpack.c.bf16 %v6414, %v6412
        %v6439 = vpack.c.bf16 %v6415, %v6413
        %v6440 = vpack.c.bf16 %v6418, %v6416
        %v6441 = vpack.c.bf16 %v6419, %v6417
        %v6442 = vpack.c.bf16 %v6422, %v6420
        %v6443 = vpack.c.bf16 %v6423, %v6421
        %v6444 = vpack.c.bf16 %v6426, %v6424
        %v6445 = vpack.c.bf16 %v6427, %v6425
        %v6446 = vpack.c.bf16 %v6430, %v6428
        %v6447 = vpack.c.bf16 %v6431, %v6429
        %v6448 = vld [vmem:[#allocation13] sm:$0xff]
        %v6449 = vld [vmem:[#allocation13 + $0x8] sm:$0xff]
        %v6450 = vld [vmem:[#allocation13 + $0x10] sm:$0xff]
        %v6451 = vld [vmem:[#allocation13 + $0x18] sm:$0xff]
        %v6452 = vld [vmem:[#allocation13 + $0x20] sm:$0xff]
        %v6453 = vld [vmem:[#allocation13 + $0x28] sm:$0xff]
        %v6454 = vld [vmem:[#allocation13 + $0x30] sm:$0xff]
        %v6455 = vld [vmem:[#allocation13 + $0x38] sm:$0xff]
        %v6456 = vld [vmem:[#allocation13 + $0x40] sm:$0xff]
        %v6457 = vld [vmem:[#allocation13 + $0x48] sm:$0xff]
        %v6458 = vld [vmem:[#allocation13 + $0x50] sm:$0xff]
        %v6459 = vld [vmem:[#allocation13 + $0x58] sm:$0xff]
        %v6460 = vld [vmem:[#allocation13 + $0x60] sm:$0xff]
        %v6461 = vld [vmem:[#allocation13 + $0x68] sm:$0xff]
        %v6462 = vld [vmem:[#allocation13 + $0x70] sm:$0xff]
        %v6463 = vld [vmem:[#allocation13 + $0x78] sm:$0xff]
        %v6464 = vld [vmem:[#allocation13 + $0x80] sm:$0xff]
        %v6465 = vld [vmem:[#allocation13 + $0x88] sm:$0xff]
        %v6466 = vld [vmem:[#allocation13 + $0x90] sm:$0xff]
        %v6467 = vld [vmem:[#allocation13 + $0x98] sm:$0xff]
        %v6468 = vld [vmem:[#allocation13 + $0xa0] sm:$0xff]
        %v6469 = vld [vmem:[#allocation13 + $0xa8] sm:$0xff]
        %v6470 = vld [vmem:[#allocation13 + $0xb0] sm:$0xff]
        %v6471 = vld [vmem:[#allocation13 + $0xb8] sm:$0xff]
        %v6472 = vld [vmem:[#allocation13 + $0xc0] sm:$0xff]
        %v6473 = vld [vmem:[#allocation13 + $0xc8] sm:$0xff]
        %v6474 = vld [vmem:[#allocation13 + $0xd0] sm:$0xff]
        %v6475 = vld [vmem:[#allocation13 + $0xd8] sm:$0xff]
        %v6476 = vld [vmem:[#allocation13 + $0xe0] sm:$0xff]
        %v6477 = vld [vmem:[#allocation13 + $0xe8] sm:$0xff]
        %v6478 = vld [vmem:[#allocation13 + $0xf0] sm:$0xff]
        %v6479 = vld [vmem:[#allocation13 + $0xf8] sm:$0xff]
        %v6480 = vld [vmem:[#allocation13 + $0x100] sm:$0xff]
        %v6481 = vld [vmem:[#allocation13 + $0x108] sm:$0xff]
        %v6482 = vld [vmem:[#allocation13 + $0x110] sm:$0xff]
        %v6483 = vld [vmem:[#allocation13 + $0x118] sm:$0xff]
        %v6484 = vld [vmem:[#allocation13 + $0x120] sm:$0xff]
        %v6485 = vld [vmem:[#allocation13 + $0x128] sm:$0xff]
        %v6486 = vld [vmem:[#allocation13 + $0x130] sm:$0xff]
        %v6487 = vld [vmem:[#allocation13 + $0x138] sm:$0xff]
        %v6488 = vld [vmem:[#allocation13 + $0x140] sm:$0xff]
        %v6489 = vld [vmem:[#allocation13 + $0x148] sm:$0xff]
        %v6490 = vld [vmem:[#allocation13 + $0x150] sm:$0xff]
        %v6491 = vld [vmem:[#allocation13 + $0x158] sm:$0xff]
        %v6492 = vld [vmem:[#allocation13 + $0x160] sm:$0xff]
        %v6493 = vld [vmem:[#allocation13 + $0x168] sm:$0xff]
        %v6494 = vld [vmem:[#allocation13 + $0x170] sm:$0xff]
        %v6495 = vld [vmem:[#allocation13 + $0x178] sm:$0xff]
        %v6496 = vld [vmem:[#allocation13 + $0x180] sm:$0xff]
        %v6497 = vld [vmem:[#allocation13 + $0x188] sm:$0xff]
        %v6498 = vld [vmem:[#allocation13 + $0x190] sm:$0xff]
        %v6499 = vld [vmem:[#allocation13 + $0x198] sm:$0xff]
        %v6500 = vld [vmem:[#allocation13 + $0x1a0] sm:$0xff]
        %v6501 = vld [vmem:[#allocation13 + $0x1a8] sm:$0xff]
        %v6502 = vld [vmem:[#allocation13 + $0x1b0] sm:$0xff]
        %v6503 = vld [vmem:[#allocation13 + $0x1b8] sm:$0xff]
        %v6504 = vld [vmem:[#allocation13 + $0x1c0] sm:$0xff]
        %v6505 = vld [vmem:[#allocation13 + $0x1c8] sm:$0xff]
        %v6506 = vld [vmem:[#allocation13 + $0x1d0] sm:$0xff]
        %v6507 = vld [vmem:[#allocation13 + $0x1d8] sm:$0xff]
        %v6508 = vld [vmem:[#allocation13 + $0x1e0] sm:$0xff]
        %v6509 = vld [vmem:[#allocation13 + $0x1e8] sm:$0xff]
        %v6510 = vld [vmem:[#allocation13 + $0x1f0] sm:$0xff]
        %v6511 = vld [vmem:[#allocation13 + $0x1f8] sm:$0xff]
        %v6512 = vld [vmem:[#allocation13 + $0x200] sm:$0xff]
        %v6513 = vld [vmem:[#allocation13 + $0x208] sm:$0xff]
        %v6514 = vld [vmem:[#allocation13 + $0x210] sm:$0xff]
        %v6515 = vld [vmem:[#allocation13 + $0x218] sm:$0xff]
        %v6516 = vld [vmem:[#allocation13 + $0x220] sm:$0xff]
        %v6517 = vld [vmem:[#allocation13 + $0x228] sm:$0xff]
        %v6518 = vld [vmem:[#allocation13 + $0x230] sm:$0xff]
        %v6519 = vld [vmem:[#allocation13 + $0x238] sm:$0xff]
        %v6520 = vld [vmem:[#allocation13 + $0x240] sm:$0xff]
        %v6521 = vld [vmem:[#allocation13 + $0x248] sm:$0xff]
        %v6522 = vld [vmem:[#allocation13 + $0x250] sm:$0xff]
        %v6523 = vld [vmem:[#allocation13 + $0x258] sm:$0xff]
        %v6524 = vld [vmem:[#allocation13 + $0x260] sm:$0xff]
        %v6525 = vld [vmem:[#allocation13 + $0x268] sm:$0xff]
        %v6526 = vld [vmem:[#allocation13 + $0x270] sm:$0xff]
        %v6527 = vld [vmem:[#allocation13 + $0x278] sm:$0xff]
        %v6528 = vld [vmem:[#allocation13 + $0x280] sm:$0xff]
        %v6529 = vld [vmem:[#allocation13 + $0x288] sm:$0xff]
        %v6530 = vld [vmem:[#allocation13 + $0x290] sm:$0xff]
        %v6531 = vld [vmem:[#allocation13 + $0x298] sm:$0xff]
        %v6532 = vld [vmem:[#allocation13 + $0x2a0] sm:$0xff]
        %v6533 = vld [vmem:[#allocation13 + $0x2a8] sm:$0xff]
        %v6534 = vld [vmem:[#allocation13 + $0x2b0] sm:$0xff]
        %v6535 = vld [vmem:[#allocation13 + $0x2b8] sm:$0xff]
        %v6536 = vld [vmem:[#allocation13 + $0x2c0] sm:$0xff]
        %v6537 = vld [vmem:[#allocation13 + $0x2c8] sm:$0xff]
        %v6538 = vld [vmem:[#allocation13 + $0x2d0] sm:$0xff]
        %v6539 = vld [vmem:[#allocation13 + $0x2d8] sm:$0xff]
        %v6540 = vld [vmem:[#allocation13 + $0x2e0] sm:$0xff]
        %v6541 = vld [vmem:[#allocation13 + $0x2e8] sm:$0xff]
        %v6542 = vld [vmem:[#allocation13 + $0x2f0] sm:$0xff]
        %v6543 = vld [vmem:[#allocation13 + $0x2f8] sm:$0xff]
        %v6544 = vld [vmem:[#allocation13 + $0x300] sm:$0xff]
        %v6545 = vld [vmem:[#allocation13 + $0x308] sm:$0xff]
        %v6546 = vld [vmem:[#allocation13 + $0x310] sm:$0xff]
        %v6547 = vld [vmem:[#allocation13 + $0x318] sm:$0xff]
        %v6548 = vld [vmem:[#allocation13 + $0x320] sm:$0xff]
        %v6549 = vld [vmem:[#allocation13 + $0x328] sm:$0xff]
        %v6550 = vld [vmem:[#allocation13 + $0x330] sm:$0xff]
        %v6551 = vld [vmem:[#allocation13 + $0x338] sm:$0xff]
        %v6552 = vld [vmem:[#allocation13 + $0x340] sm:$0xff]
        %v6553 = vld [vmem:[#allocation13 + $0x348] sm:$0xff]
        %v6554 = vld [vmem:[#allocation13 + $0x350] sm:$0xff]
        %v6555 = vld [vmem:[#allocation13 + $0x358] sm:$0xff]
        %v6556 = vld [vmem:[#allocation13 + $0x360] sm:$0xff]
        %v6557 = vld [vmem:[#allocation13 + $0x368] sm:$0xff]
        %v6558 = vld [vmem:[#allocation13 + $0x370] sm:$0xff]
        %v6559 = vld [vmem:[#allocation13 + $0x378] sm:$0xff]
        %v6560 = vld [vmem:[#allocation13 + $0x380] sm:$0xff]
        %v6561 = vld [vmem:[#allocation13 + $0x388] sm:$0xff]
        %v6562 = vld [vmem:[#allocation13 + $0x390] sm:$0xff]
        %v6563 = vld [vmem:[#allocation13 + $0x398] sm:$0xff]
        %v6564 = vld [vmem:[#allocation13 + $0x3a0] sm:$0xff]
        %v6565 = vld [vmem:[#allocation13 + $0x3a8] sm:$0xff]
        %v6566 = vld [vmem:[#allocation13 + $0x3b0] sm:$0xff]
        %v6567 = vld [vmem:[#allocation13 + $0x3b8] sm:$0xff]
        %v6568 = vld [vmem:[#allocation13 + $0x3c0] sm:$0xff]
        %v6569 = vld [vmem:[#allocation13 + $0x3c8] sm:$0xff]
        %v6570 = vld [vmem:[#allocation13 + $0x3d0] sm:$0xff]
        %v6571 = vld [vmem:[#allocation13 + $0x3d8] sm:$0xff]
        %v6572 = vld [vmem:[#allocation13 + $0x3e0] sm:$0xff]
        %v6573 = vld [vmem:[#allocation13 + $0x3e8] sm:$0xff]
        %v6574 = vld [vmem:[#allocation13 + $0x3f0] sm:$0xff]
        %v6575 = vld [vmem:[#allocation13 + $0x3f8] sm:$0xff]
        %v6704 = vunpack.c.l.b16 %v6448
        %v6705 = vunpack.c.h.b16 %v6448
        %v6706 = vunpack.c.l.b16 %v6449
        %v6707 = vunpack.c.h.b16 %v6449
        %v6708 = vunpack.c.l.b16 %v6450
        %v6709 = vunpack.c.h.b16 %v6450
        %v6710 = vunpack.c.l.b16 %v6451
        %v6711 = vunpack.c.h.b16 %v6451
        %v6712 = vunpack.c.l.b16 %v6452
        %v6713 = vunpack.c.h.b16 %v6452
        %v6714 = vunpack.c.l.b16 %v6453
        %v6715 = vunpack.c.h.b16 %v6453
        %v6716 = vunpack.c.l.b16 %v6454
        %v6717 = vunpack.c.h.b16 %v6454
        %v6718 = vunpack.c.l.b16 %v6455
        %v6719 = vunpack.c.h.b16 %v6455
        %v6720 = vunpack.c.l.b16 %v6456
        %v6721 = vunpack.c.h.b16 %v6456
        %v6722 = vunpack.c.l.b16 %v6457
        %v6723 = vunpack.c.h.b16 %v6457
        %v6724 = vunpack.c.l.b16 %v6458
        %v6725 = vunpack.c.h.b16 %v6458
        %v6726 = vunpack.c.l.b16 %v6459
        %v6727 = vunpack.c.h.b16 %v6459
        %v6728 = vunpack.c.l.b16 %v6460
        %v6729 = vunpack.c.h.b16 %v6460
        %v6730 = vunpack.c.l.b16 %v6461
        %v6731 = vunpack.c.h.b16 %v6461
        %v6732 = vunpack.c.l.b16 %v6462
        %v6733 = vunpack.c.h.b16 %v6462
        %v6734 = vunpack.c.l.b16 %v6463
        %v6735 = vunpack.c.h.b16 %v6463
        %v6736 = vunpack.c.l.b16 %v6464
        %v6737 = vunpack.c.h.b16 %v6464
        %v6738 = vunpack.c.l.b16 %v6465
        %v6739 = vunpack.c.h.b16 %v6465
        %v6740 = vunpack.c.l.b16 %v6466
        %v6741 = vunpack.c.h.b16 %v6466
        %v6742 = vunpack.c.l.b16 %v6467
        %v6743 = vunpack.c.h.b16 %v6467
        %v6744 = vunpack.c.l.b16 %v6468
        %v6745 = vunpack.c.h.b16 %v6468
        %v6746 = vunpack.c.l.b16 %v6469
        %v6747 = vunpack.c.h.b16 %v6469
        %v6748 = vunpack.c.l.b16 %v6470
        %v6749 = vunpack.c.h.b16 %v6470
        %v6750 = vunpack.c.l.b16 %v6471
        %v6751 = vunpack.c.h.b16 %v6471
        %v6752 = vunpack.c.l.b16 %v6472
        %v6753 = vunpack.c.h.b16 %v6472
        %v6754 = vunpack.c.l.b16 %v6473
        %v6755 = vunpack.c.h.b16 %v6473
        %v6756 = vunpack.c.l.b16 %v6474
        %v6757 = vunpack.c.h.b16 %v6474
        %v6758 = vunpack.c.l.b16 %v6475
        %v6759 = vunpack.c.h.b16 %v6475
        %v6760 = vunpack.c.l.b16 %v6476
        %v6761 = vunpack.c.h.b16 %v6476
        %v6762 = vunpack.c.l.b16 %v6477
        %v6763 = vunpack.c.h.b16 %v6477
        %v6764 = vunpack.c.l.b16 %v6478
        %v6765 = vunpack.c.h.b16 %v6478
        %v6766 = vunpack.c.l.b16 %v6479
        %v6767 = vunpack.c.h.b16 %v6479
        %v6768 = vunpack.c.l.b16 %v6480
        %v6769 = vunpack.c.h.b16 %v6480
        %v6770 = vunpack.c.l.b16 %v6481
        %v6771 = vunpack.c.h.b16 %v6481
        %v6772 = vunpack.c.l.b16 %v6482
        %v6773 = vunpack.c.h.b16 %v6482
        %v6774 = vunpack.c.l.b16 %v6483
        %v6775 = vunpack.c.h.b16 %v6483
        %v6776 = vunpack.c.l.b16 %v6484
        %v6777 = vunpack.c.h.b16 %v6484
        %v6778 = vunpack.c.l.b16 %v6485
        %v6779 = vunpack.c.h.b16 %v6485
        %v6780 = vunpack.c.l.b16 %v6486
        %v6781 = vunpack.c.h.b16 %v6486
        %v6782 = vunpack.c.l.b16 %v6487
        %v6783 = vunpack.c.h.b16 %v6487
        %v6784 = vunpack.c.l.b16 %v6488
        %v6785 = vunpack.c.h.b16 %v6488
        %v6786 = vunpack.c.l.b16 %v6489
        %v6787 = vunpack.c.h.b16 %v6489
        %v6788 = vunpack.c.l.b16 %v6490
        %v6789 = vunpack.c.h.b16 %v6490
        %v6790 = vunpack.c.l.b16 %v6491
        %v6791 = vunpack.c.h.b16 %v6491
        %v6792 = vunpack.c.l.b16 %v6492
        %v6793 = vunpack.c.h.b16 %v6492
        %v6794 = vunpack.c.l.b16 %v6493
        %v6795 = vunpack.c.h.b16 %v6493
        %v6796 = vunpack.c.l.b16 %v6494
        %v6797 = vunpack.c.h.b16 %v6494
        %v6798 = vunpack.c.l.b16 %v6495
        %v6799 = vunpack.c.h.b16 %v6495
        %v6800 = vunpack.c.l.b16 %v6496
        %v6801 = vunpack.c.h.b16 %v6496
        %v6802 = vunpack.c.l.b16 %v6497
        %v6803 = vunpack.c.h.b16 %v6497
        %v6804 = vunpack.c.l.b16 %v6498
        %v6805 = vunpack.c.h.b16 %v6498
        %v6806 = vunpack.c.l.b16 %v6499
        %v6807 = vunpack.c.h.b16 %v6499
        %v6808 = vunpack.c.l.b16 %v6500
        %v6809 = vunpack.c.h.b16 %v6500
        %v6810 = vunpack.c.l.b16 %v6501
        %v6811 = vunpack.c.h.b16 %v6501
        %v6812 = vunpack.c.l.b16 %v6502
        %v6813 = vunpack.c.h.b16 %v6502
        %v6814 = vunpack.c.l.b16 %v6503
        %v6815 = vunpack.c.h.b16 %v6503
        %v6816 = vunpack.c.l.b16 %v6504
        %v6817 = vunpack.c.h.b16 %v6504
        %v6818 = vunpack.c.l.b16 %v6505
        %v6819 = vunpack.c.h.b16 %v6505
        %v6820 = vunpack.c.l.b16 %v6506
        %v6821 = vunpack.c.h.b16 %v6506
        %v6822 = vunpack.c.l.b16 %v6507
        %v6823 = vunpack.c.h.b16 %v6507
        %v6824 = vunpack.c.l.b16 %v6508
        %v6825 = vunpack.c.h.b16 %v6508
        %v6826 = vunpack.c.l.b16 %v6509
        %v6827 = vunpack.c.h.b16 %v6509
        %v6828 = vunpack.c.l.b16 %v6510
        %v6829 = vunpack.c.h.b16 %v6510
        %v6830 = vunpack.c.l.b16 %v6511
        %v6831 = vunpack.c.h.b16 %v6511
        %v6832 = vunpack.c.l.b16 %v6512
        %v6833 = vunpack.c.h.b16 %v6512
        %v6834 = vunpack.c.l.b16 %v6513
        %v6835 = vunpack.c.h.b16 %v6513
        %v6836 = vunpack.c.l.b16 %v6514
        %v6837 = vunpack.c.h.b16 %v6514
        %v6838 = vunpack.c.l.b16 %v6515
        %v6839 = vunpack.c.h.b16 %v6515
        %v6840 = vunpack.c.l.b16 %v6516
        %v6841 = vunpack.c.h.b16 %v6516
        %v6842 = vunpack.c.l.b16 %v6517
        %v6843 = vunpack.c.h.b16 %v6517
        %v6844 = vunpack.c.l.b16 %v6518
        %v6845 = vunpack.c.h.b16 %v6518
        %v6846 = vunpack.c.l.b16 %v6519
        %v6847 = vunpack.c.h.b16 %v6519
        %v6848 = vunpack.c.l.b16 %v6520
        %v6849 = vunpack.c.h.b16 %v6520
        %v6850 = vunpack.c.l.b16 %v6521
        %v6851 = vunpack.c.h.b16 %v6521
        %v6852 = vunpack.c.l.b16 %v6522
        %v6853 = vunpack.c.h.b16 %v6522
        %v6854 = vunpack.c.l.b16 %v6523
        %v6855 = vunpack.c.h.b16 %v6523
        %v6856 = vunpack.c.l.b16 %v6524
        %v6857 = vunpack.c.h.b16 %v6524
        %v6858 = vunpack.c.l.b16 %v6525
        %v6859 = vunpack.c.h.b16 %v6525
        %v6860 = vunpack.c.l.b16 %v6526
        %v6861 = vunpack.c.h.b16 %v6526
        %v6862 = vunpack.c.l.b16 %v6527
        %v6863 = vunpack.c.h.b16 %v6527
        %v6864 = vunpack.c.l.b16 %v6528
        %v6865 = vunpack.c.h.b16 %v6528
        %v6866 = vunpack.c.l.b16 %v6529
        %v6867 = vunpack.c.h.b16 %v6529
        %v6868 = vunpack.c.l.b16 %v6530
        %v6869 = vunpack.c.h.b16 %v6530
        %v6870 = vunpack.c.l.b16 %v6531
        %v6871 = vunpack.c.h.b16 %v6531
        %v6872 = vunpack.c.l.b16 %v6532
        %v6873 = vunpack.c.h.b16 %v6532
        %v6874 = vunpack.c.l.b16 %v6533
        %v6875 = vunpack.c.h.b16 %v6533
        %v6876 = vunpack.c.l.b16 %v6534
        %v6877 = vunpack.c.h.b16 %v6534
        %v6878 = vunpack.c.l.b16 %v6535
        %v6879 = vunpack.c.h.b16 %v6535
        %v6880 = vunpack.c.l.b16 %v6536
        %v6881 = vunpack.c.h.b16 %v6536
        %v6882 = vunpack.c.l.b16 %v6537
        %v6883 = vunpack.c.h.b16 %v6537
        %v6884 = vunpack.c.l.b16 %v6538
        %v6885 = vunpack.c.h.b16 %v6538
        %v6886 = vunpack.c.l.b16 %v6539
        %v6887 = vunpack.c.h.b16 %v6539
        %v6888 = vunpack.c.l.b16 %v6540
        %v6889 = vunpack.c.h.b16 %v6540
        %v6890 = vunpack.c.l.b16 %v6541
        %v6891 = vunpack.c.h.b16 %v6541
        %v6892 = vunpack.c.l.b16 %v6542
        %v6893 = vunpack.c.h.b16 %v6542
        %v6894 = vunpack.c.l.b16 %v6543
        %v6895 = vunpack.c.h.b16 %v6543
        %v6896 = vunpack.c.l.b16 %v6544
        %v6897 = vunpack.c.h.b16 %v6544
        %v6898 = vunpack.c.l.b16 %v6545
        %v6899 = vunpack.c.h.b16 %v6545
        %v6900 = vunpack.c.l.b16 %v6546
        %v6901 = vunpack.c.h.b16 %v6546
        %v6902 = vunpack.c.l.b16 %v6547
        %v6903 = vunpack.c.h.b16 %v6547
        %v6904 = vunpack.c.l.b16 %v6548
        %v6905 = vunpack.c.h.b16 %v6548
        %v6906 = vunpack.c.l.b16 %v6549
        %v6907 = vunpack.c.h.b16 %v6549
        %v6908 = vunpack.c.l.b16 %v6550
        %v6909 = vunpack.c.h.b16 %v6550
        %v6910 = vunpack.c.l.b16 %v6551
        %v6911 = vunpack.c.h.b16 %v6551
        %v6912 = vunpack.c.l.b16 %v6552
        %v6913 = vunpack.c.h.b16 %v6552
        %v6914 = vunpack.c.l.b16 %v6553
        %v6915 = vunpack.c.h.b16 %v6553
        %v6916 = vunpack.c.l.b16 %v6554
        %v6917 = vunpack.c.h.b16 %v6554
        %v6918 = vunpack.c.l.b16 %v6555
        %v6919 = vunpack.c.h.b16 %v6555
        %v6920 = vunpack.c.l.b16 %v6556
        %v6921 = vunpack.c.h.b16 %v6556
        %v6922 = vunpack.c.l.b16 %v6557
        %v6923 = vunpack.c.h.b16 %v6557
        %v6924 = vunpack.c.l.b16 %v6558
        %v6925 = vunpack.c.h.b16 %v6558
        %v6926 = vunpack.c.l.b16 %v6559
        %v6927 = vunpack.c.h.b16 %v6559
        %v6928 = vunpack.c.l.b16 %v6560
        %v6929 = vunpack.c.h.b16 %v6560
        %v6930 = vunpack.c.l.b16 %v6561
        %v6931 = vunpack.c.h.b16 %v6561
        %v6932 = vunpack.c.l.b16 %v6562
        %v6933 = vunpack.c.h.b16 %v6562
        %v6934 = vunpack.c.l.b16 %v6563
        %v6935 = vunpack.c.h.b16 %v6563
        %v6936 = vunpack.c.l.b16 %v6564
        %v6937 = vunpack.c.h.b16 %v6564
        %v6938 = vunpack.c.l.b16 %v6565
        %v6939 = vunpack.c.h.b16 %v6565
        %v6940 = vunpack.c.l.b16 %v6566
        %v6941 = vunpack.c.h.b16 %v6566
        %v6942 = vunpack.c.l.b16 %v6567
        %v6943 = vunpack.c.h.b16 %v6567
        %v6944 = vunpack.c.l.b16 %v6568
        %v6945 = vunpack.c.h.b16 %v6568
        %v6946 = vunpack.c.l.b16 %v6569
        %v6947 = vunpack.c.h.b16 %v6569
        %v6948 = vunpack.c.l.b16 %v6570
        %v6949 = vunpack.c.h.b16 %v6570
        %v6950 = vunpack.c.l.b16 %v6571
        %v6951 = vunpack.c.h.b16 %v6571
        %v6952 = vunpack.c.l.b16 %v6572
        %v6953 = vunpack.c.h.b16 %v6572
        %v6954 = vunpack.c.l.b16 %v6573
        %v6955 = vunpack.c.h.b16 %v6573
        %v6956 = vunpack.c.l.b16 %v6574
        %v6957 = vunpack.c.h.b16 %v6574
        %v6958 = vunpack.c.l.b16 %v6575
        %v6959 = vunpack.c.h.b16 %v6575
        %v6960 = vpack.c.b16 %v6712, %v6704
        %v6961 = vpack.c.b16 %v6713, %v6705
        %v6962 = vpack.c.b16 %v6714, %v6706
        %v6963 = vpack.c.b16 %v6715, %v6707
        %v6964 = vpack.c.b16 %v6716, %v6708
        %v6965 = vpack.c.b16 %v6717, %v6709
        %v6966 = vpack.c.b16 %v6718, %v6710
        %v6967 = vpack.c.b16 %v6719, %v6711
        %v6968 = vpack.c.b16 %v6728, %v6720
        %v6969 = vpack.c.b16 %v6729, %v6721
        %v6970 = vpack.c.b16 %v6730, %v6722
        %v6971 = vpack.c.b16 %v6731, %v6723
        %v6972 = vpack.c.b16 %v6732, %v6724
        %v6973 = vpack.c.b16 %v6733, %v6725
        %v6974 = vpack.c.b16 %v6734, %v6726
        %v6975 = vpack.c.b16 %v6735, %v6727
        %v6976 = vpack.c.b16 %v6744, %v6736
        %v6977 = vpack.c.b16 %v6745, %v6737
        %v6978 = vpack.c.b16 %v6746, %v6738
        %v6979 = vpack.c.b16 %v6747, %v6739
        %v6980 = vpack.c.b16 %v6748, %v6740
        %v6981 = vpack.c.b16 %v6749, %v6741
        %v6982 = vpack.c.b16 %v6750, %v6742
        %v6983 = vpack.c.b16 %v6751, %v6743
        %v6984 = vpack.c.b16 %v6760, %v6752
        %v6985 = vpack.c.b16 %v6761, %v6753
        %v6986 = vpack.c.b16 %v6762, %v6754
        %v6987 = vpack.c.b16 %v6763, %v6755
        %v6988 = vpack.c.b16 %v6764, %v6756
        %v6989 = vpack.c.b16 %v6765, %v6757
        %v6990 = vpack.c.b16 %v6766, %v6758
        %v6991 = vpack.c.b16 %v6767, %v6759
        %v6992 = vpack.c.b16 %v6776, %v6768
        %v6993 = vpack.c.b16 %v6777, %v6769
        %v6994 = vpack.c.b16 %v6778, %v6770
        %v6995 = vpack.c.b16 %v6779, %v6771
        %v6996 = vpack.c.b16 %v6780, %v6772
        %v6997 = vpack.c.b16 %v6781, %v6773
        %v6998 = vpack.c.b16 %v6782, %v6774
        %v6999 = vpack.c.b16 %v6783, %v6775
        %v7000 = vpack.c.b16 %v6792, %v6784
        %v7001 = vpack.c.b16 %v6793, %v6785
        %v7002 = vpack.c.b16 %v6794, %v6786
        %v7003 = vpack.c.b16 %v6795, %v6787
        %v7004 = vpack.c.b16 %v6796, %v6788
        %v7005 = vpack.c.b16 %v6797, %v6789
        %v7006 = vpack.c.b16 %v6798, %v6790
        %v7007 = vpack.c.b16 %v6799, %v6791
        %v7008 = vpack.c.b16 %v6808, %v6800
        %v7009 = vpack.c.b16 %v6809, %v6801
        %v7010 = vpack.c.b16 %v6810, %v6802
        %v7011 = vpack.c.b16 %v6811, %v6803
        %v7012 = vpack.c.b16 %v6812, %v6804
        %v7013 = vpack.c.b16 %v6813, %v6805
        %v7014 = vpack.c.b16 %v6814, %v6806
        %v7015 = vpack.c.b16 %v6815, %v6807
        %v7016 = vpack.c.b16 %v6824, %v6816
        %v7017 = vpack.c.b16 %v6825, %v6817
        %v7018 = vpack.c.b16 %v6826, %v6818
        %v7019 = vpack.c.b16 %v6827, %v6819
        %v7020 = vpack.c.b16 %v6828, %v6820
        %v7021 = vpack.c.b16 %v6829, %v6821
        %v7022 = vpack.c.b16 %v6830, %v6822
        %v7023 = vpack.c.b16 %v6831, %v6823
        %v7024 = vpack.c.b16 %v6840, %v6832
        %v7025 = vpack.c.b16 %v6841, %v6833
        %v7026 = vpack.c.b16 %v6842, %v6834
        %v7027 = vpack.c.b16 %v6843, %v6835
        %v7028 = vpack.c.b16 %v6844, %v6836
        %v7029 = vpack.c.b16 %v6845, %v6837
        %v7030 = vpack.c.b16 %v6846, %v6838
        %v7031 = vpack.c.b16 %v6847, %v6839
        %v7032 = vpack.c.b16 %v6856, %v6848
        %v7033 = vpack.c.b16 %v6857, %v6849
        %v7034 = vpack.c.b16 %v6858, %v6850
        %v7035 = vpack.c.b16 %v6859, %v6851
        %v7036 = vpack.c.b16 %v6860, %v6852
        %v7037 = vpack.c.b16 %v6861, %v6853
        %v7038 = vpack.c.b16 %v6862, %v6854
        %v7039 = vpack.c.b16 %v6863, %v6855
        %v7040 = vpack.c.b16 %v6872, %v6864
        %v7041 = vpack.c.b16 %v6873, %v6865
        %v7042 = vpack.c.b16 %v6874, %v6866
        %v7043 = vpack.c.b16 %v6875, %v6867
        %v7044 = vpack.c.b16 %v6876, %v6868
        %v7045 = vpack.c.b16 %v6877, %v6869
        %v7046 = vpack.c.b16 %v6878, %v6870
        %v7047 = vpack.c.b16 %v6879, %v6871
        %v7048 = vpack.c.b16 %v6888, %v6880
        %v7049 = vpack.c.b16 %v6889, %v6881
        %v7050 = vpack.c.b16 %v6890, %v6882
        %v7051 = vpack.c.b16 %v6891, %v6883
        %v7052 = vpack.c.b16 %v6892, %v6884
        %v7053 = vpack.c.b16 %v6893, %v6885
        %v7054 = vpack.c.b16 %v6894, %v6886
        %v7055 = vpack.c.b16 %v6895, %v6887
        %v7056 = vpack.c.b16 %v6904, %v6896
        %v7057 = vpack.c.b16 %v6905, %v6897
        %v7058 = vpack.c.b16 %v6906, %v6898
        %v7059 = vpack.c.b16 %v6907, %v6899
        %v7060 = vpack.c.b16 %v6908, %v6900
        %v7061 = vpack.c.b16 %v6909, %v6901
        %v7062 = vpack.c.b16 %v6910, %v6902
        %v7063 = vpack.c.b16 %v6911, %v6903
        %v7064 = vpack.c.b16 %v6920, %v6912
        %v7065 = vpack.c.b16 %v6921, %v6913
        %v7066 = vpack.c.b16 %v6922, %v6914
        %v7067 = vpack.c.b16 %v6923, %v6915
        %v7068 = vpack.c.b16 %v6924, %v6916
        %v7069 = vpack.c.b16 %v6925, %v6917
        %v7070 = vpack.c.b16 %v6926, %v6918
        %v7071 = vpack.c.b16 %v6927, %v6919
        %v7072 = vpack.c.b16 %v6936, %v6928
        %v7073 = vpack.c.b16 %v6937, %v6929
        %v7074 = vpack.c.b16 %v6938, %v6930
        %v7075 = vpack.c.b16 %v6939, %v6931
        %v7076 = vpack.c.b16 %v6940, %v6932
        %v7077 = vpack.c.b16 %v6941, %v6933
        %v7078 = vpack.c.b16 %v6942, %v6934
        %v7079 = vpack.c.b16 %v6943, %v6935
        %v7080 = vpack.c.b16 %v6952, %v6944
        %v7081 = vpack.c.b16 %v6953, %v6945
        %v7082 = vpack.c.b16 %v6954, %v6946
        %v7083 = vpack.c.b16 %v6955, %v6947
        %v7084 = vpack.c.b16 %v6956, %v6948
        %v7085 = vpack.c.b16 %v6957, %v6949
        %v7086 = vpack.c.b16 %v6958, %v6950
        %v7087 = vpack.c.b16 %v6959, %v6951
        %7216 = vmatpush.bf16.msra.mxu0 %v7016
        %7217 = vmatpush.bf16.msra.mxu0 %v7008
        %7218 = vmatpush.bf16.msra.mxu0 %v7000
        %7219 = vmatpush.bf16.msra.mxu0 %v6992
        %7220 = vmatpush.bf16.msra.mxu0 %v6984
        %7221 = vmatpush.bf16.msra.mxu0 %v6976
        %7222 = vmatpush.bf16.msra.mxu0 %v6968
        %7223 = vmatpush.bf16.msra.mxu0 %v6960
        %7224 = vmatmul.bf16.gmra.mxu0 %v6432
        %v7225 = vpop.f32.mrf.mxu0
        %v7226 = vadd.f32 0.0, %v7225
        %v7227 = vpop.f32.mrf.mxu0
        %v7228 = vadd.f32 0.0, %v7227
        %7229 = vmatmul.bf16.gmra.mxu0 %v6434
        %v7230 = vpop.f32.mrf.mxu0
        %v7231 = vadd.f32 0.0, %v7230
        %v7232 = vpop.f32.mrf.mxu0
        %v7233 = vadd.f32 0.0, %v7232
        %7234 = vmatmul.bf16.gmra.mxu0 %v6436
        %v7235 = vpop.f32.mrf.mxu0
        %v7236 = vadd.f32 0.0, %v7235
        %v7237 = vpop.f32.mrf.mxu0
        %v7238 = vadd.f32 0.0, %v7237
        %7239 = vmatmul.bf16.gmra.mxu0 %v6438
        %v7240 = vpop.f32.mrf.mxu0
        %v7241 = vadd.f32 0.0, %v7240
        %v7242 = vpop.f32.mrf.mxu0
        %v7243 = vadd.f32 0.0, %v7242
        %7244 = vmatmul.bf16.gmra.mxu0 %v6440
        %v7245 = vpop.f32.mrf.mxu0
        %v7246 = vadd.f32 0.0, %v7245
        %v7247 = vpop.f32.mrf.mxu0
        %v7248 = vadd.f32 0.0, %v7247
        %7249 = vmatmul.bf16.gmra.mxu0 %v6442
        %v7250 = vpop.f32.mrf.mxu0
        %v7251 = vadd.f32 0.0, %v7250
        %v7252 = vpop.f32.mrf.mxu0
        %v7253 = vadd.f32 0.0, %v7252
        %7254 = vmatmul.bf16.gmra.mxu0 %v6444
        %v7255 = vpop.f32.mrf.mxu0
        %v7256 = vadd.f32 0.0, %v7255
        %v7257 = vpop.f32.mrf.mxu0
        %v7258 = vadd.f32 0.0, %v7257
        %7259 = vmatmul.bf16.gmra.mxu0 %v6446
        %v7260 = vpop.f32.mrf.mxu0
        %v7261 = vadd.f32 0.0, %v7260
        %v7262 = vpop.f32.mrf.mxu0
        %v7263 = vadd.f32 0.0, %v7262
        %7264 = vdwg.mxu0
        %7265 = vmatpush.bf16.msra.mxu0 %v7080
        %7266 = vmatpush.bf16.msra.mxu0 %v7072
        %7267 = vmatpush.bf16.msra.mxu0 %v7064
        %7268 = vmatpush.bf16.msra.mxu0 %v7056
        %7269 = vmatpush.bf16.msra.mxu0 %v7048
        %7270 = vmatpush.bf16.msra.mxu0 %v7040
        %7271 = vmatpush.bf16.msra.mxu0 %v7032
        %7272 = vmatpush.bf16.msra.mxu0 %v7024
        %7273 = vmatmul.bf16.gmra.mxu0 %v6433
        %v7274 = vpop.f32.mrf.mxu0
        %v7275 = vadd.f32 %v7226, %v7274
        %v7276 = vpop.f32.mrf.mxu0
        %v7277 = vadd.f32 %v7228, %v7276
        %7278 = vmatmul.bf16.gmra.mxu0 %v6435
        %v7279 = vpop.f32.mrf.mxu0
        %v7280 = vadd.f32 %v7231, %v7279
        %v7281 = vpop.f32.mrf.mxu0
        %v7282 = vadd.f32 %v7233, %v7281
        %7283 = vmatmul.bf16.gmra.mxu0 %v6437
        %v7284 = vpop.f32.mrf.mxu0
        %v7285 = vadd.f32 %v7236, %v7284
        %v7286 = vpop.f32.mrf.mxu0
        %v7287 = vadd.f32 %v7238, %v7286
        %7288 = vmatmul.bf16.gmra.mxu0 %v6439
        %v7289 = vpop.f32.mrf.mxu0
        %v7290 = vadd.f32 %v7241, %v7289
        %v7291 = vpop.f32.mrf.mxu0
        %v7292 = vadd.f32 %v7243, %v7291
        %7293 = vmatmul.bf16.gmra.mxu0 %v6441
        %v7294 = vpop.f32.mrf.mxu0
        %v7295 = vadd.f32 %v7246, %v7294
        %v7296 = vpop.f32.mrf.mxu0
        %v7297 = vadd.f32 %v7248, %v7296
        %7298 = vmatmul.bf16.gmra.mxu0 %v6443
        %v7299 = vpop.f32.mrf.mxu0
        %v7300 = vadd.f32 %v7251, %v7299
        %v7301 = vpop.f32.mrf.mxu0
        %v7302 = vadd.f32 %v7253, %v7301
        %7303 = vmatmul.bf16.gmra.mxu0 %v6445
        %v7304 = vpop.f32.mrf.mxu0
        %v7305 = vadd.f32 %v7256, %v7304
        %v7306 = vpop.f32.mrf.mxu0
        %v7307 = vadd.f32 %v7258, %v7306
        %7308 = vmatmul.bf16.gmra.mxu0 %v6447
        %v7309 = vpop.f32.mrf.mxu0
        %v7310 = vadd.f32 %v7261, %v7309
        %v7311 = vpop.f32.mrf.mxu0
        %v7312 = vadd.f32 %v7263, %v7311
        %7313 = vdwg.mxu0
        %7314 = vmatpush.bf16.msra.mxu0 %v7017
        %7315 = vmatpush.bf16.msra.mxu0 %v7009
        %7316 = vmatpush.bf16.msra.mxu0 %v7001
        %7317 = vmatpush.bf16.msra.mxu0 %v6993
        %7318 = vmatpush.bf16.msra.mxu0 %v6985
        %7319 = vmatpush.bf16.msra.mxu0 %v6977
        %7320 = vmatpush.bf16.msra.mxu0 %v6969
        %7321 = vmatpush.bf16.msra.mxu0 %v6961
        %7322 = vmatmul.bf16.gmra.mxu0 %v6432
        %v7323 = vpop.f32.mrf.mxu0
        %v7324 = vadd.f32 0.0, %v7323
        %v7325 = vpop.f32.mrf.mxu0
        %v7326 = vadd.f32 0.0, %v7325
        %7327 = vmatmul.bf16.gmra.mxu0 %v6434
        %v7328 = vpop.f32.mrf.mxu0
        %v7329 = vadd.f32 0.0, %v7328
        %v7330 = vpop.f32.mrf.mxu0
        %v7331 = vadd.f32 0.0, %v7330
        %7332 = vmatmul.bf16.gmra.mxu0 %v6436
        %v7333 = vpop.f32.mrf.mxu0
        %v7334 = vadd.f32 0.0, %v7333
        %v7335 = vpop.f32.mrf.mxu0
        %v7336 = vadd.f32 0.0, %v7335
        %7337 = vmatmul.bf16.gmra.mxu0 %v6438
        %v7338 = vpop.f32.mrf.mxu0
        %v7339 = vadd.f32 0.0, %v7338
        %v7340 = vpop.f32.mrf.mxu0
        %v7341 = vadd.f32 0.0, %v7340
        %7342 = vmatmul.bf16.gmra.mxu0 %v6440
        %v7343 = vpop.f32.mrf.mxu0
        %v7344 = vadd.f32 0.0, %v7343
        %v7345 = vpop.f32.mrf.mxu0
        %v7346 = vadd.f32 0.0, %v7345
        %7347 = vmatmul.bf16.gmra.mxu0 %v6442
        %v7348 = vpop.f32.mrf.mxu0
        %v7349 = vadd.f32 0.0, %v7348
        %v7350 = vpop.f32.mrf.mxu0
        %v7351 = vadd.f32 0.0, %v7350
        %7352 = vmatmul.bf16.gmra.mxu0 %v6444
        %v7353 = vpop.f32.mrf.mxu0
        %v7354 = vadd.f32 0.0, %v7353
        %v7355 = vpop.f32.mrf.mxu0
        %v7356 = vadd.f32 0.0, %v7355
        %7357 = vmatmul.bf16.gmra.mxu0 %v6446
        %v7358 = vpop.f32.mrf.mxu0
        %v7359 = vadd.f32 0.0, %v7358
        %v7360 = vpop.f32.mrf.mxu0
        %v7361 = vadd.f32 0.0, %v7360
        %7362 = vdwg.mxu0
        %7363 = vmatpush.bf16.msra.mxu0 %v7081
        %7364 = vmatpush.bf16.msra.mxu0 %v7073
        %7365 = vmatpush.bf16.msra.mxu0 %v7065
        %7366 = vmatpush.bf16.msra.mxu0 %v7057
        %7367 = vmatpush.bf16.msra.mxu0 %v7049
        %7368 = vmatpush.bf16.msra.mxu0 %v7041
        %7369 = vmatpush.bf16.msra.mxu0 %v7033
        %7370 = vmatpush.bf16.msra.mxu0 %v7025
        %7371 = vmatmul.bf16.gmra.mxu0 %v6433
        %v7372 = vpop.f32.mrf.mxu0
        %v7373 = vadd.f32 %v7324, %v7372
        %v7374 = vpop.f32.mrf.mxu0
        %v7375 = vadd.f32 %v7326, %v7374
        %7376 = vmatmul.bf16.gmra.mxu0 %v6435
        %v7377 = vpop.f32.mrf.mxu0
        %v7378 = vadd.f32 %v7329, %v7377
        %v7379 = vpop.f32.mrf.mxu0
        %v7380 = vadd.f32 %v7331, %v7379
        %7381 = vmatmul.bf16.gmra.mxu0 %v6437
        %v7382 = vpop.f32.mrf.mxu0
        %v7383 = vadd.f32 %v7334, %v7382
        %v7384 = vpop.f32.mrf.mxu0
        %v7385 = vadd.f32 %v7336, %v7384
        %7386 = vmatmul.bf16.gmra.mxu0 %v6439
        %v7387 = vpop.f32.mrf.mxu0
        %v7388 = vadd.f32 %v7339, %v7387
        %v7389 = vpop.f32.mrf.mxu0
        %v7390 = vadd.f32 %v7341, %v7389
        %7391 = vmatmul.bf16.gmra.mxu0 %v6441
        %v7392 = vpop.f32.mrf.mxu0
        %v7393 = vadd.f32 %v7344, %v7392
        %v7394 = vpop.f32.mrf.mxu0
        %v7395 = vadd.f32 %v7346, %v7394
        %7396 = vmatmul.bf16.gmra.mxu0 %v6443
        %v7397 = vpop.f32.mrf.mxu0
        %v7398 = vadd.f32 %v7349, %v7397
        %v7399 = vpop.f32.mrf.mxu0
        %v7400 = vadd.f32 %v7351, %v7399
        %7401 = vmatmul.bf16.gmra.mxu0 %v6445
        %v7402 = vpop.f32.mrf.mxu0
        %v7403 = vadd.f32 %v7354, %v7402
        %v7404 = vpop.f32.mrf.mxu0
        %v7405 = vadd.f32 %v7356, %v7404
        %7406 = vmatmul.bf16.gmra.mxu0 %v6447
        %v7407 = vpop.f32.mrf.mxu0
        %v7408 = vadd.f32 %v7359, %v7407
        %v7409 = vpop.f32.mrf.mxu0
        %v7410 = vadd.f32 %v7361, %v7409
        %7411 = vdwg.mxu0
        %7412 = vmatpush.bf16.msra.mxu0 %v7018
        %7413 = vmatpush.bf16.msra.mxu0 %v7010
        %7414 = vmatpush.bf16.msra.mxu0 %v7002
        %7415 = vmatpush.bf16.msra.mxu0 %v6994
        %7416 = vmatpush.bf16.msra.mxu0 %v6986
        %7417 = vmatpush.bf16.msra.mxu0 %v6978
        %7418 = vmatpush.bf16.msra.mxu0 %v6970
        %7419 = vmatpush.bf16.msra.mxu0 %v6962
        %7420 = vmatmul.bf16.gmra.mxu0 %v6432
        %v7421 = vpop.f32.mrf.mxu0
        %v7422 = vadd.f32 0.0, %v7421
        %v7423 = vpop.f32.mrf.mxu0
        %v7424 = vadd.f32 0.0, %v7423
        %7425 = vmatmul.bf16.gmra.mxu0 %v6434
        %v7426 = vpop.f32.mrf.mxu0
        %v7427 = vadd.f32 0.0, %v7426
        %v7428 = vpop.f32.mrf.mxu0
        %v7429 = vadd.f32 0.0, %v7428
        %7430 = vmatmul.bf16.gmra.mxu0 %v6436
        %v7431 = vpop.f32.mrf.mxu0
        %v7432 = vadd.f32 0.0, %v7431
        %v7433 = vpop.f32.mrf.mxu0
        %v7434 = vadd.f32 0.0, %v7433
        %7435 = vmatmul.bf16.gmra.mxu0 %v6438
        %v7436 = vpop.f32.mrf.mxu0
        %v7437 = vadd.f32 0.0, %v7436
        %v7438 = vpop.f32.mrf.mxu0
        %v7439 = vadd.f32 0.0, %v7438
        %7440 = vmatmul.bf16.gmra.mxu0 %v6440
        %v7441 = vpop.f32.mrf.mxu0
        %v7442 = vadd.f32 0.0, %v7441
        %v7443 = vpop.f32.mrf.mxu0
        %v7444 = vadd.f32 0.0, %v7443
        %7445 = vmatmul.bf16.gmra.mxu0 %v6442
        %v7446 = vpop.f32.mrf.mxu0
        %v7447 = vadd.f32 0.0, %v7446
        %v7448 = vpop.f32.mrf.mxu0
        %v7449 = vadd.f32 0.0, %v7448
        %7450 = vmatmul.bf16.gmra.mxu0 %v6444
        %v7451 = vpop.f32.mrf.mxu0
        %v7452 = vadd.f32 0.0, %v7451
        %v7453 = vpop.f32.mrf.mxu0
        %v7454 = vadd.f32 0.0, %v7453
        %7455 = vmatmul.bf16.gmra.mxu0 %v6446
        %v7456 = vpop.f32.mrf.mxu0
        %v7457 = vadd.f32 0.0, %v7456
        %v7458 = vpop.f32.mrf.mxu0
        %v7459 = vadd.f32 0.0, %v7458
        %7460 = vdwg.mxu0
        %7461 = vmatpush.bf16.msra.mxu0 %v7082
        %7462 = vmatpush.bf16.msra.mxu0 %v7074
        %7463 = vmatpush.bf16.msra.mxu0 %v7066
        %7464 = vmatpush.bf16.msra.mxu0 %v7058
        %7465 = vmatpush.bf16.msra.mxu0 %v7050
        %7466 = vmatpush.bf16.msra.mxu0 %v7042
        %7467 = vmatpush.bf16.msra.mxu0 %v7034
        %7468 = vmatpush.bf16.msra.mxu0 %v7026
        %7469 = vmatmul.bf16.gmra.mxu0 %v6433
        %v7470 = vpop.f32.mrf.mxu0
        %v7471 = vadd.f32 %v7422, %v7470
        %v7472 = vpop.f32.mrf.mxu0
        %v7473 = vadd.f32 %v7424, %v7472
        %7474 = vmatmul.bf16.gmra.mxu0 %v6435
        %v7475 = vpop.f32.mrf.mxu0
        %v7476 = vadd.f32 %v7427, %v7475
        %v7477 = vpop.f32.mrf.mxu0
        %v7478 = vadd.f32 %v7429, %v7477
        %7479 = vmatmul.bf16.gmra.mxu0 %v6437
        %v7480 = vpop.f32.mrf.mxu0
        %v7481 = vadd.f32 %v7432, %v7480
        %v7482 = vpop.f32.mrf.mxu0
        %v7483 = vadd.f32 %v7434, %v7482
        %7484 = vmatmul.bf16.gmra.mxu0 %v6439
        %v7485 = vpop.f32.mrf.mxu0
        %v7486 = vadd.f32 %v7437, %v7485
        %v7487 = vpop.f32.mrf.mxu0
        %v7488 = vadd.f32 %v7439, %v7487
        %7489 = vmatmul.bf16.gmra.mxu0 %v6441
        %v7490 = vpop.f32.mrf.mxu0
        %v7491 = vadd.f32 %v7442, %v7490
        %v7492 = vpop.f32.mrf.mxu0
        %v7493 = vadd.f32 %v7444, %v7492
        %7494 = vmatmul.bf16.gmra.mxu0 %v6443
        %v7495 = vpop.f32.mrf.mxu0
        %v7496 = vadd.f32 %v7447, %v7495
        %v7497 = vpop.f32.mrf.mxu0
        %v7498 = vadd.f32 %v7449, %v7497
        %7499 = vmatmul.bf16.gmra.mxu0 %v6445
        %v7500 = vpop.f32.mrf.mxu0
        %v7501 = vadd.f32 %v7452, %v7500
        %v7502 = vpop.f32.mrf.mxu0
        %v7503 = vadd.f32 %v7454, %v7502
        %7504 = vmatmul.bf16.gmra.mxu0 %v6447
        %v7505 = vpop.f32.mrf.mxu0
        %v7506 = vadd.f32 %v7457, %v7505
        %v7507 = vpop.f32.mrf.mxu0
        %v7508 = vadd.f32 %v7459, %v7507
        %7509 = vdwg.mxu0
        %7510 = vmatpush.bf16.msra.mxu0 %v7019
        %7511 = vmatpush.bf16.msra.mxu0 %v7011
        %7512 = vmatpush.bf16.msra.mxu0 %v7003
        %7513 = vmatpush.bf16.msra.mxu0 %v6995
        %7514 = vmatpush.bf16.msra.mxu0 %v6987
        %7515 = vmatpush.bf16.msra.mxu0 %v6979
        %7516 = vmatpush.bf16.msra.mxu0 %v6971
        %7517 = vmatpush.bf16.msra.mxu0 %v6963
        %7518 = vmatmul.bf16.gmra.mxu0 %v6432
        %v7519 = vpop.f32.mrf.mxu0
        %v7520 = vadd.f32 0.0, %v7519
        %v7521 = vpop.f32.mrf.mxu0
        %v7522 = vadd.f32 0.0, %v7521
        %7523 = vmatmul.bf16.gmra.mxu0 %v6434
        %v7524 = vpop.f32.mrf.mxu0
        %v7525 = vadd.f32 0.0, %v7524
        %v7526 = vpop.f32.mrf.mxu0
        %v7527 = vadd.f32 0.0, %v7526
        %7528 = vmatmul.bf16.gmra.mxu0 %v6436
        %v7529 = vpop.f32.mrf.mxu0
        %v7530 = vadd.f32 0.0, %v7529
        %v7531 = vpop.f32.mrf.mxu0
        %v7532 = vadd.f32 0.0, %v7531
        %7533 = vmatmul.bf16.gmra.mxu0 %v6438
        %v7534 = vpop.f32.mrf.mxu0
        %v7535 = vadd.f32 0.0, %v7534
        %v7536 = vpop.f32.mrf.mxu0
        %v7537 = vadd.f32 0.0, %v7536
        %7538 = vmatmul.bf16.gmra.mxu0 %v6440
        %v7539 = vpop.f32.mrf.mxu0
        %v7540 = vadd.f32 0.0, %v7539
        %v7541 = vpop.f32.mrf.mxu0
        %v7542 = vadd.f32 0.0, %v7541
        %7543 = vmatmul.bf16.gmra.mxu0 %v6442
        %v7544 = vpop.f32.mrf.mxu0
        %v7545 = vadd.f32 0.0, %v7544
        %v7546 = vpop.f32.mrf.mxu0
        %v7547 = vadd.f32 0.0, %v7546
        %7548 = vmatmul.bf16.gmra.mxu0 %v6444
        %v7549 = vpop.f32.mrf.mxu0
        %v7550 = vadd.f32 0.0, %v7549
        %v7551 = vpop.f32.mrf.mxu0
        %v7552 = vadd.f32 0.0, %v7551
        %7553 = vmatmul.bf16.gmra.mxu0 %v6446
        %v7554 = vpop.f32.mrf.mxu0
        %v7555 = vadd.f32 0.0, %v7554
        %v7556 = vpop.f32.mrf.mxu0
        %v7557 = vadd.f32 0.0, %v7556
        %7558 = vdwg.mxu0
        %7559 = vmatpush.bf16.msra.mxu0 %v7083
        %7560 = vmatpush.bf16.msra.mxu0 %v7075
        %7561 = vmatpush.bf16.msra.mxu0 %v7067
        %7562 = vmatpush.bf16.msra.mxu0 %v7059
        %7563 = vmatpush.bf16.msra.mxu0 %v7051
        %7564 = vmatpush.bf16.msra.mxu0 %v7043
        %7565 = vmatpush.bf16.msra.mxu0 %v7035
        %7566 = vmatpush.bf16.msra.mxu0 %v7027
        %7567 = vmatmul.bf16.gmra.mxu0 %v6433
        %v7568 = vpop.f32.mrf.mxu0
        %v7569 = vadd.f32 %v7520, %v7568
        %v7570 = vpop.f32.mrf.mxu0
        %v7571 = vadd.f32 %v7522, %v7570
        %7572 = vmatmul.bf16.gmra.mxu0 %v6435
        %v7573 = vpop.f32.mrf.mxu0
        %v7574 = vadd.f32 %v7525, %v7573
        %v7575 = vpop.f32.mrf.mxu0
        %v7576 = vadd.f32 %v7527, %v7575
        %7577 = vmatmul.bf16.gmra.mxu0 %v6437
        %v7578 = vpop.f32.mrf.mxu0
        %v7579 = vadd.f32 %v7530, %v7578
        %v7580 = vpop.f32.mrf.mxu0
        %v7581 = vadd.f32 %v7532, %v7580
        %7582 = vmatmul.bf16.gmra.mxu0 %v6439
        %v7583 = vpop.f32.mrf.mxu0
        %v7584 = vadd.f32 %v7535, %v7583
        %v7585 = vpop.f32.mrf.mxu0
        %v7586 = vadd.f32 %v7537, %v7585
        %7587 = vmatmul.bf16.gmra.mxu0 %v6441
        %v7588 = vpop.f32.mrf.mxu0
        %v7589 = vadd.f32 %v7540, %v7588
        %v7590 = vpop.f32.mrf.mxu0
        %v7591 = vadd.f32 %v7542, %v7590
        %7592 = vmatmul.bf16.gmra.mxu0 %v6443
        %v7593 = vpop.f32.mrf.mxu0
        %v7594 = vadd.f32 %v7545, %v7593
        %v7595 = vpop.f32.mrf.mxu0
        %v7596 = vadd.f32 %v7547, %v7595
        %7597 = vmatmul.bf16.gmra.mxu0 %v6445
        %v7598 = vpop.f32.mrf.mxu0
        %v7599 = vadd.f32 %v7550, %v7598
        %v7600 = vpop.f32.mrf.mxu0
        %v7601 = vadd.f32 %v7552, %v7600
        %7602 = vmatmul.bf16.gmra.mxu0 %v6447
        %v7603 = vpop.f32.mrf.mxu0
        %v7604 = vadd.f32 %v7555, %v7603
        %v7605 = vpop.f32.mrf.mxu0
        %v7606 = vadd.f32 %v7557, %v7605
        %7607 = vdwg.mxu0
        %7608 = vmatpush.bf16.msra.mxu0 %v7020
        %7609 = vmatpush.bf16.msra.mxu0 %v7012
        %7610 = vmatpush.bf16.msra.mxu0 %v7004
        %7611 = vmatpush.bf16.msra.mxu0 %v6996
        %7612 = vmatpush.bf16.msra.mxu0 %v6988
        %7613 = vmatpush.bf16.msra.mxu0 %v6980
        %7614 = vmatpush.bf16.msra.mxu0 %v6972
        %7615 = vmatpush.bf16.msra.mxu0 %v6964
        %7616 = vmatmul.bf16.gmra.mxu0 %v6432
        %v7617 = vpop.f32.mrf.mxu0
        %v7618 = vadd.f32 0.0, %v7617
        %v7619 = vpop.f32.mrf.mxu0
        %v7620 = vadd.f32 0.0, %v7619
        %7621 = vmatmul.bf16.gmra.mxu0 %v6434
        %v7622 = vpop.f32.mrf.mxu0
        %v7623 = vadd.f32 0.0, %v7622
        %v7624 = vpop.f32.mrf.mxu0
        %v7625 = vadd.f32 0.0, %v7624
        %7626 = vmatmul.bf16.gmra.mxu0 %v6436
        %v7627 = vpop.f32.mrf.mxu0
        %v7628 = vadd.f32 0.0, %v7627
        %v7629 = vpop.f32.mrf.mxu0
        %v7630 = vadd.f32 0.0, %v7629
        %7631 = vmatmul.bf16.gmra.mxu0 %v6438
        %v7632 = vpop.f32.mrf.mxu0
        %v7633 = vadd.f32 0.0, %v7632
        %v7634 = vpop.f32.mrf.mxu0
        %v7635 = vadd.f32 0.0, %v7634
        %7636 = vmatmul.bf16.gmra.mxu0 %v6440
        %v7637 = vpop.f32.mrf.mxu0
        %v7638 = vadd.f32 0.0, %v7637
        %v7639 = vpop.f32.mrf.mxu0
        %v7640 = vadd.f32 0.0, %v7639
        %7641 = vmatmul.bf16.gmra.mxu0 %v6442
        %v7642 = vpop.f32.mrf.mxu0
        %v7643 = vadd.f32 0.0, %v7642
        %v7644 = vpop.f32.mrf.mxu0
        %v7645 = vadd.f32 0.0, %v7644
        %7646 = vmatmul.bf16.gmra.mxu0 %v6444
        %v7647 = vpop.f32.mrf.mxu0
        %v7648 = vadd.f32 0.0, %v7647
        %v7649 = vpop.f32.mrf.mxu0
        %v7650 = vadd.f32 0.0, %v7649
        %7651 = vmatmul.bf16.gmra.mxu0 %v6446
        %v7652 = vpop.f32.mrf.mxu0
        %v7653 = vadd.f32 0.0, %v7652
        %v7654 = vpop.f32.mrf.mxu0
        %v7655 = vadd.f32 0.0, %v7654
        %7656 = vdwg.mxu0
        %7657 = vmatpush.bf16.msra.mxu0 %v7084
        %7658 = vmatpush.bf16.msra.mxu0 %v7076
        %7659 = vmatpush.bf16.msra.mxu0 %v7068
        %7660 = vmatpush.bf16.msra.mxu0 %v7060
        %7661 = vmatpush.bf16.msra.mxu0 %v7052
        %7662 = vmatpush.bf16.msra.mxu0 %v7044
        %7663 = vmatpush.bf16.msra.mxu0 %v7036
        %7664 = vmatpush.bf16.msra.mxu0 %v7028
        %7665 = vmatmul.bf16.gmra.mxu0 %v6433
        %v7666 = vpop.f32.mrf.mxu0
        %v7667 = vadd.f32 %v7618, %v7666
        %v7668 = vpop.f32.mrf.mxu0
        %v7669 = vadd.f32 %v7620, %v7668
        %7670 = vmatmul.bf16.gmra.mxu0 %v6435
        %v7671 = vpop.f32.mrf.mxu0
        %v7672 = vadd.f32 %v7623, %v7671
        %v7673 = vpop.f32.mrf.mxu0
        %v7674 = vadd.f32 %v7625, %v7673
        %7675 = vmatmul.bf16.gmra.mxu0 %v6437
        %v7676 = vpop.f32.mrf.mxu0
        %v7677 = vadd.f32 %v7628, %v7676
        %v7678 = vpop.f32.mrf.mxu0
        %v7679 = vadd.f32 %v7630, %v7678
        %7680 = vmatmul.bf16.gmra.mxu0 %v6439
        %v7681 = vpop.f32.mrf.mxu0
        %v7682 = vadd.f32 %v7633, %v7681
        %v7683 = vpop.f32.mrf.mxu0
        %v7684 = vadd.f32 %v7635, %v7683
        %7685 = vmatmul.bf16.gmra.mxu0 %v6441
        %v7686 = vpop.f32.mrf.mxu0
        %v7687 = vadd.f32 %v7638, %v7686
        %v7688 = vpop.f32.mrf.mxu0
        %v7689 = vadd.f32 %v7640, %v7688
        %7690 = vmatmul.bf16.gmra.mxu0 %v6443
        %v7691 = vpop.f32.mrf.mxu0
        %v7692 = vadd.f32 %v7643, %v7691
        %v7693 = vpop.f32.mrf.mxu0
        %v7694 = vadd.f32 %v7645, %v7693
        %7695 = vmatmul.bf16.gmra.mxu0 %v6445
        %v7696 = vpop.f32.mrf.mxu0
        %v7697 = vadd.f32 %v7648, %v7696
        %v7698 = vpop.f32.mrf.mxu0
        %v7699 = vadd.f32 %v7650, %v7698
        %7700 = vmatmul.bf16.gmra.mxu0 %v6447
        %v7701 = vpop.f32.mrf.mxu0
        %v7702 = vadd.f32 %v7653, %v7701
        %v7703 = vpop.f32.mrf.mxu0
        %v7704 = vadd.f32 %v7655, %v7703
        %7705 = vdwg.mxu0
        %7706 = vmatpush.bf16.msra.mxu0 %v7021
        %7707 = vmatpush.bf16.msra.mxu0 %v7013
        %7708 = vmatpush.bf16.msra.mxu0 %v7005
        %7709 = vmatpush.bf16.msra.mxu0 %v6997
        %7710 = vmatpush.bf16.msra.mxu0 %v6989
        %7711 = vmatpush.bf16.msra.mxu0 %v6981
        %7712 = vmatpush.bf16.msra.mxu0 %v6973
        %7713 = vmatpush.bf16.msra.mxu0 %v6965
        %7714 = vmatmul.bf16.gmra.mxu0 %v6432
        %v7715 = vpop.f32.mrf.mxu0
        %v7716 = vadd.f32 0.0, %v7715
        %v7717 = vpop.f32.mrf.mxu0
        %v7718 = vadd.f32 0.0, %v7717
        %7719 = vmatmul.bf16.gmra.mxu0 %v6434
        %v7720 = vpop.f32.mrf.mxu0
        %v7721 = vadd.f32 0.0, %v7720
        %v7722 = vpop.f32.mrf.mxu0
        %v7723 = vadd.f32 0.0, %v7722
        %7724 = vmatmul.bf16.gmra.mxu0 %v6436
        %v7725 = vpop.f32.mrf.mxu0
        %v7726 = vadd.f32 0.0, %v7725
        %v7727 = vpop.f32.mrf.mxu0
        %v7728 = vadd.f32 0.0, %v7727
        %7729 = vmatmul.bf16.gmra.mxu0 %v6438
        %v7730 = vpop.f32.mrf.mxu0
        %v7731 = vadd.f32 0.0, %v7730
        %v7732 = vpop.f32.mrf.mxu0
        %v7733 = vadd.f32 0.0, %v7732
        %7734 = vmatmul.bf16.gmra.mxu0 %v6440
        %v7735 = vpop.f32.mrf.mxu0
        %v7736 = vadd.f32 0.0, %v7735
        %v7737 = vpop.f32.mrf.mxu0
        %v7738 = vadd.f32 0.0, %v7737
        %7739 = vmatmul.bf16.gmra.mxu0 %v6442
        %v7740 = vpop.f32.mrf.mxu0
        %v7741 = vadd.f32 0.0, %v7740
        %v7742 = vpop.f32.mrf.mxu0
        %v7743 = vadd.f32 0.0, %v7742
        %7744 = vmatmul.bf16.gmra.mxu0 %v6444
        %v7745 = vpop.f32.mrf.mxu0
        %v7746 = vadd.f32 0.0, %v7745
        %v7747 = vpop.f32.mrf.mxu0
        %v7748 = vadd.f32 0.0, %v7747
        %7749 = vmatmul.bf16.gmra.mxu0 %v6446
        %v7750 = vpop.f32.mrf.mxu0
        %v7751 = vadd.f32 0.0, %v7750
        %v7752 = vpop.f32.mrf.mxu0
        %v7753 = vadd.f32 0.0, %v7752
        %7754 = vdwg.mxu0
        %7755 = vmatpush.bf16.msra.mxu0 %v7085
        %7756 = vmatpush.bf16.msra.mxu0 %v7077
        %7757 = vmatpush.bf16.msra.mxu0 %v7069
        %7758 = vmatpush.bf16.msra.mxu0 %v7061
        %7759 = vmatpush.bf16.msra.mxu0 %v7053
        %7760 = vmatpush.bf16.msra.mxu0 %v7045
        %7761 = vmatpush.bf16.msra.mxu0 %v7037
        %7762 = vmatpush.bf16.msra.mxu0 %v7029
        %7763 = vmatmul.bf16.gmra.mxu0 %v6433
        %v7764 = vpop.f32.mrf.mxu0
        %v7765 = vadd.f32 %v7716, %v7764
        %v7766 = vpop.f32.mrf.mxu0
        %v7767 = vadd.f32 %v7718, %v7766
        %7768 = vmatmul.bf16.gmra.mxu0 %v6435
        %v7769 = vpop.f32.mrf.mxu0
        %v7770 = vadd.f32 %v7721, %v7769
        %v7771 = vpop.f32.mrf.mxu0
        %v7772 = vadd.f32 %v7723, %v7771
        %7773 = vmatmul.bf16.gmra.mxu0 %v6437
        %v7774 = vpop.f32.mrf.mxu0
        %v7775 = vadd.f32 %v7726, %v7774
        %v7776 = vpop.f32.mrf.mxu0
        %v7777 = vadd.f32 %v7728, %v7776
        %7778 = vmatmul.bf16.gmra.mxu0 %v6439
        %v7779 = vpop.f32.mrf.mxu0
        %v7780 = vadd.f32 %v7731, %v7779
        %v7781 = vpop.f32.mrf.mxu0
        %v7782 = vadd.f32 %v7733, %v7781
        %7783 = vmatmul.bf16.gmra.mxu0 %v6441
        %v7784 = vpop.f32.mrf.mxu0
        %v7785 = vadd.f32 %v7736, %v7784
        %v7786 = vpop.f32.mrf.mxu0
        %v7787 = vadd.f32 %v7738, %v7786
        %7788 = vmatmul.bf16.gmra.mxu0 %v6443
        %v7789 = vpop.f32.mrf.mxu0
        %v7790 = vadd.f32 %v7741, %v7789
        %v7791 = vpop.f32.mrf.mxu0
        %v7792 = vadd.f32 %v7743, %v7791
        %7793 = vmatmul.bf16.gmra.mxu0 %v6445
        %v7794 = vpop.f32.mrf.mxu0
        %v7795 = vadd.f32 %v7746, %v7794
        %v7796 = vpop.f32.mrf.mxu0
        %v7797 = vadd.f32 %v7748, %v7796
        %7798 = vmatmul.bf16.gmra.mxu0 %v6447
        %v7799 = vpop.f32.mrf.mxu0
        %v7800 = vadd.f32 %v7751, %v7799
        %v7801 = vpop.f32.mrf.mxu0
        %v7802 = vadd.f32 %v7753, %v7801
        %7803 = vdwg.mxu0
        %7804 = vmatpush.bf16.msra.mxu0 %v7022
        %7805 = vmatpush.bf16.msra.mxu0 %v7014
        %7806 = vmatpush.bf16.msra.mxu0 %v7006
        %7807 = vmatpush.bf16.msra.mxu0 %v6998
        %7808 = vmatpush.bf16.msra.mxu0 %v6990
        %7809 = vmatpush.bf16.msra.mxu0 %v6982
        %7810 = vmatpush.bf16.msra.mxu0 %v6974
        %7811 = vmatpush.bf16.msra.mxu0 %v6966
        %7812 = vmatmul.bf16.gmra.mxu0 %v6432
        %v7813 = vpop.f32.mrf.mxu0
        %v7814 = vadd.f32 0.0, %v7813
        %v7815 = vpop.f32.mrf.mxu0
        %v7816 = vadd.f32 0.0, %v7815
        %7817 = vmatmul.bf16.gmra.mxu0 %v6434
        %v7818 = vpop.f32.mrf.mxu0
        %v7819 = vadd.f32 0.0, %v7818
        %v7820 = vpop.f32.mrf.mxu0
        %v7821 = vadd.f32 0.0, %v7820
        %7822 = vmatmul.bf16.gmra.mxu0 %v6436
        %v7823 = vpop.f32.mrf.mxu0
        %v7824 = vadd.f32 0.0, %v7823
        %v7825 = vpop.f32.mrf.mxu0
        %v7826 = vadd.f32 0.0, %v7825
        %7827 = vmatmul.bf16.gmra.mxu0 %v6438
        %v7828 = vpop.f32.mrf.mxu0
        %v7829 = vadd.f32 0.0, %v7828
        %v7830 = vpop.f32.mrf.mxu0
        %v7831 = vadd.f32 0.0, %v7830
        %7832 = vmatmul.bf16.gmra.mxu0 %v6440
        %v7833 = vpop.f32.mrf.mxu0
        %v7834 = vadd.f32 0.0, %v7833
        %v7835 = vpop.f32.mrf.mxu0
        %v7836 = vadd.f32 0.0, %v7835
        %7837 = vmatmul.bf16.gmra.mxu0 %v6442
        %v7838 = vpop.f32.mrf.mxu0
        %v7839 = vadd.f32 0.0, %v7838
        %v7840 = vpop.f32.mrf.mxu0
        %v7841 = vadd.f32 0.0, %v7840
        %7842 = vmatmul.bf16.gmra.mxu0 %v6444
        %v7843 = vpop.f32.mrf.mxu0
        %v7844 = vadd.f32 0.0, %v7843
        %v7845 = vpop.f32.mrf.mxu0
        %v7846 = vadd.f32 0.0, %v7845
        %7847 = vmatmul.bf16.gmra.mxu0 %v6446
        %v7848 = vpop.f32.mrf.mxu0
        %v7849 = vadd.f32 0.0, %v7848
        %v7850 = vpop.f32.mrf.mxu0
        %v7851 = vadd.f32 0.0, %v7850
        %7852 = vdwg.mxu0
        %7853 = vmatpush.bf16.msra.mxu0 %v7086
        %7854 = vmatpush.bf16.msra.mxu0 %v7078
        %7855 = vmatpush.bf16.msra.mxu0 %v7070
        %7856 = vmatpush.bf16.msra.mxu0 %v7062
        %7857 = vmatpush.bf16.msra.mxu0 %v7054
        %7858 = vmatpush.bf16.msra.mxu0 %v7046
        %7859 = vmatpush.bf16.msra.mxu0 %v7038
        %7860 = vmatpush.bf16.msra.mxu0 %v7030
        %7861 = vmatmul.bf16.gmra.mxu0 %v6433
        %v7862 = vpop.f32.mrf.mxu0
        %v7863 = vadd.f32 %v7814, %v7862
        %v7864 = vpop.f32.mrf.mxu0
        %v7865 = vadd.f32 %v7816, %v7864
        %7866 = vmatmul.bf16.gmra.mxu0 %v6435
        %v7867 = vpop.f32.mrf.mxu0
        %v7868 = vadd.f32 %v7819, %v7867
        %v7869 = vpop.f32.mrf.mxu0
        %v7870 = vadd.f32 %v7821, %v7869
        %7871 = vmatmul.bf16.gmra.mxu0 %v6437
        %v7872 = vpop.f32.mrf.mxu0
        %v7873 = vadd.f32 %v7824, %v7872
        %v7874 = vpop.f32.mrf.mxu0
        %v7875 = vadd.f32 %v7826, %v7874
        %7876 = vmatmul.bf16.gmra.mxu0 %v6439
        %v7877 = vpop.f32.mrf.mxu0
        %v7878 = vadd.f32 %v7829, %v7877
        %v7879 = vpop.f32.mrf.mxu0
        %v7880 = vadd.f32 %v7831, %v7879
        %7881 = vmatmul.bf16.gmra.mxu0 %v6441
        %v7882 = vpop.f32.mrf.mxu0
        %v7883 = vadd.f32 %v7834, %v7882
        %v7884 = vpop.f32.mrf.mxu0
        %v7885 = vadd.f32 %v7836, %v7884
        %7886 = vmatmul.bf16.gmra.mxu0 %v6443
        %v7887 = vpop.f32.mrf.mxu0
        %v7888 = vadd.f32 %v7839, %v7887
        %v7889 = vpop.f32.mrf.mxu0
        %v7890 = vadd.f32 %v7841, %v7889
        %7891 = vmatmul.bf16.gmra.mxu0 %v6445
        %v7892 = vpop.f32.mrf.mxu0
        %v7893 = vadd.f32 %v7844, %v7892
        %v7894 = vpop.f32.mrf.mxu0
        %v7895 = vadd.f32 %v7846, %v7894
        %7896 = vmatmul.bf16.gmra.mxu0 %v6447
        %v7897 = vpop.f32.mrf.mxu0
        %v7898 = vadd.f32 %v7849, %v7897
        %v7899 = vpop.f32.mrf.mxu0
        %v7900 = vadd.f32 %v7851, %v7899
        %7901 = vdwg.mxu0
        %7902 = vmatpush.bf16.msra.mxu0 %v7023
        %7903 = vmatpush.bf16.msra.mxu0 %v7015
        %7904 = vmatpush.bf16.msra.mxu0 %v7007
        %7905 = vmatpush.bf16.msra.mxu0 %v6999
        %7906 = vmatpush.bf16.msra.mxu0 %v6991
        %7907 = vmatpush.bf16.msra.mxu0 %v6983
        %7908 = vmatpush.bf16.msra.mxu0 %v6975
        %7909 = vmatpush.bf16.msra.mxu0 %v6967
        %7910 = vmatmul.bf16.gmra.mxu0 %v6432
        %v7911 = vpop.f32.mrf.mxu0
        %v7912 = vadd.f32 0.0, %v7911
        %v7913 = vpop.f32.mrf.mxu0
        %v7914 = vadd.f32 0.0, %v7913
        %7915 = vmatmul.bf16.gmra.mxu0 %v6434
        %v7916 = vpop.f32.mrf.mxu0
        %v7917 = vadd.f32 0.0, %v7916
        %v7918 = vpop.f32.mrf.mxu0
        %v7919 = vadd.f32 0.0, %v7918
        %7920 = vmatmul.bf16.gmra.mxu0 %v6436
        %v7921 = vpop.f32.mrf.mxu0
        %v7922 = vadd.f32 0.0, %v7921
        %v7923 = vpop.f32.mrf.mxu0
        %v7924 = vadd.f32 0.0, %v7923
        %7925 = vmatmul.bf16.gmra.mxu0 %v6438
        %v7926 = vpop.f32.mrf.mxu0
        %v7927 = vadd.f32 0.0, %v7926
        %v7928 = vpop.f32.mrf.mxu0
        %v7929 = vadd.f32 0.0, %v7928
        %7930 = vmatmul.bf16.gmra.mxu0 %v6440
        %v7931 = vpop.f32.mrf.mxu0
        %v7932 = vadd.f32 0.0, %v7931
        %v7933 = vpop.f32.mrf.mxu0
        %v7934 = vadd.f32 0.0, %v7933
        %7935 = vmatmul.bf16.gmra.mxu0 %v6442
        %v7936 = vpop.f32.mrf.mxu0
        %v7937 = vadd.f32 0.0, %v7936
        %v7938 = vpop.f32.mrf.mxu0
        %v7939 = vadd.f32 0.0, %v7938
        %7940 = vmatmul.bf16.gmra.mxu0 %v6444
        %v7941 = vpop.f32.mrf.mxu0
        %v7942 = vadd.f32 0.0, %v7941
        %v7943 = vpop.f32.mrf.mxu0
        %v7944 = vadd.f32 0.0, %v7943
        %7945 = vmatmul.bf16.gmra.mxu0 %v6446
        %v7946 = vpop.f32.mrf.mxu0
        %v7947 = vadd.f32 0.0, %v7946
        %v7948 = vpop.f32.mrf.mxu0
        %v7949 = vadd.f32 0.0, %v7948
        %7950 = vdwg.mxu0
        %7951 = vmatpush.bf16.msra.mxu0 %v7087
        %7952 = vmatpush.bf16.msra.mxu0 %v7079
        %7953 = vmatpush.bf16.msra.mxu0 %v7071
        %7954 = vmatpush.bf16.msra.mxu0 %v7063
        %7955 = vmatpush.bf16.msra.mxu0 %v7055
        %7956 = vmatpush.bf16.msra.mxu0 %v7047
        %7957 = vmatpush.bf16.msra.mxu0 %v7039
        %7958 = vmatpush.bf16.msra.mxu0 %v7031
        %7959 = vmatmul.bf16.gmra.mxu0 %v6433
        %v7960 = vpop.f32.mrf.mxu0
        %v7961 = vadd.f32 %v7912, %v7960
        %v7962 = vpop.f32.mrf.mxu0
        %v7963 = vadd.f32 %v7914, %v7962
        %7964 = vmatmul.bf16.gmra.mxu0 %v6435
        %v7965 = vpop.f32.mrf.mxu0
        %v7966 = vadd.f32 %v7917, %v7965
        %v7967 = vpop.f32.mrf.mxu0
        %v7968 = vadd.f32 %v7919, %v7967
        %7969 = vmatmul.bf16.gmra.mxu0 %v6437
        %v7970 = vpop.f32.mrf.mxu0
        %v7971 = vadd.f32 %v7922, %v7970
        %v7972 = vpop.f32.mrf.mxu0
        %v7973 = vadd.f32 %v7924, %v7972
        %7974 = vmatmul.bf16.gmra.mxu0 %v6439
        %v7975 = vpop.f32.mrf.mxu0
        %v7976 = vadd.f32 %v7927, %v7975
        %v7977 = vpop.f32.mrf.mxu0
        %v7978 = vadd.f32 %v7929, %v7977
        %7979 = vmatmul.bf16.gmra.mxu0 %v6441
        %v7980 = vpop.f32.mrf.mxu0
        %v7981 = vadd.f32 %v7932, %v7980
        %v7982 = vpop.f32.mrf.mxu0
        %v7983 = vadd.f32 %v7934, %v7982
        %7984 = vmatmul.bf16.gmra.mxu0 %v6443
        %v7985 = vpop.f32.mrf.mxu0
        %v7986 = vadd.f32 %v7937, %v7985
        %v7987 = vpop.f32.mrf.mxu0
        %v7988 = vadd.f32 %v7939, %v7987
        %7989 = vmatmul.bf16.gmra.mxu0 %v6445
        %v7990 = vpop.f32.mrf.mxu0
        %v7991 = vadd.f32 %v7942, %v7990
        %v7992 = vpop.f32.mrf.mxu0
        %v7993 = vadd.f32 %v7944, %v7992
        %7994 = vmatmul.bf16.gmra.mxu0 %v6447
        %v7995 = vpop.f32.mrf.mxu0
        %v7996 = vadd.f32 %v7947, %v7995
        %v7997 = vpop.f32.mrf.mxu0
        %v7998 = vadd.f32 %v7949, %v7997
        %7999 = vdwg.mxu0
        %v8000 = vsub.f32 0.0, %v7275
        %v8001 = vsub.f32 0.0, %v7373
        %v8002 = vsub.f32 0.0, %v7471
        %v8003 = vsub.f32 0.0, %v7569
        %v8004 = vsub.f32 0.0, %v7277
        %v8005 = vsub.f32 0.0, %v7375
        %v8006 = vsub.f32 0.0, %v7473
        %v8007 = vsub.f32 0.0, %v7571
        %v8008 = vsub.f32 0.0, %v7280
        %v8009 = vsub.f32 0.0, %v7378
        %v8010 = vsub.f32 0.0, %v7476
        %v8011 = vsub.f32 0.0, %v7574
        %v8012 = vsub.f32 0.0, %v7282
        %v8013 = vsub.f32 0.0, %v7380
        %v8014 = vsub.f32 0.0, %v7478
        %v8015 = vsub.f32 0.0, %v7576
        %v8016 = vsub.f32 0.0, %v7285
        %v8017 = vsub.f32 0.0, %v7383
        %v8018 = vsub.f32 0.0, %v7481
        %v8019 = vsub.f32 0.0, %v7579
        %v8020 = vsub.f32 0.0, %v7287
        %v8021 = vsub.f32 0.0, %v7385
        %v8022 = vsub.f32 0.0, %v7483
        %v8023 = vsub.f32 0.0, %v7581
        %v8024 = vsub.f32 0.0, %v7290
        %v8025 = vsub.f32 0.0, %v7388
        %v8026 = vsub.f32 0.0, %v7486
        %v8027 = vsub.f32 0.0, %v7584
        %v8028 = vsub.f32 0.0, %v7292
        %v8029 = vsub.f32 0.0, %v7390
        %v8030 = vsub.f32 0.0, %v7488
        %v8031 = vsub.f32 0.0, %v7586
        %v8032 = vsub.f32 0.0, %v7295
        %v8033 = vsub.f32 0.0, %v7393
        %v8034 = vsub.f32 0.0, %v7491
        %v8035 = vsub.f32 0.0, %v7589
        %v8036 = vsub.f32 0.0, %v7297
        %v8037 = vsub.f32 0.0, %v7395
        %v8038 = vsub.f32 0.0, %v7493
        %v8039 = vsub.f32 0.0, %v7591
        %v8040 = vsub.f32 0.0, %v7300
        %v8041 = vsub.f32 0.0, %v7398
        %v8042 = vsub.f32 0.0, %v7496
        %v8043 = vsub.f32 0.0, %v7594
        %v8044 = vsub.f32 0.0, %v7302
        %v8045 = vsub.f32 0.0, %v7400
        %v8046 = vsub.f32 0.0, %v7498
        %v8047 = vsub.f32 0.0, %v7596
        %v8048 = vsub.f32 0.0, %v7305
        %v8049 = vsub.f32 0.0, %v7403
        %v8050 = vsub.f32 0.0, %v7501
        %v8051 = vsub.f32 0.0, %v7599
        %v8052 = vsub.f32 0.0, %v7307
        %v8053 = vsub.f32 0.0, %v7405
        %v8054 = vsub.f32 0.0, %v7503
        %v8055 = vsub.f32 0.0, %v7601
        %v8056 = vsub.f32 0.0, %v7310
        %v8057 = vsub.f32 0.0, %v7408
        %v8058 = vsub.f32 0.0, %v7506
        %v8059 = vsub.f32 0.0, %v7604
        %v8060 = vsub.f32 0.0, %v7312
        %v8061 = vsub.f32 0.0, %v7410
        %v8062 = vsub.f32 0.0, %v7508
        %v8063 = vsub.f32 0.0, %v7606
        %v8064 = vmul.f32 %v8000, 1.442695
        %v8065 = vpow.pop %v8064
        %v8066 = vmul.f32 %v8001, 1.442695
        %v8067 = vpow.pop %v8066
        %v8068 = vmul.f32 %v8002, 1.442695
        %v8069 = vpow.pop %v8068
        %v8070 = vmul.f32 %v8003, 1.442695
        %v8071 = vpow.pop %v8070
        %v8072 = vmul.f32 %v8004, 1.442695
        %v8073 = vpow.pop %v8072
        %v8074 = vmul.f32 %v8005, 1.442695
        %v8075 = vpow.pop %v8074
        %v8076 = vmul.f32 %v8006, 1.442695
        %v8077 = vpow.pop %v8076
        %v8078 = vmul.f32 %v8007, 1.442695
        %v8079 = vpow.pop %v8078
        %v8080 = vmul.f32 %v8008, 1.442695
        %v8081 = vpow.pop %v8080
        %v8082 = vmul.f32 %v8009, 1.442695
        %v8083 = vpow.pop %v8082
        %v8084 = vmul.f32 %v8010, 1.442695
        %v8085 = vpow.pop %v8084
        %v8086 = vmul.f32 %v8011, 1.442695
        %v8087 = vpow.pop %v8086
        %v8088 = vmul.f32 %v8012, 1.442695
        %v8089 = vpow.pop %v8088
        %v8090 = vmul.f32 %v8013, 1.442695
        %v8091 = vpow.pop %v8090
        %v8092 = vmul.f32 %v8014, 1.442695
        %v8093 = vpow.pop %v8092
        %v8094 = vmul.f32 %v8015, 1.442695
        %v8095 = vpow.pop %v8094
        %v8096 = vmul.f32 %v8016, 1.442695
        %v8097 = vpow.pop %v8096
        %v8098 = vmul.f32 %v8017, 1.442695
        %v8099 = vpow.pop %v8098
        %v8100 = vmul.f32 %v8018, 1.442695
        %v8101 = vpow.pop %v8100
        %v8102 = vmul.f32 %v8019, 1.442695
        %v8103 = vpow.pop %v8102
        %v8104 = vmul.f32 %v8020, 1.442695
        %v8105 = vpow.pop %v8104
        %v8106 = vmul.f32 %v8021, 1.442695
        %v8107 = vpow.pop %v8106
        %v8108 = vmul.f32 %v8022, 1.442695
        %v8109 = vpow.pop %v8108
        %v8110 = vmul.f32 %v8023, 1.442695
        %v8111 = vpow.pop %v8110
        %v8112 = vmul.f32 %v8024, 1.442695
        %v8113 = vpow.pop %v8112
        %v8114 = vmul.f32 %v8025, 1.442695
        %v8115 = vpow.pop %v8114
        %v8116 = vmul.f32 %v8026, 1.442695
        %v8117 = vpow.pop %v8116
        %v8118 = vmul.f32 %v8027, 1.442695
        %v8119 = vpow.pop %v8118
        %v8120 = vmul.f32 %v8028, 1.442695
        %v8121 = vpow.pop %v8120
        %v8122 = vmul.f32 %v8029, 1.442695
        %v8123 = vpow.pop %v8122
        %v8124 = vmul.f32 %v8030, 1.442695
        %v8125 = vpow.pop %v8124
        %v8126 = vmul.f32 %v8031, 1.442695
        %v8127 = vpow.pop %v8126
        %v8128 = vmul.f32 %v8032, 1.442695
        %v8129 = vpow.pop %v8128
        %v8130 = vmul.f32 %v8033, 1.442695
        %v8131 = vpow.pop %v8130
        %v8132 = vmul.f32 %v8034, 1.442695
        %v8133 = vpow.pop %v8132
        %v8134 = vmul.f32 %v8035, 1.442695
        %v8135 = vpow.pop %v8134
        %v8136 = vmul.f32 %v8036, 1.442695
        %v8137 = vpow.pop %v8136
        %v8138 = vmul.f32 %v8037, 1.442695
        %v8139 = vpow.pop %v8138
        %v8140 = vmul.f32 %v8038, 1.442695
        %v8141 = vpow.pop %v8140
        %v8142 = vmul.f32 %v8039, 1.442695
        %v8143 = vpow.pop %v8142
        %v8144 = vmul.f32 %v8040, 1.442695
        %v8145 = vpow.pop %v8144
        %v8146 = vmul.f32 %v8041, 1.442695
        %v8147 = vpow.pop %v8146
        %v8148 = vmul.f32 %v8042, 1.442695
        %v8149 = vpow.pop %v8148
        %v8150 = vmul.f32 %v8043, 1.442695
        %v8151 = vpow.pop %v8150
        %v8152 = vmul.f32 %v8044, 1.442695
        %v8153 = vpow.pop %v8152
        %v8154 = vmul.f32 %v8045, 1.442695
        %v8155 = vpow.pop %v8154
        %v8156 = vmul.f32 %v8046, 1.442695
        %v8157 = vpow.pop %v8156
        %v8158 = vmul.f32 %v8047, 1.442695
        %v8159 = vpow.pop %v8158
        %v8160 = vmul.f32 %v8048, 1.442695
        %v8161 = vpow.pop %v8160
        %v8162 = vmul.f32 %v8049, 1.442695
        %v8163 = vpow.pop %v8162
        %v8164 = vmul.f32 %v8050, 1.442695
        %v8165 = vpow.pop %v8164
        %v8166 = vmul.f32 %v8051, 1.442695
        %v8167 = vpow.pop %v8166
        %v8168 = vmul.f32 %v8052, 1.442695
        %v8169 = vpow.pop %v8168
        %v8170 = vmul.f32 %v8053, 1.442695
        %v8171 = vpow.pop %v8170
        %v8172 = vmul.f32 %v8054, 1.442695
        %v8173 = vpow.pop %v8172
        %v8174 = vmul.f32 %v8055, 1.442695
        %v8175 = vpow.pop %v8174
        %v8176 = vmul.f32 %v8056, 1.442695
        %v8177 = vpow.pop %v8176
        %v8178 = vmul.f32 %v8057, 1.442695
        %v8179 = vpow.pop %v8178
        %v8180 = vmul.f32 %v8058, 1.442695
        %v8181 = vpow.pop %v8180
        %v8182 = vmul.f32 %v8059, 1.442695
        %v8183 = vpow.pop %v8182
        %v8184 = vmul.f32 %v8060, 1.442695
        %v8185 = vpow.pop %v8184
        %v8186 = vmul.f32 %v8061, 1.442695
        %v8187 = vpow.pop %v8186
        %v8188 = vmul.f32 %v8062, 1.442695
        %v8189 = vpow.pop %v8188
        %v8190 = vmul.f32 %v8063, 1.442695
        %v8191 = vpow.pop %v8190
        %v8192 = vadd.f32 %v8065, 1.0
        %v8193 = vadd.f32 %v8067, 1.0
        %v8194 = vadd.f32 %v8069, 1.0
        %v8195 = vadd.f32 %v8071, 1.0
        %v8196 = vadd.f32 %v8073, 1.0
        %v8197 = vadd.f32 %v8075, 1.0
        %v8198 = vadd.f32 %v8077, 1.0
        %v8199 = vadd.f32 %v8079, 1.0
        %v8200 = vadd.f32 %v8081, 1.0
        %v8201 = vadd.f32 %v8083, 1.0
        %v8202 = vadd.f32 %v8085, 1.0
        %v8203 = vadd.f32 %v8087, 1.0
        %v8204 = vadd.f32 %v8089, 1.0
        %v8205 = vadd.f32 %v8091, 1.0
        %v8206 = vadd.f32 %v8093, 1.0
        %v8207 = vadd.f32 %v8095, 1.0
        %v8208 = vadd.f32 %v8097, 1.0
        %v8209 = vadd.f32 %v8099, 1.0
        %v8210 = vadd.f32 %v8101, 1.0
        %v8211 = vadd.f32 %v8103, 1.0
        %v8212 = vadd.f32 %v8105, 1.0
        %v8213 = vadd.f32 %v8107, 1.0
        %v8214 = vadd.f32 %v8109, 1.0
        %v8215 = vadd.f32 %v8111, 1.0
        %v8216 = vadd.f32 %v8113, 1.0
        %v8217 = vadd.f32 %v8115, 1.0
        %v8218 = vadd.f32 %v8117, 1.0
        %v8219 = vadd.f32 %v8119, 1.0
        %v8220 = vadd.f32 %v8121, 1.0
        %v8221 = vadd.f32 %v8123, 1.0
        %v8222 = vadd.f32 %v8125, 1.0
        %v8223 = vadd.f32 %v8127, 1.0
        %v8224 = vadd.f32 %v8129, 1.0
        %v8225 = vadd.f32 %v8131, 1.0
        %v8226 = vadd.f32 %v8133, 1.0
        %v8227 = vadd.f32 %v8135, 1.0
        %v8228 = vadd.f32 %v8137, 1.0
        %v8229 = vadd.f32 %v8139, 1.0
        %v8230 = vadd.f32 %v8141, 1.0
        %v8231 = vadd.f32 %v8143, 1.0
        %v8232 = vadd.f32 %v8145, 1.0
        %v8233 = vadd.f32 %v8147, 1.0
        %v8234 = vadd.f32 %v8149, 1.0
        %v8235 = vadd.f32 %v8151, 1.0
        %v8236 = vadd.f32 %v8153, 1.0
        %v8237 = vadd.f32 %v8155, 1.0
        %v8238 = vadd.f32 %v8157, 1.0
        %v8239 = vadd.f32 %v8159, 1.0
        %v8240 = vadd.f32 %v8161, 1.0
        %v8241 = vadd.f32 %v8163, 1.0
        %v8242 = vadd.f32 %v8165, 1.0
        %v8243 = vadd.f32 %v8167, 1.0
        %v8244 = vadd.f32 %v8169, 1.0
        %v8245 = vadd.f32 %v8171, 1.0
        %v8246 = vadd.f32 %v8173, 1.0
        %v8247 = vadd.f32 %v8175, 1.0
        %v8248 = vadd.f32 %v8177, 1.0
        %v8249 = vadd.f32 %v8179, 1.0
        %v8250 = vadd.f32 %v8181, 1.0
        %v8251 = vadd.f32 %v8183, 1.0
        %v8252 = vadd.f32 %v8185, 1.0
        %v8253 = vadd.f32 %v8187, 1.0
        %v8254 = vadd.f32 %v8189, 1.0
        %v8255 = vadd.f32 %v8191, 1.0
        %v8256 = vrcp.pop %v8192
        %v8257 = vrcp.pop %v8193
        %v8258 = vrcp.pop %v8194
        %v8259 = vrcp.pop %v8195
        %v8260 = vrcp.pop %v8196
        %v8261 = vrcp.pop %v8197
        %v8262 = vrcp.pop %v8198
        %v8263 = vrcp.pop %v8199
        %v8264 = vrcp.pop %v8200
        %v8265 = vrcp.pop %v8201
        %v8266 = vrcp.pop %v8202
        %v8267 = vrcp.pop %v8203
        %v8268 = vrcp.pop %v8204
        %v8269 = vrcp.pop %v8205
        %v8270 = vrcp.pop %v8206
        %v8271 = vrcp.pop %v8207
        %v8272 = vrcp.pop %v8208
        %v8273 = vrcp.pop %v8209
        %v8274 = vrcp.pop %v8210
        %v8275 = vrcp.pop %v8211
        %v8276 = vrcp.pop %v8212
        %v8277 = vrcp.pop %v8213
        %v8278 = vrcp.pop %v8214
        %v8279 = vrcp.pop %v8215
        %v8280 = vrcp.pop %v8216
        %v8281 = vrcp.pop %v8217
        %v8282 = vrcp.pop %v8218
        %v8283 = vrcp.pop %v8219
        %v8284 = vrcp.pop %v8220
        %v8285 = vrcp.pop %v8221
        %v8286 = vrcp.pop %v8222
        %v8287 = vrcp.pop %v8223
        %v8288 = vrcp.pop %v8224
        %v8289 = vrcp.pop %v8225
        %v8290 = vrcp.pop %v8226
        %v8291 = vrcp.pop %v8227
        %v8292 = vrcp.pop %v8228
        %v8293 = vrcp.pop %v8229
        %v8294 = vrcp.pop %v8230
        %v8295 = vrcp.pop %v8231
        %v8296 = vrcp.pop %v8232
        %v8297 = vrcp.pop %v8233
        %v8298 = vrcp.pop %v8234
        %v8299 = vrcp.pop %v8235
        %v8300 = vrcp.pop %v8236
        %v8301 = vrcp.pop %v8237
        %v8302 = vrcp.pop %v8238
        %v8303 = vrcp.pop %v8239
        %v8304 = vrcp.pop %v8240
        %v8305 = vrcp.pop %v8241
        %v8306 = vrcp.pop %v8242
        %v8307 = vrcp.pop %v8243
        %v8308 = vrcp.pop %v8244
        %v8309 = vrcp.pop %v8245
        %v8310 = vrcp.pop %v8246
        %v8311 = vrcp.pop %v8247
        %v8312 = vrcp.pop %v8248
        %v8313 = vrcp.pop %v8249
        %v8314 = vrcp.pop %v8250
        %v8315 = vrcp.pop %v8251
        %v8316 = vrcp.pop %v8252
        %v8317 = vrcp.pop %v8253
        %v8318 = vrcp.pop %v8254
        %v8319 = vrcp.pop %v8255
        %v8320 = vmul.f32 %v7275, %v8256
        %v8321 = vmul.f32 %v7373, %v8257
        %v8322 = vmul.f32 %v7471, %v8258
        %v8323 = vmul.f32 %v7569, %v8259
        %v8324 = vmul.f32 %v7277, %v8260
        %v8325 = vmul.f32 %v7375, %v8261
        %v8326 = vmul.f32 %v7473, %v8262
        %v8327 = vmul.f32 %v7571, %v8263
        %v8328 = vmul.f32 %v7280, %v8264
        %v8329 = vmul.f32 %v7378, %v8265
        %v8330 = vmul.f32 %v7476, %v8266
        %v8331 = vmul.f32 %v7574, %v8267
        %v8332 = vmul.f32 %v7282, %v8268
        %v8333 = vmul.f32 %v7380, %v8269
        %v8334 = vmul.f32 %v7478, %v8270
        %v8335 = vmul.f32 %v7576, %v8271
        %v8336 = vmul.f32 %v7285, %v8272
        %v8337 = vmul.f32 %v7383, %v8273
        %v8338 = vmul.f32 %v7481, %v8274
        %v8339 = vmul.f32 %v7579, %v8275
        %v8340 = vmul.f32 %v7287, %v8276
        %v8341 = vmul.f32 %v7385, %v8277
        %v8342 = vmul.f32 %v7483, %v8278
        %v8343 = vmul.f32 %v7581, %v8279
        %v8344 = vmul.f32 %v7290, %v8280
        %v8345 = vmul.f32 %v7388, %v8281
        %v8346 = vmul.f32 %v7486, %v8282
        %v8347 = vmul.f32 %v7584, %v8283
        %v8348 = vmul.f32 %v7292, %v8284
        %v8349 = vmul.f32 %v7390, %v8285
        %v8350 = vmul.f32 %v7488, %v8286
        %v8351 = vmul.f32 %v7586, %v8287
        %v8352 = vmul.f32 %v7295, %v8288
        %v8353 = vmul.f32 %v7393, %v8289
        %v8354 = vmul.f32 %v7491, %v8290
        %v8355 = vmul.f32 %v7589, %v8291
        %v8356 = vmul.f32 %v7297, %v8292
        %v8357 = vmul.f32 %v7395, %v8293
        %v8358 = vmul.f32 %v7493, %v8294
        %v8359 = vmul.f32 %v7591, %v8295
        %v8360 = vmul.f32 %v7300, %v8296
        %v8361 = vmul.f32 %v7398, %v8297
        %v8362 = vmul.f32 %v7496, %v8298
        %v8363 = vmul.f32 %v7594, %v8299
        %v8364 = vmul.f32 %v7302, %v8300
        %v8365 = vmul.f32 %v7400, %v8301
        %v8366 = vmul.f32 %v7498, %v8302
        %v8367 = vmul.f32 %v7596, %v8303
        %v8368 = vmul.f32 %v7305, %v8304
        %v8369 = vmul.f32 %v7403, %v8305
        %v8370 = vmul.f32 %v7501, %v8306
        %v8371 = vmul.f32 %v7599, %v8307
        %v8372 = vmul.f32 %v7307, %v8308
        %v8373 = vmul.f32 %v7405, %v8309
        %v8374 = vmul.f32 %v7503, %v8310
        %v8375 = vmul.f32 %v7601, %v8311
        %v8376 = vmul.f32 %v7310, %v8312
        %v8377 = vmul.f32 %v7408, %v8313
        %v8378 = vmul.f32 %v7506, %v8314
        %v8379 = vmul.f32 %v7604, %v8315
        %v8380 = vmul.f32 %v7312, %v8316
        %v8381 = vmul.f32 %v7410, %v8317
        %v8382 = vmul.f32 %v7508, %v8318
        %v8383 = vmul.f32 %v7606, %v8319
        %v8384 = vmul.f32 %v8320, %v7667
        %v8385 = vmul.f32 %v8321, %v7765
        %v8386 = vmul.f32 %v8322, %v7863
        %v8387 = vmul.f32 %v8323, %v7961
        %v8388 = vmul.f32 %v8324, %v7669
        %v8389 = vmul.f32 %v8325, %v7767
        %v8390 = vmul.f32 %v8326, %v7865
        %v8391 = vmul.f32 %v8327, %v7963
        %v8392 = vmul.f32 %v8328, %v7672
        %v8393 = vmul.f32 %v8329, %v7770
        %v8394 = vmul.f32 %v8330, %v7868
        %v8395 = vmul.f32 %v8331, %v7966
        %v8396 = vmul.f32 %v8332, %v7674
        %v8397 = vmul.f32 %v8333, %v7772
        %v8398 = vmul.f32 %v8334, %v7870
        %v8399 = vmul.f32 %v8335, %v7968
        %v8400 = vmul.f32 %v8336, %v7677
        %v8401 = vmul.f32 %v8337, %v7775
        %v8402 = vmul.f32 %v8338, %v7873
        %v8403 = vmul.f32 %v8339, %v7971
        %v8404 = vmul.f32 %v8340, %v7679
        %v8405 = vmul.f32 %v8341, %v7777
        %v8406 = vmul.f32 %v8342, %v7875
        %v8407 = vmul.f32 %v8343, %v7973
        %v8408 = vmul.f32 %v8344, %v7682
        %v8409 = vmul.f32 %v8345, %v7780
        %v8410 = vmul.f32 %v8346, %v7878
        %v8411 = vmul.f32 %v8347, %v7976
        %v8412 = vmul.f32 %v8348, %v7684
        %v8413 = vmul.f32 %v8349, %v7782
        %v8414 = vmul.f32 %v8350, %v7880
        %v8415 = vmul.f32 %v8351, %v7978
        %v8416 = vmul.f32 %v8352, %v7687
        %v8417 = vmul.f32 %v8353, %v7785
        %v8418 = vmul.f32 %v8354, %v7883
        %v8419 = vmul.f32 %v8355, %v7981
        %v8420 = vmul.f32 %v8356, %v7689
        %v8421 = vmul.f32 %v8357, %v7787
        %v8422 = vmul.f32 %v8358, %v7885
        %v8423 = vmul.f32 %v8359, %v7983
        %v8424 = vmul.f32 %v8360, %v7692
        %v8425 = vmul.f32 %v8361, %v7790
        %v8426 = vmul.f32 %v8362, %v7888
        %v8427 = vmul.f32 %v8363, %v7986
        %v8428 = vmul.f32 %v8364, %v7694
        %v8429 = vmul.f32 %v8365, %v7792
        %v8430 = vmul.f32 %v8366, %v7890
        %v8431 = vmul.f32 %v8367, %v7988
        %v8432 = vmul.f32 %v8368, %v7697
        %v8433 = vmul.f32 %v8369, %v7795
        %v8434 = vmul.f32 %v8370, %v7893
        %v8435 = vmul.f32 %v8371, %v7991
        %v8436 = vmul.f32 %v8372, %v7699
        %v8437 = vmul.f32 %v8373, %v7797
        %v8438 = vmul.f32 %v8374, %v7895
        %v8439 = vmul.f32 %v8375, %v7993
        %v8440 = vmul.f32 %v8376, %v7702
        %v8441 = vmul.f32 %v8377, %v7800
        %v8442 = vmul.f32 %v8378, %v7898
        %v8443 = vmul.f32 %v8379, %v7996
        %v8444 = vmul.f32 %v8380, %v7704
        %v8445 = vmul.f32 %v8381, %v7802
        %v8446 = vmul.f32 %v8382, %v7900
        %v8447 = vmul.f32 %v8383, %v7998
        %v8448 = vpack.c.bf16 %v8388, %v8384
        %v8449 = vpack.c.bf16 %v8389, %v8385
        %v8450 = vpack.c.bf16 %v8390, %v8386
        %v8451 = vpack.c.bf16 %v8391, %v8387
        %v8452 = vpack.c.bf16 %v8396, %v8392
        %v8453 = vpack.c.bf16 %v8397, %v8393
        %v8454 = vpack.c.bf16 %v8398, %v8394
        %v8455 = vpack.c.bf16 %v8399, %v8395
        %v8456 = vpack.c.bf16 %v8404, %v8400
        %v8457 = vpack.c.bf16 %v8405, %v8401
        %v8458 = vpack.c.bf16 %v8406, %v8402
        %v8459 = vpack.c.bf16 %v8407, %v8403
        %v8460 = vpack.c.bf16 %v8412, %v8408
        %v8461 = vpack.c.bf16 %v8413, %v8409
        %v8462 = vpack.c.bf16 %v8414, %v8410
        %v8463 = vpack.c.bf16 %v8415, %v8411
        %v8464 = vpack.c.bf16 %v8420, %v8416
        %v8465 = vpack.c.bf16 %v8421, %v8417
        %v8466 = vpack.c.bf16 %v8422, %v8418
        %v8467 = vpack.c.bf16 %v8423, %v8419
        %v8468 = vpack.c.bf16 %v8428, %v8424
        %v8469 = vpack.c.bf16 %v8429, %v8425
        %v8470 = vpack.c.bf16 %v8430, %v8426
        %v8471 = vpack.c.bf16 %v8431, %v8427
        %v8472 = vpack.c.bf16 %v8436, %v8432
        %v8473 = vpack.c.bf16 %v8437, %v8433
        %v8474 = vpack.c.bf16 %v8438, %v8434
        %v8475 = vpack.c.bf16 %v8439, %v8435
        %v8476 = vpack.c.bf16 %v8444, %v8440
        %v8477 = vpack.c.bf16 %v8445, %v8441
        %v8478 = vpack.c.bf16 %v8446, %v8442
        %v8479 = vpack.c.bf16 %v8447, %v8443
        %v8480 = vld [vmem:[#allocation14] sm:$0xff]
        %v8481 = vld [vmem:[#allocation14 + $0x8] sm:$0xff]
        %v8482 = vld [vmem:[#allocation14 + $0x10] sm:$0xff]
        %v8483 = vld [vmem:[#allocation14 + $0x18] sm:$0xff]
        %v8484 = vld [vmem:[#allocation14 + $0x20] sm:$0xff]
        %v8485 = vld [vmem:[#allocation14 + $0x28] sm:$0xff]
        %v8486 = vld [vmem:[#allocation14 + $0x30] sm:$0xff]
        %v8487 = vld [vmem:[#allocation14 + $0x38] sm:$0xff]
        %v8488 = vld [vmem:[#allocation14 + $0x40] sm:$0xff]
        %v8489 = vld [vmem:[#allocation14 + $0x48] sm:$0xff]
        %v8490 = vld [vmem:[#allocation14 + $0x50] sm:$0xff]
        %v8491 = vld [vmem:[#allocation14 + $0x58] sm:$0xff]
        %v8492 = vld [vmem:[#allocation14 + $0x60] sm:$0xff]
        %v8493 = vld [vmem:[#allocation14 + $0x68] sm:$0xff]
        %v8494 = vld [vmem:[#allocation14 + $0x70] sm:$0xff]
        %v8495 = vld [vmem:[#allocation14 + $0x78] sm:$0xff]
        %v8496 = vld [vmem:[#allocation14 + $0x80] sm:$0xff]
        %v8497 = vld [vmem:[#allocation14 + $0x88] sm:$0xff]
        %v8498 = vld [vmem:[#allocation14 + $0x90] sm:$0xff]
        %v8499 = vld [vmem:[#allocation14 + $0x98] sm:$0xff]
        %v8500 = vld [vmem:[#allocation14 + $0xa0] sm:$0xff]
        %v8501 = vld [vmem:[#allocation14 + $0xa8] sm:$0xff]
        %v8502 = vld [vmem:[#allocation14 + $0xb0] sm:$0xff]
        %v8503 = vld [vmem:[#allocation14 + $0xb8] sm:$0xff]
        %v8504 = vld [vmem:[#allocation14 + $0xc0] sm:$0xff]
        %v8505 = vld [vmem:[#allocation14 + $0xc8] sm:$0xff]
        %v8506 = vld [vmem:[#allocation14 + $0xd0] sm:$0xff]
        %v8507 = vld [vmem:[#allocation14 + $0xd8] sm:$0xff]
        %v8508 = vld [vmem:[#allocation14 + $0xe0] sm:$0xff]
        %v8509 = vld [vmem:[#allocation14 + $0xe8] sm:$0xff]
        %v8510 = vld [vmem:[#allocation14 + $0xf0] sm:$0xff]
        %v8511 = vld [vmem:[#allocation14 + $0xf8] sm:$0xff]
        %v8512 = vld [vmem:[#allocation14 + $0x100] sm:$0xff]
        %v8513 = vld [vmem:[#allocation14 + $0x108] sm:$0xff]
        %v8514 = vld [vmem:[#allocation14 + $0x110] sm:$0xff]
        %v8515 = vld [vmem:[#allocation14 + $0x118] sm:$0xff]
        %v8516 = vld [vmem:[#allocation14 + $0x120] sm:$0xff]
        %v8517 = vld [vmem:[#allocation14 + $0x128] sm:$0xff]
        %v8518 = vld [vmem:[#allocation14 + $0x130] sm:$0xff]
        %v8519 = vld [vmem:[#allocation14 + $0x138] sm:$0xff]
        %v8520 = vld [vmem:[#allocation14 + $0x140] sm:$0xff]
        %v8521 = vld [vmem:[#allocation14 + $0x148] sm:$0xff]
        %v8522 = vld [vmem:[#allocation14 + $0x150] sm:$0xff]
        %v8523 = vld [vmem:[#allocation14 + $0x158] sm:$0xff]
        %v8524 = vld [vmem:[#allocation14 + $0x160] sm:$0xff]
        %v8525 = vld [vmem:[#allocation14 + $0x168] sm:$0xff]
        %v8526 = vld [vmem:[#allocation14 + $0x170] sm:$0xff]
        %v8527 = vld [vmem:[#allocation14 + $0x178] sm:$0xff]
        %v8528 = vld [vmem:[#allocation14 + $0x180] sm:$0xff]
        %v8529 = vld [vmem:[#allocation14 + $0x188] sm:$0xff]
        %v8530 = vld [vmem:[#allocation14 + $0x190] sm:$0xff]
        %v8531 = vld [vmem:[#allocation14 + $0x198] sm:$0xff]
        %v8532 = vld [vmem:[#allocation14 + $0x1a0] sm:$0xff]
        %v8533 = vld [vmem:[#allocation14 + $0x1a8] sm:$0xff]
        %v8534 = vld [vmem:[#allocation14 + $0x1b0] sm:$0xff]
        %v8535 = vld [vmem:[#allocation14 + $0x1b8] sm:$0xff]
        %v8536 = vld [vmem:[#allocation14 + $0x1c0] sm:$0xff]
        %v8537 = vld [vmem:[#allocation14 + $0x1c8] sm:$0xff]
        %v8538 = vld [vmem:[#allocation14 + $0x1d0] sm:$0xff]
        %v8539 = vld [vmem:[#allocation14 + $0x1d8] sm:$0xff]
        %v8540 = vld [vmem:[#allocation14 + $0x1e0] sm:$0xff]
        %v8541 = vld [vmem:[#allocation14 + $0x1e8] sm:$0xff]
        %v8542 = vld [vmem:[#allocation14 + $0x1f0] sm:$0xff]
        %v8543 = vld [vmem:[#allocation14 + $0x1f8] sm:$0xff]
        %v8608 = vunpack.c.l.b16 %v8480
        %v8609 = vunpack.c.h.b16 %v8480
        %v8610 = vunpack.c.l.b16 %v8481
        %v8611 = vunpack.c.h.b16 %v8481
        %v8612 = vunpack.c.l.b16 %v8482
        %v8613 = vunpack.c.h.b16 %v8482
        %v8614 = vunpack.c.l.b16 %v8483
        %v8615 = vunpack.c.h.b16 %v8483
        %v8616 = vunpack.c.l.b16 %v8484
        %v8617 = vunpack.c.h.b16 %v8484
        %v8618 = vunpack.c.l.b16 %v8485
        %v8619 = vunpack.c.h.b16 %v8485
        %v8620 = vunpack.c.l.b16 %v8486
        %v8621 = vunpack.c.h.b16 %v8486
        %v8622 = vunpack.c.l.b16 %v8487
        %v8623 = vunpack.c.h.b16 %v8487
        %v8624 = vunpack.c.l.b16 %v8488
        %v8625 = vunpack.c.h.b16 %v8488
        %v8626 = vunpack.c.l.b16 %v8489
        %v8627 = vunpack.c.h.b16 %v8489
        %v8628 = vunpack.c.l.b16 %v8490
        %v8629 = vunpack.c.h.b16 %v8490
        %v8630 = vunpack.c.l.b16 %v8491
        %v8631 = vunpack.c.h.b16 %v8491
        %v8632 = vunpack.c.l.b16 %v8492
        %v8633 = vunpack.c.h.b16 %v8492
        %v8634 = vunpack.c.l.b16 %v8493
        %v8635 = vunpack.c.h.b16 %v8493
        %v8636 = vunpack.c.l.b16 %v8494
        %v8637 = vunpack.c.h.b16 %v8494
        %v8638 = vunpack.c.l.b16 %v8495
        %v8639 = vunpack.c.h.b16 %v8495
        %v8640 = vunpack.c.l.b16 %v8496
        %v8641 = vunpack.c.h.b16 %v8496
        %v8642 = vunpack.c.l.b16 %v8497
        %v8643 = vunpack.c.h.b16 %v8497
        %v8644 = vunpack.c.l.b16 %v8498
        %v8645 = vunpack.c.h.b16 %v8498
        %v8646 = vunpack.c.l.b16 %v8499
        %v8647 = vunpack.c.h.b16 %v8499
        %v8648 = vunpack.c.l.b16 %v8500
        %v8649 = vunpack.c.h.b16 %v8500
        %v8650 = vunpack.c.l.b16 %v8501
        %v8651 = vunpack.c.h.b16 %v8501
        %v8652 = vunpack.c.l.b16 %v8502
        %v8653 = vunpack.c.h.b16 %v8502
        %v8654 = vunpack.c.l.b16 %v8503
        %v8655 = vunpack.c.h.b16 %v8503
        %v8656 = vunpack.c.l.b16 %v8504
        %v8657 = vunpack.c.h.b16 %v8504
        %v8658 = vunpack.c.l.b16 %v8505
        %v8659 = vunpack.c.h.b16 %v8505
        %v8660 = vunpack.c.l.b16 %v8506
        %v8661 = vunpack.c.h.b16 %v8506
        %v8662 = vunpack.c.l.b16 %v8507
        %v8663 = vunpack.c.h.b16 %v8507
        %v8664 = vunpack.c.l.b16 %v8508
        %v8665 = vunpack.c.h.b16 %v8508
        %v8666 = vunpack.c.l.b16 %v8509
        %v8667 = vunpack.c.h.b16 %v8509
        %v8668 = vunpack.c.l.b16 %v8510
        %v8669 = vunpack.c.h.b16 %v8510
        %v8670 = vunpack.c.l.b16 %v8511
        %v8671 = vunpack.c.h.b16 %v8511
        %v8672 = vunpack.c.l.b16 %v8512
        %v8673 = vunpack.c.h.b16 %v8512
        %v8674 = vunpack.c.l.b16 %v8513
        %v8675 = vunpack.c.h.b16 %v8513
        %v8676 = vunpack.c.l.b16 %v8514
        %v8677 = vunpack.c.h.b16 %v8514
        %v8678 = vunpack.c.l.b16 %v8515
        %v8679 = vunpack.c.h.b16 %v8515
        %v8680 = vunpack.c.l.b16 %v8516
        %v8681 = vunpack.c.h.b16 %v8516
        %v8682 = vunpack.c.l.b16 %v8517
        %v8683 = vunpack.c.h.b16 %v8517
        %v8684 = vunpack.c.l.b16 %v8518
        %v8685 = vunpack.c.h.b16 %v8518
        %v8686 = vunpack.c.l.b16 %v8519
        %v8687 = vunpack.c.h.b16 %v8519
        %v8688 = vunpack.c.l.b16 %v8520
        %v8689 = vunpack.c.h.b16 %v8520
        %v8690 = vunpack.c.l.b16 %v8521
        %v8691 = vunpack.c.h.b16 %v8521
        %v8692 = vunpack.c.l.b16 %v8522
        %v8693 = vunpack.c.h.b16 %v8522
        %v8694 = vunpack.c.l.b16 %v8523
        %v8695 = vunpack.c.h.b16 %v8523
        %v8696 = vunpack.c.l.b16 %v8524
        %v8697 = vunpack.c.h.b16 %v8524
        %v8698 = vunpack.c.l.b16 %v8525
        %v8699 = vunpack.c.h.b16 %v8525
        %v8700 = vunpack.c.l.b16 %v8526
        %v8701 = vunpack.c.h.b16 %v8526
        %v8702 = vunpack.c.l.b16 %v8527
        %v8703 = vunpack.c.h.b16 %v8527
        %v8704 = vunpack.c.l.b16 %v8528
        %v8705 = vunpack.c.h.b16 %v8528
        %v8706 = vunpack.c.l.b16 %v8529
        %v8707 = vunpack.c.h.b16 %v8529
        %v8708 = vunpack.c.l.b16 %v8530
        %v8709 = vunpack.c.h.b16 %v8530
        %v8710 = vunpack.c.l.b16 %v8531
        %v8711 = vunpack.c.h.b16 %v8531
        %v8712 = vunpack.c.l.b16 %v8532
        %v8713 = vunpack.c.h.b16 %v8532
        %v8714 = vunpack.c.l.b16 %v8533
        %v8715 = vunpack.c.h.b16 %v8533
        %v8716 = vunpack.c.l.b16 %v8534
        %v8717 = vunpack.c.h.b16 %v8534
        %v8718 = vunpack.c.l.b16 %v8535
        %v8719 = vunpack.c.h.b16 %v8535
        %v8720 = vunpack.c.l.b16 %v8536
        %v8721 = vunpack.c.h.b16 %v8536
        %v8722 = vunpack.c.l.b16 %v8537
        %v8723 = vunpack.c.h.b16 %v8537
        %v8724 = vunpack.c.l.b16 %v8538
        %v8725 = vunpack.c.h.b16 %v8538
        %v8726 = vunpack.c.l.b16 %v8539
        %v8727 = vunpack.c.h.b16 %v8539
        %v8728 = vunpack.c.l.b16 %v8540
        %v8729 = vunpack.c.h.b16 %v8540
        %v8730 = vunpack.c.l.b16 %v8541
        %v8731 = vunpack.c.h.b16 %v8541
        %v8732 = vunpack.c.l.b16 %v8542
        %v8733 = vunpack.c.h.b16 %v8542
        %v8734 = vunpack.c.l.b16 %v8543
        %v8735 = vunpack.c.h.b16 %v8543
        %v8736 = vpack.c.b16 %v8610, %v8608
        %v8737 = vpack.c.b16 %v8611, %v8609
        %v8738 = vpack.c.b16 %v8614, %v8612
        %v8739 = vpack.c.b16 %v8615, %v8613
        %v8740 = vpack.c.b16 %v8618, %v8616
        %v8741 = vpack.c.b16 %v8619, %v8617
        %v8742 = vpack.c.b16 %v8622, %v8620
        %v8743 = vpack.c.b16 %v8623, %v8621
        %v8744 = vpack.c.b16 %v8626, %v8624
        %v8745 = vpack.c.b16 %v8627, %v8625
        %v8746 = vpack.c.b16 %v8630, %v8628
        %v8747 = vpack.c.b16 %v8631, %v8629
        %v8748 = vpack.c.b16 %v8634, %v8632
        %v8749 = vpack.c.b16 %v8635, %v8633
        %v8750 = vpack.c.b16 %v8638, %v8636
        %v8751 = vpack.c.b16 %v8639, %v8637
        %v8752 = vpack.c.b16 %v8642, %v8640
        %v8753 = vpack.c.b16 %v8643, %v8641
        %v8754 = vpack.c.b16 %v8646, %v8644
        %v8755 = vpack.c.b16 %v8647, %v8645
        %v8756 = vpack.c.b16 %v8650, %v8648
        %v8757 = vpack.c.b16 %v8651, %v8649
        %v8758 = vpack.c.b16 %v8654, %v8652
        %v8759 = vpack.c.b16 %v8655, %v8653
        %v8760 = vpack.c.b16 %v8658, %v8656
        %v8761 = vpack.c.b16 %v8659, %v8657
        %v8762 = vpack.c.b16 %v8662, %v8660
        %v8763 = vpack.c.b16 %v8663, %v8661
        %v8764 = vpack.c.b16 %v8666, %v8664
        %v8765 = vpack.c.b16 %v8667, %v8665
        %v8766 = vpack.c.b16 %v8670, %v8668
        %v8767 = vpack.c.b16 %v8671, %v8669
        %v8768 = vpack.c.b16 %v8674, %v8672
        %v8769 = vpack.c.b16 %v8675, %v8673
        %v8770 = vpack.c.b16 %v8678, %v8676
        %v8771 = vpack.c.b16 %v8679, %v8677
        %v8772 = vpack.c.b16 %v8682, %v8680
        %v8773 = vpack.c.b16 %v8683, %v8681
        %v8774 = vpack.c.b16 %v8686, %v8684
        %v8775 = vpack.c.b16 %v8687, %v8685
        %v8776 = vpack.c.b16 %v8690, %v8688
        %v8777 = vpack.c.b16 %v8691, %v8689
        %v8778 = vpack.c.b16 %v8694, %v8692
        %v8779 = vpack.c.b16 %v8695, %v8693
        %v8780 = vpack.c.b16 %v8698, %v8696
        %v8781 = vpack.c.b16 %v8699, %v8697
        %v8782 = vpack.c.b16 %v8702, %v8700
        %v8783 = vpack.c.b16 %v8703, %v8701
        %v8784 = vpack.c.b16 %v8706, %v8704
        %v8785 = vpack.c.b16 %v8707, %v8705
        %v8786 = vpack.c.b16 %v8710, %v8708
        %v8787 = vpack.c.b16 %v8711, %v8709
        %v8788 = vpack.c.b16 %v8714, %v8712
        %v8789 = vpack.c.b16 %v8715, %v8713
        %v8790 = vpack.c.b16 %v8718, %v8716
        %v8791 = vpack.c.b16 %v8719, %v8717
        %v8792 = vpack.c.b16 %v8722, %v8720
        %v8793 = vpack.c.b16 %v8723, %v8721
        %v8794 = vpack.c.b16 %v8726, %v8724
        %v8795 = vpack.c.b16 %v8727, %v8725
        %v8796 = vpack.c.b16 %v8730, %v8728
        %v8797 = vpack.c.b16 %v8731, %v8729
        %v8798 = vpack.c.b16 %v8734, %v8732
        %v8799 = vpack.c.b16 %v8735, %v8733
        %8864 = vmatpush.bf16.msra.mxu0 %v8750
        %8865 = vmatpush.bf16.msra.mxu0 %v8748
        %8866 = vmatpush.bf16.msra.mxu0 %v8746
        %8867 = vmatpush.bf16.msra.mxu0 %v8744
        %8868 = vmatpush.bf16.msra.mxu0 %v8742
        %8869 = vmatpush.bf16.msra.mxu0 %v8740
        %8870 = vmatpush.bf16.msra.mxu0 %v8738
        %8871 = vmatpush.bf16.msra.mxu0 %v8736
        %8872 = vmatmul.bf16.gmra.mxu0 %v8448
        %v8873 = vpop.f32.mrf.mxu0
        %v8874 = vadd.f32 0.0, %v8873
        %v8875 = vpop.f32.mrf.mxu0
        %v8876 = vadd.f32 0.0, %v8875
        %8877 = vmatmul.bf16.gmra.mxu0 %v8452
        %v8878 = vpop.f32.mrf.mxu0
        %v8879 = vadd.f32 0.0, %v8878
        %v8880 = vpop.f32.mrf.mxu0
        %v8881 = vadd.f32 0.0, %v8880
        %8882 = vmatmul.bf16.gmra.mxu0 %v8456
        %v8883 = vpop.f32.mrf.mxu0
        %v8884 = vadd.f32 0.0, %v8883
        %v8885 = vpop.f32.mrf.mxu0
        %v8886 = vadd.f32 0.0, %v8885
        %8887 = vmatmul.bf16.gmra.mxu0 %v8460
        %v8888 = vpop.f32.mrf.mxu0
        %v8889 = vadd.f32 0.0, %v8888
        %v8890 = vpop.f32.mrf.mxu0
        %v8891 = vadd.f32 0.0, %v8890
        %8892 = vmatmul.bf16.gmra.mxu0 %v8464
        %v8893 = vpop.f32.mrf.mxu0
        %v8894 = vadd.f32 0.0, %v8893
        %v8895 = vpop.f32.mrf.mxu0
        %v8896 = vadd.f32 0.0, %v8895
        %8897 = vmatmul.bf16.gmra.mxu0 %v8468
        %v8898 = vpop.f32.mrf.mxu0
        %v8899 = vadd.f32 0.0, %v8898
        %v8900 = vpop.f32.mrf.mxu0
        %v8901 = vadd.f32 0.0, %v8900
        %8902 = vmatmul.bf16.gmra.mxu0 %v8472
        %v8903 = vpop.f32.mrf.mxu0
        %v8904 = vadd.f32 0.0, %v8903
        %v8905 = vpop.f32.mrf.mxu0
        %v8906 = vadd.f32 0.0, %v8905
        %8907 = vmatmul.bf16.gmra.mxu0 %v8476
        %v8908 = vpop.f32.mrf.mxu0
        %v8909 = vadd.f32 0.0, %v8908
        %v8910 = vpop.f32.mrf.mxu0
        %v8911 = vadd.f32 0.0, %v8910
        %8912 = vdwg.mxu0
        %8913 = vmatpush.bf16.msra.mxu0 %v8766
        %8914 = vmatpush.bf16.msra.mxu0 %v8764
        %8915 = vmatpush.bf16.msra.mxu0 %v8762
        %8916 = vmatpush.bf16.msra.mxu0 %v8760
        %8917 = vmatpush.bf16.msra.mxu0 %v8758
        %8918 = vmatpush.bf16.msra.mxu0 %v8756
        %8919 = vmatpush.bf16.msra.mxu0 %v8754
        %8920 = vmatpush.bf16.msra.mxu0 %v8752
        %8921 = vmatmul.bf16.gmra.mxu0 %v8449
        %v8922 = vpop.f32.mrf.mxu0
        %v8923 = vadd.f32 %v8874, %v8922
        %v8924 = vpop.f32.mrf.mxu0
        %v8925 = vadd.f32 %v8876, %v8924
        %8926 = vmatmul.bf16.gmra.mxu0 %v8453
        %v8927 = vpop.f32.mrf.mxu0
        %v8928 = vadd.f32 %v8879, %v8927
        %v8929 = vpop.f32.mrf.mxu0
        %v8930 = vadd.f32 %v8881, %v8929
        %8931 = vmatmul.bf16.gmra.mxu0 %v8457
        %v8932 = vpop.f32.mrf.mxu0
        %v8933 = vadd.f32 %v8884, %v8932
        %v8934 = vpop.f32.mrf.mxu0
        %v8935 = vadd.f32 %v8886, %v8934
        %8936 = vmatmul.bf16.gmra.mxu0 %v8461
        %v8937 = vpop.f32.mrf.mxu0
        %v8938 = vadd.f32 %v8889, %v8937
        %v8939 = vpop.f32.mrf.mxu0
        %v8940 = vadd.f32 %v8891, %v8939
        %8941 = vmatmul.bf16.gmra.mxu0 %v8465
        %v8942 = vpop.f32.mrf.mxu0
        %v8943 = vadd.f32 %v8894, %v8942
        %v8944 = vpop.f32.mrf.mxu0
        %v8945 = vadd.f32 %v8896, %v8944
        %8946 = vmatmul.bf16.gmra.mxu0 %v8469
        %v8947 = vpop.f32.mrf.mxu0
        %v8948 = vadd.f32 %v8899, %v8947
        %v8949 = vpop.f32.mrf.mxu0
        %v8950 = vadd.f32 %v8901, %v8949
        %8951 = vmatmul.bf16.gmra.mxu0 %v8473
        %v8952 = vpop.f32.mrf.mxu0
        %v8953 = vadd.f32 %v8904, %v8952
        %v8954 = vpop.f32.mrf.mxu0
        %v8955 = vadd.f32 %v8906, %v8954
        %8956 = vmatmul.bf16.gmra.mxu0 %v8477
        %v8957 = vpop.f32.mrf.mxu0
        %v8958 = vadd.f32 %v8909, %v8957
        %v8959 = vpop.f32.mrf.mxu0
        %v8960 = vadd.f32 %v8911, %v8959
        %8961 = vdwg.mxu0
        %8962 = vmatpush.bf16.msra.mxu0 %v8782
        %8963 = vmatpush.bf16.msra.mxu0 %v8780
        %8964 = vmatpush.bf16.msra.mxu0 %v8778
        %8965 = vmatpush.bf16.msra.mxu0 %v8776
        %8966 = vmatpush.bf16.msra.mxu0 %v8774
        %8967 = vmatpush.bf16.msra.mxu0 %v8772
        %8968 = vmatpush.bf16.msra.mxu0 %v8770
        %8969 = vmatpush.bf16.msra.mxu0 %v8768
        %8970 = vmatmul.bf16.gmra.mxu0 %v8450
        %v8971 = vpop.f32.mrf.mxu0
        %v8972 = vadd.f32 %v8923, %v8971
        %v8973 = vpop.f32.mrf.mxu0
        %v8974 = vadd.f32 %v8925, %v8973
        %8975 = vmatmul.bf16.gmra.mxu0 %v8454
        %v8976 = vpop.f32.mrf.mxu0
        %v8977 = vadd.f32 %v8928, %v8976
        %v8978 = vpop.f32.mrf.mxu0
        %v8979 = vadd.f32 %v8930, %v8978
        %8980 = vmatmul.bf16.gmra.mxu0 %v8458
        %v8981 = vpop.f32.mrf.mxu0
        %v8982 = vadd.f32 %v8933, %v8981
        %v8983 = vpop.f32.mrf.mxu0
        %v8984 = vadd.f32 %v8935, %v8983
        %8985 = vmatmul.bf16.gmra.mxu0 %v8462
        %v8986 = vpop.f32.mrf.mxu0
        %v8987 = vadd.f32 %v8938, %v8986
        %v8988 = vpop.f32.mrf.mxu0
        %v8989 = vadd.f32 %v8940, %v8988
        %8990 = vmatmul.bf16.gmra.mxu0 %v8466
        %v8991 = vpop.f32.mrf.mxu0
        %v8992 = vadd.f32 %v8943, %v8991
        %v8993 = vpop.f32.mrf.mxu0
        %v8994 = vadd.f32 %v8945, %v8993
        %8995 = vmatmul.bf16.gmra.mxu0 %v8470
        %v8996 = vpop.f32.mrf.mxu0
        %v8997 = vadd.f32 %v8948, %v8996
        %v8998 = vpop.f32.mrf.mxu0
        %v8999 = vadd.f32 %v8950, %v8998
        %9000 = vmatmul.bf16.gmra.mxu0 %v8474
        %v9001 = vpop.f32.mrf.mxu0
        %v9002 = vadd.f32 %v8953, %v9001
        %v9003 = vpop.f32.mrf.mxu0
        %v9004 = vadd.f32 %v8955, %v9003
        %9005 = vmatmul.bf16.gmra.mxu0 %v8478
        %v9006 = vpop.f32.mrf.mxu0
        %v9007 = vadd.f32 %v8958, %v9006
        %v9008 = vpop.f32.mrf.mxu0
        %v9009 = vadd.f32 %v8960, %v9008
        %9010 = vdwg.mxu0
        %9011 = vmatpush.bf16.msra.mxu0 %v8798
        %9012 = vmatpush.bf16.msra.mxu0 %v8796
        %9013 = vmatpush.bf16.msra.mxu0 %v8794
        %9014 = vmatpush.bf16.msra.mxu0 %v8792
        %9015 = vmatpush.bf16.msra.mxu0 %v8790
        %9016 = vmatpush.bf16.msra.mxu0 %v8788
        %9017 = vmatpush.bf16.msra.mxu0 %v8786
        %9018 = vmatpush.bf16.msra.mxu0 %v8784
        %9019 = vmatmul.bf16.gmra.mxu0 %v8451
        %v9020 = vpop.f32.mrf.mxu0
        %v9021 = vadd.f32 %v8972, %v9020
        %v9022 = vpop.f32.mrf.mxu0
        %v9023 = vadd.f32 %v8974, %v9022
        %9024 = vmatmul.bf16.gmra.mxu0 %v8455
        %v9025 = vpop.f32.mrf.mxu0
        %v9026 = vadd.f32 %v8977, %v9025
        %v9027 = vpop.f32.mrf.mxu0
        %v9028 = vadd.f32 %v8979, %v9027
        %9029 = vmatmul.bf16.gmra.mxu0 %v8459
        %v9030 = vpop.f32.mrf.mxu0
        %v9031 = vadd.f32 %v8982, %v9030
        %v9032 = vpop.f32.mrf.mxu0
        %v9033 = vadd.f32 %v8984, %v9032
        %9034 = vmatmul.bf16.gmra.mxu0 %v8463
        %v9035 = vpop.f32.mrf.mxu0
        %v9036 = vadd.f32 %v8987, %v9035
        %v9037 = vpop.f32.mrf.mxu0
        %v9038 = vadd.f32 %v8989, %v9037
        %9039 = vmatmul.bf16.gmra.mxu0 %v8467
        %v9040 = vpop.f32.mrf.mxu0
        %v9041 = vadd.f32 %v8992, %v9040
        %v9042 = vpop.f32.mrf.mxu0
        %v9043 = vadd.f32 %v8994, %v9042
        %9044 = vmatmul.bf16.gmra.mxu0 %v8471
        %v9045 = vpop.f32.mrf.mxu0
        %v9046 = vadd.f32 %v8997, %v9045
        %v9047 = vpop.f32.mrf.mxu0
        %v9048 = vadd.f32 %v8999, %v9047
        %9049 = vmatmul.bf16.gmra.mxu0 %v8475
        %v9050 = vpop.f32.mrf.mxu0
        %v9051 = vadd.f32 %v9002, %v9050
        %v9052 = vpop.f32.mrf.mxu0
        %v9053 = vadd.f32 %v9004, %v9052
        %9054 = vmatmul.bf16.gmra.mxu0 %v8479
        %v9055 = vpop.f32.mrf.mxu0
        %v9056 = vadd.f32 %v9007, %v9055
        %v9057 = vpop.f32.mrf.mxu0
        %v9058 = vadd.f32 %v9009, %v9057
        %9059 = vdwg.mxu0
        %9060 = vmatpush.bf16.msra.mxu0 %v8751
        %9061 = vmatpush.bf16.msra.mxu0 %v8749
        %9062 = vmatpush.bf16.msra.mxu0 %v8747
        %9063 = vmatpush.bf16.msra.mxu0 %v8745
        %9064 = vmatpush.bf16.msra.mxu0 %v8743
        %9065 = vmatpush.bf16.msra.mxu0 %v8741
        %9066 = vmatpush.bf16.msra.mxu0 %v8739
        %9067 = vmatpush.bf16.msra.mxu0 %v8737
        %9068 = vmatmul.bf16.gmra.mxu0 %v8448
        %v9069 = vpop.f32.mrf.mxu0
        %v9070 = vadd.f32 0.0, %v9069
        %v9071 = vpop.f32.mrf.mxu0
        %v9072 = vadd.f32 0.0, %v9071
        %9073 = vmatmul.bf16.gmra.mxu0 %v8452
        %v9074 = vpop.f32.mrf.mxu0
        %v9075 = vadd.f32 0.0, %v9074
        %v9076 = vpop.f32.mrf.mxu0
        %v9077 = vadd.f32 0.0, %v9076
        %9078 = vmatmul.bf16.gmra.mxu0 %v8456
        %v9079 = vpop.f32.mrf.mxu0
        %v9080 = vadd.f32 0.0, %v9079
        %v9081 = vpop.f32.mrf.mxu0
        %v9082 = vadd.f32 0.0, %v9081
        %9083 = vmatmul.bf16.gmra.mxu0 %v8460
        %v9084 = vpop.f32.mrf.mxu0
        %v9085 = vadd.f32 0.0, %v9084
        %v9086 = vpop.f32.mrf.mxu0
        %v9087 = vadd.f32 0.0, %v9086
        %9088 = vmatmul.bf16.gmra.mxu0 %v8464
        %v9089 = vpop.f32.mrf.mxu0
        %v9090 = vadd.f32 0.0, %v9089
        %v9091 = vpop.f32.mrf.mxu0
        %v9092 = vadd.f32 0.0, %v9091
        %9093 = vmatmul.bf16.gmra.mxu0 %v8468
        %v9094 = vpop.f32.mrf.mxu0
        %v9095 = vadd.f32 0.0, %v9094
        %v9096 = vpop.f32.mrf.mxu0
        %v9097 = vadd.f32 0.0, %v9096
        %9098 = vmatmul.bf16.gmra.mxu0 %v8472
        %v9099 = vpop.f32.mrf.mxu0
        %v9100 = vadd.f32 0.0, %v9099
        %v9101 = vpop.f32.mrf.mxu0
        %v9102 = vadd.f32 0.0, %v9101
        %9103 = vmatmul.bf16.gmra.mxu0 %v8476
        %v9104 = vpop.f32.mrf.mxu0
        %v9105 = vadd.f32 0.0, %v9104
        %v9106 = vpop.f32.mrf.mxu0
        %v9107 = vadd.f32 0.0, %v9106
        %9108 = vdwg.mxu0
        %9109 = vmatpush.bf16.msra.mxu0 %v8767
        %9110 = vmatpush.bf16.msra.mxu0 %v8765
        %9111 = vmatpush.bf16.msra.mxu0 %v8763
        %9112 = vmatpush.bf16.msra.mxu0 %v8761
        %9113 = vmatpush.bf16.msra.mxu0 %v8759
        %9114 = vmatpush.bf16.msra.mxu0 %v8757
        %9115 = vmatpush.bf16.msra.mxu0 %v8755
        %9116 = vmatpush.bf16.msra.mxu0 %v8753
        %9117 = vmatmul.bf16.gmra.mxu0 %v8449
        %v9118 = vpop.f32.mrf.mxu0
        %v9119 = vadd.f32 %v9070, %v9118
        %v9120 = vpop.f32.mrf.mxu0
        %v9121 = vadd.f32 %v9072, %v9120
        %9122 = vmatmul.bf16.gmra.mxu0 %v8453
        %v9123 = vpop.f32.mrf.mxu0
        %v9124 = vadd.f32 %v9075, %v9123
        %v9125 = vpop.f32.mrf.mxu0
        %v9126 = vadd.f32 %v9077, %v9125
        %9127 = vmatmul.bf16.gmra.mxu0 %v8457
        %v9128 = vpop.f32.mrf.mxu0
        %v9129 = vadd.f32 %v9080, %v9128
        %v9130 = vpop.f32.mrf.mxu0
        %v9131 = vadd.f32 %v9082, %v9130
        %9132 = vmatmul.bf16.gmra.mxu0 %v8461
        %v9133 = vpop.f32.mrf.mxu0
        %v9134 = vadd.f32 %v9085, %v9133
        %v9135 = vpop.f32.mrf.mxu0
        %v9136 = vadd.f32 %v9087, %v9135
        %9137 = vmatmul.bf16.gmra.mxu0 %v8465
        %v9138 = vpop.f32.mrf.mxu0
        %v9139 = vadd.f32 %v9090, %v9138
        %v9140 = vpop.f32.mrf.mxu0
        %v9141 = vadd.f32 %v9092, %v9140
        %9142 = vmatmul.bf16.gmra.mxu0 %v8469
        %v9143 = vpop.f32.mrf.mxu0
        %v9144 = vadd.f32 %v9095, %v9143
        %v9145 = vpop.f32.mrf.mxu0
        %v9146 = vadd.f32 %v9097, %v9145
        %9147 = vmatmul.bf16.gmra.mxu0 %v8473
        %v9148 = vpop.f32.mrf.mxu0
        %v9149 = vadd.f32 %v9100, %v9148
        %v9150 = vpop.f32.mrf.mxu0
        %v9151 = vadd.f32 %v9102, %v9150
        %9152 = vmatmul.bf16.gmra.mxu0 %v8477
        %v9153 = vpop.f32.mrf.mxu0
        %v9154 = vadd.f32 %v9105, %v9153
        %v9155 = vpop.f32.mrf.mxu0
        %v9156 = vadd.f32 %v9107, %v9155
        %9157 = vdwg.mxu0
        %9158 = vmatpush.bf16.msra.mxu0 %v8783
        %9159 = vmatpush.bf16.msra.mxu0 %v8781
        %9160 = vmatpush.bf16.msra.mxu0 %v8779
        %9161 = vmatpush.bf16.msra.mxu0 %v8777
        %9162 = vmatpush.bf16.msra.mxu0 %v8775
        %9163 = vmatpush.bf16.msra.mxu0 %v8773
        %9164 = vmatpush.bf16.msra.mxu0 %v8771
        %9165 = vmatpush.bf16.msra.mxu0 %v8769
        %9166 = vmatmul.bf16.gmra.mxu0 %v8450
        %v9167 = vpop.f32.mrf.mxu0
        %v9168 = vadd.f32 %v9119, %v9167
        %v9169 = vpop.f32.mrf.mxu0
        %v9170 = vadd.f32 %v9121, %v9169
        %9171 = vmatmul.bf16.gmra.mxu0 %v8454
        %v9172 = vpop.f32.mrf.mxu0
        %v9173 = vadd.f32 %v9124, %v9172
        %v9174 = vpop.f32.mrf.mxu0
        %v9175 = vadd.f32 %v9126, %v9174
        %9176 = vmatmul.bf16.gmra.mxu0 %v8458
        %v9177 = vpop.f32.mrf.mxu0
        %v9178 = vadd.f32 %v9129, %v9177
        %v9179 = vpop.f32.mrf.mxu0
        %v9180 = vadd.f32 %v9131, %v9179
        %9181 = vmatmul.bf16.gmra.mxu0 %v8462
        %v9182 = vpop.f32.mrf.mxu0
        %v9183 = vadd.f32 %v9134, %v9182
        %v9184 = vpop.f32.mrf.mxu0
        %v9185 = vadd.f32 %v9136, %v9184
        %9186 = vmatmul.bf16.gmra.mxu0 %v8466
        %v9187 = vpop.f32.mrf.mxu0
        %v9188 = vadd.f32 %v9139, %v9187
        %v9189 = vpop.f32.mrf.mxu0
        %v9190 = vadd.f32 %v9141, %v9189
        %9191 = vmatmul.bf16.gmra.mxu0 %v8470
        %v9192 = vpop.f32.mrf.mxu0
        %v9193 = vadd.f32 %v9144, %v9192
        %v9194 = vpop.f32.mrf.mxu0
        %v9195 = vadd.f32 %v9146, %v9194
        %9196 = vmatmul.bf16.gmra.mxu0 %v8474
        %v9197 = vpop.f32.mrf.mxu0
        %v9198 = vadd.f32 %v9149, %v9197
        %v9199 = vpop.f32.mrf.mxu0
        %v9200 = vadd.f32 %v9151, %v9199
        %9201 = vmatmul.bf16.gmra.mxu0 %v8478
        %v9202 = vpop.f32.mrf.mxu0
        %v9203 = vadd.f32 %v9154, %v9202
        %v9204 = vpop.f32.mrf.mxu0
        %v9205 = vadd.f32 %v9156, %v9204
        %9206 = vdwg.mxu0
        %9207 = vmatpush.bf16.msra.mxu0 %v8799
        %9208 = vmatpush.bf16.msra.mxu0 %v8797
        %9209 = vmatpush.bf16.msra.mxu0 %v8795
        %9210 = vmatpush.bf16.msra.mxu0 %v8793
        %9211 = vmatpush.bf16.msra.mxu0 %v8791
        %9212 = vmatpush.bf16.msra.mxu0 %v8789
        %9213 = vmatpush.bf16.msra.mxu0 %v8787
        %9214 = vmatpush.bf16.msra.mxu0 %v8785
        %9215 = vmatmul.bf16.gmra.mxu0 %v8451
        %v9216 = vpop.f32.mrf.mxu0
        %v9217 = vadd.f32 %v9168, %v9216
        %v9218 = vpop.f32.mrf.mxu0
        %v9219 = vadd.f32 %v9170, %v9218
        %9220 = vmatmul.bf16.gmra.mxu0 %v8455
        %v9221 = vpop.f32.mrf.mxu0
        %v9222 = vadd.f32 %v9173, %v9221
        %v9223 = vpop.f32.mrf.mxu0
        %v9224 = vadd.f32 %v9175, %v9223
        %9225 = vmatmul.bf16.gmra.mxu0 %v8459
        %v9226 = vpop.f32.mrf.mxu0
        %v9227 = vadd.f32 %v9178, %v9226
        %v9228 = vpop.f32.mrf.mxu0
        %v9229 = vadd.f32 %v9180, %v9228
        %9230 = vmatmul.bf16.gmra.mxu0 %v8463
        %v9231 = vpop.f32.mrf.mxu0
        %v9232 = vadd.f32 %v9183, %v9231
        %v9233 = vpop.f32.mrf.mxu0
        %v9234 = vadd.f32 %v9185, %v9233
        %9235 = vmatmul.bf16.gmra.mxu0 %v8467
        %v9236 = vpop.f32.mrf.mxu0
        %v9237 = vadd.f32 %v9188, %v9236
        %v9238 = vpop.f32.mrf.mxu0
        %v9239 = vadd.f32 %v9190, %v9238
        %9240 = vmatmul.bf16.gmra.mxu0 %v8471
        %v9241 = vpop.f32.mrf.mxu0
        %v9242 = vadd.f32 %v9193, %v9241
        %v9243 = vpop.f32.mrf.mxu0
        %v9244 = vadd.f32 %v9195, %v9243
        %9245 = vmatmul.bf16.gmra.mxu0 %v8475
        %v9246 = vpop.f32.mrf.mxu0
        %v9247 = vadd.f32 %v9198, %v9246
        %v9248 = vpop.f32.mrf.mxu0
        %v9249 = vadd.f32 %v9200, %v9248
        %9250 = vmatmul.bf16.gmra.mxu0 %v8479
        %v9251 = vpop.f32.mrf.mxu0
        %v9252 = vadd.f32 %v9203, %v9251
        %v9253 = vpop.f32.mrf.mxu0
        %v9254 = vadd.f32 %v9205, %v9253
        %9255 = vdwg.mxu0
        %v9256 = vld [vmem:[%s10] sm:$0x3]
        %v9257 = vmul.f32 %v9021, %v9021
        %v9258 = vmul.f32 %v9217, %v9217
        %v9259 = vmul.f32 %v9023, %v9023
        %v9260 = vmul.f32 %v9219, %v9219
        %v9261 = vmul.f32 %v9026, %v9026
        %v9262 = vmul.f32 %v9222, %v9222
        %v9263 = vmul.f32 %v9028, %v9028
        %v9264 = vmul.f32 %v9224, %v9224
        %v9265 = vmul.f32 %v9031, %v9031
        %v9266 = vmul.f32 %v9227, %v9227
        %v9267 = vmul.f32 %v9033, %v9033
        %v9268 = vmul.f32 %v9229, %v9229
        %v9269 = vmul.f32 %v9036, %v9036
        %v9270 = vmul.f32 %v9232, %v9232
        %v9271 = vmul.f32 %v9038, %v9038
        %v9272 = vmul.f32 %v9234, %v9234
        %v9273 = vmul.f32 %v9041, %v9041
        %v9274 = vmul.f32 %v9237, %v9237
        %v9275 = vmul.f32 %v9043, %v9043
        %v9276 = vmul.f32 %v9239, %v9239
        %v9277 = vmul.f32 %v9046, %v9046
        %v9278 = vmul.f32 %v9242, %v9242
        %v9279 = vmul.f32 %v9048, %v9048
        %v9280 = vmul.f32 %v9244, %v9244
        %v9281 = vmul.f32 %v9051, %v9051
        %v9282 = vmul.f32 %v9247, %v9247
        %v9283 = vmul.f32 %v9053, %v9053
        %v9284 = vmul.f32 %v9249, %v9249
        %v9285 = vmul.f32 %v9056, %v9056
        %v9286 = vmul.f32 %v9252, %v9252
        %v9287 = vmul.f32 %v9058, %v9058
        %v9288 = vmul.f32 %v9254, %v9254
        %v9289 = vadd.f32 %v9257, %v9258
        %9290 = vadd.xlane.f32.xlu0 %v9289
        %v9291 = vpop.xlane.xlu0 %9290
        %v9292 = vadd.f32 %v9259, %v9260
        %9293 = vadd.xlane.f32.xlu0 %v9292
        %v9294 = vpop.xlane.xlu0 %9293
        %v9295 = vadd.f32 %v9261, %v9262
        %9296 = vadd.xlane.f32.xlu0 %v9295
        %v9297 = vpop.xlane.xlu0 %9296
        %v9298 = vadd.f32 %v9263, %v9264
        %9299 = vadd.xlane.f32.xlu0 %v9298
        %v9300 = vpop.xlane.xlu0 %9299
        %v9301 = vadd.f32 %v9265, %v9266
        %9302 = vadd.xlane.f32.xlu0 %v9301
        %v9303 = vpop.xlane.xlu0 %9302
        %v9304 = vadd.f32 %v9267, %v9268
        %9305 = vadd.xlane.f32.xlu0 %v9304
        %v9306 = vpop.xlane.xlu0 %9305
        %v9307 = vadd.f32 %v9269, %v9270
        %9308 = vadd.xlane.f32.xlu0 %v9307
        %v9309 = vpop.xlane.xlu0 %9308
        %v9310 = vadd.f32 %v9271, %v9272
        %9311 = vadd.xlane.f32.xlu0 %v9310
        %v9312 = vpop.xlane.xlu0 %9311
        %v9313 = vadd.f32 %v9273, %v9274
        %9314 = vadd.xlane.f32.xlu0 %v9313
        %v9315 = vpop.xlane.xlu0 %9314
        %v9316 = vadd.f32 %v9275, %v9276
        %9317 = vadd.xlane.f32.xlu0 %v9316
        %v9318 = vpop.xlane.xlu0 %9317
        %v9319 = vadd.f32 %v9277, %v9278
        %9320 = vadd.xlane.f32.xlu0 %v9319
        %v9321 = vpop.xlane.xlu0 %9320
        %v9322 = vadd.f32 %v9279, %v9280
        %9323 = vadd.xlane.f32.xlu0 %v9322
        %v9324 = vpop.xlane.xlu0 %9323
        %v9325 = vadd.f32 %v9281, %v9282
        %9326 = vadd.xlane.f32.xlu0 %v9325
        %v9327 = vpop.xlane.xlu0 %9326
        %v9328 = vadd.f32 %v9283, %v9284
        %9329 = vadd.xlane.f32.xlu0 %v9328
        %v9330 = vpop.xlane.xlu0 %9329
        %v9331 = vadd.f32 %v9285, %v9286
        %9332 = vadd.xlane.f32.xlu0 %v9331
        %v9333 = vpop.xlane.xlu0 %9332
        %v9334 = vadd.f32 %v9287, %v9288
        %9335 = vadd.xlane.f32.xlu0 %v9334
        %v9336 = vpop.xlane.xlu0 %9335
        %v9337 = vmul.f32 %v9291, %v2218
        %v9338 = vmul.f32 %v9294, %v2218
        %v9339 = vmul.f32 %v9297, %v2218
        %v9340 = vmul.f32 %v9300, %v2218
        %v9341 = vmul.f32 %v9303, %v2218
        %v9342 = vmul.f32 %v9306, %v2218
        %v9343 = vmul.f32 %v9309, %v2218
        %v9344 = vmul.f32 %v9312, %v2218
        %v9345 = vmul.f32 %v9315, %v2218
        %v9346 = vmul.f32 %v9318, %v2218
        %v9347 = vmul.f32 %v9321, %v2218
        %v9348 = vmul.f32 %v9324, %v2218
        %v9349 = vmul.f32 %v9327, %v2218
        %v9350 = vmul.f32 %v9330, %v2218
        %v9351 = vmul.f32 %v9333, %v2218
        %v9352 = vmul.f32 %v9336, %v2218
        %v9353 = vadd.f32 %v9337, 1e-06
        %v9354 = vadd.f32 %v9338, 1e-06
        %v9355 = vadd.f32 %v9339, 1e-06
        %v9356 = vadd.f32 %v9340, 1e-06
        %v9357 = vadd.f32 %v9341, 1e-06
        %v9358 = vadd.f32 %v9342, 1e-06
        %v9359 = vadd.f32 %v9343, 1e-06
        %v9360 = vadd.f32 %v9344, 1e-06
        %v9361 = vadd.f32 %v9345, 1e-06
        %v9362 = vadd.f32 %v9346, 1e-06
        %v9363 = vadd.f32 %v9347, 1e-06
        %v9364 = vadd.f32 %v9348, 1e-06
        %v9365 = vadd.f32 %v9349, 1e-06
        %v9366 = vadd.f32 %v9350, 1e-06
        %v9367 = vadd.f32 %v9351, 1e-06
        %v9368 = vadd.f32 %v9352, 1e-06
        %v9369 = vrsqrt.pop %v9353
        %v9370 = vmul.f32 %v9369, %v9353
        %v9371 = vmul.f32 %v9370, %v9369
        %v9372 = vmul.f32 0.5, %v9371
        %v9373 = vsub.f32 1.5, %v9372
        %v9374 = vmul.f32 %v9369, %v9373
        %vm9375 = vweird.f32 %v9353
        %vm9376 = vweird.f32 %v9369
        %vm9377 = vmor %vm9375, %vm9376
        %v9378 = vsel %vm9377, %v9369, %v9374
        %v9379 = vrsqrt.pop %v9354
        %v9380 = vmul.f32 %v9379, %v9354
        %v9381 = vmul.f32 %v9380, %v9379
        %v9382 = vmul.f32 0.5, %v9381
        %v9383 = vsub.f32 1.5, %v9382
        %v9384 = vmul.f32 %v9379, %v9383
        %vm9385 = vweird.f32 %v9354
        %vm9386 = vweird.f32 %v9379
        %vm9387 = vmor %vm9385, %vm9386
        %v9388 = vsel %vm9387, %v9379, %v9384
        %v9389 = vrsqrt.pop %v9355
        %v9390 = vmul.f32 %v9389, %v9355
        %v9391 = vmul.f32 %v9390, %v9389
        %v9392 = vmul.f32 0.5, %v9391
        %v9393 = vsub.f32 1.5, %v9392
        %v9394 = vmul.f32 %v9389, %v9393
        %vm9395 = vweird.f32 %v9355
        %vm9396 = vweird.f32 %v9389
        %vm9397 = vmor %vm9395, %vm9396
        %v9398 = vsel %vm9397, %v9389, %v9394
        %v9399 = vrsqrt.pop %v9356
        %v9400 = vmul.f32 %v9399, %v9356
        %v9401 = vmul.f32 %v9400, %v9399
        %v9402 = vmul.f32 0.5, %v9401
        %v9403 = vsub.f32 1.5, %v9402
        %v9404 = vmul.f32 %v9399, %v9403
        %vm9405 = vweird.f32 %v9356
        %vm9406 = vweird.f32 %v9399
        %vm9407 = vmor %vm9405, %vm9406
        %v9408 = vsel %vm9407, %v9399, %v9404
        %v9409 = vrsqrt.pop %v9357
        %v9410 = vmul.f32 %v9409, %v9357
        %v9411 = vmul.f32 %v9410, %v9409
        %v9412 = vmul.f32 0.5, %v9411
        %v9413 = vsub.f32 1.5, %v9412
        %v9414 = vmul.f32 %v9409, %v9413
        %vm9415 = vweird.f32 %v9357
        %vm9416 = vweird.f32 %v9409
        %vm9417 = vmor %vm9415, %vm9416
        %v9418 = vsel %vm9417, %v9409, %v9414
        %v9419 = vrsqrt.pop %v9358
        %v9420 = vmul.f32 %v9419, %v9358
        %v9421 = vmul.f32 %v9420, %v9419
        %v9422 = vmul.f32 0.5, %v9421
        %v9423 = vsub.f32 1.5, %v9422
        %v9424 = vmul.f32 %v9419, %v9423
        %vm9425 = vweird.f32 %v9358
        %vm9426 = vweird.f32 %v9419
        %vm9427 = vmor %vm9425, %vm9426
        %v9428 = vsel %vm9427, %v9419, %v9424
        %v9429 = vrsqrt.pop %v9359
        %v9430 = vmul.f32 %v9429, %v9359
        %v9431 = vmul.f32 %v9430, %v9429
        %v9432 = vmul.f32 0.5, %v9431
        %v9433 = vsub.f32 1.5, %v9432
        %v9434 = vmul.f32 %v9429, %v9433
        %vm9435 = vweird.f32 %v9359
        %vm9436 = vweird.f32 %v9429
        %vm9437 = vmor %vm9435, %vm9436
        %v9438 = vsel %vm9437, %v9429, %v9434
        %v9439 = vrsqrt.pop %v9360
        %v9440 = vmul.f32 %v9439, %v9360
        %v9441 = vmul.f32 %v9440, %v9439
        %v9442 = vmul.f32 0.5, %v9441
        %v9443 = vsub.f32 1.5, %v9442
        %v9444 = vmul.f32 %v9439, %v9443
        %vm9445 = vweird.f32 %v9360
        %vm9446 = vweird.f32 %v9439
        %vm9447 = vmor %vm9445, %vm9446
        %v9448 = vsel %vm9447, %v9439, %v9444
        %v9449 = vrsqrt.pop %v9361
        %v9450 = vmul.f32 %v9449, %v9361
        %v9451 = vmul.f32 %v9450, %v9449
        %v9452 = vmul.f32 0.5, %v9451
        %v9453 = vsub.f32 1.5, %v9452
        %v9454 = vmul.f32 %v9449, %v9453
        %vm9455 = vweird.f32 %v9361
        %vm9456 = vweird.f32 %v9449
        %vm9457 = vmor %vm9455, %vm9456
        %v9458 = vsel %vm9457, %v9449, %v9454
        %v9459 = vrsqrt.pop %v9362
        %v9460 = vmul.f32 %v9459, %v9362
        %v9461 = vmul.f32 %v9460, %v9459
        %v9462 = vmul.f32 0.5, %v9461
        %v9463 = vsub.f32 1.5, %v9462
        %v9464 = vmul.f32 %v9459, %v9463
        %vm9465 = vweird.f32 %v9362
        %vm9466 = vweird.f32 %v9459
        %vm9467 = vmor %vm9465, %vm9466
        %v9468 = vsel %vm9467, %v9459, %v9464
        %v9469 = vrsqrt.pop %v9363
        %v9470 = vmul.f32 %v9469, %v9363
        %v9471 = vmul.f32 %v9470, %v9469
        %v9472 = vmul.f32 0.5, %v9471
        %v9473 = vsub.f32 1.5, %v9472
        %v9474 = vmul.f32 %v9469, %v9473
        %vm9475 = vweird.f32 %v9363
        %vm9476 = vweird.f32 %v9469
        %vm9477 = vmor %vm9475, %vm9476
        %v9478 = vsel %vm9477, %v9469, %v9474
        %v9479 = vrsqrt.pop %v9364
        %v9480 = vmul.f32 %v9479, %v9364
        %v9481 = vmul.f32 %v9480, %v9479
        %v9482 = vmul.f32 0.5, %v9481
        %v9483 = vsub.f32 1.5, %v9482
        %v9484 = vmul.f32 %v9479, %v9483
        %vm9485 = vweird.f32 %v9364
        %vm9486 = vweird.f32 %v9479
        %vm9487 = vmor %vm9485, %vm9486
        %v9488 = vsel %vm9487, %v9479, %v9484
        %v9489 = vrsqrt.pop %v9365
        %v9490 = vmul.f32 %v9489, %v9365
        %v9491 = vmul.f32 %v9490, %v9489
        %v9492 = vmul.f32 0.5, %v9491
        %v9493 = vsub.f32 1.5, %v9492
        %v9494 = vmul.f32 %v9489, %v9493
        %vm9495 = vweird.f32 %v9365
        %vm9496 = vweird.f32 %v9489
        %vm9497 = vmor %vm9495, %vm9496
        %v9498 = vsel %vm9497, %v9489, %v9494
        %v9499 = vrsqrt.pop %v9366
        %v9500 = vmul.f32 %v9499, %v9366
        %v9501 = vmul.f32 %v9500, %v9499
        %v9502 = vmul.f32 0.5, %v9501
        %v9503 = vsub.f32 1.5, %v9502
        %v9504 = vmul.f32 %v9499, %v9503
        %vm9505 = vweird.f32 %v9366
        %vm9506 = vweird.f32 %v9499
        %vm9507 = vmor %vm9505, %vm9506
        %v9508 = vsel %vm9507, %v9499, %v9504
        %v9509 = vrsqrt.pop %v9367
        %v9510 = vmul.f32 %v9509, %v9367
        %v9511 = vmul.f32 %v9510, %v9509
        %v9512 = vmul.f32 0.5, %v9511
        %v9513 = vsub.f32 1.5, %v9512
        %v9514 = vmul.f32 %v9509, %v9513
        %vm9515 = vweird.f32 %v9367
        %vm9516 = vweird.f32 %v9509
        %vm9517 = vmor %vm9515, %vm9516
        %v9518 = vsel %vm9517, %v9509, %v9514
        %v9519 = vrsqrt.pop %v9368
        %v9520 = vmul.f32 %v9519, %v9368
        %v9521 = vmul.f32 %v9520, %v9519
        %v9522 = vmul.f32 0.5, %v9521
        %v9523 = vsub.f32 1.5, %v9522
        %v9524 = vmul.f32 %v9519, %v9523
        %vm9525 = vweird.f32 %v9368
        %vm9526 = vweird.f32 %v9519
        %vm9527 = vmor %vm9525, %vm9526
        %v9528 = vsel %vm9527, %v9519, %v9524
        %v9529 = vmul.f32 %v9021, %v9378
        %v9530 = vmul.f32 %v9217, %v9378
        %v9531 = vmul.f32 %v9023, %v9388
        %v9532 = vmul.f32 %v9219, %v9388
        %v9533 = vmul.f32 %v9026, %v9398
        %v9534 = vmul.f32 %v9222, %v9398
        %v9535 = vmul.f32 %v9028, %v9408
        %v9536 = vmul.f32 %v9224, %v9408
        %v9537 = vmul.f32 %v9031, %v9418
        %v9538 = vmul.f32 %v9227, %v9418
        %v9539 = vmul.f32 %v9033, %v9428
        %v9540 = vmul.f32 %v9229, %v9428
        %v9541 = vmul.f32 %v9036, %v9438
        %v9542 = vmul.f32 %v9232, %v9438
        %v9543 = vmul.f32 %v9038, %v9448
        %v9544 = vmul.f32 %v9234, %v9448
        %v9545 = vmul.f32 %v9041, %v9458
        %v9546 = vmul.f32 %v9237, %v9458
        %v9547 = vmul.f32 %v9043, %v9468
        %v9548 = vmul.f32 %v9239, %v9468
        %v9549 = vmul.f32 %v9046, %v9478
        %v9550 = vmul.f32 %v9242, %v9478
        %v9551 = vmul.f32 %v9048, %v9488
        %v9552 = vmul.f32 %v9244, %v9488
        %v9553 = vmul.f32 %v9051, %v9498
        %v9554 = vmul.f32 %v9247, %v9498
        %v9555 = vmul.f32 %v9053, %v9508
        %v9556 = vmul.f32 %v9249, %v9508
        %v9557 = vmul.f32 %v9056, %v9518
        %v9558 = vmul.f32 %v9252, %v9518
        %v9559 = vmul.f32 %v9058, %v9528
        %v9560 = vmul.f32 %v9254, %v9528
        %v9562 = vperm.slane %v9256, 0
        %v9563 = vperm.slane %v9256, 1
        %v9566 = vmul.f32 %v9529, %v9562
        %v9567 = vmul.f32 %v9530, %v9563
        %v9568 = vmul.f32 %v9531, %v9562
        %v9569 = vmul.f32 %v9532, %v9563
        %v9570 = vmul.f32 %v9533, %v9562
        %v9571 = vmul.f32 %v9534, %v9563
        %v9572 = vmul.f32 %v9535, %v9562
        %v9573 = vmul.f32 %v9536, %v9563
        %v9574 = vmul.f32 %v9537, %v9562
        %v9575 = vmul.f32 %v9538, %v9563
        %v9576 = vmul.f32 %v9539, %v9562
        %v9577 = vmul.f32 %v9540, %v9563
        %v9578 = vmul.f32 %v9541, %v9562
        %v9579 = vmul.f32 %v9542, %v9563
        %v9580 = vmul.f32 %v9543, %v9562
        %v9581 = vmul.f32 %v9544, %v9563
        %v9582 = vmul.f32 %v9545, %v9562
        %v9583 = vmul.f32 %v9546, %v9563
        %v9584 = vmul.f32 %v9547, %v9562
        %v9585 = vmul.f32 %v9548, %v9563
        %v9586 = vmul.f32 %v9549, %v9562
        %v9587 = vmul.f32 %v9550, %v9563
        %v9588 = vmul.f32 %v9551, %v9562
        %v9589 = vmul.f32 %v9552, %v9563
        %v9590 = vmul.f32 %v9553, %v9562
        %v9591 = vmul.f32 %v9554, %v9563
        %v9592 = vmul.f32 %v9555, %v9562
        %v9593 = vmul.f32 %v9556, %v9563
        %v9594 = vmul.f32 %v9557, %v9562
        %v9595 = vmul.f32 %v9558, %v9563
        %v9596 = vmul.f32 %v9559, %v9562
        %v9597 = vmul.f32 %v9560, %v9563
        %v9598 = vadd.f32 %v9566, %v6400
        %v9599 = vadd.f32 %v9567, %v6401
        %v9600 = vadd.f32 %v9568, %v6402
        %v9601 = vadd.f32 %v9569, %v6403
        %v9602 = vadd.f32 %v9570, %v6404
        %v9603 = vadd.f32 %v9571, %v6405
        %v9604 = vadd.f32 %v9572, %v6406
        %v9605 = vadd.f32 %v9573, %v6407
        %v9606 = vadd.f32 %v9574, %v6408
        %v9607 = vadd.f32 %v9575, %v6409
        %v9608 = vadd.f32 %v9576, %v6410
        %v9609 = vadd.f32 %v9577, %v6411
        %v9610 = vadd.f32 %v9578, %v6412
        %v9611 = vadd.f32 %v9579, %v6413
        %v9612 = vadd.f32 %v9580, %v6414
        %v9613 = vadd.f32 %v9581, %v6415
        %v9614 = vadd.f32 %v9582, %v6416
        %v9615 = vadd.f32 %v9583, %v6417
        %v9616 = vadd.f32 %v9584, %v6418
        %v9617 = vadd.f32 %v9585, %v6419
        %v9618 = vadd.f32 %v9586, %v6420
        %v9619 = vadd.f32 %v9587, %v6421
        %v9620 = vadd.f32 %v9588, %v6422
        %v9621 = vadd.f32 %v9589, %v6423
        %v9622 = vadd.f32 %v9590, %v6424
        %v9623 = vadd.f32 %v9591, %v6425
        %v9624 = vadd.f32 %v9592, %v6426
        %v9625 = vadd.f32 %v9593, %v6427
        %v9626 = vadd.f32 %v9594, %v6428
        %v9627 = vadd.f32 %v9595, %v6429
        %v9628 = vadd.f32 %v9596, %v6430
        %v9629 = vadd.f32 %v9597, %v6431
        %9630 = vst [vmem:[%s495] sm:$0xff] %v9598
        %9631 = vst [vmem:[%s495 + $0x8] sm:$0xff] %v9599
        %9632 = vst [vmem:[%s495 + $0x10] sm:$0xff] %v9600
        %9633 = vst [vmem:[%s495 + $0x18] sm:$0xff] %v9601
        %9634 = vst [vmem:[%s495 + $0x20] sm:$0xff] %v9602
        %9635 = vst [vmem:[%s495 + $0x28] sm:$0xff] %v9603
        %9636 = vst [vmem:[%s495 + $0x30] sm:$0xff] %v9604
        %9637 = vst [vmem:[%s495 + $0x38] sm:$0xff] %v9605
        %9638 = vst [vmem:[%s495 + $0x40] sm:$0xff] %v9606
        %9639 = vst [vmem:[%s495 + $0x48] sm:$0xff] %v9607
        %9640 = vst [vmem:[%s495 + $0x50] sm:$0xff] %v9608
        %9641 = vst [vmem:[%s495 + $0x58] sm:$0xff] %v9609
        %9642 = vst [vmem:[%s495 + $0x60] sm:$0xff] %v9610
        %9643 = vst [vmem:[%s495 + $0x68] sm:$0xff] %v9611
        %9644 = vst [vmem:[%s495 + $0x70] sm:$0xff] %v9612
        %9645 = vst [vmem:[%s495 + $0x78] sm:$0xff] %v9613
        %9646 = vst [vmem:[%s495 + $0x80] sm:$0xff] %v9614
        %9647 = vst [vmem:[%s495 + $0x88] sm:$0xff] %v9615
        %9648 = vst [vmem:[%s495 + $0x90] sm:$0xff] %v9616
        %9649 = vst [vmem:[%s495 + $0x98] sm:$0xff] %v9617
        %9650 = vst [vmem:[%s495 + $0xa0] sm:$0xff] %v9618
        %9651 = vst [vmem:[%s495 + $0xa8] sm:$0xff] %v9619
        %9652 = vst [vmem:[%s495 + $0xb0] sm:$0xff] %v9620
        %9653 = vst [vmem:[%s495 + $0xb8] sm:$0xff] %v9621
        %9654 = vst [vmem:[%s495 + $0xc0] sm:$0xff] %v9622
        %9655 = vst [vmem:[%s495 + $0xc8] sm:$0xff] %v9623
        %9656 = vst [vmem:[%s495 + $0xd0] sm:$0xff] %v9624
        %9657 = vst [vmem:[%s495 + $0xd8] sm:$0xff] %v9625
        %9658 = vst [vmem:[%s495 + $0xe0] sm:$0xff] %v9626
        %9659 = vst [vmem:[%s495 + $0xe8] sm:$0xff] %v9627
        %9660 = vst [vmem:[%s495 + $0xf0] sm:$0xff] %v9628
        %9661 = vst [vmem:[%s495 + $0xf8] sm:$0xff] %v9629
        %s9662 = sand.u32 %s269, 1
        %s9663 = scalar_lea.sflag [#allocation4], %s9662
        %s9664 = sand.u32 %s269, 1
        %s9665 = smul.addr %s9664, 256
        %s9666 = scalar_lea.vmem [#allocation16], %s9665
        // Predicated region
        $region97: #{olmo_decoder_layer.1} parent=63 // pred_check
          %p9667 = pneg %p279
        $region98: #{olmo_decoder_layer.1} parent=63 // pred_check_branch
          %9669 = sbr.rel (%p9667) target = $region100
        $region99: #{olmo_decoder_layer.1} parent=63 // pred_region
          %s9670 = smul.u32 16, %s30
          %9672 = vsyncadd %s9663, 0
          %s9673 = smul.addr %s9670, 2
          %s9674 = smul.addr %s9673, 8
          %s9675 = scalar_lea.hbm %s11, %s9674
          %s9676 = sshll.u32 %s9666, 4
          %s9677 = int_to_ptr.vmem [resolvable:$true] %s9676
          %s9678 = sshll.u32 %s9675, 4
          %s9679 = int_to_ptr.hbm [resolvable:$true] %s9678
          %9684 = dma.vmem_to_hbm [thread:$0]  %s9677, 4096, %s9679, %s9663, 256, 256, 16
        $region100: #{olmo_decoder_layer.1} parent=63 // pred_fallthru
          _
      $region64: #{olmo_decoder_layer.1} parent=5 // pred_fallthru
        _
      %p9685 = scmp.le.s32.totalorder 2, %s25
      // Predicated region
      $region101: #{olmo_decoder_layer.1} parent=5 // pred_check
        %p9686 = pneg %p9685
      $region102: #{olmo_decoder_layer.1} parent=5 // pred_check_branch
        %9688 = sbr.rel (%p9686) target = $region104
      $region103: #{olmo_decoder_layer.1} parent=5 // pred_region
        %s9689 = ssub.s32 %s25, 2
        // Predicated region
        $region105: #{olmo_decoder_layer.1} parent=103 // pred_check
          %p9690 = pneg %p285
        $region106: #{olmo_decoder_layer.1} parent=103 // pred_check_branch
          %9692 = sbr.rel (%p9690) target = $region108
        $region107: #{olmo_decoder_layer.1} parent=103 // pred_region
          %s9693 = sand.u32 %s270, 1
          %s9694 = scalar_lea.sflag [#allocation4], %s9693
          %s9695 = sand.u32 %s270, 1
          %s9696 = smul.addr %s9695, 256
          %s9697 = scalar_lea.vmem [#allocation16], %s9696
          %9699 = dma.done %s9694, 4096
        $region108: #{olmo_decoder_layer.1} parent=103 // pred_fallthru
          _
      $region104: #{olmo_decoder_layer.1} parent=5 // pred_fallthru
        _
    $region6: #{olmo_decoder_layer.1} parent=1 // loop_footer
      %s29 = sadd.s32 1, %s25
    $region7: #{olmo_decoder_layer.1} parent=1 // loop_footer_branch
      %24 = sbr.rel target = $region3
    $region8: #{olmo_decoder_layer.1} parent=1 // loop_exit
      _
    %9700 = vsyncpa [#allocation3], 1
    %s9701 = scalar_lea.sflag [#allocation3], 1
    %9702 = vsyncpa %s9701, 1
    %9703 = vsyncpa [#allocation6], 1
    %9704 = vsyncpa [#allocation9], 1
    %9705 = vsyncpa [#allocation12], 1
    %9706 = vsyncpa [#allocation15], 1
    %9707 = vsyncpa [#allocation4], 1
    %s9708 = scalar_lea.sflag [#allocation4], 1
    %9709 = vsyncpa %s9708, 1

</llo_original>
